<compile_context>
chip_gen: v7x
topology: tpu7x:2x2x1
jax: 0.10.0
libtpu: 0.0.40
codegen_flags: <defaults>
</compile_context>

<pallas_src>
import functools
import math

import jax
import jax.numpy as jnp
from jax import lax
from jax.experimental import pallas as pl
from jax.experimental.pallas import tpu as pltpu


# ---------------------------------------------------------------------------
# Generation-aware defaults (VMEM limit + reach-operand dtype).
# ---------------------------------------------------------------------------
def _hw_defaults():
    vmem_phys = 128 * 1024 * 1024
    try:
        info_fn = getattr(pltpu, "get_tpu_info", None)
        if info_fn is not None:
            vmem_phys = int(info_fn().vmem_capacity_bytes)
    except Exception:
        pass
    kind = ""
    try:
        kind = jax.devices()[0].device_kind.lower()
    except Exception:
        pass
    # int8 reach operands only where the MXU has a native int path (v5*/v6*).
    use_int8 = ("v5" in kind) or ("v6" in kind)
    reach_dtype = jnp.int8 if use_int8 else jnp.bfloat16
    if vmem_phys <= 64 * 1024 * 1024:
        # v7x-class: 64 MiB per TC -> leave headroom below physical capacity.
        return (vmem_phys * 3) // 4, reach_dtype
    # v5e/v6e-class (128 MiB physical): large limit unlocks T=256+.
    return min(100 * 1024 * 1024, (vmem_phys * 4) // 5), reach_dtype


# ---------------------------------------------------------------------------
# Kernel 1: substructure features + block-diagonal branch linear.
# Grid: (i row-tile, j column-tile, k hop-tile), k innermost.
# ---------------------------------------------------------------------------
def _feat_kernel(
    a_ref,      # (T, T)   bf16   A[i_blk, j_blk]      (out-edge multiplicity)
    w_ref,      # (T, T)   bf16   W[i_blk, j_blk]      (summed edge weights)
    aik_ref,    # (T, T)   narrow (A^T + I)[i_blk, k_blk]   (reach operand)
    akj_ref,    # (T, T)   narrow (A^T + I)[k_blk, j_blk]   (reach operand)
    xj_ref,     # (T, Cin) bf16   x[j_blk]
    xi_ref,     # (T, Cin) bf16   x[i_blk]
    xnj_ref,    # (T, Cin) bf16   L2-normalized x[j_blk]
    xni_ref,    # (T, Cin) bf16   L2-normalized x[i_blk]
    wb_ref,     # (4*Cin, 4H) f32 block-diagonal branch weight
    bb_ref,     # (1, 4H)  f32    concatenated branch biases
    hpre_ref,   # (T, 4H)  bf16   out: [ego|cut|cos|glob] pre-activations
    reach_sc,   # (T, T)   f32/int32  per-(i,j) 2-hop accumulator
    egosum_sc,  # (T, Cin) f32
    cnt_sc,     # (T, 1)   f32
    wsum_sc,    # (T, Cin) f32
    tw_sc,      # (T, 1)   f32
    deg_sc,     # (T, 1)   f32
    cden_sc,    # (T, 1)   f32
    cnum_sc,    # (T, Cin) f32
):
    f32 = jnp.float32
    bf16 = jnp.bfloat16
    j = pl.program_id(1)
    k = pl.program_id(2)
    nj = pl.num_programs(1)
    nk = pl.num_programs(2)
    cin = xi_ref.shape[1]

    @pl.when(jnp.logical_and(j == 0, k == 0))
    def _init_row():
        egosum_sc[...] = jnp.zeros_like(egosum_sc)
        cnt_sc[...] = jnp.zeros_like(cnt_sc)
        wsum_sc[...] = jnp.zeros_like(wsum_sc)
        tw_sc[...] = jnp.zeros_like(tw_sc)
        deg_sc[...] = jnp.zeros_like(deg_sc)
        cden_sc[...] = jnp.zeros_like(cden_sc)
        cnum_sc[...] = jnp.zeros_like(cnum_sc)

    @pl.when(k == 0)
    def _per_col_block():
        # reset the per-(i,j) 2-hop accumulator
        reach_sc[...] = jnp.zeros_like(reach_sc)

        a_f32 = a_ref[...].astype(f32)
        w_blk = w_ref[...]
        x_j = xj_ref[...]

        # ---- cut: edge-weight weighted sums over out-neighbours.
        wsum_sc[...] += jnp.dot(w_blk, x_j, preferred_element_type=f32)
        tw_sc[...] += jnp.sum(w_blk.astype(f32), axis=1, keepdims=True)
        deg_sc[...] += jnp.sum(a_f32, axis=1, keepdims=True)

        # ---- cosine: softmax over cosine sims (|cos|<=1, so no max shift).
        s_blk = lax.dot_general(xni_ref[...], xnj_ref[...],
                                (((1,), (1,)), ((), ())),
                                preferred_element_type=f32)
        p_blk = a_f32 * jnp.exp(s_blk)          # exactly 0 where there is no edge
        cden_sc[...] += jnp.sum(p_blk, axis=1, keepdims=True)
        cnum_sc[...] += jnp.dot(p_blk.astype(bf16), x_j,
                                preferred_element_type=f32)

    # ---- ego: (AT+I)@(AT+I) > 0  <=>  (I + AT + AT@AT) > 0 ; narrow operands.
    reach_sc[...] += jnp.dot(aik_ref[...], akj_ref[...],
                             preferred_element_type=reach_sc.dtype)

    @pl.when(k == nk - 1)
    def _fold_reach():
        r_bool = reach_sc[...] > 0
        cnt_sc[...] += jnp.sum(r_bool.astype(f32), axis=1, keepdims=True)
        egosum_sc[...] += jnp.dot(r_bool.astype(bf16), xj_ref[...],
                                  preferred_element_type=f32)

    @pl.when(jnp.logical_and(j == nj - 1, k == nk - 1))
    def _finalize():
        x_i = xi_ref[...].astype(f32)

        # ego: mean over the 2-hop reachable set (always >= 1 via the +I self).
        ego_feat = egosum_sc[...] / cnt_sc[...]

        has_nbr = deg_sc[...] > 0.0
        tw = tw_sc[...]
        cut_feat = jnp.where(jnp.logical_and(has_nbr, tw > 0.0),
                             wsum_sc[...] / jnp.where(tw > 0.0, tw, 1.0),
                             x_i)

        den = cden_sc[...]
        cos_feat = jnp.where(has_nbr,
                             cnum_sc[...] / jnp.where(den > 0.0, den, 1.0),
                             x_i)

        # Single block-diagonal branch linear ([ego|cut|cos|x] @ Wb + bb),
        # realized as four full-lane (T,Cin)@(Cin,4H) matmuls on row slices of
        # Wb -- no cross-lane concatenate, lane-dense 128-wide store.
        hp = bb_ref[...]
        hp = hp + jnp.dot(ego_feat.astype(bf16),
                          wb_ref[0 * cin:1 * cin, :].astype(bf16),
                          preferred_element_type=f32)
        hp = hp + jnp.dot(cut_feat.astype(bf16),
                          wb_ref[1 * cin:2 * cin, :].astype(bf16),
                          preferred_element_type=f32)
        hp = hp + jnp.dot(cos_feat.astype(bf16),
                          wb_ref[2 * cin:3 * cin, :].astype(bf16),
                          preferred_element_type=f32)
        hp = hp + jnp.dot(xi_ref[...],
                          wb_ref[3 * cin:4 * cin, :].astype(bf16),
                          preferred_element_type=f32)
        hpre_ref[...] = hp.astype(hpre_ref.dtype)


# ---------------------------------------------------------------------------
# Kernel 2: message-passing aggregation + final fc + log-softmax.
# ---------------------------------------------------------------------------
def _mp_kernel(ati_ref,   # (T2, T2)  bf16  (A^T + I)[i_blk, k_blk]
               hk_ref,    # (T2, 4H)  bf16  h_pre[k_blk, :]
               hi_ref,    # (T2, 4H)  bf16  h_pre[i_blk, :]
               wf_ref,    # (4H, OP)  bf16  final fc weight (lane-padded)
               bf_ref,    # (1, OP)   f32   final fc bias   (lane-padded)
               out_ref,   # (T2, OP)  f32   log-probs (lane-padded)
               acc_sc,    # (T2, 4H)  f32
               *, n_out):
    f32 = jnp.float32
    k = pl.program_id(1)
    nk = pl.num_programs(1)

    @pl.when(k == 0)
    def _init():
        acc_sc[...] = jnp.zeros_like(acc_sc)

    # Aggregate over incoming edges with the shared (A^T + I) array; the +I
    # contribution is removed again at finalize (exact in bf16).
    acc_sc[...] += jnp.dot(ati_ref[...], hk_ref[...],
                           preferred_element_type=f32)

    @pl.when(k == nk - 1)
    def _finalize():
        four_h = acc_sc.shape[1]
        h3 = (four_h // 4) * 3
        h_i = hi_ref[...].astype(f32)
        agg = acc_sc[...] - h_i                       # undo the +I
        col4 = lax.broadcasted_iota(jnp.int32, agg.shape, 1)
        # first 3H lanes: relu(aggregated branches); last H lanes: global enc.
        comb = jnp.where(col4 < h3, jnp.maximum(agg, 0.0), h_i)
        logits = jnp.dot(comb.astype(jnp.bfloat16), wf_ref[...],
                         preferred_element_type=f32) + bf_ref[...]
        colo = lax.broadcasted_iota(jnp.int32, logits.shape, 1)
        logits = jnp.where(colo < n_out, logits, -1e30)   # mask padded lanes
        lmax = jnp.max(logits, axis=1, keepdims=True)
        lse = lmax + jnp.log(jnp.sum(jnp.exp(logits - lmax),
                                     axis=1, keepdims=True))
        out_ref[...] = (logits - lse).astype(out_ref.dtype)


# ---------------------------------------------------------------------------
# Parameters (nn.Linear-style init) and JAX wrapper.
# ---------------------------------------------------------------------------
def init_params(key, in_channels, hidden_channels, out_channels):
    ks = jax.random.split(key, 5)

    def lin(k, fan_in, fan_out):
        kw, kb = jax.random.split(k)
        bound = 1.0 / jnp.sqrt(jnp.float32(fan_in))
        w = jax.random.uniform(kw, (fan_out, fan_in), jnp.float32, -bound, bound)
        b = jax.random.uniform(kb, (fan_out,), jnp.float32, -bound, bound)
        return w, b

    p = {}
    p["ego_w"], p["ego_b"] = lin(ks[0], in_channels, hidden_channels)
    p["cut_w"], p["cut_b"] = lin(ks[1], in_channels, hidden_channels)
    p["cos_w"], p["cos_b"] = lin(ks[2], in_channels, hidden_channels)
    p["glob_w"], p["glob_b"] = lin(ks[3], in_channels, hidden_channels)
    p["fin_w"], p["fin_b"] = lin(ks[4], 4 * hidden_channels, out_channels)
    return p


def sagn_cs_forward(x, edge_index, edge_weight, params, *,
                    tile=256, tile2=256, reach_dtype=None,
                    vmem_limit_bytes=None):
    """x: [N, Cin] f32, edge_index: [2, E] int32, edge_weight: [E] f32 or None."""
    N, Cin = x.shape
    H = params["ego_w"].shape[0]
    O = params["fin_w"].shape[0]
    T, T2 = int(tile), int(tile2)
    assert T % 128 == 0 and T2 % 128 == 0
    step = T * T2 // math.gcd(T, T2)
    Np = ((N + step - 1) // step) * step
    OP = ((max(O, 1) + 127) // 128) * 128

    auto_vmem, auto_reach = _hw_defaults()
    if vmem_limit_bytes is None:
        vmem_limit_bytes = auto_vmem
    if reach_dtype is None:
        reach_dtype = auto_reach
    acc_dtype = jnp.int32 if jnp.issubdtype(reach_dtype, jnp.integer) else jnp.float32
    rbytes = 1 if jnp.issubdtype(reach_dtype, jnp.integer) else 2

    f32, bf16 = jnp.float32, jnp.bfloat16
    src = edge_index[0].astype(jnp.int32)
    dst = edge_index[1].astype(jnp.int32)
    if edge_weight is None:
        edge_weight = jnp.ones((edge_index.shape[1],), f32)

    # Glue: edge list -> dense (padded) adjacency / weight matrices, plus
    # hoisted L2-normalized / bf16 feature copies.
    x32 = x.astype(f32)
    xp = jnp.zeros((Np, Cin), f32).at[:N].set(x32)
    nrm = jnp.maximum(jnp.sqrt(jnp.sum(xp * xp, axis=1, keepdims=True)), 1e-12)
    xp_bf = xp.astype(bf16)
    xn_bf = (xp / nrm).astype(bf16)

    A = jnp.zeros((Np, Np), f32).at[src, dst].add(1.0)
    Wm = jnp.zeros((Np, Np), f32).at[src, dst].add(edge_weight.astype(f32))
    ATI = A.T + jnp.eye(Np, dtype=f32)        # (A^T + I), shared by both kernels
    A_bf = A.astype(bf16)                     # counts exact in bf16 (<= 256)
    W_bf = Wm.astype(bf16)
    ATI_bf = ATI.astype(bf16)                 # kernel-2 aggregation (exact +I)
    ATI_rd = ATI.astype(reach_dtype)          # reach-only narrow copy (i8 / bf16)

    # Block-diagonal branch weight (4*Cin, 4H) and concatenated biases.
    wb = jnp.zeros((4 * Cin, 4 * H), f32)
    wb = wb.at[0 * Cin:1 * Cin, 0 * H:1 * H].set(params["ego_w"].T.astype(f32))
    wb = wb.at[1 * Cin:2 * Cin, 1 * H:2 * H].set(params["cut_w"].T.astype(f32))
    wb = wb.at[2 * Cin:3 * Cin, 2 * H:3 * H].set(params["cos_w"].T.astype(f32))
    wb = wb.at[3 * Cin:4 * Cin, 3 * H:4 * H].set(params["glob_w"].T.astype(f32))
    bb = jnp.concatenate([params["ego_b"], params["cut_b"],
                          params["cos_b"], params["glob_b"]]
                         ).reshape(1, 4 * H).astype(f32)

    wf = jnp.zeros((4 * H, OP), f32).at[:, :O].set(
        params["fin_w"].T.astype(f32)).astype(bf16)
    bfin = jnp.zeros((1, OP), f32).at[0, :O].set(params["fin_b"].astype(f32))

    g1 = Np // T
    g2 = Np // T2
    cparams1 = pltpu.CompilerParams(
        dimension_semantics=("parallel", "arbitrary", "arbitrary"),
        vmem_limit_bytes=int(vmem_limit_bytes))
    cparams2 = pltpu.CompilerParams(
        dimension_semantics=("parallel", "arbitrary"),
        vmem_limit_bytes=int(vmem_limit_bytes))

    # ---- kernel 1: substructure features -> branch pre-activations [Np, 4H]
    feat_specs = [
        pl.BlockSpec((T, T), lambda i, j, k: (i, j)),        # A block
        pl.BlockSpec((T, T), lambda i, j, k: (i, j)),        # W block
        pl.BlockSpec((T, T), lambda i, j, k: (i, k)),        # (AT+I) reach, row
        pl.BlockSpec((T, T), lambda i, j, k: (k, j)),        # (AT+I) reach, col
        pl.BlockSpec((T, Cin), lambda i, j, k: (j, 0)),      # x[j]
        pl.BlockSpec((T, Cin), lambda i, j, k: (i, 0)),      # x[i]
        pl.BlockSpec((T, Cin), lambda i, j, k: (j, 0)),      # xn[j]
        pl.BlockSpec((T, Cin), lambda i, j, k: (i, 0)),      # xn[i]
        pl.BlockSpec((4 * Cin, 4 * H), lambda i, j, k: (0, 0)),
        pl.BlockSpec((1, 4 * H), lambda i, j, k: (0, 0)),
    ]
    cost1 = pl.CostEstimate(
        flops=int(2 * Np**3 + 12 * Np * Np * Cin),
        transcendentals=int(Np * Np),
        bytes_accessed=int(2 * (Np**3 // T) * rbytes + 4 * Np * Np
                           + 16 * Np * Cin + 2 * Np * 4 * H))
    hpre = pl.pallas_call(
        _feat_kernel,
        out_shape=jax.ShapeDtypeStruct((Np, 4 * H), bf16),
        grid_spec=pltpu.PrefetchScalarGridSpec(
            num_scalar_prefetch=0,
            grid=(g1, g1, g1),
            in_specs=feat_specs,
            out_specs=pl.BlockSpec((T, 4 * H), lambda i, j, k: (i, 0)),
            scratch_shapes=[
                pltpu.VMEM((T, T), acc_dtype),    # 2-hop reach block
                pltpu.VMEM((T, Cin), f32),        # ego sum
                pltpu.VMEM((T, 1), f32),          # ego count
                pltpu.VMEM((T, Cin), f32),        # cut weighted sum
                pltpu.VMEM((T, 1), f32),          # cut total weight
                pltpu.VMEM((T, 1), f32),          # out-degree
                pltpu.VMEM((T, 1), f32),          # cosine denom
                pltpu.VMEM((T, Cin), f32),        # cosine numerator
            ]),
        compiler_params=cparams1,
        cost_estimate=cost1,
    )(A_bf, W_bf, ATI_rd, ATI_rd, xp_bf, xp_bf, xn_bf, xn_bf, wb, bb)

    # ---- kernel 2: aggregation + final fc + log-softmax (lane-dense output)
    mp_specs = [
        pl.BlockSpec((T2, T2), lambda i, k: (i, k)),        # (AT+I) bf16 block
        pl.BlockSpec((T2, 4 * H), lambda i, k: (k, 0)),     # h_pre, K view
        pl.BlockSpec((T2, 4 * H), lambda i, k: (i, 0)),     # h_pre, row view
        pl.BlockSpec((4 * H, OP), lambda i, k: (0, 0)),     # final fc weight
        pl.BlockSpec((1, OP), lambda i, k: (0, 0)),         # final fc bias
    ]
    cost2 = pl.CostEstimate(
        flops=int(2 * Np * Np * 4 * H + 2 * Np * 4 * H * OP),
        transcendentals=int(Np * OP),
        bytes_accessed=int(2 * Np * Np + 2 * Np * 4 * H * (g2 + 1) + 4 * Np * OP))
    out_pad = pl.pallas_call(
        functools.partial(_mp_kernel, n_out=O),
        out_shape=jax.ShapeDtypeStruct((Np, OP), f32),
        grid_spec=pltpu.PrefetchScalarGridSpec(
            num_scalar_prefetch=0,
            grid=(g2, g2),
            in_specs=mp_specs,
            out_specs=pl.BlockSpec((T2, OP), lambda i, k: (i, 0)),
            scratch_shapes=[pltpu.VMEM((T2, 4 * H), f32)]),
        compiler_params=cparams2,
        cost_estimate=cost2,
    )(ATI_bf, hpre, hpre, wf, bfin)

    return out_pad[:N, :O]


# ---------------------------------------------------------------------------
# Dense f32 reference of the same forward (plain JAX, used for validation).
# ---------------------------------------------------------------------------
def _dense_reference(x, edge_index, edge_weight, params):
    N = x.shape[0]
    src, dst = edge_index[0], edge_index[1]
    if edge_weight is None:
        edge_weight = jnp.ones((edge_index.shape[1],), jnp.float32)
    A = jnp.zeros((N, N), jnp.float32).at[src, dst].add(1.0)
    Wm = jnp.zeros((N, N), jnp.float32).at[src, dst].add(edge_weight)
    AT = A.T
    eye = jnp.eye(N, dtype=jnp.float32)
    R = ((eye + AT + AT @ AT) > 0).astype(jnp.float32)
    ego = (R @ x) / jnp.sum(R, axis=1, keepdims=True)
    deg = jnp.sum(A, axis=1, keepdims=True)
    tw = jnp.sum(Wm, axis=1, keepdims=True)
    cut = jnp.where((deg > 0) & (tw > 0),
                    (Wm @ x) / jnp.where(tw > 0, tw, 1.0), x)
    nx = x / jnp.maximum(jnp.sqrt(jnp.sum(x * x, axis=1, keepdims=True)), 1e-12)
    E = A * jnp.exp(nx @ nx.T)
    den = jnp.sum(E, axis=1, keepdims=True)
    cos = jnp.where(deg > 0, (E @ x) / jnp.where(den > 0, den, 1.0), x)

    def mp(feat, w, b):
        return jnp.maximum(AT @ (feat @ w.T + b[None, :]), 0.0)

    comb = jnp.concatenate([
        mp(ego, params["ego_w"], params["ego_b"]),
        mp(cut, params["cut_w"], params["cut_b"]),
        mp(cos, params["cos_w"], params["cos_b"]),
        x @ params["glob_w"].T + params["glob_b"][None, :],
    ], axis=1)
    logits = comb @ params["fin_w"].T + params["fin_b"][None, :]
    return jax.nn.log_softmax(logits, axis=1)


if __name__ == "__main__":
    key = jax.random.PRNGKey(0)
    N, Cin, H, O = 200, 8, 32, 8     # 4H = 128 lanes, out padded to 128 lanes

    k_x, k_w, k_p = jax.random.split(key, 3)
    x = jax.random.normal(k_x, (N, Cin), jnp.float32)

    # Deterministic directed graph: bidirectional ring + chords + a few
    # duplicate edges and one self-loop (exercise multiplicities).
    src_list, dst_list = [], []
    for i in range(N):
        src_list += [i, (i + 1) % N]
        dst_list += [(i + 1) % N, i]
    for i in range(0, N, 4):
        src_list.append(i)
        dst_list.append((i + 7) % N)
    src_list += [0, 0, 5]
    dst_list += [1, 1, 5]
    edge_index = jnp.array([src_list, dst_list], dtype=jnp.int32)
    edge_weight = jnp.abs(
        jax.random.normal(k_w, (edge_index.shape[1],), jnp.float32)) + 0.5

    params = init_params(k_p, Cin, H, O)

    log_probs = jax.block_until_ready(
        sagn_cs_forward(x, edge_index, edge_weight, params))

    assert log_probs.shape == (N, O)
    assert bool(jnp.all(jnp.isfinite(log_probs)))
    assert bool(jnp.allclose(jnp.sum(jnp.exp(log_probs), axis=1), 1.0,
                             atol=1e-4))

    # loose check against a dense f32 reference (bf16 MXU noise)
    ref_lp = _dense_reference(x, edge_index, edge_weight, params)
    max_prob_err = float(jnp.max(jnp.abs(jnp.exp(log_probs) - jnp.exp(ref_lp))))
    assert max_prob_err < 0.1, f"max prob err {max_prob_err}"

    print("KERNEL_OK")
</pallas_src>

<mosaic_0001>
module attributes {stable_mosaic.version = 11 : i64} {
  func.func @_feat_kernel(%arg0: i32, %arg1: i32, %arg2: i32, %arg3: memref<256x256xbf16, #tpu.memory_space<vmem>>, %arg4: memref<256x256xbf16, #tpu.memory_space<vmem>>, %arg5: memref<256x256xbf16, #tpu.memory_space<vmem>>, %arg6: memref<256x256xbf16, #tpu.memory_space<vmem>>, %arg7: memref<256x8xbf16, #tpu.memory_space<vmem>>, %arg8: memref<256x8xbf16, #tpu.memory_space<vmem>>, %arg9: memref<256x8xbf16, #tpu.memory_space<vmem>>, %arg10: memref<256x8xbf16, #tpu.memory_space<vmem>>, %arg11: memref<32x128xf32, #tpu.memory_space<vmem>>, %arg12: memref<1x128xf32, #tpu.memory_space<vmem>>, %arg13: memref<256x128xbf16, #tpu.memory_space<vmem>>, %arg14: memref<256x256xf32, #tpu.memory_space<vmem>>, %arg15: memref<256x8xf32, #tpu.memory_space<vmem>>, %arg16: memref<256x1xf32, #tpu.memory_space<vmem>>, %arg17: memref<256x8xf32, #tpu.memory_space<vmem>>, %arg18: memref<256x1xf32, #tpu.memory_space<vmem>>, %arg19: memref<256x1xf32, #tpu.memory_space<vmem>>, %arg20: memref<256x1xf32, #tpu.memory_space<vmem>>, %arg21: memref<256x8xf32, #tpu.memory_space<vmem>>) attributes {dimension_semantics = [#tpu.dimension_semantics<parallel>, #tpu.dimension_semantics<arbitrary>, #tpu.dimension_semantics<arbitrary>], iteration_bounds = array<i64: 1, 1, 1>, scalar_prefetch = 0 : i64, scratch_operands = 8 : i64, tpu.core_type = #tpu.core_type<tc>, window_params = [{transform_indices = @transform_0, window_bounds = array<i64: 256, 256>}, {transform_indices = @transform_1, window_bounds = array<i64: 256, 256>}, {transform_indices = @transform_2, window_bounds = array<i64: 256, 256>}, {transform_indices = @transform_3, window_bounds = array<i64: 256, 256>}, {transform_indices = @transform_4, window_bounds = array<i64: 256, 8>}, {transform_indices = @transform_5, window_bounds = array<i64: 256, 8>}, {transform_indices = @transform_6, window_bounds = array<i64: 256, 8>}, {transform_indices = @transform_7, window_bounds = array<i64: 256, 8>}, {pipeline_mode = #tpu.pipeline_mode<synchronous>, transform_indices = @transform_8, window_bounds = array<i64: 32, 128>}, {pipeline_mode = #tpu.pipeline_mode<synchronous>, transform_indices = @transform_9, window_bounds = array<i64: 1, 128>}, {transform_indices = @transform_10, window_bounds = array<i64: 256, 128>}]} {
    %c0_i32 = arith.constant 0 : i32
    %0 = arith.cmpi eq, %arg1, %c0_i32 : i32
    %c0_i32_0 = arith.constant 0 : i32
    %1 = arith.cmpi eq, %arg2, %c0_i32_0 : i32
    %2 = arith.andi %0, %1 : i1
    %3 = arith.extui %2 : i1 to i32
    %c0_i32_1 = arith.constant 0 : i32
    %4 = arith.cmpi ne, %3, %c0_i32_1 : i32
    scf.if %4 {
      %cst_16 = arith.constant 0.000000e+00 : f32
      %22 = vector.broadcast %cst_16 : f32 to vector<256x8xf32>
      %c0_17 = arith.constant 0 : index
      %c0_18 = arith.constant 0 : index
      %23 = vector.load %arg15[%c0_17, %c0_18] : memref<256x8xf32, #tpu.memory_space<vmem>>, vector<256x8xf32>
      tpu.vector_store %arg15[%c0_17, %c0_18], %22 {strides = array<i32>} : memref<256x8xf32, #tpu.memory_space<vmem>>, vector<256x8xf32>,
      %cst_19 = arith.constant 0.000000e+00 : f32
      %24 = vector.broadcast %cst_19 : f32 to vector<256x1xf32>
      %c0_20 = arith.constant 0 : index
      %c0_21 = arith.constant 0 : index
      %25 = vector.load %arg16[%c0_20, %c0_21] : memref<256x1xf32, #tpu.memory_space<vmem>>, vector<256x1xf32>
      tpu.vector_store %arg16[%c0_20, %c0_21], %24 {strides = array<i32>} : memref<256x1xf32, #tpu.memory_space<vmem>>, vector<256x1xf32>,
      %cst_22 = arith.constant 0.000000e+00 : f32
      %26 = vector.broadcast %cst_22 : f32 to vector<256x8xf32>
      %c0_23 = arith.constant 0 : index
      %c0_24 = arith.constant 0 : index
      %27 = vector.load %arg17[%c0_23, %c0_24] : memref<256x8xf32, #tpu.memory_space<vmem>>, vector<256x8xf32>
      tpu.vector_store %arg17[%c0_23, %c0_24], %26 {strides = array<i32>} : memref<256x8xf32, #tpu.memory_space<vmem>>, vector<256x8xf32>,
      %cst_25 = arith.constant 0.000000e+00 : f32
      %28 = vector.broadcast %cst_25 : f32 to vector<256x1xf32>
      %c0_26 = arith.constant 0 : index
      %c0_27 = arith.constant 0 : index
      %29 = vector.load %arg18[%c0_26, %c0_27] : memref<256x1xf32, #tpu.memory_space<vmem>>, vector<256x1xf32>
      tpu.vector_store %arg18[%c0_26, %c0_27], %28 {strides = array<i32>} : memref<256x1xf32, #tpu.memory_space<vmem>>, vector<256x1xf32>,
      %cst_28 = arith.constant 0.000000e+00 : f32
      %30 = vector.broadcast %cst_28 : f32 to vector<256x1xf32>
      %c0_29 = arith.constant 0 : index
      %c0_30 = arith.constant 0 : index
      %31 = vector.load %arg19[%c0_29, %c0_30] : memref<256x1xf32, #tpu.memory_space<vmem>>, vector<256x1xf32>
      tpu.vector_store %arg19[%c0_29, %c0_30], %30 {strides = array<i32>} : memref<256x1xf32, #tpu.memory_space<vmem>>, vector<256x1xf32>,
      %cst_31 = arith.constant 0.000000e+00 : f32
      %32 = vector.broadcast %cst_31 : f32 to vector<256x1xf32>
      %c0_32 = arith.constant 0 : index
      %c0_33 = arith.constant 0 : index
      %33 = vector.load %arg20[%c0_32, %c0_33] : memref<256x1xf32, #tpu.memory_space<vmem>>, vector<256x1xf32>
      tpu.vector_store %arg20[%c0_32, %c0_33], %32 {strides = array<i32>} : memref<256x1xf32, #tpu.memory_space<vmem>>, vector<256x1xf32>,
      %cst_34 = arith.constant 0.000000e+00 : f32
      %34 = vector.broadcast %cst_34 : f32 to vector<256x8xf32>
      %c0_35 = arith.constant 0 : index
      %c0_36 = arith.constant 0 : index
      %35 = vector.load %arg21[%c0_35, %c0_36] : memref<256x8xf32, #tpu.memory_space<vmem>>, vector<256x8xf32>
      tpu.vector_store %arg21[%c0_35, %c0_36], %34 {strides = array<i32>} : memref<256x8xf32, #tpu.memory_space<vmem>>, vector<256x8xf32>,
    } else {
    }
    %c0_i32_2 = arith.constant 0 : i32
    %5 = arith.cmpi eq, %arg2, %c0_i32_2 : i32
    %6 = arith.extui %5 : i1 to i32
    %c0_i32_3 = arith.constant 0 : i32
    %7 = arith.cmpi ne, %6, %c0_i32_3 : i32
    scf.if %7 {
      %cst_16 = arith.constant 0.000000e+00 : f32
      %22 = vector.broadcast %cst_16 : f32 to vector<256x256xf32>
      %c0_17 = arith.constant 0 : index
      %c0_18 = arith.constant 0 : index
      %23 = vector.load %arg14[%c0_17, %c0_18] : memref<256x256xf32, #tpu.memory_space<vmem>>, vector<256x256xf32>
      tpu.vector_store %arg14[%c0_17, %c0_18], %22 {strides = array<i32>} : memref<256x256xf32, #tpu.memory_space<vmem>>, vector<256x256xf32>,
      %c0_19 = arith.constant 0 : index
      %c0_20 = arith.constant 0 : index
      %24 = vector.load %arg3[%c0_19, %c0_20] : memref<256x256xbf16, #tpu.memory_space<vmem>>, vector<256x256xbf16>
      %25 = arith.extf %24 : vector<256x256xbf16> to vector<256x256xf32>
      %c0_21 = arith.constant 0 : index
      %c0_22 = arith.constant 0 : index
      %26 = vector.load %arg4[%c0_21, %c0_22] : memref<256x256xbf16, #tpu.memory_space<vmem>>, vector<256x256xbf16>
      %c0_23 = arith.constant 0 : index
      %c0_24 = arith.constant 0 : index
      %27 = vector.load %arg7[%c0_23, %c0_24] : memref<256x8xbf16, #tpu.memory_space<vmem>>, vector<256x8xbf16>
      %c0_25 = arith.constant 0 : index
      %c0_26 = arith.constant 0 : index
      %28 = vector.load %arg17[%c0_25, %c0_26] : memref<256x8xf32, #tpu.memory_space<vmem>>, vector<256x8xf32>
      %cst_27 = arith.constant dense<0.000000e+00> : vector<256x8xf32>
      %29 = tpu.matmul %26, %27, %cst_27 {dimension_numbers = #tpu.dot_dimension_numbers<[1], [0], [0], [1], [0, 0, 1, 1], [], []>} : vector<256x256xbf16>, vector<256x8xbf16>, vector<256x8xf32> -> vector<256x8xf32>
      %30 = arith.addf %28, %29 : vector<256x8xf32>
      %c0_28 = arith.constant 0 : index
      %c0_29 = arith.constant 0 : index
      %31 = vector.load %arg17[%c0_28, %c0_29] : memref<256x8xf32, #tpu.memory_space<vmem>>, vector<256x8xf32>
      tpu.vector_store %arg17[%c0_28, %c0_29], %30 {strides = array<i32>} : memref<256x8xf32, #tpu.memory_space<vmem>>, vector<256x8xf32>,
      %c0_30 = arith.constant 0 : index
      %c0_31 = arith.constant 0 : index
      %32 = vector.load %arg18[%c0_30, %c0_31] : memref<256x1xf32, #tpu.memory_space<vmem>>, vector<256x1xf32>
      %33 = arith.extf %26 : vector<256x256xbf16> to vector<256x256xf32>
      %cst_32 = arith.constant dense<0.000000e+00> : vector<256xf32>
      %34 = vector.multi_reduction <add>, %33, %cst_32 [1] : vector<256x256xf32> to vector<256xf32>
      %35 = vector.shape_cast %34 : vector<256xf32> to vector<256x1xf32>
      %36 = arith.addf %32, %35 : vector<256x1xf32>
      %c0_33 = arith.constant 0 : index
      %c0_34 = arith.constant 0 : index
      %37 = vector.load %arg18[%c0_33, %c0_34] : memref<256x1xf32, #tpu.memory_space<vmem>>, vector<256x1xf32>
      tpu.vector_store %arg18[%c0_33, %c0_34], %36 {strides = array<i32>} : memref<256x1xf32, #tpu.memory_space<vmem>>, vector<256x1xf32>,
      %c0_35 = arith.constant 0 : index
      %c0_36 = arith.constant 0 : index
      %38 = vector.load %arg19[%c0_35, %c0_36] : memref<256x1xf32, #tpu.memory_space<vmem>>, vector<256x1xf32>
      %cst_37 = arith.constant dense<0.000000e+00> : vector<256xf32>
      %39 = vector.multi_reduction <add>, %25, %cst_37 [1] : vector<256x256xf32> to vector<256xf32>
      %40 = vector.shape_cast %39 : vector<256xf32> to vector<256x1xf32>
      %41 = arith.addf %38, %40 : vector<256x1xf32>
      %c0_38 = arith.constant 0 : index
      %c0_39 = arith.constant 0 : index
      %42 = vector.load %arg19[%c0_38, %c0_39] : memref<256x1xf32, #tpu.memory_space<vmem>>, vector<256x1xf32>
      tpu.vector_store %arg19[%c0_38, %c0_39], %41 {strides = array<i32>} : memref<256x1xf32, #tpu.memory_space<vmem>>, vector<256x1xf32>,
      %c0_40 = arith.constant 0 : index
      %c0_41 = arith.constant 0 : index
      %43 = vector.load %arg10[%c0_40, %c0_41] : memref<256x8xbf16, #tpu.memory_space<vmem>>, vector<256x8xbf16>
      %c0_42 = arith.constant 0 : index
      %c0_43 = arith.constant 0 : index
      %44 = vector.load %arg9[%c0_42, %c0_43] : memref<256x8xbf16, #tpu.memory_space<vmem>>, vector<256x8xbf16>
      %cst_44 = arith.constant dense<0.000000e+00> : vector<256x256xf32>
      %45 = tpu.matmul %43, %44, %cst_44 {dimension_numbers = #tpu.dot_dimension_numbers<[1], [1], [0], [0], [0, 0, 1, 0], [], []>} : vector<256x8xbf16>, vector<256x8xbf16>, vector<256x256xf32> -> vector<256x256xf32>
      %46 = math.exp %45 : vector<256x256xf32>
      %47 = arith.mulf %25, %46 : vector<256x256xf32>
      %c0_45 = arith.constant 0 : index
      %c0_46 = arith.constant 0 : index
      %48 = vector.load %arg20[%c0_45, %c0_46] : memref<256x1xf32, #tpu.memory_space<vmem>>, vector<256x1xf32>
      %cst_47 = arith.constant dense<0.000000e+00> : vector<256xf32>
      %49 = vector.multi_reduction <add>, %47, %cst_47 [1] : vector<256x256xf32> to vector<256xf32>
      %50 = vector.shape_cast %49 : vector<256xf32> to vector<256x1xf32>
      %51 = arith.addf %48, %50 : vector<256x1xf32>
      %c0_48 = arith.constant 0 : index
      %c0_49 = arith.constant 0 : index
      %52 = vector.load %arg20[%c0_48, %c0_49] : memref<256x1xf32, #tpu.memory_space<vmem>>, vector<256x1xf32>
      tpu.vector_store %arg20[%c0_48, %c0_49], %51 {strides = array<i32>} : memref<256x1xf32, #tpu.memory_space<vmem>>, vector<256x1xf32>,
      %c0_50 = arith.constant 0 : index
      %c0_51 = arith.constant 0 : index
      %53 = vector.load %arg21[%c0_50, %c0_51] : memref<256x8xf32, #tpu.memory_space<vmem>>, vector<256x8xf32>
      %54 = arith.truncf %47 : vector<256x256xf32> to vector<256x256xbf16>
      %cst_52 = arith.constant dense<0.000000e+00> : vector<256x8xf32>
      %55 = tpu.matmul %54, %27, %cst_52 {dimension_numbers = #tpu.dot_dimension_numbers<[1], [0], [0], [1], [0, 0, 1, 1], [], []>} : vector<256x256xbf16>, vector<256x8xbf16>, vector<256x8xf32> -> vector<256x8xf32>
      %56 = arith.addf %53, %55 : vector<256x8xf32>
      %c0_53 = arith.constant 0 : index
      %c0_54 = arith.constant 0 : index
      %57 = vector.load %arg21[%c0_53, %c0_54] : memref<256x8xf32, #tpu.memory_space<vmem>>, vector<256x8xf32>
      tpu.vector_store %arg21[%c0_53, %c0_54], %56 {strides = array<i32>} : memref<256x8xf32, #tpu.memory_space<vmem>>, vector<256x8xf32>,
    } else {
    }
    %c0 = arith.constant 0 : index
    %c0_4 = arith.constant 0 : index
    %8 = vector.load %arg14[%c0, %c0_4] : memref<256x256xf32, #tpu.memory_space<vmem>>, vector<256x256xf32>
    %c0_5 = arith.constant 0 : index
    %c0_6 = arith.constant 0 : index
    %9 = vector.load %arg5[%c0_5, %c0_6] : memref<256x256xbf16, #tpu.memory_space<vmem>>, vector<256x256xbf16>
    %c0_7 = arith.constant 0 : index
    %c0_8 = arith.constant 0 : index
    %10 = vector.load %arg6[%c0_7, %c0_8] : memref<256x256xbf16, #tpu.memory_space<vmem>>, vector<256x256xbf16>
    %cst = arith.constant dense<0.000000e+00> : vector<256x256xf32>
    %11 = tpu.matmul %9, %10, %cst {dimension_numbers = #tpu.dot_dimension_numbers<[1], [0], [0], [1], [0, 0, 1, 1], [], []>} : vector<256x256xbf16>, vector<256x256xbf16>, vector<256x256xf32> -> vector<256x256xf32>
    %12 = arith.addf %8, %11 : vector<256x256xf32>
    %c0_9 = arith.constant 0 : index
    %c0_10 = arith.constant 0 : index
    %13 = vector.load %arg14[%c0_9, %c0_10] : memref<256x256xf32, #tpu.memory_space<vmem>>, vector<256x256xf32>
    tpu.vector_store %arg14[%c0_9, %c0_10], %12 {strides = array<i32>} : memref<256x256xf32, #tpu.memory_space<vmem>>, vector<256x256xf32>,
    %c0_i32_11 = arith.constant 0 : i32
    %14 = arith.cmpi eq, %arg2, %c0_i32_11 : i32
    %15 = arith.extui %14 : i1 to i32
    %c0_i32_12 = arith.constant 0 : i32
    %16 = arith.cmpi ne, %15, %c0_i32_12 : i32
    scf.if %16 {
      %c0_16 = arith.constant 0 : index
      %c0_17 = arith.constant 0 : index
      %22 = vector.load %arg14[%c0_16, %c0_17] : memref<256x256xf32, #tpu.memory_space<vmem>>, vector<256x256xf32>
      %cst_18 = arith.constant 0.000000e+00 : f32
      %23 = vector.broadcast %cst_18 : f32 to vector<256x256xf32>
      %24 = arith.cmpf ogt, %22, %23 : vector<256x256xf32>
      %c0_19 = arith.constant 0 : index
      %c0_20 = arith.constant 0 : index
      %25 = vector.load %arg16[%c0_19, %c0_20] : memref<256x1xf32, #tpu.memory_space<vmem>>, vector<256x1xf32>
      %26 = arith.extui %24 : vector<256x256xi1> to vector<256x256xi32>
      %27 = arith.sitofp %26 : vector<256x256xi32> to vector<256x256xf32>
      %cst_21 = arith.constant dense<0.000000e+00> : vector<256xf32>
      %28 = vector.multi_reduction <add>, %27, %cst_21 [1] : vector<256x256xf32> to vector<256xf32>
      %29 = vector.shape_cast %28 : vector<256xf32> to vector<256x1xf32>
      %30 = arith.addf %25, %29 : vector<256x1xf32>
      %c0_22 = arith.constant 0 : index
      %c0_23 = arith.constant 0 : index
      %31 = vector.load %arg16[%c0_22, %c0_23] : memref<256x1xf32, #tpu.memory_space<vmem>>, vector<256x1xf32>
      tpu.vector_store %arg16[%c0_22, %c0_23], %30 {strides = array<i32>} : memref<256x1xf32, #tpu.memory_space<vmem>>, vector<256x1xf32>,
      %c0_24 = arith.constant 0 : index
      %c0_25 = arith.constant 0 : index
      %32 = vector.load %arg15[%c0_24, %c0_25] : memref<256x8xf32, #tpu.memory_space<vmem>>, vector<256x8xf32>
      %33 = arith.extui %24 : vector<256x256xi1> to vector<256x256xi32>
      %34 = arith.sitofp %33 : vector<256x256xi32> to vector<256x256xf32>
      %35 = arith.truncf %34 : vector<256x256xf32> to vector<256x256xbf16>
      %c0_26 = arith.constant 0 : index
      %c0_27 = arith.constant 0 : index
      %36 = vector.load %arg7[%c0_26, %c0_27] : memref<256x8xbf16, #tpu.memory_space<vmem>>, vector<256x8xbf16>
      %cst_28 = arith.constant dense<0.000000e+00> : vector<256x8xf32>
      %37 = tpu.matmul %35, %36, %cst_28 {dimension_numbers = #tpu.dot_dimension_numbers<[1], [0], [0], [1], [0, 0, 1, 1], [], []>} : vector<256x256xbf16>, vector<256x8xbf16>, vector<256x8xf32> -> vector<256x8xf32>
      %38 = arith.addf %32, %37 : vector<256x8xf32>
      %c0_29 = arith.constant 0 : index
      %c0_30 = arith.constant 0 : index
      %39 = vector.load %arg15[%c0_29, %c0_30] : memref<256x8xf32, #tpu.memory_space<vmem>>, vector<256x8xf32>
      tpu.vector_store %arg15[%c0_29, %c0_30], %38 {strides = array<i32>} : memref<256x8xf32, #tpu.memory_space<vmem>>, vector<256x8xf32>,
    } else {
    }
    %c0_i32_13 = arith.constant 0 : i32
    %17 = arith.cmpi eq, %arg1, %c0_i32_13 : i32
    %c0_i32_14 = arith.constant 0 : i32
    %18 = arith.cmpi eq, %arg2, %c0_i32_14 : i32
    %19 = arith.andi %17, %18 : i1
    %20 = arith.extui %19 : i1 to i32
    %c0_i32_15 = arith.constant 0 : i32
    %21 = arith.cmpi ne, %20, %c0_i32_15 : i32
    scf.if %21 {
      %c0_16 = arith.constant 0 : index
      %c0_17 = arith.constant 0 : index
      %22 = vector.load %arg8[%c0_16, %c0_17] : memref<256x8xbf16, #tpu.memory_space<vmem>>, vector<256x8xbf16>
      %23 = arith.extf %22 : vector<256x8xbf16> to vector<256x8xf32>
      %c0_18 = arith.constant 0 : index
      %c0_19 = arith.constant 0 : index
      %24 = vector.load %arg15[%c0_18, %c0_19] : memref<256x8xf32, #tpu.memory_space<vmem>>, vector<256x8xf32>
      %c0_20 = arith.constant 0 : index
      %c0_21 = arith.constant 0 : index
      %25 = vector.load %arg16[%c0_20, %c0_21] : memref<256x1xf32, #tpu.memory_space<vmem>>, vector<256x1xf32>
      %26 = vector.broadcast %25 : vector<256x1xf32> to vector<256x8xf32>
      %27 = arith.divf %24, %26 : vector<256x8xf32>
      %c0_22 = arith.constant 0 : index
      %c0_23 = arith.constant 0 : index
      %28 = vector.load %arg19[%c0_22, %c0_23] : memref<256x1xf32, #tpu.memory_space<vmem>>, vector<256x1xf32>
      %cst_24 = arith.constant 0.000000e+00 : f32
      %29 = vector.broadcast %cst_24 : f32 to vector<256x1xf32>
      %30 = arith.cmpf ogt, %28, %29 : vector<256x1xf32>
      %c0_25 = arith.constant 0 : index
      %c0_26 = arith.constant 0 : index
      %31 = vector.load %arg18[%c0_25, %c0_26] : memref<256x1xf32, #tpu.memory_space<vmem>>, vector<256x1xf32>
      %cst_27 = arith.constant 0.000000e+00 : f32
      %32 = vector.broadcast %cst_27 : f32 to vector<256x1xf32>
      %33 = arith.cmpf ogt, %31, %32 : vector<256x1xf32>
      %34 = arith.andi %30, %33 : vector<256x1xi1>
      %c0_28 = arith.constant 0 : index
      %c0_29 = arith.constant 0 : index
      %35 = vector.load %arg17[%c0_28, %c0_29] : memref<256x8xf32, #tpu.memory_space<vmem>>, vector<256x8xf32>
      %cst_30 = arith.constant 0.000000e+00 : f32
      %36 = vector.broadcast %cst_30 : f32 to vector<256x1xf32>
      %37 = arith.cmpf ogt, %31, %36 : vector<256x1xf32>
      %cst_31 = arith.constant 1.000000e+00 : f32
      %38 = vector.broadcast %cst_31 : f32 to vector<256x1xf32>
      %39 = arith.select %37, %31, %38 : vector<256x1xi1>, vector<256x1xf32>
      %40 = vector.broadcast %39 : vector<256x1xf32> to vector<256x8xf32>
      %41 = arith.divf %35, %40 : vector<256x8xf32>
      %42 = vector.shape_cast %34 : vector<256x1xi1> to vector<256x1xi1>
      %43 = vector.broadcast %42 : vector<256x1xi1> to vector<256x8xi1>
      %44 = arith.select %43, %41, %23 : vector<256x8xi1>, vector<256x8xf32>
      %c0_32 = arith.constant 0 : index
      %c0_33 = arith.constant 0 : index
      %45 = vector.load %arg20[%c0_32, %c0_33] : memref<256x1xf32, #tpu.memory_space<vmem>>, vector<256x1xf32>
      %c0_34 = arith.constant 0 : index
      %c0_35 = arith.constant 0 : index
      %46 = vector.load %arg21[%c0_34, %c0_35] : memref<256x8xf32, #tpu.memory_space<vmem>>, vector<256x8xf32>
      %cst_36 = arith.constant 0.000000e+00 : f32
      %47 = vector.broadcast %cst_36 : f32 to vector<256x1xf32>
      %48 = arith.cmpf ogt, %45, %47 : vector<256x1xf32>
      %cst_37 = arith.constant 1.000000e+00 : f32
      %49 = vector.broadcast %cst_37 : f32 to vector<256x1xf32>
      %50 = arith.select %48, %45, %49 : vector<256x1xi1>, vector<256x1xf32>
      %51 = vector.broadcast %50 : vector<256x1xf32> to vector<256x8xf32>
      %52 = arith.divf %46, %51 : vector<256x8xf32>
      %53 = vector.shape_cast %30 : vector<256x1xi1> to vector<256x1xi1>
      %54 = vector.broadcast %53 : vector<256x1xi1> to vector<256x8xi1>
      %55 = arith.select %54, %52, %23 : vector<256x8xi1>, vector<256x8xf32>
      %c0_38 = arith.constant 0 : index
      %c0_39 = arith.constant 0 : index
      %56 = vector.load %arg12[%c0_38, %c0_39] : memref<1x128xf32, #tpu.memory_space<vmem>>, vector<1x128xf32>
      %57 = arith.truncf %27 : vector<256x8xf32> to vector<256x8xbf16>
      %c0_40 = arith.constant 0 : index
      %c0_41 = arith.constant 0 : index
      %58 = vector.load %arg11[%c0_40, %c0_41] : memref<32x128xf32, #tpu.memory_space<vmem>>, vector<8x128xf32>
      %59 = arith.truncf %58 : vector<8x128xf32> to vector<8x128xbf16>
      %cst_42 = arith.constant dense<0.000000e+00> : vector<256x128xf32>
      %60 = tpu.matmul %57, %59, %cst_42 {dimension_numbers = #tpu.dot_dimension_numbers<[1], [0], [0], [1], [0, 0, 1, 1], [], []>} : vector<256x8xbf16>, vector<8x128xbf16>, vector<256x128xf32> -> vector<256x128xf32>
      %61 = vector.broadcast %56 : vector<1x128xf32> to vector<256x128xf32>
      %62 = arith.addf %61, %60 : vector<256x128xf32>
      %63 = arith.truncf %44 : vector<256x8xf32> to vector<256x8xbf16>
      %c8 = arith.constant 8 : index
      %c0_43 = arith.constant 0 : index
      %64 = vector.load %arg11[%c8, %c0_43] : memref<32x128xf32, #tpu.memory_space<vmem>>, vector<8x128xf32>
      %65 = arith.truncf %64 : vector<8x128xf32> to vector<8x128xbf16>
      %cst_44 = arith.constant dense<0.000000e+00> : vector<256x128xf32>
      %66 = tpu.matmul %63, %65, %cst_44 {dimension_numbers = #tpu.dot_dimension_numbers<[1], [0], [0], [1], [0, 0, 1, 1], [], []>} : vector<256x8xbf16>, vector<8x128xbf16>, vector<256x128xf32> -> vector<256x128xf32>
      %67 = arith.addf %62, %66 : vector<256x128xf32>
      %68 = arith.truncf %55 : vector<256x8xf32> to vector<256x8xbf16>
      %c16 = arith.constant 16 : index
      %c0_45 = arith.constant 0 : index
      %69 = vector.load %arg11[%c16, %c0_45] : memref<32x128xf32, #tpu.memory_space<vmem>>, vector<8x128xf32>
      %70 = arith.truncf %69 : vector<8x128xf32> to vector<8x128xbf16>
      %cst_46 = arith.constant dense<0.000000e+00> : vector<256x128xf32>
      %71 = tpu.matmul %68, %70, %cst_46 {dimension_numbers = #tpu.dot_dimension_numbers<[1], [0], [0], [1], [0, 0, 1, 1], [], []>} : vector<256x8xbf16>, vector<8x128xbf16>, vector<256x128xf32> -> vector<256x128xf32>
      %72 = arith.addf %67, %71 : vector<256x128xf32>
      %c0_47 = arith.constant 0 : index
      %c0_48 = arith.constant 0 : index
      %73 = vector.load %arg8[%c0_47, %c0_48] : memref<256x8xbf16, #tpu.memory_space<vmem>>, vector<256x8xbf16>
      %c24 = arith.constant 24 : index
      %c0_49 = arith.constant 0 : index
      %74 = vector.load %arg11[%c24, %c0_49] : memref<32x128xf32, #tpu.memory_space<vmem>>, vector<8x128xf32>
      %75 = arith.truncf %74 : vector<8x128xf32> to vector<8x128xbf16>
      %cst_50 = arith.constant dense<0.000000e+00> : vector<256x128xf32>
      %76 = tpu.matmul %73, %75, %cst_50 {dimension_numbers = #tpu.dot_dimension_numbers<[1], [0], [0], [1], [0, 0, 1, 1], [], []>} : vector<256x8xbf16>, vector<8x128xbf16>, vector<256x128xf32> -> vector<256x128xf32>
      %77 = arith.addf %72, %76 : vector<256x128xf32>
      %78 = arith.truncf %77 : vector<256x128xf32> to vector<256x128xbf16>
      %c0_51 = arith.constant 0 : index
      %c0_52 = arith.constant 0 : index
      %79 = vector.load %arg13[%c0_51, %c0_52] : memref<256x128xbf16, #tpu.memory_space<vmem>>, vector<256x128xbf16>
      tpu.vector_store %arg13[%c0_51, %c0_52], %78 {strides = array<i32>} : memref<256x128xbf16, #tpu.memory_space<vmem>>, vector<256x128xbf16>,
    } else {
    }
    return
  }
  func.func @transform_0(%arg0: i32, %arg1: i32, %arg2: i32) -> (i32, i32) {
    %c0_i32 = arith.constant 0 : i32
    return %arg0, %arg1 : i32, i32
  }
  func.func @transform_1(%arg0: i32, %arg1: i32, %arg2: i32) -> (i32, i32) {
    %c0_i32 = arith.constant 0 : i32
    return %arg0, %arg1 : i32, i32
  }
  func.func @transform_2(%arg0: i32, %arg1: i32, %arg2: i32) -> (i32, i32) {
    %c0_i32 = arith.constant 0 : i32
    return %arg0, %arg2 : i32, i32
  }
  func.func @transform_3(%arg0: i32, %arg1: i32, %arg2: i32) -> (i32, i32) {
    %c0_i32 = arith.constant 0 : i32
    return %arg2, %arg1 : i32, i32
  }
  func.func @transform_4(%arg0: i32, %arg1: i32, %arg2: i32) -> (i32, i32) {
    %c0_i32 = arith.constant 0 : i32
    %c0_i32_0 = arith.constant 0 : i32
    return %arg1, %c0_i32 : i32, i32
  }
  func.func @transform_5(%arg0: i32, %arg1: i32, %arg2: i32) -> (i32, i32) {
    %c0_i32 = arith.constant 0 : i32
    %c0_i32_0 = arith.constant 0 : i32
    return %arg0, %c0_i32 : i32, i32
  }
  func.func @transform_6(%arg0: i32, %arg1: i32, %arg2: i32) -> (i32, i32) {
    %c0_i32 = arith.constant 0 : i32
    %c0_i32_0 = arith.constant 0 : i32
    return %arg1, %c0_i32 : i32, i32
  }
  func.func @transform_7(%arg0: i32, %arg1: i32, %arg2: i32) -> (i32, i32) {
    %c0_i32 = arith.constant 0 : i32
    %c0_i32_0 = arith.constant 0 : i32
    return %arg0, %c0_i32 : i32, i32
  }
  func.func @transform_8(%arg0: i32, %arg1: i32, %arg2: i32) -> (i32, i32) {
    %c0_i32 = arith.constant 0 : i32
    %c0_i32_0 = arith.constant 0 : i32
    %c0_i32_1 = arith.constant 0 : i32
    return %c0_i32, %c0_i32_0 : i32, i32
  }
  func.func @transform_9(%arg0: i32, %arg1: i32, %arg2: i32) -> (i32, i32) {
    %c0_i32 = arith.constant 0 : i32
    %c0_i32_0 = arith.constant 0 : i32
    %c0_i32_1 = arith.constant 0 : i32
    return %c0_i32, %c0_i32_0 : i32, i32
  }
  func.func @transform_10(%arg0: i32, %arg1: i32, %arg2: i32) -> (i32, i32) {
    %c0_i32 = arith.constant 0 : i32
    %c0_i32_0 = arith.constant 0 : i32
    return %arg0, %c0_i32 : i32, i32
  }
}

</mosaic_0001>

<llo_original>
// kernel: tpu_custom_call.1
$region0: #{tpu_custom_call.1}
  #allocation0 [shape = 'u32[]', space=smem, size = 0x4, offset = 0x4, fixed_abs, tag = 'smem constant byte address 0x4 - core index']
  #allocation1 [shape = 'u32[144,128]{1,0:T(1,128)}', space=vmem, size = 0x12000, scoped, tag = 'internal scratch']
  #allocation2 [shape = 'f32[256,256]{1,0:T(8,128)}', space=vmem, size = 0x40000, scoped, tag = 'scratch operand']
  #allocation3 [shape = 'f32[256,8]{1,0:T(8,128)}', space=vmem, size = 0x20000, scoped, tag = 'scratch operand']
  #allocation4 [shape = 'f32[256,1]{1,0:T(8,128)}', space=vmem, size = 0x20000, scoped, tag = 'scratch operand']
  #allocation5 [shape = 'f32[256,8]{1,0:T(8,128)}', space=vmem, size = 0x20000, scoped, tag = 'scratch operand']
  #allocation6 [shape = 'f32[256,1]{1,0:T(8,128)}', space=vmem, size = 0x20000, scoped, tag = 'scratch operand']
  #allocation7 [shape = 'f32[256,1]{1,0:T(8,128)}', space=vmem, size = 0x20000, scoped, tag = 'scratch operand']
  #allocation8 [shape = 'f32[256,1]{1,0:T(8,128)}', space=vmem, size = 0x20000, scoped, tag = 'scratch operand']
  #allocation9 [shape = 'f32[256,8]{1,0:T(8,128)}', space=vmem, size = 0x20000, scoped, tag = 'scratch operand']
  %s0 = inlined_call_operand.hbm [shape: bf16[256,256], index: 0, kind: input, shape index: {}]
  %s1 = inlined_call_operand.hbm [shape: bf16[256,256], index: 1, kind: input, shape index: {}]
  %s2 = inlined_call_operand.hbm [shape: bf16[256,256], index: 2, kind: input, shape index: {}]
  %s3 = inlined_call_operand.hbm [shape: bf16[256,256], index: 3, kind: input, shape index: {}]
  %s4 = inlined_call_operand.hbm [shape: bf16[256,8], index: 4, kind: input, shape index: {}]
  %s5 = inlined_call_operand.hbm [shape: bf16[256,8], index: 5, kind: input, shape index: {}]
  %s6 = inlined_call_operand.hbm [shape: bf16[256,8], index: 6, kind: input, shape index: {}]
  %s7 = inlined_call_operand.hbm [shape: bf16[256,8], index: 7, kind: input, shape index: {}]
  %s8 = inlined_call_operand.hbm [shape: f32[32,128], index: 8, kind: input, shape index: {}]
  %s9 = inlined_call_operand.hbm [shape: f32[1,128], index: 9, kind: input, shape index: {}]
  %s10 = inlined_call_operand.hbm [shape: bf16[256,128], index: 10, kind: output, shape index: {}]
  %s11 = sld [smem:[#allocation0]]
  $region106: #{tpu_custom_call.1} parent=0
    _
  %s13 = ssub.s32 1, %s11
  %s14 = scalar_select 0, %s13, %s11
  $region1: #{tpu_custom_call.1} parent=0
    #allocation10 [shape = 'u8[131072]{0}', space=vmem, size = 0x20000, scoped, tag = 'input window, operand 0, single buffered']
    #allocation11 [shape = 's32[1]{0}', space=sflag, size = 0x4, scoped, tag = 'scoped memory for tpu_custom_call.1']
    #allocation12 [shape = 's32[1]{0}', space=sflag, size = 0x4, scoped, tag = 'scoped memory for tpu_custom_call.1']
    #allocation13 [shape = 'u8[131072]{0}', space=vmem, size = 0x20000, scoped, tag = 'input window, operand 1, single buffered']
    #allocation14 [shape = 's32[1]{0}', space=sflag, size = 0x4, scoped, tag = 'scoped memory for tpu_custom_call.1']
    #allocation15 [shape = 'u8[131072]{0}', space=vmem, size = 0x20000, scoped, tag = 'input window, operand 2, single buffered']
    #allocation16 [shape = 'u8[131072]{0}', space=vmem, size = 0x20000, scoped, tag = 'input window, operand 3, single buffered']
    #allocation17 [shape = 's32[1]{0}', space=sflag, size = 0x4, scoped, tag = 'scoped memory for tpu_custom_call.1']
    #allocation18 [shape = 'u8[65536]{0}', space=vmem, size = 0x10000, scoped, tag = 'input window, operand 4, single buffered']
    #allocation19 [shape = 'u8[65536]{0}', space=vmem, size = 0x10000, scoped, tag = 'input window, operand 5, single buffered']
    #allocation20 [shape = 's32[1]{0}', space=sflag, size = 0x4, scoped, tag = 'scoped memory for tpu_custom_call.1']
    #allocation21 [shape = 'u8[65536]{0}', space=vmem, size = 0x10000, scoped, tag = 'input window, operand 6, single buffered']
    #allocation22 [shape = 'u8[65536]{0}', space=vmem, size = 0x10000, scoped, tag = 'input window, operand 7, single buffered']
    #allocation23 [shape = 's32[1]{0}', space=sflag, size = 0x4, scoped, tag = 'scoped memory for tpu_custom_call.1']
    #allocation24 [shape = 'u8[16384]{0}', space=vmem, size = 0x4000, scoped, tag = 'input window, operand 8, single buffered']
    #allocation25 [shape = 'u8[512]{0}', space=vmem, size = 0x400, scoped, tag = 'input window, operand 9, single buffered']
    #allocation26 [shape = 's32[1]{0}', space=sflag, size = 0x4, scoped, tag = 'scoped memory for tpu_custom_call.1']
    #allocation27 [shape = 'u8[65536]{0}', space=vmem, size = 0x10000, scoped, tag = 'output window, operand 0, single buffered']
    %15 = vsyncpa [#allocation11], 0
    %16 = vsyncpa [#allocation14], 0
    %17 = vsyncpa [#allocation17], 0
    %18 = vsyncpa [#allocation20], 0
    %19 = vsyncpa [#allocation23], 0
    %20 = vsyncpa [#allocation26], 0
    %21 = vsyncpa [#allocation12], 0
    // Predicated region
    $region2: #{tpu_custom_call.1} parent=1 // pred_check
      _
    $region3: #{tpu_custom_call.1} parent=1 // pred_check_branch
      %23 = sbr.rel (0) target = $region5
    $region4: #{tpu_custom_call.1} parent=1 // pred_region
      %s25 = ssub.s32 4096, 4096
      %26 = vsyncadd [#allocation11], %s25
      %s27 = sshll.u32 [#allocation10], 4
      %s28 = int_to_ptr.vmem [resolvable:$true] %s27
      %33 = dma.hbm_to_vmem [thread:$0]  %s0, 4096, %s28, [#allocation11], 128, 128, 8
    $region5: #{tpu_custom_call.1} parent=1 // pred_fallthru
      _
    // Predicated region
    $region6: #{tpu_custom_call.1} parent=1 // pred_check
      _
    $region7: #{tpu_custom_call.1} parent=1 // pred_check_branch
      %35 = sbr.rel (0) target = $region9
    $region8: #{tpu_custom_call.1} parent=1 // pred_region
      %s37 = ssub.s32 4096, 4096
      %38 = vsyncadd [#allocation14], %s37
      %s39 = sshll.u32 [#allocation13], 4
      %s40 = int_to_ptr.vmem [resolvable:$true] %s39
      %45 = dma.hbm_to_vmem [thread:$0]  %s1, 4096, %s40, [#allocation14], 128, 128, 8
    $region9: #{tpu_custom_call.1} parent=1 // pred_fallthru
      _
    // Predicated region
    $region10: #{tpu_custom_call.1} parent=1 // pred_check
      _
    $region11: #{tpu_custom_call.1} parent=1 // pred_check_branch
      %47 = sbr.rel (0) target = $region13
    $region12: #{tpu_custom_call.1} parent=1 // pred_region
      %s49 = ssub.s32 4096, 4096
      %50 = vsyncadd [#allocation14], %s49
      %s51 = sshll.u32 [#allocation15], 4
      %s52 = int_to_ptr.vmem [resolvable:$true] %s51
      %57 = dma.hbm_to_vmem [thread:$0]  %s2, 4096, %s52, [#allocation14], 128, 128, 8
    $region13: #{tpu_custom_call.1} parent=1 // pred_fallthru
      _
    // Predicated region
    $region14: #{tpu_custom_call.1} parent=1 // pred_check
      _
    $region15: #{tpu_custom_call.1} parent=1 // pred_check_branch
      %59 = sbr.rel (0) target = $region17
    $region16: #{tpu_custom_call.1} parent=1 // pred_region
      %s61 = ssub.s32 4096, 4096
      %62 = vsyncadd [#allocation17], %s61
      %s63 = sshll.u32 [#allocation16], 4
      %s64 = int_to_ptr.vmem [resolvable:$true] %s63
      %69 = dma.hbm_to_vmem [thread:$0]  %s3, 4096, %s64, [#allocation17], 128, 128, 8
    $region17: #{tpu_custom_call.1} parent=1 // pred_fallthru
      _
    // Predicated region
    $region18: #{tpu_custom_call.1} parent=1 // pred_check
      _
    $region19: #{tpu_custom_call.1} parent=1 // pred_check_branch
      %71 = sbr.rel (0) target = $region21
    $region20: #{tpu_custom_call.1} parent=1 // pred_region
      %s73 = ssub.s32 2048, 2048
      %74 = vsyncadd [#allocation17], %s73
      %s75 = sshll.u32 [#allocation18], 4
      %s76 = int_to_ptr.vmem [resolvable:$true] %s75
      %81 = dma.hbm_to_vmem [thread:$0]  %s4, 2048, %s76, [#allocation17], 64, 64, 4
    $region21: #{tpu_custom_call.1} parent=1 // pred_fallthru
      _
    // Predicated region
    $region22: #{tpu_custom_call.1} parent=1 // pred_check
      _
    $region23: #{tpu_custom_call.1} parent=1 // pred_check_branch
      %83 = sbr.rel (0) target = $region25
    $region24: #{tpu_custom_call.1} parent=1 // pred_region
      %s85 = ssub.s32 2048, 2048
      %86 = vsyncadd [#allocation20], %s85
      %s87 = sshll.u32 [#allocation19], 4
      %s88 = int_to_ptr.vmem [resolvable:$true] %s87
      %93 = dma.hbm_to_vmem [thread:$0]  %s5, 2048, %s88, [#allocation20], 64, 64, 4
    $region25: #{tpu_custom_call.1} parent=1 // pred_fallthru
      _
    // Predicated region
    $region26: #{tpu_custom_call.1} parent=1 // pred_check
      _
    $region27: #{tpu_custom_call.1} parent=1 // pred_check_branch
      %95 = sbr.rel (0) target = $region29
    $region28: #{tpu_custom_call.1} parent=1 // pred_region
      %s97 = ssub.s32 2048, 2048
      %98 = vsyncadd [#allocation20], %s97
      %s99 = sshll.u32 [#allocation21], 4
      %s100 = int_to_ptr.vmem [resolvable:$true] %s99
      %105 = dma.hbm_to_vmem [thread:$0]  %s6, 2048, %s100, [#allocation20], 64, 64, 4
    $region29: #{tpu_custom_call.1} parent=1 // pred_fallthru
      _
    // Predicated region
    $region30: #{tpu_custom_call.1} parent=1 // pred_check
      _
    $region31: #{tpu_custom_call.1} parent=1 // pred_check_branch
      %107 = sbr.rel (0) target = $region33
    $region32: #{tpu_custom_call.1} parent=1 // pred_region
      %s109 = ssub.s32 2048, 2048
      %110 = vsyncadd [#allocation23], %s109
      %s111 = sshll.u32 [#allocation22], 4
      %s112 = int_to_ptr.vmem [resolvable:$true] %s111
      %117 = dma.hbm_to_vmem [thread:$0]  %s7, 2048, %s112, [#allocation23], 64, 64, 4
    $region33: #{tpu_custom_call.1} parent=1 // pred_fallthru
      _
    // Predicated region
    $region34: #{tpu_custom_call.1} parent=1 // pred_check
      _
    $region35: #{tpu_custom_call.1} parent=1 // pred_check_branch
      %119 = sbr.rel (0) target = $region37
    $region36: #{tpu_custom_call.1} parent=1 // pred_region
      %s121 = ssub.s32 512, 512
      %122 = vsyncadd [#allocation23], %s121
      %s123 = sshll.u32 [#allocation24], 4
      %s124 = int_to_ptr.vmem [resolvable:$true] %s123
      %129 = dma.hbm_to_vmem [thread:$0]  %s8, 512, %s124, [#allocation23], 128, 128, 8
    $region37: #{tpu_custom_call.1} parent=1 // pred_fallthru
      _
    // Predicated region
    $region38: #{tpu_custom_call.1} parent=1 // pred_check
      _
    $region39: #{tpu_custom_call.1} parent=1 // pred_check_branch
      %131 = sbr.rel (0) target = $region41
    $region40: #{tpu_custom_call.1} parent=1 // pred_region
      %s133 = ssub.s32 16, 16
      %134 = vsyncadd [#allocation26], %s133
      %s136 = sshll.u32 [#allocation25], 4
      %s137 = int_to_ptr.vmem [resolvable:$true] %s136
      %139 = dma.hbm_to_vmem [thread:$0]  %s9, 16, %s137, [#allocation26]
    $region41: #{tpu_custom_call.1} parent=1 // pred_fallthru
      _
    // Predicated region
    $region42: #{tpu_custom_call.1} parent=1 // pred_check
      _
    $region43: #{tpu_custom_call.1} parent=1 // pred_check_branch
      %141 = sbr.rel (0) target = $region45
    $region44: #{tpu_custom_call.1} parent=1 // pred_region
      %142 = dma.done [#allocation11], 4096
    $region45: #{tpu_custom_call.1} parent=1 // pred_fallthru
      _
    // Predicated region
    $region46: #{tpu_custom_call.1} parent=1 // pred_check
      _
    $region47: #{tpu_custom_call.1} parent=1 // pred_check_branch
      %144 = sbr.rel (0) target = $region49
    $region48: #{tpu_custom_call.1} parent=1 // pred_region
      %145 = dma.done [#allocation14], 4096
    $region49: #{tpu_custom_call.1} parent=1 // pred_fallthru
      _
    // Predicated region
    $region50: #{tpu_custom_call.1} parent=1 // pred_check
      _
    $region51: #{tpu_custom_call.1} parent=1 // pred_check_branch
      %147 = sbr.rel (0) target = $region53
    $region52: #{tpu_custom_call.1} parent=1 // pred_region
      %148 = dma.done [#allocation14], 4096
    $region53: #{tpu_custom_call.1} parent=1 // pred_fallthru
      _
    // Predicated region
    $region54: #{tpu_custom_call.1} parent=1 // pred_check
      _
    $region55: #{tpu_custom_call.1} parent=1 // pred_check_branch
      %150 = sbr.rel (0) target = $region57
    $region56: #{tpu_custom_call.1} parent=1 // pred_region
      %151 = dma.done [#allocation17], 4096
    $region57: #{tpu_custom_call.1} parent=1 // pred_fallthru
      _
    // Predicated region
    $region58: #{tpu_custom_call.1} parent=1 // pred_check
      _
    $region59: #{tpu_custom_call.1} parent=1 // pred_check_branch
      %153 = sbr.rel (0) target = $region61
    $region60: #{tpu_custom_call.1} parent=1 // pred_region
      %154 = dma.done [#allocation17], 2048
    $region61: #{tpu_custom_call.1} parent=1 // pred_fallthru
      _
    // Predicated region
    $region62: #{tpu_custom_call.1} parent=1 // pred_check
      _
    $region63: #{tpu_custom_call.1} parent=1 // pred_check_branch
      %156 = sbr.rel (0) target = $region65
    $region64: #{tpu_custom_call.1} parent=1 // pred_region
      %157 = dma.done [#allocation20], 2048
    $region65: #{tpu_custom_call.1} parent=1 // pred_fallthru
      _
    // Predicated region
    $region66: #{tpu_custom_call.1} parent=1 // pred_check
      _
    $region67: #{tpu_custom_call.1} parent=1 // pred_check_branch
      %159 = sbr.rel (0) target = $region69
    $region68: #{tpu_custom_call.1} parent=1 // pred_region
      %160 = dma.done [#allocation20], 2048
    $region69: #{tpu_custom_call.1} parent=1 // pred_fallthru
      _
    // Predicated region
    $region70: #{tpu_custom_call.1} parent=1 // pred_check
      _
    $region71: #{tpu_custom_call.1} parent=1 // pred_check_branch
      %162 = sbr.rel (0) target = $region73
    $region72: #{tpu_custom_call.1} parent=1 // pred_region
      %163 = dma.done [#allocation23], 2048
    $region73: #{tpu_custom_call.1} parent=1 // pred_fallthru
      _
    // Predicated region
    $region74: #{tpu_custom_call.1} parent=1 // pred_check
      _
    $region75: #{tpu_custom_call.1} parent=1 // pred_check_branch
      %165 = sbr.rel (0) target = $region77
    $region76: #{tpu_custom_call.1} parent=1 // pred_region
      %166 = dma.done [#allocation23], 512
    $region77: #{tpu_custom_call.1} parent=1 // pred_fallthru
      _
    // Predicated region
    $region78: #{tpu_custom_call.1} parent=1 // pred_check
      _
    $region79: #{tpu_custom_call.1} parent=1 // pred_check_branch
      %168 = sbr.rel (0) target = $region81
    $region80: #{tpu_custom_call.1} parent=1 // pred_region
      %169 = dma.done [#allocation26], 16
    $region81: #{tpu_custom_call.1} parent=1 // pred_fallthru
      _
    %p171 = scmp.eq.s32.totalorder 0, 0
    %p172 = scmp.eq.s32.totalorder 0, 0
    %p173 = pnand %p171, %p172
    %p174 = pneg %p173
    // Predicated region
    $region82: #{tpu_custom_call.1} parent=1 // pred_check
      _
    $region83: #{tpu_custom_call.1} parent=1 // pred_check_branch
      %176 = sbr.rel (%p173) target = $region85
    $region84: #{tpu_custom_call.1} parent=1 // pred_region
      %vm177 = vcmask 64512
      %178 = vst.msk [vmem:[#allocation3] sm:$0xff] %vm177, 0.0
      %179 = vst.msk [vmem:[#allocation3 + $0x8] sm:$0xff] %vm177, 0.0
      %180 = vst.msk [vmem:[#allocation3 + $0x10] sm:$0xff] %vm177, 0.0
      %181 = vst.msk [vmem:[#allocation3 + $0x18] sm:$0xff] %vm177, 0.0
      %182 = vst.msk [vmem:[#allocation3 + $0x20] sm:$0xff] %vm177, 0.0
      %183 = vst.msk [vmem:[#allocation3 + $0x28] sm:$0xff] %vm177, 0.0
      %184 = vst.msk [vmem:[#allocation3 + $0x30] sm:$0xff] %vm177, 0.0
      %185 = vst.msk [vmem:[#allocation3 + $0x38] sm:$0xff] %vm177, 0.0
      %186 = vst.msk [vmem:[#allocation3 + $0x40] sm:$0xff] %vm177, 0.0
      %187 = vst.msk [vmem:[#allocation3 + $0x48] sm:$0xff] %vm177, 0.0
      %188 = vst.msk [vmem:[#allocation3 + $0x50] sm:$0xff] %vm177, 0.0
      %189 = vst.msk [vmem:[#allocation3 + $0x58] sm:$0xff] %vm177, 0.0
      %190 = vst.msk [vmem:[#allocation3 + $0x60] sm:$0xff] %vm177, 0.0
      %191 = vst.msk [vmem:[#allocation3 + $0x68] sm:$0xff] %vm177, 0.0
      %192 = vst.msk [vmem:[#allocation3 + $0x70] sm:$0xff] %vm177, 0.0
      %193 = vst.msk [vmem:[#allocation3 + $0x78] sm:$0xff] %vm177, 0.0
      %194 = vst.msk [vmem:[#allocation3 + $0x80] sm:$0xff] %vm177, 0.0
      %195 = vst.msk [vmem:[#allocation3 + $0x88] sm:$0xff] %vm177, 0.0
      %196 = vst.msk [vmem:[#allocation3 + $0x90] sm:$0xff] %vm177, 0.0
      %197 = vst.msk [vmem:[#allocation3 + $0x98] sm:$0xff] %vm177, 0.0
      %198 = vst.msk [vmem:[#allocation3 + $0xa0] sm:$0xff] %vm177, 0.0
      %199 = vst.msk [vmem:[#allocation3 + $0xa8] sm:$0xff] %vm177, 0.0
      %200 = vst.msk [vmem:[#allocation3 + $0xb0] sm:$0xff] %vm177, 0.0
      %201 = vst.msk [vmem:[#allocation3 + $0xb8] sm:$0xff] %vm177, 0.0
      %202 = vst.msk [vmem:[#allocation3 + $0xc0] sm:$0xff] %vm177, 0.0
      %203 = vst.msk [vmem:[#allocation3 + $0xc8] sm:$0xff] %vm177, 0.0
      %204 = vst.msk [vmem:[#allocation3 + $0xd0] sm:$0xff] %vm177, 0.0
      %205 = vst.msk [vmem:[#allocation3 + $0xd8] sm:$0xff] %vm177, 0.0
      %206 = vst.msk [vmem:[#allocation3 + $0xe0] sm:$0xff] %vm177, 0.0
      %207 = vst.msk [vmem:[#allocation3 + $0xe8] sm:$0xff] %vm177, 0.0
      %208 = vst.msk [vmem:[#allocation3 + $0xf0] sm:$0xff] %vm177, 0.0
      %209 = vst.msk [vmem:[#allocation3 + $0xf8] sm:$0xff] %vm177, 0.0
      %vm210 = vcmask 7168
      %211 = vst.msk [vmem:[#allocation4] sm:$0xff] %vm210, 0.0
      %212 = vst.msk [vmem:[#allocation4 + $0x8] sm:$0xff] %vm210, 0.0
      %213 = vst.msk [vmem:[#allocation4 + $0x10] sm:$0xff] %vm210, 0.0
      %214 = vst.msk [vmem:[#allocation4 + $0x18] sm:$0xff] %vm210, 0.0
      %215 = vst.msk [vmem:[#allocation4 + $0x20] sm:$0xff] %vm210, 0.0
      %216 = vst.msk [vmem:[#allocation4 + $0x28] sm:$0xff] %vm210, 0.0
      %217 = vst.msk [vmem:[#allocation4 + $0x30] sm:$0xff] %vm210, 0.0
      %218 = vst.msk [vmem:[#allocation4 + $0x38] sm:$0xff] %vm210, 0.0
      %219 = vst.msk [vmem:[#allocation4 + $0x40] sm:$0xff] %vm210, 0.0
      %220 = vst.msk [vmem:[#allocation4 + $0x48] sm:$0xff] %vm210, 0.0
      %221 = vst.msk [vmem:[#allocation4 + $0x50] sm:$0xff] %vm210, 0.0
      %222 = vst.msk [vmem:[#allocation4 + $0x58] sm:$0xff] %vm210, 0.0
      %223 = vst.msk [vmem:[#allocation4 + $0x60] sm:$0xff] %vm210, 0.0
      %224 = vst.msk [vmem:[#allocation4 + $0x68] sm:$0xff] %vm210, 0.0
      %225 = vst.msk [vmem:[#allocation4 + $0x70] sm:$0xff] %vm210, 0.0
      %226 = vst.msk [vmem:[#allocation4 + $0x78] sm:$0xff] %vm210, 0.0
      %227 = vst.msk [vmem:[#allocation4 + $0x80] sm:$0xff] %vm210, 0.0
      %228 = vst.msk [vmem:[#allocation4 + $0x88] sm:$0xff] %vm210, 0.0
      %229 = vst.msk [vmem:[#allocation4 + $0x90] sm:$0xff] %vm210, 0.0
      %230 = vst.msk [vmem:[#allocation4 + $0x98] sm:$0xff] %vm210, 0.0
      %231 = vst.msk [vmem:[#allocation4 + $0xa0] sm:$0xff] %vm210, 0.0
      %232 = vst.msk [vmem:[#allocation4 + $0xa8] sm:$0xff] %vm210, 0.0
      %233 = vst.msk [vmem:[#allocation4 + $0xb0] sm:$0xff] %vm210, 0.0
      %234 = vst.msk [vmem:[#allocation4 + $0xb8] sm:$0xff] %vm210, 0.0
      %235 = vst.msk [vmem:[#allocation4 + $0xc0] sm:$0xff] %vm210, 0.0
      %236 = vst.msk [vmem:[#allocation4 + $0xc8] sm:$0xff] %vm210, 0.0
      %237 = vst.msk [vmem:[#allocation4 + $0xd0] sm:$0xff] %vm210, 0.0
      %238 = vst.msk [vmem:[#allocation4 + $0xd8] sm:$0xff] %vm210, 0.0
      %239 = vst.msk [vmem:[#allocation4 + $0xe0] sm:$0xff] %vm210, 0.0
      %240 = vst.msk [vmem:[#allocation4 + $0xe8] sm:$0xff] %vm210, 0.0
      %241 = vst.msk [vmem:[#allocation4 + $0xf0] sm:$0xff] %vm210, 0.0
      %242 = vst.msk [vmem:[#allocation4 + $0xf8] sm:$0xff] %vm210, 0.0
      %243 = vst.msk [vmem:[#allocation5] sm:$0xff] %vm177, 0.0
      %244 = vst.msk [vmem:[#allocation5 + $0x8] sm:$0xff] %vm177, 0.0
      %245 = vst.msk [vmem:[#allocation5 + $0x10] sm:$0xff] %vm177, 0.0
      %246 = vst.msk [vmem:[#allocation5 + $0x18] sm:$0xff] %vm177, 0.0
      %247 = vst.msk [vmem:[#allocation5 + $0x20] sm:$0xff] %vm177, 0.0
      %248 = vst.msk [vmem:[#allocation5 + $0x28] sm:$0xff] %vm177, 0.0
      %249 = vst.msk [vmem:[#allocation5 + $0x30] sm:$0xff] %vm177, 0.0
      %250 = vst.msk [vmem:[#allocation5 + $0x38] sm:$0xff] %vm177, 0.0
      %251 = vst.msk [vmem:[#allocation5 + $0x40] sm:$0xff] %vm177, 0.0
      %252 = vst.msk [vmem:[#allocation5 + $0x48] sm:$0xff] %vm177, 0.0
      %253 = vst.msk [vmem:[#allocation5 + $0x50] sm:$0xff] %vm177, 0.0
      %254 = vst.msk [vmem:[#allocation5 + $0x58] sm:$0xff] %vm177, 0.0
      %255 = vst.msk [vmem:[#allocation5 + $0x60] sm:$0xff] %vm177, 0.0
      %256 = vst.msk [vmem:[#allocation5 + $0x68] sm:$0xff] %vm177, 0.0
      %257 = vst.msk [vmem:[#allocation5 + $0x70] sm:$0xff] %vm177, 0.0
      %258 = vst.msk [vmem:[#allocation5 + $0x78] sm:$0xff] %vm177, 0.0
      %259 = vst.msk [vmem:[#allocation5 + $0x80] sm:$0xff] %vm177, 0.0
      %260 = vst.msk [vmem:[#allocation5 + $0x88] sm:$0xff] %vm177, 0.0
      %261 = vst.msk [vmem:[#allocation5 + $0x90] sm:$0xff] %vm177, 0.0
      %262 = vst.msk [vmem:[#allocation5 + $0x98] sm:$0xff] %vm177, 0.0
      %263 = vst.msk [vmem:[#allocation5 + $0xa0] sm:$0xff] %vm177, 0.0
      %264 = vst.msk [vmem:[#allocation5 + $0xa8] sm:$0xff] %vm177, 0.0
      %265 = vst.msk [vmem:[#allocation5 + $0xb0] sm:$0xff] %vm177, 0.0
      %266 = vst.msk [vmem:[#allocation5 + $0xb8] sm:$0xff] %vm177, 0.0
      %267 = vst.msk [vmem:[#allocation5 + $0xc0] sm:$0xff] %vm177, 0.0
      %268 = vst.msk [vmem:[#allocation5 + $0xc8] sm:$0xff] %vm177, 0.0
      %269 = vst.msk [vmem:[#allocation5 + $0xd0] sm:$0xff] %vm177, 0.0
      %270 = vst.msk [vmem:[#allocation5 + $0xd8] sm:$0xff] %vm177, 0.0
      %271 = vst.msk [vmem:[#allocation5 + $0xe0] sm:$0xff] %vm177, 0.0
      %272 = vst.msk [vmem:[#allocation5 + $0xe8] sm:$0xff] %vm177, 0.0
      %273 = vst.msk [vmem:[#allocation5 + $0xf0] sm:$0xff] %vm177, 0.0
      %274 = vst.msk [vmem:[#allocation5 + $0xf8] sm:$0xff] %vm177, 0.0
      %275 = vst.msk [vmem:[#allocation6] sm:$0xff] %vm210, 0.0
      %276 = vst.msk [vmem:[#allocation6 + $0x8] sm:$0xff] %vm210, 0.0
      %277 = vst.msk [vmem:[#allocation6 + $0x10] sm:$0xff] %vm210, 0.0
      %278 = vst.msk [vmem:[#allocation6 + $0x18] sm:$0xff] %vm210, 0.0
      %279 = vst.msk [vmem:[#allocation6 + $0x20] sm:$0xff] %vm210, 0.0
      %280 = vst.msk [vmem:[#allocation6 + $0x28] sm:$0xff] %vm210, 0.0
      %281 = vst.msk [vmem:[#allocation6 + $0x30] sm:$0xff] %vm210, 0.0
      %282 = vst.msk [vmem:[#allocation6 + $0x38] sm:$0xff] %vm210, 0.0
      %283 = vst.msk [vmem:[#allocation6 + $0x40] sm:$0xff] %vm210, 0.0
      %284 = vst.msk [vmem:[#allocation6 + $0x48] sm:$0xff] %vm210, 0.0
      %285 = vst.msk [vmem:[#allocation6 + $0x50] sm:$0xff] %vm210, 0.0
      %286 = vst.msk [vmem:[#allocation6 + $0x58] sm:$0xff] %vm210, 0.0
      %287 = vst.msk [vmem:[#allocation6 + $0x60] sm:$0xff] %vm210, 0.0
      %288 = vst.msk [vmem:[#allocation6 + $0x68] sm:$0xff] %vm210, 0.0
      %289 = vst.msk [vmem:[#allocation6 + $0x70] sm:$0xff] %vm210, 0.0
      %290 = vst.msk [vmem:[#allocation6 + $0x78] sm:$0xff] %vm210, 0.0
      %291 = vst.msk [vmem:[#allocation6 + $0x80] sm:$0xff] %vm210, 0.0
      %292 = vst.msk [vmem:[#allocation6 + $0x88] sm:$0xff] %vm210, 0.0
      %293 = vst.msk [vmem:[#allocation6 + $0x90] sm:$0xff] %vm210, 0.0
      %294 = vst.msk [vmem:[#allocation6 + $0x98] sm:$0xff] %vm210, 0.0
      %295 = vst.msk [vmem:[#allocation6 + $0xa0] sm:$0xff] %vm210, 0.0
      %296 = vst.msk [vmem:[#allocation6 + $0xa8] sm:$0xff] %vm210, 0.0
      %297 = vst.msk [vmem:[#allocation6 + $0xb0] sm:$0xff] %vm210, 0.0
      %298 = vst.msk [vmem:[#allocation6 + $0xb8] sm:$0xff] %vm210, 0.0
      %299 = vst.msk [vmem:[#allocation6 + $0xc0] sm:$0xff] %vm210, 0.0
      %300 = vst.msk [vmem:[#allocation6 + $0xc8] sm:$0xff] %vm210, 0.0
      %301 = vst.msk [vmem:[#allocation6 + $0xd0] sm:$0xff] %vm210, 0.0
      %302 = vst.msk [vmem:[#allocation6 + $0xd8] sm:$0xff] %vm210, 0.0
      %303 = vst.msk [vmem:[#allocation6 + $0xe0] sm:$0xff] %vm210, 0.0
      %304 = vst.msk [vmem:[#allocation6 + $0xe8] sm:$0xff] %vm210, 0.0
      %305 = vst.msk [vmem:[#allocation6 + $0xf0] sm:$0xff] %vm210, 0.0
      %306 = vst.msk [vmem:[#allocation6 + $0xf8] sm:$0xff] %vm210, 0.0
      %307 = vst.msk [vmem:[#allocation7] sm:$0xff] %vm210, 0.0
      %308 = vst.msk [vmem:[#allocation7 + $0x8] sm:$0xff] %vm210, 0.0
      %309 = vst.msk [vmem:[#allocation7 + $0x10] sm:$0xff] %vm210, 0.0
      %310 = vst.msk [vmem:[#allocation7 + $0x18] sm:$0xff] %vm210, 0.0
      %311 = vst.msk [vmem:[#allocation7 + $0x20] sm:$0xff] %vm210, 0.0
      %312 = vst.msk [vmem:[#allocation7 + $0x28] sm:$0xff] %vm210, 0.0
      %313 = vst.msk [vmem:[#allocation7 + $0x30] sm:$0xff] %vm210, 0.0
      %314 = vst.msk [vmem:[#allocation7 + $0x38] sm:$0xff] %vm210, 0.0
      %315 = vst.msk [vmem:[#allocation7 + $0x40] sm:$0xff] %vm210, 0.0
      %316 = vst.msk [vmem:[#allocation7 + $0x48] sm:$0xff] %vm210, 0.0
      %317 = vst.msk [vmem:[#allocation7 + $0x50] sm:$0xff] %vm210, 0.0
      %318 = vst.msk [vmem:[#allocation7 + $0x58] sm:$0xff] %vm210, 0.0
      %319 = vst.msk [vmem:[#allocation7 + $0x60] sm:$0xff] %vm210, 0.0
      %320 = vst.msk [vmem:[#allocation7 + $0x68] sm:$0xff] %vm210, 0.0
      %321 = vst.msk [vmem:[#allocation7 + $0x70] sm:$0xff] %vm210, 0.0
      %322 = vst.msk [vmem:[#allocation7 + $0x78] sm:$0xff] %vm210, 0.0
      %323 = vst.msk [vmem:[#allocation7 + $0x80] sm:$0xff] %vm210, 0.0
      %324 = vst.msk [vmem:[#allocation7 + $0x88] sm:$0xff] %vm210, 0.0
      %325 = vst.msk [vmem:[#allocation7 + $0x90] sm:$0xff] %vm210, 0.0
      %326 = vst.msk [vmem:[#allocation7 + $0x98] sm:$0xff] %vm210, 0.0
      %327 = vst.msk [vmem:[#allocation7 + $0xa0] sm:$0xff] %vm210, 0.0
      %328 = vst.msk [vmem:[#allocation7 + $0xa8] sm:$0xff] %vm210, 0.0
      %329 = vst.msk [vmem:[#allocation7 + $0xb0] sm:$0xff] %vm210, 0.0
      %330 = vst.msk [vmem:[#allocation7 + $0xb8] sm:$0xff] %vm210, 0.0
      %331 = vst.msk [vmem:[#allocation7 + $0xc0] sm:$0xff] %vm210, 0.0
      %332 = vst.msk [vmem:[#allocation7 + $0xc8] sm:$0xff] %vm210, 0.0
      %333 = vst.msk [vmem:[#allocation7 + $0xd0] sm:$0xff] %vm210, 0.0
      %334 = vst.msk [vmem:[#allocation7 + $0xd8] sm:$0xff] %vm210, 0.0
      %335 = vst.msk [vmem:[#allocation7 + $0xe0] sm:$0xff] %vm210, 0.0
      %336 = vst.msk [vmem:[#allocation7 + $0xe8] sm:$0xff] %vm210, 0.0
      %337 = vst.msk [vmem:[#allocation7 + $0xf0] sm:$0xff] %vm210, 0.0
      %338 = vst.msk [vmem:[#allocation7 + $0xf8] sm:$0xff] %vm210, 0.0
      %339 = vst.msk [vmem:[#allocation8] sm:$0xff] %vm210, 0.0
      %340 = vst.msk [vmem:[#allocation8 + $0x8] sm:$0xff] %vm210, 0.0
      %341 = vst.msk [vmem:[#allocation8 + $0x10] sm:$0xff] %vm210, 0.0
      %342 = vst.msk [vmem:[#allocation8 + $0x18] sm:$0xff] %vm210, 0.0
      %343 = vst.msk [vmem:[#allocation8 + $0x20] sm:$0xff] %vm210, 0.0
      %344 = vst.msk [vmem:[#allocation8 + $0x28] sm:$0xff] %vm210, 0.0
      %345 = vst.msk [vmem:[#allocation8 + $0x30] sm:$0xff] %vm210, 0.0
      %346 = vst.msk [vmem:[#allocation8 + $0x38] sm:$0xff] %vm210, 0.0
      %347 = vst.msk [vmem:[#allocation8 + $0x40] sm:$0xff] %vm210, 0.0
      %348 = vst.msk [vmem:[#allocation8 + $0x48] sm:$0xff] %vm210, 0.0
      %349 = vst.msk [vmem:[#allocation8 + $0x50] sm:$0xff] %vm210, 0.0
      %350 = vst.msk [vmem:[#allocation8 + $0x58] sm:$0xff] %vm210, 0.0
      %351 = vst.msk [vmem:[#allocation8 + $0x60] sm:$0xff] %vm210, 0.0
      %352 = vst.msk [vmem:[#allocation8 + $0x68] sm:$0xff] %vm210, 0.0
      %353 = vst.msk [vmem:[#allocation8 + $0x70] sm:$0xff] %vm210, 0.0
      %354 = vst.msk [vmem:[#allocation8 + $0x78] sm:$0xff] %vm210, 0.0
      %355 = vst.msk [vmem:[#allocation8 + $0x80] sm:$0xff] %vm210, 0.0
      %356 = vst.msk [vmem:[#allocation8 + $0x88] sm:$0xff] %vm210, 0.0
      %357 = vst.msk [vmem:[#allocation8 + $0x90] sm:$0xff] %vm210, 0.0
      %358 = vst.msk [vmem:[#allocation8 + $0x98] sm:$0xff] %vm210, 0.0
      %359 = vst.msk [vmem:[#allocation8 + $0xa0] sm:$0xff] %vm210, 0.0
      %360 = vst.msk [vmem:[#allocation8 + $0xa8] sm:$0xff] %vm210, 0.0
      %361 = vst.msk [vmem:[#allocation8 + $0xb0] sm:$0xff] %vm210, 0.0
      %362 = vst.msk [vmem:[#allocation8 + $0xb8] sm:$0xff] %vm210, 0.0
      %363 = vst.msk [vmem:[#allocation8 + $0xc0] sm:$0xff] %vm210, 0.0
      %364 = vst.msk [vmem:[#allocation8 + $0xc8] sm:$0xff] %vm210, 0.0
      %365 = vst.msk [vmem:[#allocation8 + $0xd0] sm:$0xff] %vm210, 0.0
      %366 = vst.msk [vmem:[#allocation8 + $0xd8] sm:$0xff] %vm210, 0.0
      %367 = vst.msk [vmem:[#allocation8 + $0xe0] sm:$0xff] %vm210, 0.0
      %368 = vst.msk [vmem:[#allocation8 + $0xe8] sm:$0xff] %vm210, 0.0
      %369 = vst.msk [vmem:[#allocation8 + $0xf0] sm:$0xff] %vm210, 0.0
      %370 = vst.msk [vmem:[#allocation8 + $0xf8] sm:$0xff] %vm210, 0.0
      %371 = vst.msk [vmem:[#allocation9] sm:$0xff] %vm177, 0.0
      %372 = vst.msk [vmem:[#allocation9 + $0x8] sm:$0xff] %vm177, 0.0
      %373 = vst.msk [vmem:[#allocation9 + $0x10] sm:$0xff] %vm177, 0.0
      %374 = vst.msk [vmem:[#allocation9 + $0x18] sm:$0xff] %vm177, 0.0
      %375 = vst.msk [vmem:[#allocation9 + $0x20] sm:$0xff] %vm177, 0.0
      %376 = vst.msk [vmem:[#allocation9 + $0x28] sm:$0xff] %vm177, 0.0
      %377 = vst.msk [vmem:[#allocation9 + $0x30] sm:$0xff] %vm177, 0.0
      %378 = vst.msk [vmem:[#allocation9 + $0x38] sm:$0xff] %vm177, 0.0
      %379 = vst.msk [vmem:[#allocation9 + $0x40] sm:$0xff] %vm177, 0.0
      %380 = vst.msk [vmem:[#allocation9 + $0x48] sm:$0xff] %vm177, 0.0
      %381 = vst.msk [vmem:[#allocation9 + $0x50] sm:$0xff] %vm177, 0.0
      %382 = vst.msk [vmem:[#allocation9 + $0x58] sm:$0xff] %vm177, 0.0
      %383 = vst.msk [vmem:[#allocation9 + $0x60] sm:$0xff] %vm177, 0.0
      %384 = vst.msk [vmem:[#allocation9 + $0x68] sm:$0xff] %vm177, 0.0
      %385 = vst.msk [vmem:[#allocation9 + $0x70] sm:$0xff] %vm177, 0.0
      %386 = vst.msk [vmem:[#allocation9 + $0x78] sm:$0xff] %vm177, 0.0
      %387 = vst.msk [vmem:[#allocation9 + $0x80] sm:$0xff] %vm177, 0.0
      %388 = vst.msk [vmem:[#allocation9 + $0x88] sm:$0xff] %vm177, 0.0
      %389 = vst.msk [vmem:[#allocation9 + $0x90] sm:$0xff] %vm177, 0.0
      %390 = vst.msk [vmem:[#allocation9 + $0x98] sm:$0xff] %vm177, 0.0
      %391 = vst.msk [vmem:[#allocation9 + $0xa0] sm:$0xff] %vm177, 0.0
      %392 = vst.msk [vmem:[#allocation9 + $0xa8] sm:$0xff] %vm177, 0.0
      %393 = vst.msk [vmem:[#allocation9 + $0xb0] sm:$0xff] %vm177, 0.0
      %394 = vst.msk [vmem:[#allocation9 + $0xb8] sm:$0xff] %vm177, 0.0
      %395 = vst.msk [vmem:[#allocation9 + $0xc0] sm:$0xff] %vm177, 0.0
      %396 = vst.msk [vmem:[#allocation9 + $0xc8] sm:$0xff] %vm177, 0.0
      %397 = vst.msk [vmem:[#allocation9 + $0xd0] sm:$0xff] %vm177, 0.0
      %398 = vst.msk [vmem:[#allocation9 + $0xd8] sm:$0xff] %vm177, 0.0
      %399 = vst.msk [vmem:[#allocation9 + $0xe0] sm:$0xff] %vm177, 0.0
      %400 = vst.msk [vmem:[#allocation9 + $0xe8] sm:$0xff] %vm177, 0.0
      %401 = vst.msk [vmem:[#allocation9 + $0xf0] sm:$0xff] %vm177, 0.0
      %402 = vst.msk [vmem:[#allocation9 + $0xf8] sm:$0xff] %vm177, 0.0
    $region85: #{tpu_custom_call.1} parent=1 // pred_fallthru
      _
    // Predicated region
    $region86: #{tpu_custom_call.1} parent=1 // pred_check
      %p403 = pneg %p172
    $region87: #{tpu_custom_call.1} parent=1 // pred_check_branch
      %405 = sbr.rel (%p403) target = $region89
    $region88: #{tpu_custom_call.1} parent=1 // pred_region
      %406 = vst [vmem:[#allocation2] sm:$0xff] 0.0
      %407 = vst [vmem:[#allocation2 + $0x8] sm:$0xff] 0.0
      %408 = vst [vmem:[#allocation2 + $0x10] sm:$0xff] 0.0
      %409 = vst [vmem:[#allocation2 + $0x18] sm:$0xff] 0.0
      %410 = vst [vmem:[#allocation2 + $0x20] sm:$0xff] 0.0
      %411 = vst [vmem:[#allocation2 + $0x28] sm:$0xff] 0.0
      %412 = vst [vmem:[#allocation2 + $0x30] sm:$0xff] 0.0
      %413 = vst [vmem:[#allocation2 + $0x38] sm:$0xff] 0.0
      %414 = vst [vmem:[#allocation2 + $0x40] sm:$0xff] 0.0
      %415 = vst [vmem:[#allocation2 + $0x48] sm:$0xff] 0.0
      %416 = vst [vmem:[#allocation2 + $0x50] sm:$0xff] 0.0
      %417 = vst [vmem:[#allocation2 + $0x58] sm:$0xff] 0.0
      %418 = vst [vmem:[#allocation2 + $0x60] sm:$0xff] 0.0
      %419 = vst [vmem:[#allocation2 + $0x68] sm:$0xff] 0.0
      %420 = vst [vmem:[#allocation2 + $0x70] sm:$0xff] 0.0
      %421 = vst [vmem:[#allocation2 + $0x78] sm:$0xff] 0.0
      %422 = vst [vmem:[#allocation2 + $0x80] sm:$0xff] 0.0
      %423 = vst [vmem:[#allocation2 + $0x88] sm:$0xff] 0.0
      %424 = vst [vmem:[#allocation2 + $0x90] sm:$0xff] 0.0
      %425 = vst [vmem:[#allocation2 + $0x98] sm:$0xff] 0.0
      %426 = vst [vmem:[#allocation2 + $0xa0] sm:$0xff] 0.0
      %427 = vst [vmem:[#allocation2 + $0xa8] sm:$0xff] 0.0
      %428 = vst [vmem:[#allocation2 + $0xb0] sm:$0xff] 0.0
      %429 = vst [vmem:[#allocation2 + $0xb8] sm:$0xff] 0.0
      %430 = vst [vmem:[#allocation2 + $0xc0] sm:$0xff] 0.0
      %431 = vst [vmem:[#allocation2 + $0xc8] sm:$0xff] 0.0
      %432 = vst [vmem:[#allocation2 + $0xd0] sm:$0xff] 0.0
      %433 = vst [vmem:[#allocation2 + $0xd8] sm:$0xff] 0.0
      %434 = vst [vmem:[#allocation2 + $0xe0] sm:$0xff] 0.0
      %435 = vst [vmem:[#allocation2 + $0xe8] sm:$0xff] 0.0
      %436 = vst [vmem:[#allocation2 + $0xf0] sm:$0xff] 0.0
      %437 = vst [vmem:[#allocation2 + $0xf8] sm:$0xff] 0.0
      %438 = vst [vmem:[#allocation2 + $0x100] sm:$0xff] 0.0
      %439 = vst [vmem:[#allocation2 + $0x108] sm:$0xff] 0.0
      %440 = vst [vmem:[#allocation2 + $0x110] sm:$0xff] 0.0
      %441 = vst [vmem:[#allocation2 + $0x118] sm:$0xff] 0.0
      %442 = vst [vmem:[#allocation2 + $0x120] sm:$0xff] 0.0
      %443 = vst [vmem:[#allocation2 + $0x128] sm:$0xff] 0.0
      %444 = vst [vmem:[#allocation2 + $0x130] sm:$0xff] 0.0
      %445 = vst [vmem:[#allocation2 + $0x138] sm:$0xff] 0.0
      %446 = vst [vmem:[#allocation2 + $0x140] sm:$0xff] 0.0
      %447 = vst [vmem:[#allocation2 + $0x148] sm:$0xff] 0.0
      %448 = vst [vmem:[#allocation2 + $0x150] sm:$0xff] 0.0
      %449 = vst [vmem:[#allocation2 + $0x158] sm:$0xff] 0.0
      %450 = vst [vmem:[#allocation2 + $0x160] sm:$0xff] 0.0
      %451 = vst [vmem:[#allocation2 + $0x168] sm:$0xff] 0.0
      %452 = vst [vmem:[#allocation2 + $0x170] sm:$0xff] 0.0
      %453 = vst [vmem:[#allocation2 + $0x178] sm:$0xff] 0.0
      %454 = vst [vmem:[#allocation2 + $0x180] sm:$0xff] 0.0
      %455 = vst [vmem:[#allocation2 + $0x188] sm:$0xff] 0.0
      %456 = vst [vmem:[#allocation2 + $0x190] sm:$0xff] 0.0
      %457 = vst [vmem:[#allocation2 + $0x198] sm:$0xff] 0.0
      %458 = vst [vmem:[#allocation2 + $0x1a0] sm:$0xff] 0.0
      %459 = vst [vmem:[#allocation2 + $0x1a8] sm:$0xff] 0.0
      %460 = vst [vmem:[#allocation2 + $0x1b0] sm:$0xff] 0.0
      %461 = vst [vmem:[#allocation2 + $0x1b8] sm:$0xff] 0.0
      %462 = vst [vmem:[#allocation2 + $0x1c0] sm:$0xff] 0.0
      %463 = vst [vmem:[#allocation2 + $0x1c8] sm:$0xff] 0.0
      %464 = vst [vmem:[#allocation2 + $0x1d0] sm:$0xff] 0.0
      %465 = vst [vmem:[#allocation2 + $0x1d8] sm:$0xff] 0.0
      %466 = vst [vmem:[#allocation2 + $0x1e0] sm:$0xff] 0.0
      %467 = vst [vmem:[#allocation2 + $0x1e8] sm:$0xff] 0.0
      %468 = vst [vmem:[#allocation2 + $0x1f0] sm:$0xff] 0.0
      %469 = vst [vmem:[#allocation2 + $0x1f8] sm:$0xff] 0.0
      %v470 = vld [vmem:[#allocation10] sm:$0xff]
      %v471 = vld [vmem:[#allocation10 + $0x8] sm:$0xff]
      %v472 = vld [vmem:[#allocation10 + $0x10] sm:$0xff]
      %v473 = vld [vmem:[#allocation10 + $0x18] sm:$0xff]
      %v474 = vld [vmem:[#allocation10 + $0x20] sm:$0xff]
      %v475 = vld [vmem:[#allocation10 + $0x28] sm:$0xff]
      %v476 = vld [vmem:[#allocation10 + $0x30] sm:$0xff]
      %v477 = vld [vmem:[#allocation10 + $0x38] sm:$0xff]
      %v478 = vld [vmem:[#allocation10 + $0x40] sm:$0xff]
      %v479 = vld [vmem:[#allocation10 + $0x48] sm:$0xff]
      %v480 = vld [vmem:[#allocation10 + $0x50] sm:$0xff]
      %v481 = vld [vmem:[#allocation10 + $0x58] sm:$0xff]
      %v482 = vld [vmem:[#allocation10 + $0x60] sm:$0xff]
      %v483 = vld [vmem:[#allocation10 + $0x68] sm:$0xff]
      %v484 = vld [vmem:[#allocation10 + $0x70] sm:$0xff]
      %v485 = vld [vmem:[#allocation10 + $0x78] sm:$0xff]
      %v486 = vld [vmem:[#allocation10 + $0x80] sm:$0xff]
      %v487 = vld [vmem:[#allocation10 + $0x88] sm:$0xff]
      %v488 = vld [vmem:[#allocation10 + $0x90] sm:$0xff]
      %v489 = vld [vmem:[#allocation10 + $0x98] sm:$0xff]
      %v490 = vld [vmem:[#allocation10 + $0xa0] sm:$0xff]
      %v491 = vld [vmem:[#allocation10 + $0xa8] sm:$0xff]
      %v492 = vld [vmem:[#allocation10 + $0xb0] sm:$0xff]
      %v493 = vld [vmem:[#allocation10 + $0xb8] sm:$0xff]
      %v494 = vld [vmem:[#allocation10 + $0xc0] sm:$0xff]
      %v495 = vld [vmem:[#allocation10 + $0xc8] sm:$0xff]
      %v496 = vld [vmem:[#allocation10 + $0xd0] sm:$0xff]
      %v497 = vld [vmem:[#allocation10 + $0xd8] sm:$0xff]
      %v498 = vld [vmem:[#allocation10 + $0xe0] sm:$0xff]
      %v499 = vld [vmem:[#allocation10 + $0xe8] sm:$0xff]
      %v500 = vld [vmem:[#allocation10 + $0xf0] sm:$0xff]
      %v501 = vld [vmem:[#allocation10 + $0xf8] sm:$0xff]
      %v502 = vunpack.c.l.bf16 %v470
      %v503 = vunpack.c.h.bf16 %v470
      %v504 = vunpack.c.l.bf16 %v471
      %v505 = vunpack.c.h.bf16 %v471
      %v506 = vunpack.c.l.bf16 %v472
      %v507 = vunpack.c.h.bf16 %v472
      %v508 = vunpack.c.l.bf16 %v473
      %v509 = vunpack.c.h.bf16 %v473
      %v510 = vunpack.c.l.bf16 %v474
      %v511 = vunpack.c.h.bf16 %v474
      %v512 = vunpack.c.l.bf16 %v475
      %v513 = vunpack.c.h.bf16 %v475
      %v514 = vunpack.c.l.bf16 %v476
      %v515 = vunpack.c.h.bf16 %v476
      %v516 = vunpack.c.l.bf16 %v477
      %v517 = vunpack.c.h.bf16 %v477
      %v518 = vunpack.c.l.bf16 %v478
      %v519 = vunpack.c.h.bf16 %v478
      %v520 = vunpack.c.l.bf16 %v479
      %v521 = vunpack.c.h.bf16 %v479
      %v522 = vunpack.c.l.bf16 %v480
      %v523 = vunpack.c.h.bf16 %v480
      %v524 = vunpack.c.l.bf16 %v481
      %v525 = vunpack.c.h.bf16 %v481
      %v526 = vunpack.c.l.bf16 %v482
      %v527 = vunpack.c.h.bf16 %v482
      %v528 = vunpack.c.l.bf16 %v483
      %v529 = vunpack.c.h.bf16 %v483
      %v530 = vunpack.c.l.bf16 %v484
      %v531 = vunpack.c.h.bf16 %v484
      %v532 = vunpack.c.l.bf16 %v485
      %v533 = vunpack.c.h.bf16 %v485
      %v534 = vunpack.c.l.bf16 %v486
      %v535 = vunpack.c.h.bf16 %v486
      %v536 = vunpack.c.l.bf16 %v487
      %v537 = vunpack.c.h.bf16 %v487
      %v538 = vunpack.c.l.bf16 %v488
      %v539 = vunpack.c.h.bf16 %v488
      %v540 = vunpack.c.l.bf16 %v489
      %v541 = vunpack.c.h.bf16 %v489
      %v542 = vunpack.c.l.bf16 %v490
      %v543 = vunpack.c.h.bf16 %v490
      %v544 = vunpack.c.l.bf16 %v491
      %v545 = vunpack.c.h.bf16 %v491
      %v546 = vunpack.c.l.bf16 %v492
      %v547 = vunpack.c.h.bf16 %v492
      %v548 = vunpack.c.l.bf16 %v493
      %v549 = vunpack.c.h.bf16 %v493
      %v550 = vunpack.c.l.bf16 %v494
      %v551 = vunpack.c.h.bf16 %v494
      %v552 = vunpack.c.l.bf16 %v495
      %v553 = vunpack.c.h.bf16 %v495
      %v554 = vunpack.c.l.bf16 %v496
      %v555 = vunpack.c.h.bf16 %v496
      %v556 = vunpack.c.l.bf16 %v497
      %v557 = vunpack.c.h.bf16 %v497
      %v558 = vunpack.c.l.bf16 %v498
      %v559 = vunpack.c.h.bf16 %v498
      %v560 = vunpack.c.l.bf16 %v499
      %v561 = vunpack.c.h.bf16 %v499
      %v562 = vunpack.c.l.bf16 %v500
      %v563 = vunpack.c.h.bf16 %v500
      %v564 = vunpack.c.l.bf16 %v501
      %v565 = vunpack.c.h.bf16 %v501
      %v566 = vld [vmem:[#allocation13] sm:$0xff]
      %v567 = vld [vmem:[#allocation13 + $0x8] sm:$0xff]
      %v568 = vld [vmem:[#allocation13 + $0x10] sm:$0xff]
      %v569 = vld [vmem:[#allocation13 + $0x18] sm:$0xff]
      %v570 = vld [vmem:[#allocation13 + $0x20] sm:$0xff]
      %v571 = vld [vmem:[#allocation13 + $0x28] sm:$0xff]
      %v572 = vld [vmem:[#allocation13 + $0x30] sm:$0xff]
      %v573 = vld [vmem:[#allocation13 + $0x38] sm:$0xff]
      %v574 = vld [vmem:[#allocation13 + $0x40] sm:$0xff]
      %v575 = vld [vmem:[#allocation13 + $0x48] sm:$0xff]
      %v576 = vld [vmem:[#allocation13 + $0x50] sm:$0xff]
      %v577 = vld [vmem:[#allocation13 + $0x58] sm:$0xff]
      %v578 = vld [vmem:[#allocation13 + $0x60] sm:$0xff]
      %v579 = vld [vmem:[#allocation13 + $0x68] sm:$0xff]
      %v580 = vld [vmem:[#allocation13 + $0x70] sm:$0xff]
      %v581 = vld [vmem:[#allocation13 + $0x78] sm:$0xff]
      %v582 = vld [vmem:[#allocation13 + $0x80] sm:$0xff]
      %v583 = vld [vmem:[#allocation13 + $0x88] sm:$0xff]
      %v584 = vld [vmem:[#allocation13 + $0x90] sm:$0xff]
      %v585 = vld [vmem:[#allocation13 + $0x98] sm:$0xff]
      %v586 = vld [vmem:[#allocation13 + $0xa0] sm:$0xff]
      %v587 = vld [vmem:[#allocation13 + $0xa8] sm:$0xff]
      %v588 = vld [vmem:[#allocation13 + $0xb0] sm:$0xff]
      %v589 = vld [vmem:[#allocation13 + $0xb8] sm:$0xff]
      %v590 = vld [vmem:[#allocation13 + $0xc0] sm:$0xff]
      %v591 = vld [vmem:[#allocation13 + $0xc8] sm:$0xff]
      %v592 = vld [vmem:[#allocation13 + $0xd0] sm:$0xff]
      %v593 = vld [vmem:[#allocation13 + $0xd8] sm:$0xff]
      %v594 = vld [vmem:[#allocation13 + $0xe0] sm:$0xff]
      %v595 = vld [vmem:[#allocation13 + $0xe8] sm:$0xff]
      %v596 = vld [vmem:[#allocation13 + $0xf0] sm:$0xff]
      %v597 = vld [vmem:[#allocation13 + $0xf8] sm:$0xff]
      %v598 = vld [vmem:[#allocation18] sm:$0xf]
      %v599 = vld [vmem:[#allocation18 + $0x4] sm:$0xf]
      %v600 = vld [vmem:[#allocation18 + $0x8] sm:$0xf]
      %v601 = vld [vmem:[#allocation18 + $0xc] sm:$0xf]
      %v602 = vld [vmem:[#allocation18 + $0x10] sm:$0xf]
      %v603 = vld [vmem:[#allocation18 + $0x14] sm:$0xf]
      %v604 = vld [vmem:[#allocation18 + $0x18] sm:$0xf]
      %v605 = vld [vmem:[#allocation18 + $0x1c] sm:$0xf]
      %v606 = vld [vmem:[#allocation18 + $0x20] sm:$0xf]
      %v607 = vld [vmem:[#allocation18 + $0x24] sm:$0xf]
      %v608 = vld [vmem:[#allocation18 + $0x28] sm:$0xf]
      %v609 = vld [vmem:[#allocation18 + $0x2c] sm:$0xf]
      %v610 = vld [vmem:[#allocation18 + $0x30] sm:$0xf]
      %v611 = vld [vmem:[#allocation18 + $0x34] sm:$0xf]
      %v612 = vld [vmem:[#allocation18 + $0x38] sm:$0xf]
      %v613 = vld [vmem:[#allocation18 + $0x3c] sm:$0xf]
      %v614 = vld [vmem:[#allocation18 + $0x40] sm:$0xf]
      %v615 = vld [vmem:[#allocation18 + $0x44] sm:$0xf]
      %v616 = vld [vmem:[#allocation18 + $0x48] sm:$0xf]
      %v617 = vld [vmem:[#allocation18 + $0x4c] sm:$0xf]
      %v618 = vld [vmem:[#allocation18 + $0x50] sm:$0xf]
      %v619 = vld [vmem:[#allocation18 + $0x54] sm:$0xf]
      %v620 = vld [vmem:[#allocation18 + $0x58] sm:$0xf]
      %v621 = vld [vmem:[#allocation18 + $0x5c] sm:$0xf]
      %v622 = vld [vmem:[#allocation18 + $0x60] sm:$0xf]
      %v623 = vld [vmem:[#allocation18 + $0x64] sm:$0xf]
      %v624 = vld [vmem:[#allocation18 + $0x68] sm:$0xf]
      %v625 = vld [vmem:[#allocation18 + $0x6c] sm:$0xf]
      %v626 = vld [vmem:[#allocation18 + $0x70] sm:$0xf]
      %v627 = vld [vmem:[#allocation18 + $0x74] sm:$0xf]
      %v628 = vld [vmem:[#allocation18 + $0x78] sm:$0xf]
      %v629 = vld [vmem:[#allocation18 + $0x7c] sm:$0xf]
      %v630 = vld [vmem:[#allocation5] sm:$0xff]
      %v631 = vld [vmem:[#allocation5 + $0x8] sm:$0xff]
      %v632 = vld [vmem:[#allocation5 + $0x10] sm:$0xff]
      %v633 = vld [vmem:[#allocation5 + $0x18] sm:$0xff]
      %v634 = vld [vmem:[#allocation5 + $0x20] sm:$0xff]
      %v635 = vld [vmem:[#allocation5 + $0x28] sm:$0xff]
      %v636 = vld [vmem:[#allocation5 + $0x30] sm:$0xff]
      %v637 = vld [vmem:[#allocation5 + $0x38] sm:$0xff]
      %v638 = vld [vmem:[#allocation5 + $0x40] sm:$0xff]
      %v639 = vld [vmem:[#allocation5 + $0x48] sm:$0xff]
      %v640 = vld [vmem:[#allocation5 + $0x50] sm:$0xff]
      %v641 = vld [vmem:[#allocation5 + $0x58] sm:$0xff]
      %v642 = vld [vmem:[#allocation5 + $0x60] sm:$0xff]
      %v643 = vld [vmem:[#allocation5 + $0x68] sm:$0xff]
      %v644 = vld [vmem:[#allocation5 + $0x70] sm:$0xff]
      %v645 = vld [vmem:[#allocation5 + $0x78] sm:$0xff]
      %v646 = vld [vmem:[#allocation5 + $0x80] sm:$0xff]
      %v647 = vld [vmem:[#allocation5 + $0x88] sm:$0xff]
      %v648 = vld [vmem:[#allocation5 + $0x90] sm:$0xff]
      %v649 = vld [vmem:[#allocation5 + $0x98] sm:$0xff]
      %v650 = vld [vmem:[#allocation5 + $0xa0] sm:$0xff]
      %v651 = vld [vmem:[#allocation5 + $0xa8] sm:$0xff]
      %v652 = vld [vmem:[#allocation5 + $0xb0] sm:$0xff]
      %v653 = vld [vmem:[#allocation5 + $0xb8] sm:$0xff]
      %v654 = vld [vmem:[#allocation5 + $0xc0] sm:$0xff]
      %v655 = vld [vmem:[#allocation5 + $0xc8] sm:$0xff]
      %v656 = vld [vmem:[#allocation5 + $0xd0] sm:$0xff]
      %v657 = vld [vmem:[#allocation5 + $0xd8] sm:$0xff]
      %v658 = vld [vmem:[#allocation5 + $0xe0] sm:$0xff]
      %v659 = vld [vmem:[#allocation5 + $0xe8] sm:$0xff]
      %v660 = vld [vmem:[#allocation5 + $0xf0] sm:$0xff]
      %v661 = vld [vmem:[#allocation5 + $0xf8] sm:$0xff]
      %v694 = vunpack.c.l.b16 %v566
      %v695 = vunpack.c.h.b16 %v566
      %v696 = vunpack.c.l.b16 %v567
      %v697 = vunpack.c.h.b16 %v567
      %v698 = vunpack.c.l.b16 %v568
      %v699 = vunpack.c.h.b16 %v568
      %v700 = vunpack.c.l.b16 %v569
      %v701 = vunpack.c.h.b16 %v569
      %v702 = vunpack.c.l.b16 %v570
      %v703 = vunpack.c.h.b16 %v570
      %v704 = vunpack.c.l.b16 %v571
      %v705 = vunpack.c.h.b16 %v571
      %v706 = vunpack.c.l.b16 %v572
      %v707 = vunpack.c.h.b16 %v572
      %v708 = vunpack.c.l.b16 %v573
      %v709 = vunpack.c.h.b16 %v573
      %v710 = vunpack.c.l.b16 %v574
      %v711 = vunpack.c.h.b16 %v574
      %v712 = vunpack.c.l.b16 %v575
      %v713 = vunpack.c.h.b16 %v575
      %v714 = vunpack.c.l.b16 %v576
      %v715 = vunpack.c.h.b16 %v576
      %v716 = vunpack.c.l.b16 %v577
      %v717 = vunpack.c.h.b16 %v577
      %v718 = vunpack.c.l.b16 %v578
      %v719 = vunpack.c.h.b16 %v578
      %v720 = vunpack.c.l.b16 %v579
      %v721 = vunpack.c.h.b16 %v579
      %v722 = vunpack.c.l.b16 %v580
      %v723 = vunpack.c.h.b16 %v580
      %v724 = vunpack.c.l.b16 %v581
      %v725 = vunpack.c.h.b16 %v581
      %v726 = vunpack.c.l.b16 %v582
      %v727 = vunpack.c.h.b16 %v582
      %v728 = vunpack.c.l.b16 %v583
      %v729 = vunpack.c.h.b16 %v583
      %v730 = vunpack.c.l.b16 %v584
      %v731 = vunpack.c.h.b16 %v584
      %v732 = vunpack.c.l.b16 %v585
      %v733 = vunpack.c.h.b16 %v585
      %v734 = vunpack.c.l.b16 %v586
      %v735 = vunpack.c.h.b16 %v586
      %v736 = vunpack.c.l.b16 %v587
      %v737 = vunpack.c.h.b16 %v587
      %v738 = vunpack.c.l.b16 %v588
      %v739 = vunpack.c.h.b16 %v588
      %v740 = vunpack.c.l.b16 %v589
      %v741 = vunpack.c.h.b16 %v589
      %v742 = vunpack.c.l.b16 %v590
      %v743 = vunpack.c.h.b16 %v590
      %v744 = vunpack.c.l.b16 %v591
      %v745 = vunpack.c.h.b16 %v591
      %v746 = vunpack.c.l.b16 %v592
      %v747 = vunpack.c.h.b16 %v592
      %v748 = vunpack.c.l.b16 %v593
      %v749 = vunpack.c.h.b16 %v593
      %v750 = vunpack.c.l.b16 %v594
      %v751 = vunpack.c.h.b16 %v594
      %v752 = vunpack.c.l.b16 %v595
      %v753 = vunpack.c.h.b16 %v595
      %v754 = vunpack.c.l.b16 %v596
      %v755 = vunpack.c.h.b16 %v596
      %v756 = vunpack.c.l.b16 %v597
      %v757 = vunpack.c.h.b16 %v597
      %v758 = vpack.c.b16 %v696, %v694
      %v759 = vpack.c.b16 %v697, %v695
      %v760 = vpack.c.b16 %v700, %v698
      %v761 = vpack.c.b16 %v701, %v699
      %v762 = vpack.c.b16 %v704, %v702
      %v763 = vpack.c.b16 %v705, %v703
      %v764 = vpack.c.b16 %v708, %v706
      %v765 = vpack.c.b16 %v709, %v707
      %v766 = vpack.c.b16 %v712, %v710
      %v767 = vpack.c.b16 %v713, %v711
      %v768 = vpack.c.b16 %v716, %v714
      %v769 = vpack.c.b16 %v717, %v715
      %v770 = vpack.c.b16 %v720, %v718
      %v771 = vpack.c.b16 %v721, %v719
      %v772 = vpack.c.b16 %v724, %v722
      %v773 = vpack.c.b16 %v725, %v723
      %v774 = vpack.c.b16 %v728, %v726
      %v775 = vpack.c.b16 %v729, %v727
      %v776 = vpack.c.b16 %v732, %v730
      %v777 = vpack.c.b16 %v733, %v731
      %v778 = vpack.c.b16 %v736, %v734
      %v779 = vpack.c.b16 %v737, %v735
      %v780 = vpack.c.b16 %v740, %v738
      %v781 = vpack.c.b16 %v741, %v739
      %v782 = vpack.c.b16 %v744, %v742
      %v783 = vpack.c.b16 %v745, %v743
      %v784 = vpack.c.b16 %v748, %v746
      %v785 = vpack.c.b16 %v749, %v747
      %v786 = vpack.c.b16 %v752, %v750
      %v787 = vpack.c.b16 %v753, %v751
      %v788 = vpack.c.b16 %v756, %v754
      %v789 = vpack.c.b16 %v757, %v755
      %v854 = vunpack.c.l.b16 %v598
      %v855 = vunpack.c.l.b16 %v599
      %v856 = vunpack.c.l.b16 %v600
      %v857 = vunpack.c.l.b16 %v601
      %v858 = vunpack.c.l.b16 %v602
      %v859 = vunpack.c.l.b16 %v603
      %v860 = vunpack.c.l.b16 %v604
      %v861 = vunpack.c.l.b16 %v605
      %v862 = vunpack.c.l.b16 %v606
      %v863 = vunpack.c.l.b16 %v607
      %v864 = vunpack.c.l.b16 %v608
      %v865 = vunpack.c.l.b16 %v609
      %v866 = vunpack.c.l.b16 %v610
      %v867 = vunpack.c.l.b16 %v611
      %v868 = vunpack.c.l.b16 %v612
      %v869 = vunpack.c.l.b16 %v613
      %v870 = vunpack.c.l.b16 %v614
      %v871 = vunpack.c.l.b16 %v615
      %v872 = vunpack.c.l.b16 %v616
      %v873 = vunpack.c.l.b16 %v617
      %v874 = vunpack.c.l.b16 %v618
      %v875 = vunpack.c.l.b16 %v619
      %v876 = vunpack.c.l.b16 %v620
      %v877 = vunpack.c.l.b16 %v621
      %v878 = vunpack.c.l.b16 %v622
      %v879 = vunpack.c.l.b16 %v623
      %v880 = vunpack.c.l.b16 %v624
      %v881 = vunpack.c.l.b16 %v625
      %v882 = vunpack.c.l.b16 %v626
      %v883 = vunpack.c.l.b16 %v627
      %v884 = vunpack.c.l.b16 %v628
      %v885 = vunpack.c.l.b16 %v629
      %v886 = vpack.c.b16 %v855, %v854
      %v887 = vpack.c.b16 %v857, %v856
      %v888 = vpack.c.b16 %v859, %v858
      %v889 = vpack.c.b16 %v861, %v860
      %v890 = vpack.c.b16 %v863, %v862
      %v891 = vpack.c.b16 %v865, %v864
      %v892 = vpack.c.b16 %v867, %v866
      %v893 = vpack.c.b16 %v869, %v868
      %v894 = vpack.c.b16 %v871, %v870
      %v895 = vpack.c.b16 %v873, %v872
      %v896 = vpack.c.b16 %v875, %v874
      %v897 = vpack.c.b16 %v877, %v876
      %v898 = vpack.c.b16 %v879, %v878
      %v899 = vpack.c.b16 %v881, %v880
      %v900 = vpack.c.b16 %v883, %v882
      %v901 = vpack.c.b16 %v885, %v884
      %918 = vmatprep.subr.bf16.mxu0 0
      %919 = vmatpush1.bf16.msra.mxu0 %v886
      %920 = vmatprep.subr.bf16.mxu0 0
      %921 = vmatpush1.bf16.msra.mxu0 %v887
      %922 = vmatprep.subr.bf16.mxu0 0
      %923 = vmatpush1.bf16.msra.mxu0 %v888
      %924 = vmatprep.subr.bf16.mxu0 0
      %925 = vmatpush1.bf16.msra.mxu0 %v889
      %926 = vmatprep.subr.bf16.mxu0 0
      %927 = vmatpush1.bf16.msra.mxu0 %v890
      %928 = vmatprep.subr.bf16.mxu0 0
      %929 = vmatpush1.bf16.msra.mxu0 %v891
      %930 = vmatprep.subr.bf16.mxu0 0
      %931 = vmatpush1.bf16.msra.mxu0 %v892
      %932 = vmatprep.subr.bf16.mxu0 0
      %933 = vmatpush1.bf16.msra.mxu0 %v893
      %934 = vmatprep.subr.bf16.mxu0 0
      %935 = vmatpush1.bf16.msra.mxu0 %v894
      %936 = vmatprep.subr.bf16.mxu0 0
      %937 = vmatpush1.bf16.msra.mxu0 %v895
      %938 = vmatprep.subr.bf16.mxu0 0
      %939 = vmatpush1.bf16.msra.mxu0 %v896
      %940 = vmatprep.subr.bf16.mxu0 0
      %941 = vmatpush1.bf16.msra.mxu0 %v897
      %942 = vmatprep.subr.bf16.mxu0 0
      %943 = vmatpush1.bf16.msra.mxu0 %v898
      %944 = vmatprep.subr.bf16.mxu0 0
      %945 = vmatpush1.bf16.msra.mxu0 %v899
      %946 = vmatprep.subr.bf16.mxu0 0
      %947 = vmatpush1.bf16.msra.mxu0 %v900
      %948 = vmatprep.subr.bf16.mxu0 0
      %949 = vmatpush1.bf16.msra.mxu0 %v901
      %950 = vmatprep.mubr.bf16.mxu0 %v759
      %951 = vmatmul.mubr.bf16.gmra.mrb[0].mxu0 %v758
      %v952 = vpop.f32.mrb[0].mxu0
      %v953 = vadd.f32 0.0, %v952
      %v954 = vpop.f32.mrb[0].mxu0
      %v955 = vpop.f32.mrb[0].mxu0
      %v956 = vadd.f32 0.0, %v955
      %v957 = vpop.f32.mrb[0].mxu0
      %958 = vmatprep.mubr.bf16.mxu0 %v761
      %959 = vmatmul.mubr.bf16.gmra.mrb[0].mxu0 %v760
      %v960 = vpop.f32.mrb[0].mxu0
      %v961 = vadd.f32 0.0, %v960
      %v962 = vpop.f32.mrb[0].mxu0
      %v963 = vpop.f32.mrb[0].mxu0
      %v964 = vadd.f32 0.0, %v963
      %v965 = vpop.f32.mrb[0].mxu0
      %966 = vmatprep.mubr.bf16.mxu0 %v763
      %967 = vmatmul.mubr.bf16.gmra.mrb[0].mxu0 %v762
      %v968 = vpop.f32.mrb[0].mxu0
      %v969 = vadd.f32 0.0, %v968
      %v970 = vpop.f32.mrb[0].mxu0
      %v971 = vpop.f32.mrb[0].mxu0
      %v972 = vadd.f32 0.0, %v971
      %v973 = vpop.f32.mrb[0].mxu0
      %974 = vmatprep.mubr.bf16.mxu0 %v765
      %975 = vmatmul.mubr.bf16.gmra.mrb[0].mxu0 %v764
      %v976 = vpop.f32.mrb[0].mxu0
      %v977 = vadd.f32 0.0, %v976
      %v978 = vpop.f32.mrb[0].mxu0
      %v979 = vpop.f32.mrb[0].mxu0
      %v980 = vadd.f32 0.0, %v979
      %v981 = vpop.f32.mrb[0].mxu0
      %982 = vmatprep.mubr.bf16.mxu0 %v767
      %983 = vmatmul.mubr.bf16.gmra.mrb[0].mxu0 %v766
      %v984 = vpop.f32.mrb[0].mxu0
      %v985 = vadd.f32 0.0, %v984
      %v986 = vpop.f32.mrb[0].mxu0
      %v987 = vpop.f32.mrb[0].mxu0
      %v988 = vadd.f32 0.0, %v987
      %v989 = vpop.f32.mrb[0].mxu0
      %990 = vmatprep.mubr.bf16.mxu0 %v769
      %991 = vmatmul.mubr.bf16.gmra.mrb[0].mxu0 %v768
      %v992 = vpop.f32.mrb[0].mxu0
      %v993 = vadd.f32 0.0, %v992
      %v994 = vpop.f32.mrb[0].mxu0
      %v995 = vpop.f32.mrb[0].mxu0
      %v996 = vadd.f32 0.0, %v995
      %v997 = vpop.f32.mrb[0].mxu0
      %998 = vmatprep.mubr.bf16.mxu0 %v771
      %999 = vmatmul.mubr.bf16.gmra.mrb[0].mxu0 %v770
      %v1000 = vpop.f32.mrb[0].mxu0
      %v1001 = vadd.f32 0.0, %v1000
      %v1002 = vpop.f32.mrb[0].mxu0
      %v1003 = vpop.f32.mrb[0].mxu0
      %v1004 = vadd.f32 0.0, %v1003
      %v1005 = vpop.f32.mrb[0].mxu0
      %1006 = vmatprep.mubr.bf16.mxu0 %v773
      %1007 = vmatmul.mubr.bf16.gmra.mrb[0].mxu0 %v772
      %v1008 = vpop.f32.mrb[0].mxu0
      %v1009 = vadd.f32 0.0, %v1008
      %v1010 = vpop.f32.mrb[0].mxu0
      %v1011 = vpop.f32.mrb[0].mxu0
      %v1012 = vadd.f32 0.0, %v1011
      %v1013 = vpop.f32.mrb[0].mxu0
      %1014 = vmatprep.mubr.bf16.mxu0 %v775
      %1015 = vmatmul.mubr.bf16.gmra.mrb[0].mxu0 %v774
      %v1016 = vpop.f32.mrb[0].mxu0
      %v1017 = vadd.f32 0.0, %v1016
      %v1018 = vpop.f32.mrb[0].mxu0
      %v1019 = vpop.f32.mrb[0].mxu0
      %v1020 = vadd.f32 0.0, %v1019
      %v1021 = vpop.f32.mrb[0].mxu0
      %1022 = vmatprep.mubr.bf16.mxu0 %v777
      %1023 = vmatmul.mubr.bf16.gmra.mrb[0].mxu0 %v776
      %v1024 = vpop.f32.mrb[0].mxu0
      %v1025 = vadd.f32 0.0, %v1024
      %v1026 = vpop.f32.mrb[0].mxu0
      %v1027 = vpop.f32.mrb[0].mxu0
      %v1028 = vadd.f32 0.0, %v1027
      %v1029 = vpop.f32.mrb[0].mxu0
      %1030 = vmatprep.mubr.bf16.mxu0 %v779
      %1031 = vmatmul.mubr.bf16.gmra.mrb[0].mxu0 %v778
      %v1032 = vpop.f32.mrb[0].mxu0
      %v1033 = vadd.f32 0.0, %v1032
      %v1034 = vpop.f32.mrb[0].mxu0
      %v1035 = vpop.f32.mrb[0].mxu0
      %v1036 = vadd.f32 0.0, %v1035
      %v1037 = vpop.f32.mrb[0].mxu0
      %1038 = vmatprep.mubr.bf16.mxu0 %v781
      %1039 = vmatmul.mubr.bf16.gmra.mrb[0].mxu0 %v780
      %v1040 = vpop.f32.mrb[0].mxu0
      %v1041 = vadd.f32 0.0, %v1040
      %v1042 = vpop.f32.mrb[0].mxu0
      %v1043 = vpop.f32.mrb[0].mxu0
      %v1044 = vadd.f32 0.0, %v1043
      %v1045 = vpop.f32.mrb[0].mxu0
      %1046 = vmatprep.mubr.bf16.mxu0 %v783
      %1047 = vmatmul.mubr.bf16.gmra.mrb[0].mxu0 %v782
      %v1048 = vpop.f32.mrb[0].mxu0
      %v1049 = vadd.f32 0.0, %v1048
      %v1050 = vpop.f32.mrb[0].mxu0
      %v1051 = vpop.f32.mrb[0].mxu0
      %v1052 = vadd.f32 0.0, %v1051
      %v1053 = vpop.f32.mrb[0].mxu0
      %1054 = vmatprep.mubr.bf16.mxu0 %v785
      %1055 = vmatmul.mubr.bf16.gmra.mrb[0].mxu0 %v784
      %v1056 = vpop.f32.mrb[0].mxu0
      %v1057 = vadd.f32 0.0, %v1056
      %v1058 = vpop.f32.mrb[0].mxu0
      %v1059 = vpop.f32.mrb[0].mxu0
      %v1060 = vadd.f32 0.0, %v1059
      %v1061 = vpop.f32.mrb[0].mxu0
      %1062 = vmatprep.mubr.bf16.mxu0 %v787
      %1063 = vmatmul.mubr.bf16.gmra.mrb[0].mxu0 %v786
      %v1064 = vpop.f32.mrb[0].mxu0
      %v1065 = vadd.f32 0.0, %v1064
      %v1066 = vpop.f32.mrb[0].mxu0
      %v1067 = vpop.f32.mrb[0].mxu0
      %v1068 = vadd.f32 0.0, %v1067
      %v1069 = vpop.f32.mrb[0].mxu0
      %1070 = vmatprep.mubr.bf16.mxu0 %v789
      %1071 = vmatmul.mubr.bf16.gmra.mrb[0].mxu0 %v788
      %v1072 = vpop.f32.mrb[0].mxu0
      %v1073 = vadd.f32 0.0, %v1072
      %v1074 = vpop.f32.mrb[0].mxu0
      %v1075 = vpop.f32.mrb[0].mxu0
      %v1076 = vadd.f32 0.0, %v1075
      %v1077 = vpop.f32.mrb[0].mxu0
      %1078 = vdwg.mxu0
      %v1079 = vadd.f32 %v630, %v953
      %v1080 = vadd.f32 %v631, %v956
      %v1081 = vadd.f32 %v632, %v961
      %v1082 = vadd.f32 %v633, %v964
      %v1083 = vadd.f32 %v634, %v969
      %v1084 = vadd.f32 %v635, %v972
      %v1085 = vadd.f32 %v636, %v977
      %v1086 = vadd.f32 %v637, %v980
      %v1087 = vadd.f32 %v638, %v985
      %v1088 = vadd.f32 %v639, %v988
      %v1089 = vadd.f32 %v640, %v993
      %v1090 = vadd.f32 %v641, %v996
      %v1091 = vadd.f32 %v642, %v1001
      %v1092 = vadd.f32 %v643, %v1004
      %v1093 = vadd.f32 %v644, %v1009
      %v1094 = vadd.f32 %v645, %v1012
      %v1095 = vadd.f32 %v646, %v1017
      %v1096 = vadd.f32 %v647, %v1020
      %v1097 = vadd.f32 %v648, %v1025
      %v1098 = vadd.f32 %v649, %v1028
      %v1099 = vadd.f32 %v650, %v1033
      %v1100 = vadd.f32 %v651, %v1036
      %v1101 = vadd.f32 %v652, %v1041
      %v1102 = vadd.f32 %v653, %v1044
      %v1103 = vadd.f32 %v654, %v1049
      %v1104 = vadd.f32 %v655, %v1052
      %v1105 = vadd.f32 %v656, %v1057
      %v1106 = vadd.f32 %v657, %v1060
      %v1107 = vadd.f32 %v658, %v1065
      %v1108 = vadd.f32 %v659, %v1068
      %v1109 = vadd.f32 %v660, %v1073
      %v1110 = vadd.f32 %v661, %v1076
      %vm1111 = vcmask 64512
      %1112 = vst.msk [vmem:[#allocation5] sm:$0xff] %vm1111, %v1079
      %1113 = vst.msk [vmem:[#allocation5 + $0x8] sm:$0xff] %vm1111, %v1080
      %1114 = vst.msk [vmem:[#allocation5 + $0x10] sm:$0xff] %vm1111, %v1081
      %1115 = vst.msk [vmem:[#allocation5 + $0x18] sm:$0xff] %vm1111, %v1082
      %1116 = vst.msk [vmem:[#allocation5 + $0x20] sm:$0xff] %vm1111, %v1083
      %1117 = vst.msk [vmem:[#allocation5 + $0x28] sm:$0xff] %vm1111, %v1084
      %1118 = vst.msk [vmem:[#allocation5 + $0x30] sm:$0xff] %vm1111, %v1085
      %1119 = vst.msk [vmem:[#allocation5 + $0x38] sm:$0xff] %vm1111, %v1086
      %1120 = vst.msk [vmem:[#allocation5 + $0x40] sm:$0xff] %vm1111, %v1087
      %1121 = vst.msk [vmem:[#allocation5 + $0x48] sm:$0xff] %vm1111, %v1088
      %1122 = vst.msk [vmem:[#allocation5 + $0x50] sm:$0xff] %vm1111, %v1089
      %1123 = vst.msk [vmem:[#allocation5 + $0x58] sm:$0xff] %vm1111, %v1090
      %1124 = vst.msk [vmem:[#allocation5 + $0x60] sm:$0xff] %vm1111, %v1091
      %1125 = vst.msk [vmem:[#allocation5 + $0x68] sm:$0xff] %vm1111, %v1092
      %1126 = vst.msk [vmem:[#allocation5 + $0x70] sm:$0xff] %vm1111, %v1093
      %1127 = vst.msk [vmem:[#allocation5 + $0x78] sm:$0xff] %vm1111, %v1094
      %1128 = vst.msk [vmem:[#allocation5 + $0x80] sm:$0xff] %vm1111, %v1095
      %1129 = vst.msk [vmem:[#allocation5 + $0x88] sm:$0xff] %vm1111, %v1096
      %1130 = vst.msk [vmem:[#allocation5 + $0x90] sm:$0xff] %vm1111, %v1097
      %1131 = vst.msk [vmem:[#allocation5 + $0x98] sm:$0xff] %vm1111, %v1098
      %1132 = vst.msk [vmem:[#allocation5 + $0xa0] sm:$0xff] %vm1111, %v1099
      %1133 = vst.msk [vmem:[#allocation5 + $0xa8] sm:$0xff] %vm1111, %v1100
      %1134 = vst.msk [vmem:[#allocation5 + $0xb0] sm:$0xff] %vm1111, %v1101
      %1135 = vst.msk [vmem:[#allocation5 + $0xb8] sm:$0xff] %vm1111, %v1102
      %1136 = vst.msk [vmem:[#allocation5 + $0xc0] sm:$0xff] %vm1111, %v1103
      %1137 = vst.msk [vmem:[#allocation5 + $0xc8] sm:$0xff] %vm1111, %v1104
      %1138 = vst.msk [vmem:[#allocation5 + $0xd0] sm:$0xff] %vm1111, %v1105
      %1139 = vst.msk [vmem:[#allocation5 + $0xd8] sm:$0xff] %vm1111, %v1106
      %1140 = vst.msk [vmem:[#allocation5 + $0xe0] sm:$0xff] %vm1111, %v1107
      %1141 = vst.msk [vmem:[#allocation5 + $0xe8] sm:$0xff] %vm1111, %v1108
      %1142 = vst.msk [vmem:[#allocation5 + $0xf0] sm:$0xff] %vm1111, %v1109
      %1143 = vst.msk [vmem:[#allocation5 + $0xf8] sm:$0xff] %vm1111, %v1110
      %v1144 = vld [vmem:[#allocation6] sm:$0xff]
      %v1145 = vld [vmem:[#allocation6 + $0x8] sm:$0xff]
      %v1146 = vld [vmem:[#allocation6 + $0x10] sm:$0xff]
      %v1147 = vld [vmem:[#allocation6 + $0x18] sm:$0xff]
      %v1148 = vld [vmem:[#allocation6 + $0x20] sm:$0xff]
      %v1149 = vld [vmem:[#allocation6 + $0x28] sm:$0xff]
      %v1150 = vld [vmem:[#allocation6 + $0x30] sm:$0xff]
      %v1151 = vld [vmem:[#allocation6 + $0x38] sm:$0xff]
      %v1152 = vld [vmem:[#allocation6 + $0x40] sm:$0xff]
      %v1153 = vld [vmem:[#allocation6 + $0x48] sm:$0xff]
      %v1154 = vld [vmem:[#allocation6 + $0x50] sm:$0xff]
      %v1155 = vld [vmem:[#allocation6 + $0x58] sm:$0xff]
      %v1156 = vld [vmem:[#allocation6 + $0x60] sm:$0xff]
      %v1157 = vld [vmem:[#allocation6 + $0x68] sm:$0xff]
      %v1158 = vld [vmem:[#allocation6 + $0x70] sm:$0xff]
      %v1159 = vld [vmem:[#allocation6 + $0x78] sm:$0xff]
      %v1160 = vld [vmem:[#allocation6 + $0x80] sm:$0xff]
      %v1161 = vld [vmem:[#allocation6 + $0x88] sm:$0xff]
      %v1162 = vld [vmem:[#allocation6 + $0x90] sm:$0xff]
      %v1163 = vld [vmem:[#allocation6 + $0x98] sm:$0xff]
      %v1164 = vld [vmem:[#allocation6 + $0xa0] sm:$0xff]
      %v1165 = vld [vmem:[#allocation6 + $0xa8] sm:$0xff]
      %v1166 = vld [vmem:[#allocation6 + $0xb0] sm:$0xff]
      %v1167 = vld [vmem:[#allocation6 + $0xb8] sm:$0xff]
      %v1168 = vld [vmem:[#allocation6 + $0xc0] sm:$0xff]
      %v1169 = vld [vmem:[#allocation6 + $0xc8] sm:$0xff]
      %v1170 = vld [vmem:[#allocation6 + $0xd0] sm:$0xff]
      %v1171 = vld [vmem:[#allocation6 + $0xd8] sm:$0xff]
      %v1172 = vld [vmem:[#allocation6 + $0xe0] sm:$0xff]
      %v1173 = vld [vmem:[#allocation6 + $0xe8] sm:$0xff]
      %v1174 = vld [vmem:[#allocation6 + $0xf0] sm:$0xff]
      %v1175 = vld [vmem:[#allocation6 + $0xf8] sm:$0xff]
      %v1176 = vunpack.c.l.bf16 %v566
      %v1177 = vunpack.c.h.bf16 %v566
      %v1178 = vunpack.c.l.bf16 %v567
      %v1179 = vunpack.c.h.bf16 %v567
      %v1180 = vunpack.c.l.bf16 %v568
      %v1181 = vunpack.c.h.bf16 %v568
      %v1182 = vunpack.c.l.bf16 %v569
      %v1183 = vunpack.c.h.bf16 %v569
      %v1184 = vunpack.c.l.bf16 %v570
      %v1185 = vunpack.c.h.bf16 %v570
      %v1186 = vunpack.c.l.bf16 %v571
      %v1187 = vunpack.c.h.bf16 %v571
      %v1188 = vunpack.c.l.bf16 %v572
      %v1189 = vunpack.c.h.bf16 %v572
      %v1190 = vunpack.c.l.bf16 %v573
      %v1191 = vunpack.c.h.bf16 %v573
      %v1192 = vunpack.c.l.bf16 %v574
      %v1193 = vunpack.c.h.bf16 %v574
      %v1194 = vunpack.c.l.bf16 %v575
      %v1195 = vunpack.c.h.bf16 %v575
      %v1196 = vunpack.c.l.bf16 %v576
      %v1197 = vunpack.c.h.bf16 %v576
      %v1198 = vunpack.c.l.bf16 %v577
      %v1199 = vunpack.c.h.bf16 %v577
      %v1200 = vunpack.c.l.bf16 %v578
      %v1201 = vunpack.c.h.bf16 %v578
      %v1202 = vunpack.c.l.bf16 %v579
      %v1203 = vunpack.c.h.bf16 %v579
      %v1204 = vunpack.c.l.bf16 %v580
      %v1205 = vunpack.c.h.bf16 %v580
      %v1206 = vunpack.c.l.bf16 %v581
      %v1207 = vunpack.c.h.bf16 %v581
      %v1208 = vunpack.c.l.bf16 %v582
      %v1209 = vunpack.c.h.bf16 %v582
      %v1210 = vunpack.c.l.bf16 %v583
      %v1211 = vunpack.c.h.bf16 %v583
      %v1212 = vunpack.c.l.bf16 %v584
      %v1213 = vunpack.c.h.bf16 %v584
      %v1214 = vunpack.c.l.bf16 %v585
      %v1215 = vunpack.c.h.bf16 %v585
      %v1216 = vunpack.c.l.bf16 %v586
      %v1217 = vunpack.c.h.bf16 %v586
      %v1218 = vunpack.c.l.bf16 %v587
      %v1219 = vunpack.c.h.bf16 %v587
      %v1220 = vunpack.c.l.bf16 %v588
      %v1221 = vunpack.c.h.bf16 %v588
      %v1222 = vunpack.c.l.bf16 %v589
      %v1223 = vunpack.c.h.bf16 %v589
      %v1224 = vunpack.c.l.bf16 %v590
      %v1225 = vunpack.c.h.bf16 %v590
      %v1226 = vunpack.c.l.bf16 %v591
      %v1227 = vunpack.c.h.bf16 %v591
      %v1228 = vunpack.c.l.bf16 %v592
      %v1229 = vunpack.c.h.bf16 %v592
      %v1230 = vunpack.c.l.bf16 %v593
      %v1231 = vunpack.c.h.bf16 %v593
      %v1232 = vunpack.c.l.bf16 %v594
      %v1233 = vunpack.c.h.bf16 %v594
      %v1234 = vunpack.c.l.bf16 %v595
      %v1235 = vunpack.c.h.bf16 %v595
      %v1236 = vunpack.c.l.bf16 %v596
      %v1237 = vunpack.c.h.bf16 %v596
      %v1238 = vunpack.c.l.bf16 %v597
      %v1239 = vunpack.c.h.bf16 %v597
      %v1240 = vadd.f32 %v1176, %v1177
      %1241 = vadd.xlane.f32.xlu0 %v1240
      %v1242 = vpop.xlane.xlu0 %1241
      %v1243 = vadd.f32 %v1178, %v1179
      %1244 = vadd.xlane.f32.xlu0 %v1243
      %v1245 = vpop.xlane.xlu0 %1244
      %v1246 = vadd.f32 %v1180, %v1181
      %1247 = vadd.xlane.f32.xlu0 %v1246
      %v1248 = vpop.xlane.xlu0 %1247
      %v1249 = vadd.f32 %v1182, %v1183
      %1250 = vadd.xlane.f32.xlu0 %v1249
      %v1251 = vpop.xlane.xlu0 %1250
      %v1252 = vadd.f32 %v1184, %v1185
      %1253 = vadd.xlane.f32.xlu0 %v1252
      %v1254 = vpop.xlane.xlu0 %1253
      %v1255 = vadd.f32 %v1186, %v1187
      %1256 = vadd.xlane.f32.xlu0 %v1255
      %v1257 = vpop.xlane.xlu0 %1256
      %v1258 = vadd.f32 %v1188, %v1189
      %1259 = vadd.xlane.f32.xlu0 %v1258
      %v1260 = vpop.xlane.xlu0 %1259
      %v1261 = vadd.f32 %v1190, %v1191
      %1262 = vadd.xlane.f32.xlu0 %v1261
      %v1263 = vpop.xlane.xlu0 %1262
      %v1264 = vadd.f32 %v1192, %v1193
      %1265 = vadd.xlane.f32.xlu0 %v1264
      %v1266 = vpop.xlane.xlu0 %1265
      %v1267 = vadd.f32 %v1194, %v1195
      %1268 = vadd.xlane.f32.xlu0 %v1267
      %v1269 = vpop.xlane.xlu0 %1268
      %v1270 = vadd.f32 %v1196, %v1197
      %1271 = vadd.xlane.f32.xlu0 %v1270
      %v1272 = vpop.xlane.xlu0 %1271
      %v1273 = vadd.f32 %v1198, %v1199
      %1274 = vadd.xlane.f32.xlu0 %v1273
      %v1275 = vpop.xlane.xlu0 %1274
      %v1276 = vadd.f32 %v1200, %v1201
      %1277 = vadd.xlane.f32.xlu0 %v1276
      %v1278 = vpop.xlane.xlu0 %1277
      %v1279 = vadd.f32 %v1202, %v1203
      %1280 = vadd.xlane.f32.xlu0 %v1279
      %v1281 = vpop.xlane.xlu0 %1280
      %v1282 = vadd.f32 %v1204, %v1205
      %1283 = vadd.xlane.f32.xlu0 %v1282
      %v1284 = vpop.xlane.xlu0 %1283
      %v1285 = vadd.f32 %v1206, %v1207
      %1286 = vadd.xlane.f32.xlu0 %v1285
      %v1287 = vpop.xlane.xlu0 %1286
      %v1288 = vadd.f32 %v1208, %v1209
      %1289 = vadd.xlane.f32.xlu0 %v1288
      %v1290 = vpop.xlane.xlu0 %1289
      %v1291 = vadd.f32 %v1210, %v1211
      %1292 = vadd.xlane.f32.xlu0 %v1291
      %v1293 = vpop.xlane.xlu0 %1292
      %v1294 = vadd.f32 %v1212, %v1213
      %1295 = vadd.xlane.f32.xlu0 %v1294
      %v1296 = vpop.xlane.xlu0 %1295
      %v1297 = vadd.f32 %v1214, %v1215
      %1298 = vadd.xlane.f32.xlu0 %v1297
      %v1299 = vpop.xlane.xlu0 %1298
      %v1300 = vadd.f32 %v1216, %v1217
      %1301 = vadd.xlane.f32.xlu0 %v1300
      %v1302 = vpop.xlane.xlu0 %1301
      %v1303 = vadd.f32 %v1218, %v1219
      %1304 = vadd.xlane.f32.xlu0 %v1303
      %v1305 = vpop.xlane.xlu0 %1304
      %v1306 = vadd.f32 %v1220, %v1221
      %1307 = vadd.xlane.f32.xlu0 %v1306
      %v1308 = vpop.xlane.xlu0 %1307
      %v1309 = vadd.f32 %v1222, %v1223
      %1310 = vadd.xlane.f32.xlu0 %v1309
      %v1311 = vpop.xlane.xlu0 %1310
      %v1312 = vadd.f32 %v1224, %v1225
      %1313 = vadd.xlane.f32.xlu0 %v1312
      %v1314 = vpop.xlane.xlu0 %1313
      %v1315 = vadd.f32 %v1226, %v1227
      %1316 = vadd.xlane.f32.xlu0 %v1315
      %v1317 = vpop.xlane.xlu0 %1316
      %v1318 = vadd.f32 %v1228, %v1229
      %1319 = vadd.xlane.f32.xlu0 %v1318
      %v1320 = vpop.xlane.xlu0 %1319
      %v1321 = vadd.f32 %v1230, %v1231
      %1322 = vadd.xlane.f32.xlu0 %v1321
      %v1323 = vpop.xlane.xlu0 %1322
      %v1324 = vadd.f32 %v1232, %v1233
      %1325 = vadd.xlane.f32.xlu0 %v1324
      %v1326 = vpop.xlane.xlu0 %1325
      %v1327 = vadd.f32 %v1234, %v1235
      %1328 = vadd.xlane.f32.xlu0 %v1327
      %v1329 = vpop.xlane.xlu0 %1328
      %v1330 = vadd.f32 %v1236, %v1237
      %1331 = vadd.xlane.f32.xlu0 %v1330
      %v1332 = vpop.xlane.xlu0 %1331
      %v1333 = vadd.f32 %v1238, %v1239
      %1334 = vadd.xlane.f32.xlu0 %v1333
      %v1335 = vpop.xlane.xlu0 %1334
      %v1336 = vadd.f32 %v1144, %v1242
      %v1337 = vadd.f32 %v1145, %v1245
      %v1338 = vadd.f32 %v1146, %v1248
      %v1339 = vadd.f32 %v1147, %v1251
      %v1340 = vadd.f32 %v1148, %v1254
      %v1341 = vadd.f32 %v1149, %v1257
      %v1342 = vadd.f32 %v1150, %v1260
      %v1343 = vadd.f32 %v1151, %v1263
      %v1344 = vadd.f32 %v1152, %v1266
      %v1345 = vadd.f32 %v1153, %v1269
      %v1346 = vadd.f32 %v1154, %v1272
      %v1347 = vadd.f32 %v1155, %v1275
      %v1348 = vadd.f32 %v1156, %v1278
      %v1349 = vadd.f32 %v1157, %v1281
      %v1350 = vadd.f32 %v1158, %v1284
      %v1351 = vadd.f32 %v1159, %v1287
      %v1352 = vadd.f32 %v1160, %v1290
      %v1353 = vadd.f32 %v1161, %v1293
      %v1354 = vadd.f32 %v1162, %v1296
      %v1355 = vadd.f32 %v1163, %v1299
      %v1356 = vadd.f32 %v1164, %v1302
      %v1357 = vadd.f32 %v1165, %v1305
      %v1358 = vadd.f32 %v1166, %v1308
      %v1359 = vadd.f32 %v1167, %v1311
      %v1360 = vadd.f32 %v1168, %v1314
      %v1361 = vadd.f32 %v1169, %v1317
      %v1362 = vadd.f32 %v1170, %v1320
      %v1363 = vadd.f32 %v1171, %v1323
      %v1364 = vadd.f32 %v1172, %v1326
      %v1365 = vadd.f32 %v1173, %v1329
      %v1366 = vadd.f32 %v1174, %v1332
      %v1367 = vadd.f32 %v1175, %v1335
      %vm1368 = vcmask 7168
      %1369 = vst.msk [vmem:[#allocation6] sm:$0xff] %vm1368, %v1336
      %1370 = vst.msk [vmem:[#allocation6 + $0x8] sm:$0xff] %vm1368, %v1337
      %1371 = vst.msk [vmem:[#allocation6 + $0x10] sm:$0xff] %vm1368, %v1338
      %1372 = vst.msk [vmem:[#allocation6 + $0x18] sm:$0xff] %vm1368, %v1339
      %1373 = vst.msk [vmem:[#allocation6 + $0x20] sm:$0xff] %vm1368, %v1340
      %1374 = vst.msk [vmem:[#allocation6 + $0x28] sm:$0xff] %vm1368, %v1341
      %1375 = vst.msk [vmem:[#allocation6 + $0x30] sm:$0xff] %vm1368, %v1342
      %1376 = vst.msk [vmem:[#allocation6 + $0x38] sm:$0xff] %vm1368, %v1343
      %1377 = vst.msk [vmem:[#allocation6 + $0x40] sm:$0xff] %vm1368, %v1344
      %1378 = vst.msk [vmem:[#allocation6 + $0x48] sm:$0xff] %vm1368, %v1345
      %1379 = vst.msk [vmem:[#allocation6 + $0x50] sm:$0xff] %vm1368, %v1346
      %1380 = vst.msk [vmem:[#allocation6 + $0x58] sm:$0xff] %vm1368, %v1347
      %1381 = vst.msk [vmem:[#allocation6 + $0x60] sm:$0xff] %vm1368, %v1348
      %1382 = vst.msk [vmem:[#allocation6 + $0x68] sm:$0xff] %vm1368, %v1349
      %1383 = vst.msk [vmem:[#allocation6 + $0x70] sm:$0xff] %vm1368, %v1350
      %1384 = vst.msk [vmem:[#allocation6 + $0x78] sm:$0xff] %vm1368, %v1351
      %1385 = vst.msk [vmem:[#allocation6 + $0x80] sm:$0xff] %vm1368, %v1352
      %1386 = vst.msk [vmem:[#allocation6 + $0x88] sm:$0xff] %vm1368, %v1353
      %1387 = vst.msk [vmem:[#allocation6 + $0x90] sm:$0xff] %vm1368, %v1354
      %1388 = vst.msk [vmem:[#allocation6 + $0x98] sm:$0xff] %vm1368, %v1355
      %1389 = vst.msk [vmem:[#allocation6 + $0xa0] sm:$0xff] %vm1368, %v1356
      %1390 = vst.msk [vmem:[#allocation6 + $0xa8] sm:$0xff] %vm1368, %v1357
      %1391 = vst.msk [vmem:[#allocation6 + $0xb0] sm:$0xff] %vm1368, %v1358
      %1392 = vst.msk [vmem:[#allocation6 + $0xb8] sm:$0xff] %vm1368, %v1359
      %1393 = vst.msk [vmem:[#allocation6 + $0xc0] sm:$0xff] %vm1368, %v1360
      %1394 = vst.msk [vmem:[#allocation6 + $0xc8] sm:$0xff] %vm1368, %v1361
      %1395 = vst.msk [vmem:[#allocation6 + $0xd0] sm:$0xff] %vm1368, %v1362
      %1396 = vst.msk [vmem:[#allocation6 + $0xd8] sm:$0xff] %vm1368, %v1363
      %1397 = vst.msk [vmem:[#allocation6 + $0xe0] sm:$0xff] %vm1368, %v1364
      %1398 = vst.msk [vmem:[#allocation6 + $0xe8] sm:$0xff] %vm1368, %v1365
      %1399 = vst.msk [vmem:[#allocation6 + $0xf0] sm:$0xff] %vm1368, %v1366
      %1400 = vst.msk [vmem:[#allocation6 + $0xf8] sm:$0xff] %vm1368, %v1367
      %v1401 = vld [vmem:[#allocation7] sm:$0xff]
      %v1402 = vld [vmem:[#allocation7 + $0x8] sm:$0xff]
      %v1403 = vld [vmem:[#allocation7 + $0x10] sm:$0xff]
      %v1404 = vld [vmem:[#allocation7 + $0x18] sm:$0xff]
      %v1405 = vld [vmem:[#allocation7 + $0x20] sm:$0xff]
      %v1406 = vld [vmem:[#allocation7 + $0x28] sm:$0xff]
      %v1407 = vld [vmem:[#allocation7 + $0x30] sm:$0xff]
      %v1408 = vld [vmem:[#allocation7 + $0x38] sm:$0xff]
      %v1409 = vld [vmem:[#allocation7 + $0x40] sm:$0xff]
      %v1410 = vld [vmem:[#allocation7 + $0x48] sm:$0xff]
      %v1411 = vld [vmem:[#allocation7 + $0x50] sm:$0xff]
      %v1412 = vld [vmem:[#allocation7 + $0x58] sm:$0xff]
      %v1413 = vld [vmem:[#allocation7 + $0x60] sm:$0xff]
      %v1414 = vld [vmem:[#allocation7 + $0x68] sm:$0xff]
      %v1415 = vld [vmem:[#allocation7 + $0x70] sm:$0xff]
      %v1416 = vld [vmem:[#allocation7 + $0x78] sm:$0xff]
      %v1417 = vld [vmem:[#allocation7 + $0x80] sm:$0xff]
      %v1418 = vld [vmem:[#allocation7 + $0x88] sm:$0xff]
      %v1419 = vld [vmem:[#allocation7 + $0x90] sm:$0xff]
      %v1420 = vld [vmem:[#allocation7 + $0x98] sm:$0xff]
      %v1421 = vld [vmem:[#allocation7 + $0xa0] sm:$0xff]
      %v1422 = vld [vmem:[#allocation7 + $0xa8] sm:$0xff]
      %v1423 = vld [vmem:[#allocation7 + $0xb0] sm:$0xff]
      %v1424 = vld [vmem:[#allocation7 + $0xb8] sm:$0xff]
      %v1425 = vld [vmem:[#allocation7 + $0xc0] sm:$0xff]
      %v1426 = vld [vmem:[#allocation7 + $0xc8] sm:$0xff]
      %v1427 = vld [vmem:[#allocation7 + $0xd0] sm:$0xff]
      %v1428 = vld [vmem:[#allocation7 + $0xd8] sm:$0xff]
      %v1429 = vld [vmem:[#allocation7 + $0xe0] sm:$0xff]
      %v1430 = vld [vmem:[#allocation7 + $0xe8] sm:$0xff]
      %v1431 = vld [vmem:[#allocation7 + $0xf0] sm:$0xff]
      %v1432 = vld [vmem:[#allocation7 + $0xf8] sm:$0xff]
      %v1433 = vadd.f32 %v502, %v503
      %1434 = vadd.xlane.f32.xlu0 %v1433
      %v1435 = vpop.xlane.xlu0 %1434
      %v1436 = vadd.f32 %v504, %v505
      %1437 = vadd.xlane.f32.xlu0 %v1436
      %v1438 = vpop.xlane.xlu0 %1437
      %v1439 = vadd.f32 %v506, %v507
      %1440 = vadd.xlane.f32.xlu0 %v1439
      %v1441 = vpop.xlane.xlu0 %1440
      %v1442 = vadd.f32 %v508, %v509
      %1443 = vadd.xlane.f32.xlu0 %v1442
      %v1444 = vpop.xlane.xlu0 %1443
      %v1445 = vadd.f32 %v510, %v511
      %1446 = vadd.xlane.f32.xlu0 %v1445
      %v1447 = vpop.xlane.xlu0 %1446
      %v1448 = vadd.f32 %v512, %v513
      %1449 = vadd.xlane.f32.xlu0 %v1448
      %v1450 = vpop.xlane.xlu0 %1449
      %v1451 = vadd.f32 %v514, %v515
      %1452 = vadd.xlane.f32.xlu0 %v1451
      %v1453 = vpop.xlane.xlu0 %1452
      %v1454 = vadd.f32 %v516, %v517
      %1455 = vadd.xlane.f32.xlu0 %v1454
      %v1456 = vpop.xlane.xlu0 %1455
      %v1457 = vadd.f32 %v518, %v519
      %1458 = vadd.xlane.f32.xlu0 %v1457
      %v1459 = vpop.xlane.xlu0 %1458
      %v1460 = vadd.f32 %v520, %v521
      %1461 = vadd.xlane.f32.xlu0 %v1460
      %v1462 = vpop.xlane.xlu0 %1461
      %v1463 = vadd.f32 %v522, %v523
      %1464 = vadd.xlane.f32.xlu0 %v1463
      %v1465 = vpop.xlane.xlu0 %1464
      %v1466 = vadd.f32 %v524, %v525
      %1467 = vadd.xlane.f32.xlu0 %v1466
      %v1468 = vpop.xlane.xlu0 %1467
      %v1469 = vadd.f32 %v526, %v527
      %1470 = vadd.xlane.f32.xlu0 %v1469
      %v1471 = vpop.xlane.xlu0 %1470
      %v1472 = vadd.f32 %v528, %v529
      %1473 = vadd.xlane.f32.xlu0 %v1472
      %v1474 = vpop.xlane.xlu0 %1473
      %v1475 = vadd.f32 %v530, %v531
      %1476 = vadd.xlane.f32.xlu0 %v1475
      %v1477 = vpop.xlane.xlu0 %1476
      %v1478 = vadd.f32 %v532, %v533
      %1479 = vadd.xlane.f32.xlu0 %v1478
      %v1480 = vpop.xlane.xlu0 %1479
      %v1481 = vadd.f32 %v534, %v535
      %1482 = vadd.xlane.f32.xlu0 %v1481
      %v1483 = vpop.xlane.xlu0 %1482
      %v1484 = vadd.f32 %v536, %v537
      %1485 = vadd.xlane.f32.xlu0 %v1484
      %v1486 = vpop.xlane.xlu0 %1485
      %v1487 = vadd.f32 %v538, %v539
      %1488 = vadd.xlane.f32.xlu0 %v1487
      %v1489 = vpop.xlane.xlu0 %1488
      %v1490 = vadd.f32 %v540, %v541
      %1491 = vadd.xlane.f32.xlu0 %v1490
      %v1492 = vpop.xlane.xlu0 %1491
      %v1493 = vadd.f32 %v542, %v543
      %1494 = vadd.xlane.f32.xlu0 %v1493
      %v1495 = vpop.xlane.xlu0 %1494
      %v1496 = vadd.f32 %v544, %v545
      %1497 = vadd.xlane.f32.xlu0 %v1496
      %v1498 = vpop.xlane.xlu0 %1497
      %v1499 = vadd.f32 %v546, %v547
      %1500 = vadd.xlane.f32.xlu0 %v1499
      %v1501 = vpop.xlane.xlu0 %1500
      %v1502 = vadd.f32 %v548, %v549
      %1503 = vadd.xlane.f32.xlu0 %v1502
      %v1504 = vpop.xlane.xlu0 %1503
      %v1505 = vadd.f32 %v550, %v551
      %1506 = vadd.xlane.f32.xlu0 %v1505
      %v1507 = vpop.xlane.xlu0 %1506
      %v1508 = vadd.f32 %v552, %v553
      %1509 = vadd.xlane.f32.xlu0 %v1508
      %v1510 = vpop.xlane.xlu0 %1509
      %v1511 = vadd.f32 %v554, %v555
      %1512 = vadd.xlane.f32.xlu0 %v1511
      %v1513 = vpop.xlane.xlu0 %1512
      %v1514 = vadd.f32 %v556, %v557
      %1515 = vadd.xlane.f32.xlu0 %v1514
      %v1516 = vpop.xlane.xlu0 %1515
      %v1517 = vadd.f32 %v558, %v559
      %1518 = vadd.xlane.f32.xlu0 %v1517
      %v1519 = vpop.xlane.xlu0 %1518
      %v1520 = vadd.f32 %v560, %v561
      %1521 = vadd.xlane.f32.xlu0 %v1520
      %v1522 = vpop.xlane.xlu0 %1521
      %v1523 = vadd.f32 %v562, %v563
      %1524 = vadd.xlane.f32.xlu0 %v1523
      %v1525 = vpop.xlane.xlu0 %1524
      %v1526 = vadd.f32 %v564, %v565
      %1527 = vadd.xlane.f32.xlu0 %v1526
      %v1528 = vpop.xlane.xlu0 %1527
      %v1529 = vadd.f32 %v1401, %v1435
      %v1530 = vadd.f32 %v1402, %v1438
      %v1531 = vadd.f32 %v1403, %v1441
      %v1532 = vadd.f32 %v1404, %v1444
      %v1533 = vadd.f32 %v1405, %v1447
      %v1534 = vadd.f32 %v1406, %v1450
      %v1535 = vadd.f32 %v1407, %v1453
      %v1536 = vadd.f32 %v1408, %v1456
      %v1537 = vadd.f32 %v1409, %v1459
      %v1538 = vadd.f32 %v1410, %v1462
      %v1539 = vadd.f32 %v1411, %v1465
      %v1540 = vadd.f32 %v1412, %v1468
      %v1541 = vadd.f32 %v1413, %v1471
      %v1542 = vadd.f32 %v1414, %v1474
      %v1543 = vadd.f32 %v1415, %v1477
      %v1544 = vadd.f32 %v1416, %v1480
      %v1545 = vadd.f32 %v1417, %v1483
      %v1546 = vadd.f32 %v1418, %v1486
      %v1547 = vadd.f32 %v1419, %v1489
      %v1548 = vadd.f32 %v1420, %v1492
      %v1549 = vadd.f32 %v1421, %v1495
      %v1550 = vadd.f32 %v1422, %v1498
      %v1551 = vadd.f32 %v1423, %v1501
      %v1552 = vadd.f32 %v1424, %v1504
      %v1553 = vadd.f32 %v1425, %v1507
      %v1554 = vadd.f32 %v1426, %v1510
      %v1555 = vadd.f32 %v1427, %v1513
      %v1556 = vadd.f32 %v1428, %v1516
      %v1557 = vadd.f32 %v1429, %v1519
      %v1558 = vadd.f32 %v1430, %v1522
      %v1559 = vadd.f32 %v1431, %v1525
      %v1560 = vadd.f32 %v1432, %v1528
      %1561 = vst.msk [vmem:[#allocation7] sm:$0xff] %vm1368, %v1529
      %1562 = vst.msk [vmem:[#allocation7 + $0x8] sm:$0xff] %vm1368, %v1530
      %1563 = vst.msk [vmem:[#allocation7 + $0x10] sm:$0xff] %vm1368, %v1531
      %1564 = vst.msk [vmem:[#allocation7 + $0x18] sm:$0xff] %vm1368, %v1532
      %1565 = vst.msk [vmem:[#allocation7 + $0x20] sm:$0xff] %vm1368, %v1533
      %1566 = vst.msk [vmem:[#allocation7 + $0x28] sm:$0xff] %vm1368, %v1534
      %1567 = vst.msk [vmem:[#allocation7 + $0x30] sm:$0xff] %vm1368, %v1535
      %1568 = vst.msk [vmem:[#allocation7 + $0x38] sm:$0xff] %vm1368, %v1536
      %1569 = vst.msk [vmem:[#allocation7 + $0x40] sm:$0xff] %vm1368, %v1537
      %1570 = vst.msk [vmem:[#allocation7 + $0x48] sm:$0xff] %vm1368, %v1538
      %1571 = vst.msk [vmem:[#allocation7 + $0x50] sm:$0xff] %vm1368, %v1539
      %1572 = vst.msk [vmem:[#allocation7 + $0x58] sm:$0xff] %vm1368, %v1540
      %1573 = vst.msk [vmem:[#allocation7 + $0x60] sm:$0xff] %vm1368, %v1541
      %1574 = vst.msk [vmem:[#allocation7 + $0x68] sm:$0xff] %vm1368, %v1542
      %1575 = vst.msk [vmem:[#allocation7 + $0x70] sm:$0xff] %vm1368, %v1543
      %1576 = vst.msk [vmem:[#allocation7 + $0x78] sm:$0xff] %vm1368, %v1544
      %1577 = vst.msk [vmem:[#allocation7 + $0x80] sm:$0xff] %vm1368, %v1545
      %1578 = vst.msk [vmem:[#allocation7 + $0x88] sm:$0xff] %vm1368, %v1546
      %1579 = vst.msk [vmem:[#allocation7 + $0x90] sm:$0xff] %vm1368, %v1547
      %1580 = vst.msk [vmem:[#allocation7 + $0x98] sm:$0xff] %vm1368, %v1548
      %1581 = vst.msk [vmem:[#allocation7 + $0xa0] sm:$0xff] %vm1368, %v1549
      %1582 = vst.msk [vmem:[#allocation7 + $0xa8] sm:$0xff] %vm1368, %v1550
      %1583 = vst.msk [vmem:[#allocation7 + $0xb0] sm:$0xff] %vm1368, %v1551
      %1584 = vst.msk [vmem:[#allocation7 + $0xb8] sm:$0xff] %vm1368, %v1552
      %1585 = vst.msk [vmem:[#allocation7 + $0xc0] sm:$0xff] %vm1368, %v1553
      %1586 = vst.msk [vmem:[#allocation7 + $0xc8] sm:$0xff] %vm1368, %v1554
      %1587 = vst.msk [vmem:[#allocation7 + $0xd0] sm:$0xff] %vm1368, %v1555
      %1588 = vst.msk [vmem:[#allocation7 + $0xd8] sm:$0xff] %vm1368, %v1556
      %1589 = vst.msk [vmem:[#allocation7 + $0xe0] sm:$0xff] %vm1368, %v1557
      %1590 = vst.msk [vmem:[#allocation7 + $0xe8] sm:$0xff] %vm1368, %v1558
      %1591 = vst.msk [vmem:[#allocation7 + $0xf0] sm:$0xff] %vm1368, %v1559
      %1592 = vst.msk [vmem:[#allocation7 + $0xf8] sm:$0xff] %vm1368, %v1560
      %v1593 = vld [vmem:[#allocation22] sm:$0xf]
      %v1594 = vld [vmem:[#allocation22 + $0x4] sm:$0xf]
      %v1595 = vld [vmem:[#allocation22 + $0x8] sm:$0xf]
      %v1596 = vld [vmem:[#allocation22 + $0xc] sm:$0xf]
      %v1597 = vld [vmem:[#allocation22 + $0x10] sm:$0xf]
      %v1598 = vld [vmem:[#allocation22 + $0x14] sm:$0xf]
      %v1599 = vld [vmem:[#allocation22 + $0x18] sm:$0xf]
      %v1600 = vld [vmem:[#allocation22 + $0x1c] sm:$0xf]
      %v1601 = vld [vmem:[#allocation22 + $0x20] sm:$0xf]
      %v1602 = vld [vmem:[#allocation22 + $0x24] sm:$0xf]
      %v1603 = vld [vmem:[#allocation22 + $0x28] sm:$0xf]
      %v1604 = vld [vmem:[#allocation22 + $0x2c] sm:$0xf]
      %v1605 = vld [vmem:[#allocation22 + $0x30] sm:$0xf]
      %v1606 = vld [vmem:[#allocation22 + $0x34] sm:$0xf]
      %v1607 = vld [vmem:[#allocation22 + $0x38] sm:$0xf]
      %v1608 = vld [vmem:[#allocation22 + $0x3c] sm:$0xf]
      %v1609 = vld [vmem:[#allocation22 + $0x40] sm:$0xf]
      %v1610 = vld [vmem:[#allocation22 + $0x44] sm:$0xf]
      %v1611 = vld [vmem:[#allocation22 + $0x48] sm:$0xf]
      %v1612 = vld [vmem:[#allocation22 + $0x4c] sm:$0xf]
      %v1613 = vld [vmem:[#allocation22 + $0x50] sm:$0xf]
      %v1614 = vld [vmem:[#allocation22 + $0x54] sm:$0xf]
      %v1615 = vld [vmem:[#allocation22 + $0x58] sm:$0xf]
      %v1616 = vld [vmem:[#allocation22 + $0x5c] sm:$0xf]
      %v1617 = vld [vmem:[#allocation22 + $0x60] sm:$0xf]
      %v1618 = vld [vmem:[#allocation22 + $0x64] sm:$0xf]
      %v1619 = vld [vmem:[#allocation22 + $0x68] sm:$0xf]
      %v1620 = vld [vmem:[#allocation22 + $0x6c] sm:$0xf]
      %v1621 = vld [vmem:[#allocation22 + $0x70] sm:$0xf]
      %v1622 = vld [vmem:[#allocation22 + $0x74] sm:$0xf]
      %v1623 = vld [vmem:[#allocation22 + $0x78] sm:$0xf]
      %v1624 = vld [vmem:[#allocation22 + $0x7c] sm:$0xf]
      %v1625 = vld [vmem:[#allocation21] sm:$0xf]
      %v1626 = vld [vmem:[#allocation21 + $0x4] sm:$0xf]
      %v1627 = vld [vmem:[#allocation21 + $0x8] sm:$0xf]
      %v1628 = vld [vmem:[#allocation21 + $0xc] sm:$0xf]
      %v1629 = vld [vmem:[#allocation21 + $0x10] sm:$0xf]
      %v1630 = vld [vmem:[#allocation21 + $0x14] sm:$0xf]
      %v1631 = vld [vmem:[#allocation21 + $0x18] sm:$0xf]
      %v1632 = vld [vmem:[#allocation21 + $0x1c] sm:$0xf]
      %v1633 = vld [vmem:[#allocation21 + $0x20] sm:$0xf]
      %v1634 = vld [vmem:[#allocation21 + $0x24] sm:$0xf]
      %v1635 = vld [vmem:[#allocation21 + $0x28] sm:$0xf]
      %v1636 = vld [vmem:[#allocation21 + $0x2c] sm:$0xf]
      %v1637 = vld [vmem:[#allocation21 + $0x30] sm:$0xf]
      %v1638 = vld [vmem:[#allocation21 + $0x34] sm:$0xf]
      %v1639 = vld [vmem:[#allocation21 + $0x38] sm:$0xf]
      %v1640 = vld [vmem:[#allocation21 + $0x3c] sm:$0xf]
      %v1641 = vld [vmem:[#allocation21 + $0x40] sm:$0xf]
      %v1642 = vld [vmem:[#allocation21 + $0x44] sm:$0xf]
      %v1643 = vld [vmem:[#allocation21 + $0x48] sm:$0xf]
      %v1644 = vld [vmem:[#allocation21 + $0x4c] sm:$0xf]
      %v1645 = vld [vmem:[#allocation21 + $0x50] sm:$0xf]
      %v1646 = vld [vmem:[#allocation21 + $0x54] sm:$0xf]
      %v1647 = vld [vmem:[#allocation21 + $0x58] sm:$0xf]
      %v1648 = vld [vmem:[#allocation21 + $0x5c] sm:$0xf]
      %v1649 = vld [vmem:[#allocation21 + $0x60] sm:$0xf]
      %v1650 = vld [vmem:[#allocation21 + $0x64] sm:$0xf]
      %v1651 = vld [vmem:[#allocation21 + $0x68] sm:$0xf]
      %v1652 = vld [vmem:[#allocation21 + $0x6c] sm:$0xf]
      %v1653 = vld [vmem:[#allocation21 + $0x70] sm:$0xf]
      %v1654 = vld [vmem:[#allocation21 + $0x74] sm:$0xf]
      %v1655 = vld [vmem:[#allocation21 + $0x78] sm:$0xf]
      %v1656 = vld [vmem:[#allocation21 + $0x7c] sm:$0xf]
      %v1689 = vunpack.c.l.b16 %v1593
      %v1690 = vunpack.c.l.b16 %v1594
      %v1691 = vunpack.c.l.b16 %v1595
      %v1692 = vunpack.c.l.b16 %v1596
      %v1693 = vunpack.c.l.b16 %v1597
      %v1694 = vunpack.c.l.b16 %v1598
      %v1695 = vunpack.c.l.b16 %v1599
      %v1696 = vunpack.c.l.b16 %v1600
      %v1697 = vunpack.c.l.b16 %v1601
      %v1698 = vunpack.c.l.b16 %v1602
      %v1699 = vunpack.c.l.b16 %v1603
      %v1700 = vunpack.c.l.b16 %v1604
      %v1701 = vunpack.c.l.b16 %v1605
      %v1702 = vunpack.c.l.b16 %v1606
      %v1703 = vunpack.c.l.b16 %v1607
      %v1704 = vunpack.c.l.b16 %v1608
      %v1705 = vunpack.c.l.b16 %v1609
      %v1706 = vunpack.c.l.b16 %v1610
      %v1707 = vunpack.c.l.b16 %v1611
      %v1708 = vunpack.c.l.b16 %v1612
      %v1709 = vunpack.c.l.b16 %v1613
      %v1710 = vunpack.c.l.b16 %v1614
      %v1711 = vunpack.c.l.b16 %v1615
      %v1712 = vunpack.c.l.b16 %v1616
      %v1713 = vunpack.c.l.b16 %v1617
      %v1714 = vunpack.c.l.b16 %v1618
      %v1715 = vunpack.c.l.b16 %v1619
      %v1716 = vunpack.c.l.b16 %v1620
      %v1717 = vunpack.c.l.b16 %v1621
      %v1718 = vunpack.c.l.b16 %v1622
      %v1719 = vunpack.c.l.b16 %v1623
      %v1720 = vunpack.c.l.b16 %v1624
      %v1721 = vpack.c.b16 %v1690, %v1689
      %v1722 = vpack.c.b16 %v1692, %v1691
      %v1723 = vpack.c.b16 %v1694, %v1693
      %v1724 = vpack.c.b16 %v1696, %v1695
      %v1725 = vpack.c.b16 %v1698, %v1697
      %v1726 = vpack.c.b16 %v1700, %v1699
      %v1727 = vpack.c.b16 %v1702, %v1701
      %v1728 = vpack.c.b16 %v1704, %v1703
      %v1729 = vpack.c.b16 %v1706, %v1705
      %v1730 = vpack.c.b16 %v1708, %v1707
      %v1731 = vpack.c.b16 %v1710, %v1709
      %v1732 = vpack.c.b16 %v1712, %v1711
      %v1733 = vpack.c.b16 %v1714, %v1713
      %v1734 = vpack.c.b16 %v1716, %v1715
      %v1735 = vpack.c.b16 %v1718, %v1717
      %v1736 = vpack.c.b16 %v1720, %v1719
      %v1769 = vunpack.c.l.b16 %v1625
      %v1770 = vunpack.c.l.b16 %v1626
      %v1771 = vunpack.c.l.b16 %v1627
      %v1772 = vunpack.c.l.b16 %v1628
      %v1773 = vunpack.c.l.b16 %v1629
      %v1774 = vunpack.c.l.b16 %v1630
      %v1775 = vunpack.c.l.b16 %v1631
      %v1776 = vunpack.c.l.b16 %v1632
      %v1777 = vunpack.c.l.b16 %v1633
      %v1778 = vunpack.c.l.b16 %v1634
      %v1779 = vunpack.c.l.b16 %v1635
      %v1780 = vunpack.c.l.b16 %v1636
      %v1781 = vunpack.c.l.b16 %v1637
      %v1782 = vunpack.c.l.b16 %v1638
      %v1783 = vunpack.c.l.b16 %v1639
      %v1784 = vunpack.c.l.b16 %v1640
      %v1785 = vunpack.c.l.b16 %v1641
      %v1786 = vunpack.c.l.b16 %v1642
      %v1787 = vunpack.c.l.b16 %v1643
      %v1788 = vunpack.c.l.b16 %v1644
      %v1789 = vunpack.c.l.b16 %v1645
      %v1790 = vunpack.c.l.b16 %v1646
      %v1791 = vunpack.c.l.b16 %v1647
      %v1792 = vunpack.c.l.b16 %v1648
      %v1793 = vunpack.c.l.b16 %v1649
      %v1794 = vunpack.c.l.b16 %v1650
      %v1795 = vunpack.c.l.b16 %v1651
      %v1796 = vunpack.c.l.b16 %v1652
      %v1797 = vunpack.c.l.b16 %v1653
      %v1798 = vunpack.c.l.b16 %v1654
      %v1799 = vunpack.c.l.b16 %v1655
      %v1800 = vunpack.c.l.b16 %v1656
      %v1801 = vpack.c.b16 %v1770, %v1769
      %v1802 = vpack.c.b16 %v1772, %v1771
      %v1803 = vpack.c.b16 %v1774, %v1773
      %v1804 = vpack.c.b16 %v1776, %v1775
      %v1805 = vpack.c.b16 %v1778, %v1777
      %v1806 = vpack.c.b16 %v1780, %v1779
      %v1807 = vpack.c.b16 %v1782, %v1781
      %v1808 = vpack.c.b16 %v1784, %v1783
      %v1809 = vpack.c.b16 %v1786, %v1785
      %v1810 = vpack.c.b16 %v1788, %v1787
      %v1811 = vpack.c.b16 %v1790, %v1789
      %v1812 = vpack.c.b16 %v1792, %v1791
      %v1813 = vpack.c.b16 %v1794, %v1793
      %v1814 = vpack.c.b16 %v1796, %v1795
      %v1815 = vpack.c.b16 %v1798, %v1797
      %v1816 = vpack.c.b16 %v1800, %v1799
      %v1818 = vsel %vm1111, %v1721, 0
      %v1821 = vsel %vm1111, %v1722, 0
      %v1824 = vsel %vm1111, %v1723, 0
      %v1827 = vsel %vm1111, %v1724, 0
      %v1830 = vsel %vm1111, %v1725, 0
      %v1833 = vsel %vm1111, %v1726, 0
      %v1836 = vsel %vm1111, %v1727, 0
      %v1839 = vsel %vm1111, %v1728, 0
      %v1842 = vsel %vm1111, %v1729, 0
      %v1845 = vsel %vm1111, %v1730, 0
      %v1848 = vsel %vm1111, %v1731, 0
      %v1851 = vsel %vm1111, %v1732, 0
      %v1854 = vsel %vm1111, %v1733, 0
      %v1857 = vsel %vm1111, %v1734, 0
      %v1860 = vsel %vm1111, %v1735, 0
      %v1863 = vsel %vm1111, %v1736, 0
      %v1866 = vsel %vm1111, %v1801, 0
      %v1869 = vsel %vm1111, %v1802, 0
      %v1872 = vsel %vm1111, %v1803, 0
      %v1875 = vsel %vm1111, %v1804, 0
      %v1878 = vsel %vm1111, %v1805, 0
      %v1881 = vsel %vm1111, %v1806, 0
      %v1884 = vsel %vm1111, %v1807, 0
      %v1887 = vsel %vm1111, %v1808, 0
      %v1890 = vsel %vm1111, %v1809, 0
      %v1893 = vsel %vm1111, %v1810, 0
      %v1896 = vsel %vm1111, %v1811, 0
      %v1899 = vsel %vm1111, %v1812, 0
      %v1902 = vsel %vm1111, %v1813, 0
      %v1905 = vsel %vm1111, %v1814, 0
      %v1908 = vsel %vm1111, %v1815, 0
      %v1911 = vsel %vm1111, %v1816, 0
      %1913 = vmatprep.subr.bf16.mxu0 0
      %1914 = vmatpush1.bf16.xpose.msra.mxu0 %v1866
      %1915 = vmatprep.subr.bf16.mxu0 0
      %1916 = vmatpush1.bf16.xpose.msra.mxu0 %v1869
      %1917 = vmatprep.subr.bf16.mxu0 0
      %1918 = vmatpush1.bf16.xpose.msra.mxu0 %v1872
      %1919 = vmatprep.subr.bf16.mxu0 0
      %1920 = vmatpush1.bf16.xpose.msra.mxu0 %v1875
      %1921 = vmatprep.subr.bf16.mxu0 0
      %1922 = vmatpush1.bf16.xpose.msra.mxu0 %v1878
      %1923 = vmatprep.subr.bf16.mxu0 0
      %1924 = vmatpush1.bf16.xpose.msra.mxu0 %v1881
      %1925 = vmatprep.subr.bf16.mxu0 0
      %1926 = vmatpush1.bf16.xpose.msra.mxu0 %v1884
      %1927 = vmatprep.subr.bf16.mxu0 0
      %1928 = vmatpush1.bf16.xpose.msra.mxu0 %v1887
      %1929 = vmatprep.subr.bf16.mxu0 0
      %1930 = vmatpush1.bf16.xpose.msra.mxu0 %v1890
      %1931 = vmatprep.subr.bf16.mxu0 0
      %1932 = vmatpush1.bf16.xpose.msra.mxu0 %v1893
      %1933 = vmatprep.subr.bf16.mxu0 0
      %1934 = vmatpush1.bf16.xpose.msra.mxu0 %v1896
      %1935 = vmatprep.subr.bf16.mxu0 0
      %1936 = vmatpush1.bf16.xpose.msra.mxu0 %v1899
      %1937 = vmatprep.subr.bf16.mxu0 0
      %1938 = vmatpush1.bf16.xpose.msra.mxu0 %v1902
      %1939 = vmatprep.subr.bf16.mxu0 0
      %1940 = vmatpush1.bf16.xpose.msra.mxu0 %v1905
      %1941 = vmatprep.subr.bf16.mxu0 0
      %1942 = vmatpush1.bf16.xpose.msra.mxu0 %v1908
      %1943 = vmatprep.subr.bf16.mxu0 0
      %1944 = vmatpush1.bf16.xpose.msra.mxu0 %v1911
      %1945 = vmatprep.mubr.bf16.mxu0 0
      %1946 = vmatmul.mubr.bf16.gmra.mrb[0].mxu0 %v1818
      %v1947 = vpop.f32.mrb[0].mxu0
      %v1948 = vadd.f32 0.0, %v1947
      %v1949 = vpop.f32.mrb[0].mxu0
      %v1950 = vadd.f32 0.0, %v1949
      %v1951 = vpop.f32.mrb[0].mxu0
      %v1952 = vadd.f32 0.0, %v1951
      %v1953 = vpop.f32.mrb[0].mxu0
      %v1954 = vadd.f32 0.0, %v1953
      %1955 = vmatprep.mubr.bf16.mxu0 0
      %1956 = vmatmul.mubr.bf16.gmra.mrb[0].mxu0 %v1821
      %v1957 = vpop.f32.mrb[0].mxu0
      %v1958 = vadd.f32 0.0, %v1957
      %v1959 = vpop.f32.mrb[0].mxu0
      %v1960 = vadd.f32 0.0, %v1959
      %v1961 = vpop.f32.mrb[0].mxu0
      %v1962 = vadd.f32 0.0, %v1961
      %v1963 = vpop.f32.mrb[0].mxu0
      %v1964 = vadd.f32 0.0, %v1963
      %1965 = vmatprep.mubr.bf16.mxu0 0
      %1966 = vmatmul.mubr.bf16.gmra.mrb[0].mxu0 %v1824
      %v1967 = vpop.f32.mrb[0].mxu0
      %v1968 = vadd.f32 0.0, %v1967
      %v1969 = vpop.f32.mrb[0].mxu0
      %v1970 = vadd.f32 0.0, %v1969
      %v1971 = vpop.f32.mrb[0].mxu0
      %v1972 = vadd.f32 0.0, %v1971
      %v1973 = vpop.f32.mrb[0].mxu0
      %v1974 = vadd.f32 0.0, %v1973
      %1975 = vmatprep.mubr.bf16.mxu0 0
      %1976 = vmatmul.mubr.bf16.gmra.mrb[0].mxu0 %v1827
      %v1977 = vpop.f32.mrb[0].mxu0
      %v1978 = vadd.f32 0.0, %v1977
      %v1979 = vpop.f32.mrb[0].mxu0
      %v1980 = vadd.f32 0.0, %v1979
      %v1981 = vpop.f32.mrb[0].mxu0
      %v1982 = vadd.f32 0.0, %v1981
      %v1983 = vpop.f32.mrb[0].mxu0
      %v1984 = vadd.f32 0.0, %v1983
      %1985 = vmatprep.mubr.bf16.mxu0 0
      %1986 = vmatmul.mubr.bf16.gmra.mrb[0].mxu0 %v1830
      %v1987 = vpop.f32.mrb[0].mxu0
      %v1988 = vadd.f32 0.0, %v1987
      %v1989 = vpop.f32.mrb[0].mxu0
      %v1990 = vadd.f32 0.0, %v1989
      %v1991 = vpop.f32.mrb[0].mxu0
      %v1992 = vadd.f32 0.0, %v1991
      %v1993 = vpop.f32.mrb[0].mxu0
      %v1994 = vadd.f32 0.0, %v1993
      %1995 = vmatprep.mubr.bf16.mxu0 0
      %1996 = vmatmul.mubr.bf16.gmra.mrb[0].mxu0 %v1833
      %v1997 = vpop.f32.mrb[0].mxu0
      %v1998 = vadd.f32 0.0, %v1997
      %v1999 = vpop.f32.mrb[0].mxu0
      %v2000 = vadd.f32 0.0, %v1999
      %v2001 = vpop.f32.mrb[0].mxu0
      %v2002 = vadd.f32 0.0, %v2001
      %v2003 = vpop.f32.mrb[0].mxu0
      %v2004 = vadd.f32 0.0, %v2003
      %2005 = vmatprep.mubr.bf16.mxu0 0
      %2006 = vmatmul.mubr.bf16.gmra.mrb[0].mxu0 %v1836
      %v2007 = vpop.f32.mrb[0].mxu0
      %v2008 = vadd.f32 0.0, %v2007
      %v2009 = vpop.f32.mrb[0].mxu0
      %v2010 = vadd.f32 0.0, %v2009
      %v2011 = vpop.f32.mrb[0].mxu0
      %v2012 = vadd.f32 0.0, %v2011
      %v2013 = vpop.f32.mrb[0].mxu0
      %v2014 = vadd.f32 0.0, %v2013
      %2015 = vmatprep.mubr.bf16.mxu0 0
      %2016 = vmatmul.mubr.bf16.gmra.mrb[0].mxu0 %v1839
      %v2017 = vpop.f32.mrb[0].mxu0
      %v2018 = vadd.f32 0.0, %v2017
      %v2019 = vpop.f32.mrb[0].mxu0
      %v2020 = vadd.f32 0.0, %v2019
      %v2021 = vpop.f32.mrb[0].mxu0
      %v2022 = vadd.f32 0.0, %v2021
      %v2023 = vpop.f32.mrb[0].mxu0
      %v2024 = vadd.f32 0.0, %v2023
      %2025 = vmatprep.mubr.bf16.mxu0 0
      %2026 = vmatmul.mubr.bf16.gmra.mrb[0].mxu0 %v1842
      %v2027 = vpop.f32.mrb[0].mxu0
      %v2028 = vadd.f32 0.0, %v2027
      %v2029 = vpop.f32.mrb[0].mxu0
      %v2030 = vadd.f32 0.0, %v2029
      %v2031 = vpop.f32.mrb[0].mxu0
      %v2032 = vadd.f32 0.0, %v2031
      %v2033 = vpop.f32.mrb[0].mxu0
      %v2034 = vadd.f32 0.0, %v2033
      %2035 = vmatprep.mubr.bf16.mxu0 0
      %2036 = vmatmul.mubr.bf16.gmra.mrb[0].mxu0 %v1845
      %v2037 = vpop.f32.mrb[0].mxu0
      %v2038 = vadd.f32 0.0, %v2037
      %v2039 = vpop.f32.mrb[0].mxu0
      %v2040 = vadd.f32 0.0, %v2039
      %v2041 = vpop.f32.mrb[0].mxu0
      %v2042 = vadd.f32 0.0, %v2041
      %v2043 = vpop.f32.mrb[0].mxu0
      %v2044 = vadd.f32 0.0, %v2043
      %2045 = vmatprep.mubr.bf16.mxu0 0
      %2046 = vmatmul.mubr.bf16.gmra.mrb[0].mxu0 %v1848
      %v2047 = vpop.f32.mrb[0].mxu0
      %v2048 = vadd.f32 0.0, %v2047
      %v2049 = vpop.f32.mrb[0].mxu0
      %v2050 = vadd.f32 0.0, %v2049
      %v2051 = vpop.f32.mrb[0].mxu0
      %v2052 = vadd.f32 0.0, %v2051
      %v2053 = vpop.f32.mrb[0].mxu0
      %v2054 = vadd.f32 0.0, %v2053
      %2055 = vmatprep.mubr.bf16.mxu0 0
      %2056 = vmatmul.mubr.bf16.gmra.mrb[0].mxu0 %v1851
      %v2057 = vpop.f32.mrb[0].mxu0
      %v2058 = vadd.f32 0.0, %v2057
      %v2059 = vpop.f32.mrb[0].mxu0
      %v2060 = vadd.f32 0.0, %v2059
      %v2061 = vpop.f32.mrb[0].mxu0
      %v2062 = vadd.f32 0.0, %v2061
      %v2063 = vpop.f32.mrb[0].mxu0
      %v2064 = vadd.f32 0.0, %v2063
      %2065 = vmatprep.mubr.bf16.mxu0 0
      %2066 = vmatmul.mubr.bf16.gmra.mrb[0].mxu0 %v1854
      %v2067 = vpop.f32.mrb[0].mxu0
      %v2068 = vadd.f32 0.0, %v2067
      %v2069 = vpop.f32.mrb[0].mxu0
      %v2070 = vadd.f32 0.0, %v2069
      %v2071 = vpop.f32.mrb[0].mxu0
      %v2072 = vadd.f32 0.0, %v2071
      %v2073 = vpop.f32.mrb[0].mxu0
      %v2074 = vadd.f32 0.0, %v2073
      %2075 = vmatprep.mubr.bf16.mxu0 0
      %2076 = vmatmul.mubr.bf16.gmra.mrb[0].mxu0 %v1857
      %v2077 = vpop.f32.mrb[0].mxu0
      %v2078 = vadd.f32 0.0, %v2077
      %v2079 = vpop.f32.mrb[0].mxu0
      %v2080 = vadd.f32 0.0, %v2079
      %v2081 = vpop.f32.mrb[0].mxu0
      %v2082 = vadd.f32 0.0, %v2081
      %v2083 = vpop.f32.mrb[0].mxu0
      %v2084 = vadd.f32 0.0, %v2083
      %2085 = vmatprep.mubr.bf16.mxu0 0
      %2086 = vmatmul.mubr.bf16.gmra.mrb[0].mxu0 %v1860
      %v2087 = vpop.f32.mrb[0].mxu0
      %v2088 = vadd.f32 0.0, %v2087
      %v2089 = vpop.f32.mrb[0].mxu0
      %v2090 = vadd.f32 0.0, %v2089
      %v2091 = vpop.f32.mrb[0].mxu0
      %v2092 = vadd.f32 0.0, %v2091
      %v2093 = vpop.f32.mrb[0].mxu0
      %v2094 = vadd.f32 0.0, %v2093
      %2095 = vmatprep.mubr.bf16.mxu0 0
      %2096 = vmatmul.mubr.bf16.gmra.mrb[0].mxu0 %v1863
      %v2097 = vpop.f32.mrb[0].mxu0
      %v2098 = vadd.f32 0.0, %v2097
      %v2099 = vpop.f32.mrb[0].mxu0
      %v2100 = vadd.f32 0.0, %v2099
      %v2101 = vpop.f32.mrb[0].mxu0
      %v2102 = vadd.f32 0.0, %v2101
      %v2103 = vpop.f32.mrb[0].mxu0
      %v2104 = vadd.f32 0.0, %v2103
      %2105 = vdwg.mxu0
      %v2106 = vmul.f32 %v1948, 1.442695
      %v2107 = vpow.pop %v2106
      %v2108 = vmul.f32 %v1950, 1.442695
      %v2109 = vpow.pop %v2108
      %v2110 = vmul.f32 %v1952, 1.442695
      %v2111 = vpow.pop %v2110
      %v2112 = vmul.f32 %v1954, 1.442695
      %v2113 = vpow.pop %v2112
      %v2114 = vmul.f32 %v1958, 1.442695
      %v2115 = vpow.pop %v2114
      %v2116 = vmul.f32 %v1960, 1.442695
      %v2117 = vpow.pop %v2116
      %v2118 = vmul.f32 %v1962, 1.442695
      %v2119 = vpow.pop %v2118
      %v2120 = vmul.f32 %v1964, 1.442695
      %v2121 = vpow.pop %v2120
      %v2122 = vmul.f32 %v1968, 1.442695
      %v2123 = vpow.pop %v2122
      %v2124 = vmul.f32 %v1970, 1.442695
      %v2125 = vpow.pop %v2124
      %v2126 = vmul.f32 %v1972, 1.442695
      %v2127 = vpow.pop %v2126
      %v2128 = vmul.f32 %v1974, 1.442695
      %v2129 = vpow.pop %v2128
      %v2130 = vmul.f32 %v1978, 1.442695
      %v2131 = vpow.pop %v2130
      %v2132 = vmul.f32 %v1980, 1.442695
      %v2133 = vpow.pop %v2132
      %v2134 = vmul.f32 %v1982, 1.442695
      %v2135 = vpow.pop %v2134
      %v2136 = vmul.f32 %v1984, 1.442695
      %v2137 = vpow.pop %v2136
      %v2138 = vmul.f32 %v1988, 1.442695
      %v2139 = vpow.pop %v2138
      %v2140 = vmul.f32 %v1990, 1.442695
      %v2141 = vpow.pop %v2140
      %v2142 = vmul.f32 %v1992, 1.442695
      %v2143 = vpow.pop %v2142
      %v2144 = vmul.f32 %v1994, 1.442695
      %v2145 = vpow.pop %v2144
      %v2146 = vmul.f32 %v1998, 1.442695
      %v2147 = vpow.pop %v2146
      %v2148 = vmul.f32 %v2000, 1.442695
      %v2149 = vpow.pop %v2148
      %v2150 = vmul.f32 %v2002, 1.442695
      %v2151 = vpow.pop %v2150
      %v2152 = vmul.f32 %v2004, 1.442695
      %v2153 = vpow.pop %v2152
      %v2154 = vmul.f32 %v2008, 1.442695
      %v2155 = vpow.pop %v2154
      %v2156 = vmul.f32 %v2010, 1.442695
      %v2157 = vpow.pop %v2156
      %v2158 = vmul.f32 %v2012, 1.442695
      %v2159 = vpow.pop %v2158
      %v2160 = vmul.f32 %v2014, 1.442695
      %v2161 = vpow.pop %v2160
      %v2162 = vmul.f32 %v2018, 1.442695
      %v2163 = vpow.pop %v2162
      %v2164 = vmul.f32 %v2020, 1.442695
      %v2165 = vpow.pop %v2164
      %v2166 = vmul.f32 %v2022, 1.442695
      %v2167 = vpow.pop %v2166
      %v2168 = vmul.f32 %v2024, 1.442695
      %v2169 = vpow.pop %v2168
      %v2170 = vmul.f32 %v2028, 1.442695
      %v2171 = vpow.pop %v2170
      %v2172 = vmul.f32 %v2030, 1.442695
      %v2173 = vpow.pop %v2172
      %v2174 = vmul.f32 %v2032, 1.442695
      %v2175 = vpow.pop %v2174
      %v2176 = vmul.f32 %v2034, 1.442695
      %v2177 = vpow.pop %v2176
      %v2178 = vmul.f32 %v2038, 1.442695
      %v2179 = vpow.pop %v2178
      %v2180 = vmul.f32 %v2040, 1.442695
      %v2181 = vpow.pop %v2180
      %v2182 = vmul.f32 %v2042, 1.442695
      %v2183 = vpow.pop %v2182
      %v2184 = vmul.f32 %v2044, 1.442695
      %v2185 = vpow.pop %v2184
      %v2186 = vmul.f32 %v2048, 1.442695
      %v2187 = vpow.pop %v2186
      %v2188 = vmul.f32 %v2050, 1.442695
      %v2189 = vpow.pop %v2188
      %v2190 = vmul.f32 %v2052, 1.442695
      %v2191 = vpow.pop %v2190
      %v2192 = vmul.f32 %v2054, 1.442695
      %v2193 = vpow.pop %v2192
      %v2194 = vmul.f32 %v2058, 1.442695
      %v2195 = vpow.pop %v2194
      %v2196 = vmul.f32 %v2060, 1.442695
      %v2197 = vpow.pop %v2196
      %v2198 = vmul.f32 %v2062, 1.442695
      %v2199 = vpow.pop %v2198
      %v2200 = vmul.f32 %v2064, 1.442695
      %v2201 = vpow.pop %v2200
      %v2202 = vmul.f32 %v2068, 1.442695
      %v2203 = vpow.pop %v2202
      %v2204 = vmul.f32 %v2070, 1.442695
      %v2205 = vpow.pop %v2204
      %v2206 = vmul.f32 %v2072, 1.442695
      %v2207 = vpow.pop %v2206
      %v2208 = vmul.f32 %v2074, 1.442695
      %v2209 = vpow.pop %v2208
      %v2210 = vmul.f32 %v2078, 1.442695
      %v2211 = vpow.pop %v2210
      %v2212 = vmul.f32 %v2080, 1.442695
      %v2213 = vpow.pop %v2212
      %v2214 = vmul.f32 %v2082, 1.442695
      %v2215 = vpow.pop %v2214
      %v2216 = vmul.f32 %v2084, 1.442695
      %v2217 = vpow.pop %v2216
      %v2218 = vmul.f32 %v2088, 1.442695
      %v2219 = vpow.pop %v2218
      %v2220 = vmul.f32 %v2090, 1.442695
      %v2221 = vpow.pop %v2220
      %v2222 = vmul.f32 %v2092, 1.442695
      %v2223 = vpow.pop %v2222
      %v2224 = vmul.f32 %v2094, 1.442695
      %v2225 = vpow.pop %v2224
      %v2226 = vmul.f32 %v2098, 1.442695
      %v2227 = vpow.pop %v2226
      %v2228 = vmul.f32 %v2100, 1.442695
      %v2229 = vpow.pop %v2228
      %v2230 = vmul.f32 %v2102, 1.442695
      %v2231 = vpow.pop %v2230
      %v2232 = vmul.f32 %v2104, 1.442695
      %v2233 = vpow.pop %v2232
      %v2234 = vmul.f32 %v502, %v2107
      %v2235 = vmul.f32 %v503, %v2109
      %v2236 = vmul.f32 %v504, %v2111
      %v2237 = vmul.f32 %v505, %v2113
      %v2238 = vmul.f32 %v506, %v2115
      %v2239 = vmul.f32 %v507, %v2117
      %v2240 = vmul.f32 %v508, %v2119
      %v2241 = vmul.f32 %v509, %v2121
      %v2242 = vmul.f32 %v510, %v2123
      %v2243 = vmul.f32 %v511, %v2125
      %v2244 = vmul.f32 %v512, %v2127
      %v2245 = vmul.f32 %v513, %v2129
      %v2246 = vmul.f32 %v514, %v2131
      %v2247 = vmul.f32 %v515, %v2133
      %v2248 = vmul.f32 %v516, %v2135
      %v2249 = vmul.f32 %v517, %v2137
      %v2250 = vmul.f32 %v518, %v2139
      %v2251 = vmul.f32 %v519, %v2141
      %v2252 = vmul.f32 %v520, %v2143
      %v2253 = vmul.f32 %v521, %v2145
      %v2254 = vmul.f32 %v522, %v2147
      %v2255 = vmul.f32 %v523, %v2149
      %v2256 = vmul.f32 %v524, %v2151
      %v2257 = vmul.f32 %v525, %v2153
      %v2258 = vmul.f32 %v526, %v2155
      %v2259 = vmul.f32 %v527, %v2157
      %v2260 = vmul.f32 %v528, %v2159
      %v2261 = vmul.f32 %v529, %v2161
      %v2262 = vmul.f32 %v530, %v2163
      %v2263 = vmul.f32 %v531, %v2165
      %v2264 = vmul.f32 %v532, %v2167
      %v2265 = vmul.f32 %v533, %v2169
      %v2266 = vmul.f32 %v534, %v2171
      %v2267 = vmul.f32 %v535, %v2173
      %v2268 = vmul.f32 %v536, %v2175
      %v2269 = vmul.f32 %v537, %v2177
      %v2270 = vmul.f32 %v538, %v2179
      %v2271 = vmul.f32 %v539, %v2181
      %v2272 = vmul.f32 %v540, %v2183
      %v2273 = vmul.f32 %v541, %v2185
      %v2274 = vmul.f32 %v542, %v2187
      %v2275 = vmul.f32 %v543, %v2189
      %v2276 = vmul.f32 %v544, %v2191
      %v2277 = vmul.f32 %v545, %v2193
      %v2278 = vmul.f32 %v546, %v2195
      %v2279 = vmul.f32 %v547, %v2197
      %v2280 = vmul.f32 %v548, %v2199
      %v2281 = vmul.f32 %v549, %v2201
      %v2282 = vmul.f32 %v550, %v2203
      %v2283 = vmul.f32 %v551, %v2205
      %v2284 = vmul.f32 %v552, %v2207
      %v2285 = vmul.f32 %v553, %v2209
      %v2286 = vmul.f32 %v554, %v2211
      %v2287 = vmul.f32 %v555, %v2213
      %v2288 = vmul.f32 %v556, %v2215
      %v2289 = vmul.f32 %v557, %v2217
      %v2290 = vmul.f32 %v558, %v2219
      %v2291 = vmul.f32 %v559, %v2221
      %v2292 = vmul.f32 %v560, %v2223
      %v2293 = vmul.f32 %v561, %v2225
      %v2294 = vmul.f32 %v562, %v2227
      %v2295 = vmul.f32 %v563, %v2229
      %v2296 = vmul.f32 %v564, %v2231
      %v2297 = vmul.f32 %v565, %v2233
      %v2298 = vld [vmem:[#allocation8] sm:$0xff]
      %v2299 = vld [vmem:[#allocation8 + $0x8] sm:$0xff]
      %v2300 = vld [vmem:[#allocation8 + $0x10] sm:$0xff]
      %v2301 = vld [vmem:[#allocation8 + $0x18] sm:$0xff]
      %v2302 = vld [vmem:[#allocation8 + $0x20] sm:$0xff]
      %v2303 = vld [vmem:[#allocation8 + $0x28] sm:$0xff]
      %v2304 = vld [vmem:[#allocation8 + $0x30] sm:$0xff]
      %v2305 = vld [vmem:[#allocation8 + $0x38] sm:$0xff]
      %v2306 = vld [vmem:[#allocation8 + $0x40] sm:$0xff]
      %v2307 = vld [vmem:[#allocation8 + $0x48] sm:$0xff]
      %v2308 = vld [vmem:[#allocation8 + $0x50] sm:$0xff]
      %v2309 = vld [vmem:[#allocation8 + $0x58] sm:$0xff]
      %v2310 = vld [vmem:[#allocation8 + $0x60] sm:$0xff]
      %v2311 = vld [vmem:[#allocation8 + $0x68] sm:$0xff]
      %v2312 = vld [vmem:[#allocation8 + $0x70] sm:$0xff]
      %v2313 = vld [vmem:[#allocation8 + $0x78] sm:$0xff]
      %v2314 = vld [vmem:[#allocation8 + $0x80] sm:$0xff]
      %v2315 = vld [vmem:[#allocation8 + $0x88] sm:$0xff]
      %v2316 = vld [vmem:[#allocation8 + $0x90] sm:$0xff]
      %v2317 = vld [vmem:[#allocation8 + $0x98] sm:$0xff]
      %v2318 = vld [vmem:[#allocation8 + $0xa0] sm:$0xff]
      %v2319 = vld [vmem:[#allocation8 + $0xa8] sm:$0xff]
      %v2320 = vld [vmem:[#allocation8 + $0xb0] sm:$0xff]
      %v2321 = vld [vmem:[#allocation8 + $0xb8] sm:$0xff]
      %v2322 = vld [vmem:[#allocation8 + $0xc0] sm:$0xff]
      %v2323 = vld [vmem:[#allocation8 + $0xc8] sm:$0xff]
      %v2324 = vld [vmem:[#allocation8 + $0xd0] sm:$0xff]
      %v2325 = vld [vmem:[#allocation8 + $0xd8] sm:$0xff]
      %v2326 = vld [vmem:[#allocation8 + $0xe0] sm:$0xff]
      %v2327 = vld [vmem:[#allocation8 + $0xe8] sm:$0xff]
      %v2328 = vld [vmem:[#allocation8 + $0xf0] sm:$0xff]
      %v2329 = vld [vmem:[#allocation8 + $0xf8] sm:$0xff]
      %v2330 = vadd.f32 %v2234, %v2235
      %2331 = vadd.xlane.f32.xlu0 %v2330
      %v2332 = vpop.xlane.xlu0 %2331
      %v2333 = vadd.f32 %v2236, %v2237
      %2334 = vadd.xlane.f32.xlu0 %v2333
      %v2335 = vpop.xlane.xlu0 %2334
      %v2336 = vadd.f32 %v2238, %v2239
      %2337 = vadd.xlane.f32.xlu0 %v2336
      %v2338 = vpop.xlane.xlu0 %2337
      %v2339 = vadd.f32 %v2240, %v2241
      %2340 = vadd.xlane.f32.xlu0 %v2339
      %v2341 = vpop.xlane.xlu0 %2340
      %v2342 = vadd.f32 %v2242, %v2243
      %2343 = vadd.xlane.f32.xlu0 %v2342
      %v2344 = vpop.xlane.xlu0 %2343
      %v2345 = vadd.f32 %v2244, %v2245
      %2346 = vadd.xlane.f32.xlu0 %v2345
      %v2347 = vpop.xlane.xlu0 %2346
      %v2348 = vadd.f32 %v2246, %v2247
      %2349 = vadd.xlane.f32.xlu0 %v2348
      %v2350 = vpop.xlane.xlu0 %2349
      %v2351 = vadd.f32 %v2248, %v2249
      %2352 = vadd.xlane.f32.xlu0 %v2351
      %v2353 = vpop.xlane.xlu0 %2352
      %v2354 = vadd.f32 %v2250, %v2251
      %2355 = vadd.xlane.f32.xlu0 %v2354
      %v2356 = vpop.xlane.xlu0 %2355
      %v2357 = vadd.f32 %v2252, %v2253
      %2358 = vadd.xlane.f32.xlu0 %v2357
      %v2359 = vpop.xlane.xlu0 %2358
      %v2360 = vadd.f32 %v2254, %v2255
      %2361 = vadd.xlane.f32.xlu0 %v2360
      %v2362 = vpop.xlane.xlu0 %2361
      %v2363 = vadd.f32 %v2256, %v2257
      %2364 = vadd.xlane.f32.xlu0 %v2363
      %v2365 = vpop.xlane.xlu0 %2364
      %v2366 = vadd.f32 %v2258, %v2259
      %2367 = vadd.xlane.f32.xlu0 %v2366
      %v2368 = vpop.xlane.xlu0 %2367
      %v2369 = vadd.f32 %v2260, %v2261
      %2370 = vadd.xlane.f32.xlu0 %v2369
      %v2371 = vpop.xlane.xlu0 %2370
      %v2372 = vadd.f32 %v2262, %v2263
      %2373 = vadd.xlane.f32.xlu0 %v2372
      %v2374 = vpop.xlane.xlu0 %2373
      %v2375 = vadd.f32 %v2264, %v2265
      %2376 = vadd.xlane.f32.xlu0 %v2375
      %v2377 = vpop.xlane.xlu0 %2376
      %v2378 = vadd.f32 %v2266, %v2267
      %2379 = vadd.xlane.f32.xlu0 %v2378
      %v2380 = vpop.xlane.xlu0 %2379
      %v2381 = vadd.f32 %v2268, %v2269
      %2382 = vadd.xlane.f32.xlu0 %v2381
      %v2383 = vpop.xlane.xlu0 %2382
      %v2384 = vadd.f32 %v2270, %v2271
      %2385 = vadd.xlane.f32.xlu0 %v2384
      %v2386 = vpop.xlane.xlu0 %2385
      %v2387 = vadd.f32 %v2272, %v2273
      %2388 = vadd.xlane.f32.xlu0 %v2387
      %v2389 = vpop.xlane.xlu0 %2388
      %v2390 = vadd.f32 %v2274, %v2275
      %2391 = vadd.xlane.f32.xlu0 %v2390
      %v2392 = vpop.xlane.xlu0 %2391
      %v2393 = vadd.f32 %v2276, %v2277
      %2394 = vadd.xlane.f32.xlu0 %v2393
      %v2395 = vpop.xlane.xlu0 %2394
      %v2396 = vadd.f32 %v2278, %v2279
      %2397 = vadd.xlane.f32.xlu0 %v2396
      %v2398 = vpop.xlane.xlu0 %2397
      %v2399 = vadd.f32 %v2280, %v2281
      %2400 = vadd.xlane.f32.xlu0 %v2399
      %v2401 = vpop.xlane.xlu0 %2400
      %v2402 = vadd.f32 %v2282, %v2283
      %2403 = vadd.xlane.f32.xlu0 %v2402
      %v2404 = vpop.xlane.xlu0 %2403
      %v2405 = vadd.f32 %v2284, %v2285
      %2406 = vadd.xlane.f32.xlu0 %v2405
      %v2407 = vpop.xlane.xlu0 %2406
      %v2408 = vadd.f32 %v2286, %v2287
      %2409 = vadd.xlane.f32.xlu0 %v2408
      %v2410 = vpop.xlane.xlu0 %2409
      %v2411 = vadd.f32 %v2288, %v2289
      %2412 = vadd.xlane.f32.xlu0 %v2411
      %v2413 = vpop.xlane.xlu0 %2412
      %v2414 = vadd.f32 %v2290, %v2291
      %2415 = vadd.xlane.f32.xlu0 %v2414
      %v2416 = vpop.xlane.xlu0 %2415
      %v2417 = vadd.f32 %v2292, %v2293
      %2418 = vadd.xlane.f32.xlu0 %v2417
      %v2419 = vpop.xlane.xlu0 %2418
      %v2420 = vadd.f32 %v2294, %v2295
      %2421 = vadd.xlane.f32.xlu0 %v2420
      %v2422 = vpop.xlane.xlu0 %2421
      %v2423 = vadd.f32 %v2296, %v2297
      %2424 = vadd.xlane.f32.xlu0 %v2423
      %v2425 = vpop.xlane.xlu0 %2424
      %v2426 = vadd.f32 %v2298, %v2332
      %v2427 = vadd.f32 %v2299, %v2335
      %v2428 = vadd.f32 %v2300, %v2338
      %v2429 = vadd.f32 %v2301, %v2341
      %v2430 = vadd.f32 %v2302, %v2344
      %v2431 = vadd.f32 %v2303, %v2347
      %v2432 = vadd.f32 %v2304, %v2350
      %v2433 = vadd.f32 %v2305, %v2353
      %v2434 = vadd.f32 %v2306, %v2356
      %v2435 = vadd.f32 %v2307, %v2359
      %v2436 = vadd.f32 %v2308, %v2362
      %v2437 = vadd.f32 %v2309, %v2365
      %v2438 = vadd.f32 %v2310, %v2368
      %v2439 = vadd.f32 %v2311, %v2371
      %v2440 = vadd.f32 %v2312, %v2374
      %v2441 = vadd.f32 %v2313, %v2377
      %v2442 = vadd.f32 %v2314, %v2380
      %v2443 = vadd.f32 %v2315, %v2383
      %v2444 = vadd.f32 %v2316, %v2386
      %v2445 = vadd.f32 %v2317, %v2389
      %v2446 = vadd.f32 %v2318, %v2392
      %v2447 = vadd.f32 %v2319, %v2395
      %v2448 = vadd.f32 %v2320, %v2398
      %v2449 = vadd.f32 %v2321, %v2401
      %v2450 = vadd.f32 %v2322, %v2404
      %v2451 = vadd.f32 %v2323, %v2407
      %v2452 = vadd.f32 %v2324, %v2410
      %v2453 = vadd.f32 %v2325, %v2413
      %v2454 = vadd.f32 %v2326, %v2416
      %v2455 = vadd.f32 %v2327, %v2419
      %v2456 = vadd.f32 %v2328, %v2422
      %v2457 = vadd.f32 %v2329, %v2425
      %2458 = vst.msk [vmem:[#allocation8] sm:$0xff] %vm1368, %v2426
      %2459 = vst.msk [vmem:[#allocation8 + $0x8] sm:$0xff] %vm1368, %v2427
      %2460 = vst.msk [vmem:[#allocation8 + $0x10] sm:$0xff] %vm1368, %v2428
      %2461 = vst.msk [vmem:[#allocation8 + $0x18] sm:$0xff] %vm1368, %v2429
      %2462 = vst.msk [vmem:[#allocation8 + $0x20] sm:$0xff] %vm1368, %v2430
      %2463 = vst.msk [vmem:[#allocation8 + $0x28] sm:$0xff] %vm1368, %v2431
      %2464 = vst.msk [vmem:[#allocation8 + $0x30] sm:$0xff] %vm1368, %v2432
      %2465 = vst.msk [vmem:[#allocation8 + $0x38] sm:$0xff] %vm1368, %v2433
      %2466 = vst.msk [vmem:[#allocation8 + $0x40] sm:$0xff] %vm1368, %v2434
      %2467 = vst.msk [vmem:[#allocation8 + $0x48] sm:$0xff] %vm1368, %v2435
      %2468 = vst.msk [vmem:[#allocation8 + $0x50] sm:$0xff] %vm1368, %v2436
      %2469 = vst.msk [vmem:[#allocation8 + $0x58] sm:$0xff] %vm1368, %v2437
      %2470 = vst.msk [vmem:[#allocation8 + $0x60] sm:$0xff] %vm1368, %v2438
      %2471 = vst.msk [vmem:[#allocation8 + $0x68] sm:$0xff] %vm1368, %v2439
      %2472 = vst.msk [vmem:[#allocation8 + $0x70] sm:$0xff] %vm1368, %v2440
      %2473 = vst.msk [vmem:[#allocation8 + $0x78] sm:$0xff] %vm1368, %v2441
      %2474 = vst.msk [vmem:[#allocation8 + $0x80] sm:$0xff] %vm1368, %v2442
      %2475 = vst.msk [vmem:[#allocation8 + $0x88] sm:$0xff] %vm1368, %v2443
      %2476 = vst.msk [vmem:[#allocation8 + $0x90] sm:$0xff] %vm1368, %v2444
      %2477 = vst.msk [vmem:[#allocation8 + $0x98] sm:$0xff] %vm1368, %v2445
      %2478 = vst.msk [vmem:[#allocation8 + $0xa0] sm:$0xff] %vm1368, %v2446
      %2479 = vst.msk [vmem:[#allocation8 + $0xa8] sm:$0xff] %vm1368, %v2447
      %2480 = vst.msk [vmem:[#allocation8 + $0xb0] sm:$0xff] %vm1368, %v2448
      %2481 = vst.msk [vmem:[#allocation8 + $0xb8] sm:$0xff] %vm1368, %v2449
      %2482 = vst.msk [vmem:[#allocation8 + $0xc0] sm:$0xff] %vm1368, %v2450
      %2483 = vst.msk [vmem:[#allocation8 + $0xc8] sm:$0xff] %vm1368, %v2451
      %2484 = vst.msk [vmem:[#allocation8 + $0xd0] sm:$0xff] %vm1368, %v2452
      %2485 = vst.msk [vmem:[#allocation8 + $0xd8] sm:$0xff] %vm1368, %v2453
      %2486 = vst.msk [vmem:[#allocation8 + $0xe0] sm:$0xff] %vm1368, %v2454
      %2487 = vst.msk [vmem:[#allocation8 + $0xe8] sm:$0xff] %vm1368, %v2455
      %2488 = vst.msk [vmem:[#allocation8 + $0xf0] sm:$0xff] %vm1368, %v2456
      %2489 = vst.msk [vmem:[#allocation8 + $0xf8] sm:$0xff] %vm1368, %v2457
      %v2490 = vld [vmem:[#allocation9] sm:$0xff]
      %v2491 = vld [vmem:[#allocation9 + $0x8] sm:$0xff]
      %v2492 = vld [vmem:[#allocation9 + $0x10] sm:$0xff]
      %v2493 = vld [vmem:[#allocation9 + $0x18] sm:$0xff]
      %v2494 = vld [vmem:[#allocation9 + $0x20] sm:$0xff]
      %v2495 = vld [vmem:[#allocation9 + $0x28] sm:$0xff]
      %v2496 = vld [vmem:[#allocation9 + $0x30] sm:$0xff]
      %v2497 = vld [vmem:[#allocation9 + $0x38] sm:$0xff]
      %v2498 = vld [vmem:[#allocation9 + $0x40] sm:$0xff]
      %v2499 = vld [vmem:[#allocation9 + $0x48] sm:$0xff]
      %v2500 = vld [vmem:[#allocation9 + $0x50] sm:$0xff]
      %v2501 = vld [vmem:[#allocation9 + $0x58] sm:$0xff]
      %v2502 = vld [vmem:[#allocation9 + $0x60] sm:$0xff]
      %v2503 = vld [vmem:[#allocation9 + $0x68] sm:$0xff]
      %v2504 = vld [vmem:[#allocation9 + $0x70] sm:$0xff]
      %v2505 = vld [vmem:[#allocation9 + $0x78] sm:$0xff]
      %v2506 = vld [vmem:[#allocation9 + $0x80] sm:$0xff]
      %v2507 = vld [vmem:[#allocation9 + $0x88] sm:$0xff]
      %v2508 = vld [vmem:[#allocation9 + $0x90] sm:$0xff]
      %v2509 = vld [vmem:[#allocation9 + $0x98] sm:$0xff]
      %v2510 = vld [vmem:[#allocation9 + $0xa0] sm:$0xff]
      %v2511 = vld [vmem:[#allocation9 + $0xa8] sm:$0xff]
      %v2512 = vld [vmem:[#allocation9 + $0xb0] sm:$0xff]
      %v2513 = vld [vmem:[#allocation9 + $0xb8] sm:$0xff]
      %v2514 = vld [vmem:[#allocation9 + $0xc0] sm:$0xff]
      %v2515 = vld [vmem:[#allocation9 + $0xc8] sm:$0xff]
      %v2516 = vld [vmem:[#allocation9 + $0xd0] sm:$0xff]
      %v2517 = vld [vmem:[#allocation9 + $0xd8] sm:$0xff]
      %v2518 = vld [vmem:[#allocation9 + $0xe0] sm:$0xff]
      %v2519 = vld [vmem:[#allocation9 + $0xe8] sm:$0xff]
      %v2520 = vld [vmem:[#allocation9 + $0xf0] sm:$0xff]
      %v2521 = vld [vmem:[#allocation9 + $0xf8] sm:$0xff]
      %v2522 = vpack.c.bf16 %v2236, %v2234
      %v2523 = vpack.c.bf16 %v2237, %v2235
      %v2524 = vpack.c.bf16 %v2240, %v2238
      %v2525 = vpack.c.bf16 %v2241, %v2239
      %v2526 = vpack.c.bf16 %v2244, %v2242
      %v2527 = vpack.c.bf16 %v2245, %v2243
      %v2528 = vpack.c.bf16 %v2248, %v2246
      %v2529 = vpack.c.bf16 %v2249, %v2247
      %v2530 = vpack.c.bf16 %v2252, %v2250
      %v2531 = vpack.c.bf16 %v2253, %v2251
      %v2532 = vpack.c.bf16 %v2256, %v2254
      %v2533 = vpack.c.bf16 %v2257, %v2255
      %v2534 = vpack.c.bf16 %v2260, %v2258
      %v2535 = vpack.c.bf16 %v2261, %v2259
      %v2536 = vpack.c.bf16 %v2264, %v2262
      %v2537 = vpack.c.bf16 %v2265, %v2263
      %v2538 = vpack.c.bf16 %v2268, %v2266
      %v2539 = vpack.c.bf16 %v2269, %v2267
      %v2540 = vpack.c.bf16 %v2272, %v2270
      %v2541 = vpack.c.bf16 %v2273, %v2271
      %v2542 = vpack.c.bf16 %v2276, %v2274
      %v2543 = vpack.c.bf16 %v2277, %v2275
      %v2544 = vpack.c.bf16 %v2280, %v2278
      %v2545 = vpack.c.bf16 %v2281, %v2279
      %v2546 = vpack.c.bf16 %v2284, %v2282
      %v2547 = vpack.c.bf16 %v2285, %v2283
      %v2548 = vpack.c.bf16 %v2288, %v2286
      %v2549 = vpack.c.bf16 %v2289, %v2287
      %v2550 = vpack.c.bf16 %v2292, %v2290
      %v2551 = vpack.c.bf16 %v2293, %v2291
      %v2552 = vpack.c.bf16 %v2296, %v2294
      %v2553 = vpack.c.bf16 %v2297, %v2295
      %2554 = vmatprep.subr.bf16.mxu0 0
      %2555 = vmatpush1.bf16.msra.mxu0 %v886
      %2556 = vmatprep.subr.bf16.mxu0 0
      %2557 = vmatpush1.bf16.msra.mxu0 %v887
      %2558 = vmatprep.subr.bf16.mxu0 0
      %2559 = vmatpush1.bf16.msra.mxu0 %v888
      %2560 = vmatprep.subr.bf16.mxu0 0
      %2561 = vmatpush1.bf16.msra.mxu0 %v889
      %2562 = vmatprep.subr.bf16.mxu0 0
      %2563 = vmatpush1.bf16.msra.mxu0 %v890
      %2564 = vmatprep.subr.bf16.mxu0 0
      %2565 = vmatpush1.bf16.msra.mxu0 %v891
      %2566 = vmatprep.subr.bf16.mxu0 0
      %2567 = vmatpush1.bf16.msra.mxu0 %v892
      %2568 = vmatprep.subr.bf16.mxu0 0
      %2569 = vmatpush1.bf16.msra.mxu0 %v893
      %2570 = vmatprep.subr.bf16.mxu0 0
      %2571 = vmatpush1.bf16.msra.mxu0 %v894
      %2572 = vmatprep.subr.bf16.mxu0 0
      %2573 = vmatpush1.bf16.msra.mxu0 %v895
      %2574 = vmatprep.subr.bf16.mxu0 0
      %2575 = vmatpush1.bf16.msra.mxu0 %v896
      %2576 = vmatprep.subr.bf16.mxu0 0
      %2577 = vmatpush1.bf16.msra.mxu0 %v897
      %2578 = vmatprep.subr.bf16.mxu0 0
      %2579 = vmatpush1.bf16.msra.mxu0 %v898
      %2580 = vmatprep.subr.bf16.mxu0 0
      %2581 = vmatpush1.bf16.msra.mxu0 %v899
      %2582 = vmatprep.subr.bf16.mxu0 0
      %2583 = vmatpush1.bf16.msra.mxu0 %v900
      %2584 = vmatprep.subr.bf16.mxu0 0
      %2585 = vmatpush1.bf16.msra.mxu0 %v901
      %2586 = vmatprep.mubr.bf16.mxu0 %v2523
      %2587 = vmatmul.mubr.bf16.gmra.mrb[0].mxu0 %v2522
      %v2588 = vpop.f32.mrb[0].mxu0
      %v2589 = vadd.f32 0.0, %v2588
      %v2590 = vpop.f32.mrb[0].mxu0
      %v2591 = vpop.f32.mrb[0].mxu0
      %v2592 = vadd.f32 0.0, %v2591
      %v2593 = vpop.f32.mrb[0].mxu0
      %2594 = vmatprep.mubr.bf16.mxu0 %v2525
      %2595 = vmatmul.mubr.bf16.gmra.mrb[0].mxu0 %v2524
      %v2596 = vpop.f32.mrb[0].mxu0
      %v2597 = vadd.f32 0.0, %v2596
      %v2598 = vpop.f32.mrb[0].mxu0
      %v2599 = vpop.f32.mrb[0].mxu0
      %v2600 = vadd.f32 0.0, %v2599
      %v2601 = vpop.f32.mrb[0].mxu0
      %2602 = vmatprep.mubr.bf16.mxu0 %v2527
      %2603 = vmatmul.mubr.bf16.gmra.mrb[0].mxu0 %v2526
      %v2604 = vpop.f32.mrb[0].mxu0
      %v2605 = vadd.f32 0.0, %v2604
      %v2606 = vpop.f32.mrb[0].mxu0
      %v2607 = vpop.f32.mrb[0].mxu0
      %v2608 = vadd.f32 0.0, %v2607
      %v2609 = vpop.f32.mrb[0].mxu0
      %2610 = vmatprep.mubr.bf16.mxu0 %v2529
      %2611 = vmatmul.mubr.bf16.gmra.mrb[0].mxu0 %v2528
      %v2612 = vpop.f32.mrb[0].mxu0
      %v2613 = vadd.f32 0.0, %v2612
      %v2614 = vpop.f32.mrb[0].mxu0
      %v2615 = vpop.f32.mrb[0].mxu0
      %v2616 = vadd.f32 0.0, %v2615
      %v2617 = vpop.f32.mrb[0].mxu0
      %2618 = vmatprep.mubr.bf16.mxu0 %v2531
      %2619 = vmatmul.mubr.bf16.gmra.mrb[0].mxu0 %v2530
      %v2620 = vpop.f32.mrb[0].mxu0
      %v2621 = vadd.f32 0.0, %v2620
      %v2622 = vpop.f32.mrb[0].mxu0
      %v2623 = vpop.f32.mrb[0].mxu0
      %v2624 = vadd.f32 0.0, %v2623
      %v2625 = vpop.f32.mrb[0].mxu0
      %2626 = vmatprep.mubr.bf16.mxu0 %v2533
      %2627 = vmatmul.mubr.bf16.gmra.mrb[0].mxu0 %v2532
      %v2628 = vpop.f32.mrb[0].mxu0
      %v2629 = vadd.f32 0.0, %v2628
      %v2630 = vpop.f32.mrb[0].mxu0
      %v2631 = vpop.f32.mrb[0].mxu0
      %v2632 = vadd.f32 0.0, %v2631
      %v2633 = vpop.f32.mrb[0].mxu0
      %2634 = vmatprep.mubr.bf16.mxu0 %v2535
      %2635 = vmatmul.mubr.bf16.gmra.mrb[0].mxu0 %v2534
      %v2636 = vpop.f32.mrb[0].mxu0
      %v2637 = vadd.f32 0.0, %v2636
      %v2638 = vpop.f32.mrb[0].mxu0
      %v2639 = vpop.f32.mrb[0].mxu0
      %v2640 = vadd.f32 0.0, %v2639
      %v2641 = vpop.f32.mrb[0].mxu0
      %2642 = vmatprep.mubr.bf16.mxu0 %v2537
      %2643 = vmatmul.mubr.bf16.gmra.mrb[0].mxu0 %v2536
      %v2644 = vpop.f32.mrb[0].mxu0
      %v2645 = vadd.f32 0.0, %v2644
      %v2646 = vpop.f32.mrb[0].mxu0
      %v2647 = vpop.f32.mrb[0].mxu0
      %v2648 = vadd.f32 0.0, %v2647
      %v2649 = vpop.f32.mrb[0].mxu0
      %2650 = vmatprep.mubr.bf16.mxu0 %v2539
      %2651 = vmatmul.mubr.bf16.gmra.mrb[0].mxu0 %v2538
      %v2652 = vpop.f32.mrb[0].mxu0
      %v2653 = vadd.f32 0.0, %v2652
      %v2654 = vpop.f32.mrb[0].mxu0
      %v2655 = vpop.f32.mrb[0].mxu0
      %v2656 = vadd.f32 0.0, %v2655
      %v2657 = vpop.f32.mrb[0].mxu0
      %2658 = vmatprep.mubr.bf16.mxu0 %v2541
      %2659 = vmatmul.mubr.bf16.gmra.mrb[0].mxu0 %v2540
      %v2660 = vpop.f32.mrb[0].mxu0
      %v2661 = vadd.f32 0.0, %v2660
      %v2662 = vpop.f32.mrb[0].mxu0
      %v2663 = vpop.f32.mrb[0].mxu0
      %v2664 = vadd.f32 0.0, %v2663
      %v2665 = vpop.f32.mrb[0].mxu0
      %2666 = vmatprep.mubr.bf16.mxu0 %v2543
      %2667 = vmatmul.mubr.bf16.gmra.mrb[0].mxu0 %v2542
      %v2668 = vpop.f32.mrb[0].mxu0
      %v2669 = vadd.f32 0.0, %v2668
      %v2670 = vpop.f32.mrb[0].mxu0
      %v2671 = vpop.f32.mrb[0].mxu0
      %v2672 = vadd.f32 0.0, %v2671
      %v2673 = vpop.f32.mrb[0].mxu0
      %2674 = vmatprep.mubr.bf16.mxu0 %v2545
      %2675 = vmatmul.mubr.bf16.gmra.mrb[0].mxu0 %v2544
      %v2676 = vpop.f32.mrb[0].mxu0
      %v2677 = vadd.f32 0.0, %v2676
      %v2678 = vpop.f32.mrb[0].mxu0
      %v2679 = vpop.f32.mrb[0].mxu0
      %v2680 = vadd.f32 0.0, %v2679
      %v2681 = vpop.f32.mrb[0].mxu0
      %2682 = vmatprep.mubr.bf16.mxu0 %v2547
      %2683 = vmatmul.mubr.bf16.gmra.mrb[0].mxu0 %v2546
      %v2684 = vpop.f32.mrb[0].mxu0
      %v2685 = vadd.f32 0.0, %v2684
      %v2686 = vpop.f32.mrb[0].mxu0
      %v2687 = vpop.f32.mrb[0].mxu0
      %v2688 = vadd.f32 0.0, %v2687
      %v2689 = vpop.f32.mrb[0].mxu0
      %2690 = vmatprep.mubr.bf16.mxu0 %v2549
      %2691 = vmatmul.mubr.bf16.gmra.mrb[0].mxu0 %v2548
      %v2692 = vpop.f32.mrb[0].mxu0
      %v2693 = vadd.f32 0.0, %v2692
      %v2694 = vpop.f32.mrb[0].mxu0
      %v2695 = vpop.f32.mrb[0].mxu0
      %v2696 = vadd.f32 0.0, %v2695
      %v2697 = vpop.f32.mrb[0].mxu0
      %2698 = vmatprep.mubr.bf16.mxu0 %v2551
      %2699 = vmatmul.mubr.bf16.gmra.mrb[0].mxu0 %v2550
      %v2700 = vpop.f32.mrb[0].mxu0
      %v2701 = vadd.f32 0.0, %v2700
      %v2702 = vpop.f32.mrb[0].mxu0
      %v2703 = vpop.f32.mrb[0].mxu0
      %v2704 = vadd.f32 0.0, %v2703
      %v2705 = vpop.f32.mrb[0].mxu0
      %2706 = vmatprep.mubr.bf16.mxu0 %v2553
      %2707 = vmatmul.mubr.bf16.gmra.mrb[0].mxu0 %v2552
      %v2708 = vpop.f32.mrb[0].mxu0
      %v2709 = vadd.f32 0.0, %v2708
      %v2710 = vpop.f32.mrb[0].mxu0
      %v2711 = vpop.f32.mrb[0].mxu0
      %v2712 = vadd.f32 0.0, %v2711
      %v2713 = vpop.f32.mrb[0].mxu0
      %2714 = vdwg.mxu0
      %v2715 = vadd.f32 %v2490, %v2589
      %v2716 = vadd.f32 %v2491, %v2592
      %v2717 = vadd.f32 %v2492, %v2597
      %v2718 = vadd.f32 %v2493, %v2600
      %v2719 = vadd.f32 %v2494, %v2605
      %v2720 = vadd.f32 %v2495, %v2608
      %v2721 = vadd.f32 %v2496, %v2613
      %v2722 = vadd.f32 %v2497, %v2616
      %v2723 = vadd.f32 %v2498, %v2621
      %v2724 = vadd.f32 %v2499, %v2624
      %v2725 = vadd.f32 %v2500, %v2629
      %v2726 = vadd.f32 %v2501, %v2632
      %v2727 = vadd.f32 %v2502, %v2637
      %v2728 = vadd.f32 %v2503, %v2640
      %v2729 = vadd.f32 %v2504, %v2645
      %v2730 = vadd.f32 %v2505, %v2648
      %v2731 = vadd.f32 %v2506, %v2653
      %v2732 = vadd.f32 %v2507, %v2656
      %v2733 = vadd.f32 %v2508, %v2661
      %v2734 = vadd.f32 %v2509, %v2664
      %v2735 = vadd.f32 %v2510, %v2669
      %v2736 = vadd.f32 %v2511, %v2672
      %v2737 = vadd.f32 %v2512, %v2677
      %v2738 = vadd.f32 %v2513, %v2680
      %v2739 = vadd.f32 %v2514, %v2685
      %v2740 = vadd.f32 %v2515, %v2688
      %v2741 = vadd.f32 %v2516, %v2693
      %v2742 = vadd.f32 %v2517, %v2696
      %v2743 = vadd.f32 %v2518, %v2701
      %v2744 = vadd.f32 %v2519, %v2704
      %v2745 = vadd.f32 %v2520, %v2709
      %v2746 = vadd.f32 %v2521, %v2712
      %2747 = vst.msk [vmem:[#allocation9] sm:$0xff] %vm1111, %v2715
      %2748 = vst.msk [vmem:[#allocation9 + $0x8] sm:$0xff] %vm1111, %v2716
      %2749 = vst.msk [vmem:[#allocation9 + $0x10] sm:$0xff] %vm1111, %v2717
      %2750 = vst.msk [vmem:[#allocation9 + $0x18] sm:$0xff] %vm1111, %v2718
      %2751 = vst.msk [vmem:[#allocation9 + $0x20] sm:$0xff] %vm1111, %v2719
      %2752 = vst.msk [vmem:[#allocation9 + $0x28] sm:$0xff] %vm1111, %v2720
      %2753 = vst.msk [vmem:[#allocation9 + $0x30] sm:$0xff] %vm1111, %v2721
      %2754 = vst.msk [vmem:[#allocation9 + $0x38] sm:$0xff] %vm1111, %v2722
      %2755 = vst.msk [vmem:[#allocation9 + $0x40] sm:$0xff] %vm1111, %v2723
      %2756 = vst.msk [vmem:[#allocation9 + $0x48] sm:$0xff] %vm1111, %v2724
      %2757 = vst.msk [vmem:[#allocation9 + $0x50] sm:$0xff] %vm1111, %v2725
      %2758 = vst.msk [vmem:[#allocation9 + $0x58] sm:$0xff] %vm1111, %v2726
      %2759 = vst.msk [vmem:[#allocation9 + $0x60] sm:$0xff] %vm1111, %v2727
      %2760 = vst.msk [vmem:[#allocation9 + $0x68] sm:$0xff] %vm1111, %v2728
      %2761 = vst.msk [vmem:[#allocation9 + $0x70] sm:$0xff] %vm1111, %v2729
      %2762 = vst.msk [vmem:[#allocation9 + $0x78] sm:$0xff] %vm1111, %v2730
      %2763 = vst.msk [vmem:[#allocation9 + $0x80] sm:$0xff] %vm1111, %v2731
      %2764 = vst.msk [vmem:[#allocation9 + $0x88] sm:$0xff] %vm1111, %v2732
      %2765 = vst.msk [vmem:[#allocation9 + $0x90] sm:$0xff] %vm1111, %v2733
      %2766 = vst.msk [vmem:[#allocation9 + $0x98] sm:$0xff] %vm1111, %v2734
      %2767 = vst.msk [vmem:[#allocation9 + $0xa0] sm:$0xff] %vm1111, %v2735
      %2768 = vst.msk [vmem:[#allocation9 + $0xa8] sm:$0xff] %vm1111, %v2736
      %2769 = vst.msk [vmem:[#allocation9 + $0xb0] sm:$0xff] %vm1111, %v2737
      %2770 = vst.msk [vmem:[#allocation9 + $0xb8] sm:$0xff] %vm1111, %v2738
      %2771 = vst.msk [vmem:[#allocation9 + $0xc0] sm:$0xff] %vm1111, %v2739
      %2772 = vst.msk [vmem:[#allocation9 + $0xc8] sm:$0xff] %vm1111, %v2740
      %2773 = vst.msk [vmem:[#allocation9 + $0xd0] sm:$0xff] %vm1111, %v2741
      %2774 = vst.msk [vmem:[#allocation9 + $0xd8] sm:$0xff] %vm1111, %v2742
      %2775 = vst.msk [vmem:[#allocation9 + $0xe0] sm:$0xff] %vm1111, %v2743
      %2776 = vst.msk [vmem:[#allocation9 + $0xe8] sm:$0xff] %vm1111, %v2744
      %2777 = vst.msk [vmem:[#allocation9 + $0xf0] sm:$0xff] %vm1111, %v2745
      %2778 = vst.msk [vmem:[#allocation9 + $0xf8] sm:$0xff] %vm1111, %v2746
    $region89: #{tpu_custom_call.1} parent=1 // pred_fallthru
      _
    %v2779 = vld [vmem:[#allocation2] sm:$0xff]
    %v2780 = vld [vmem:[#allocation2 + $0x8] sm:$0xff]
    %v2781 = vld [vmem:[#allocation2 + $0x10] sm:$0xff]
    %v2782 = vld [vmem:[#allocation2 + $0x18] sm:$0xff]
    %v2783 = vld [vmem:[#allocation2 + $0x20] sm:$0xff]
    %v2784 = vld [vmem:[#allocation2 + $0x28] sm:$0xff]
    %v2785 = vld [vmem:[#allocation2 + $0x30] sm:$0xff]
    %v2786 = vld [vmem:[#allocation2 + $0x38] sm:$0xff]
    %v2787 = vld [vmem:[#allocation2 + $0x40] sm:$0xff]
    %v2788 = vld [vmem:[#allocation2 + $0x48] sm:$0xff]
    %v2789 = vld [vmem:[#allocation2 + $0x50] sm:$0xff]
    %v2790 = vld [vmem:[#allocation2 + $0x58] sm:$0xff]
    %v2791 = vld [vmem:[#allocation2 + $0x60] sm:$0xff]
    %v2792 = vld [vmem:[#allocation2 + $0x68] sm:$0xff]
    %v2793 = vld [vmem:[#allocation2 + $0x70] sm:$0xff]
    %v2794 = vld [vmem:[#allocation2 + $0x78] sm:$0xff]
    %v2795 = vld [vmem:[#allocation2 + $0x80] sm:$0xff]
    %v2796 = vld [vmem:[#allocation2 + $0x88] sm:$0xff]
    %v2797 = vld [vmem:[#allocation2 + $0x90] sm:$0xff]
    %v2798 = vld [vmem:[#allocation2 + $0x98] sm:$0xff]
    %v2799 = vld [vmem:[#allocation2 + $0xa0] sm:$0xff]
    %v2800 = vld [vmem:[#allocation2 + $0xa8] sm:$0xff]
    %v2801 = vld [vmem:[#allocation2 + $0xb0] sm:$0xff]
    %v2802 = vld [vmem:[#allocation2 + $0xb8] sm:$0xff]
    %v2803 = vld [vmem:[#allocation2 + $0xc0] sm:$0xff]
    %v2804 = vld [vmem:[#allocation2 + $0xc8] sm:$0xff]
    %v2805 = vld [vmem:[#allocation2 + $0xd0] sm:$0xff]
    %v2806 = vld [vmem:[#allocation2 + $0xd8] sm:$0xff]
    %v2807 = vld [vmem:[#allocation2 + $0xe0] sm:$0xff]
    %v2808 = vld [vmem:[#allocation2 + $0xe8] sm:$0xff]
    %v2809 = vld [vmem:[#allocation2 + $0xf0] sm:$0xff]
    %v2810 = vld [vmem:[#allocation2 + $0xf8] sm:$0xff]
    %v2811 = vld [vmem:[#allocation2 + $0x100] sm:$0xff]
    %v2812 = vld [vmem:[#allocation2 + $0x108] sm:$0xff]
    %v2813 = vld [vmem:[#allocation2 + $0x110] sm:$0xff]
    %v2814 = vld [vmem:[#allocation2 + $0x118] sm:$0xff]
    %v2815 = vld [vmem:[#allocation2 + $0x120] sm:$0xff]
    %v2816 = vld [vmem:[#allocation2 + $0x128] sm:$0xff]
    %v2817 = vld [vmem:[#allocation2 + $0x130] sm:$0xff]
    %v2818 = vld [vmem:[#allocation2 + $0x138] sm:$0xff]
    %v2819 = vld [vmem:[#allocation2 + $0x140] sm:$0xff]
    %v2820 = vld [vmem:[#allocation2 + $0x148] sm:$0xff]
    %v2821 = vld [vmem:[#allocation2 + $0x150] sm:$0xff]
    %v2822 = vld [vmem:[#allocation2 + $0x158] sm:$0xff]
    %v2823 = vld [vmem:[#allocation2 + $0x160] sm:$0xff]
    %v2824 = vld [vmem:[#allocation2 + $0x168] sm:$0xff]
    %v2825 = vld [vmem:[#allocation2 + $0x170] sm:$0xff]
    %v2826 = vld [vmem:[#allocation2 + $0x178] sm:$0xff]
    %v2827 = vld [vmem:[#allocation2 + $0x180] sm:$0xff]
    %v2828 = vld [vmem:[#allocation2 + $0x188] sm:$0xff]
    %v2829 = vld [vmem:[#allocation2 + $0x190] sm:$0xff]
    %v2830 = vld [vmem:[#allocation2 + $0x198] sm:$0xff]
    %v2831 = vld [vmem:[#allocation2 + $0x1a0] sm:$0xff]
    %v2832 = vld [vmem:[#allocation2 + $0x1a8] sm:$0xff]
    %v2833 = vld [vmem:[#allocation2 + $0x1b0] sm:$0xff]
    %v2834 = vld [vmem:[#allocation2 + $0x1b8] sm:$0xff]
    %v2835 = vld [vmem:[#allocation2 + $0x1c0] sm:$0xff]
    %v2836 = vld [vmem:[#allocation2 + $0x1c8] sm:$0xff]
    %v2837 = vld [vmem:[#allocation2 + $0x1d0] sm:$0xff]
    %v2838 = vld [vmem:[#allocation2 + $0x1d8] sm:$0xff]
    %v2839 = vld [vmem:[#allocation2 + $0x1e0] sm:$0xff]
    %v2840 = vld [vmem:[#allocation2 + $0x1e8] sm:$0xff]
    %v2841 = vld [vmem:[#allocation2 + $0x1f0] sm:$0xff]
    %v2842 = vld [vmem:[#allocation2 + $0x1f8] sm:$0xff]
    %v2843 = vld [vmem:[#allocation15] sm:$0xff]
    %v2844 = vld [vmem:[#allocation15 + $0x8] sm:$0xff]
    %v2845 = vld [vmem:[#allocation15 + $0x10] sm:$0xff]
    %v2846 = vld [vmem:[#allocation15 + $0x18] sm:$0xff]
    %v2847 = vld [vmem:[#allocation15 + $0x20] sm:$0xff]
    %v2848 = vld [vmem:[#allocation15 + $0x28] sm:$0xff]
    %v2849 = vld [vmem:[#allocation15 + $0x30] sm:$0xff]
    %v2850 = vld [vmem:[#allocation15 + $0x38] sm:$0xff]
    %v2851 = vld [vmem:[#allocation15 + $0x40] sm:$0xff]
    %v2852 = vld [vmem:[#allocation15 + $0x48] sm:$0xff]
    %v2853 = vld [vmem:[#allocation15 + $0x50] sm:$0xff]
    %v2854 = vld [vmem:[#allocation15 + $0x58] sm:$0xff]
    %v2855 = vld [vmem:[#allocation15 + $0x60] sm:$0xff]
    %v2856 = vld [vmem:[#allocation15 + $0x68] sm:$0xff]
    %v2857 = vld [vmem:[#allocation15 + $0x70] sm:$0xff]
    %v2858 = vld [vmem:[#allocation15 + $0x78] sm:$0xff]
    %v2859 = vld [vmem:[#allocation15 + $0x80] sm:$0xff]
    %v2860 = vld [vmem:[#allocation15 + $0x88] sm:$0xff]
    %v2861 = vld [vmem:[#allocation15 + $0x90] sm:$0xff]
    %v2862 = vld [vmem:[#allocation15 + $0x98] sm:$0xff]
    %v2863 = vld [vmem:[#allocation15 + $0xa0] sm:$0xff]
    %v2864 = vld [vmem:[#allocation15 + $0xa8] sm:$0xff]
    %v2865 = vld [vmem:[#allocation15 + $0xb0] sm:$0xff]
    %v2866 = vld [vmem:[#allocation15 + $0xb8] sm:$0xff]
    %v2867 = vld [vmem:[#allocation15 + $0xc0] sm:$0xff]
    %v2868 = vld [vmem:[#allocation15 + $0xc8] sm:$0xff]
    %v2869 = vld [vmem:[#allocation15 + $0xd0] sm:$0xff]
    %v2870 = vld [vmem:[#allocation15 + $0xd8] sm:$0xff]
    %v2871 = vld [vmem:[#allocation15 + $0xe0] sm:$0xff]
    %v2872 = vld [vmem:[#allocation15 + $0xe8] sm:$0xff]
    %v2873 = vld [vmem:[#allocation15 + $0xf0] sm:$0xff]
    %v2874 = vld [vmem:[#allocation15 + $0xf8] sm:$0xff]
    %v2875 = vld [vmem:[#allocation16] sm:$0xff]
    %v2876 = vld [vmem:[#allocation16 + $0x8] sm:$0xff]
    %v2877 = vld [vmem:[#allocation16 + $0x10] sm:$0xff]
    %v2878 = vld [vmem:[#allocation16 + $0x18] sm:$0xff]
    %v2879 = vld [vmem:[#allocation16 + $0x20] sm:$0xff]
    %v2880 = vld [vmem:[#allocation16 + $0x28] sm:$0xff]
    %v2881 = vld [vmem:[#allocation16 + $0x30] sm:$0xff]
    %v2882 = vld [vmem:[#allocation16 + $0x38] sm:$0xff]
    %v2883 = vld [vmem:[#allocation16 + $0x40] sm:$0xff]
    %v2884 = vld [vmem:[#allocation16 + $0x48] sm:$0xff]
    %v2885 = vld [vmem:[#allocation16 + $0x50] sm:$0xff]
    %v2886 = vld [vmem:[#allocation16 + $0x58] sm:$0xff]
    %v2887 = vld [vmem:[#allocation16 + $0x60] sm:$0xff]
    %v2888 = vld [vmem:[#allocation16 + $0x68] sm:$0xff]
    %v2889 = vld [vmem:[#allocation16 + $0x70] sm:$0xff]
    %v2890 = vld [vmem:[#allocation16 + $0x78] sm:$0xff]
    %v2891 = vld [vmem:[#allocation16 + $0x80] sm:$0xff]
    %v2892 = vld [vmem:[#allocation16 + $0x88] sm:$0xff]
    %v2893 = vld [vmem:[#allocation16 + $0x90] sm:$0xff]
    %v2894 = vld [vmem:[#allocation16 + $0x98] sm:$0xff]
    %v2895 = vld [vmem:[#allocation16 + $0xa0] sm:$0xff]
    %v2896 = vld [vmem:[#allocation16 + $0xa8] sm:$0xff]
    %v2897 = vld [vmem:[#allocation16 + $0xb0] sm:$0xff]
    %v2898 = vld [vmem:[#allocation16 + $0xb8] sm:$0xff]
    %v2899 = vld [vmem:[#allocation16 + $0xc0] sm:$0xff]
    %v2900 = vld [vmem:[#allocation16 + $0xc8] sm:$0xff]
    %v2901 = vld [vmem:[#allocation16 + $0xd0] sm:$0xff]
    %v2902 = vld [vmem:[#allocation16 + $0xd8] sm:$0xff]
    %v2903 = vld [vmem:[#allocation16 + $0xe0] sm:$0xff]
    %v2904 = vld [vmem:[#allocation16 + $0xe8] sm:$0xff]
    %v2905 = vld [vmem:[#allocation16 + $0xf0] sm:$0xff]
    %v2906 = vld [vmem:[#allocation16 + $0xf8] sm:$0xff]
    %v2939 = vunpack.c.l.b16 %v2843
    %v2940 = vunpack.c.h.b16 %v2843
    %v2941 = vunpack.c.l.b16 %v2844
    %v2942 = vunpack.c.h.b16 %v2844
    %v2943 = vunpack.c.l.b16 %v2845
    %v2944 = vunpack.c.h.b16 %v2845
    %v2945 = vunpack.c.l.b16 %v2846
    %v2946 = vunpack.c.h.b16 %v2846
    %v2947 = vunpack.c.l.b16 %v2847
    %v2948 = vunpack.c.h.b16 %v2847
    %v2949 = vunpack.c.l.b16 %v2848
    %v2950 = vunpack.c.h.b16 %v2848
    %v2951 = vunpack.c.l.b16 %v2849
    %v2952 = vunpack.c.h.b16 %v2849
    %v2953 = vunpack.c.l.b16 %v2850
    %v2954 = vunpack.c.h.b16 %v2850
    %v2955 = vunpack.c.l.b16 %v2851
    %v2956 = vunpack.c.h.b16 %v2851
    %v2957 = vunpack.c.l.b16 %v2852
    %v2958 = vunpack.c.h.b16 %v2852
    %v2959 = vunpack.c.l.b16 %v2853
    %v2960 = vunpack.c.h.b16 %v2853
    %v2961 = vunpack.c.l.b16 %v2854
    %v2962 = vunpack.c.h.b16 %v2854
    %v2963 = vunpack.c.l.b16 %v2855
    %v2964 = vunpack.c.h.b16 %v2855
    %v2965 = vunpack.c.l.b16 %v2856
    %v2966 = vunpack.c.h.b16 %v2856
    %v2967 = vunpack.c.l.b16 %v2857
    %v2968 = vunpack.c.h.b16 %v2857
    %v2969 = vunpack.c.l.b16 %v2858
    %v2970 = vunpack.c.h.b16 %v2858
    %v2971 = vunpack.c.l.b16 %v2859
    %v2972 = vunpack.c.h.b16 %v2859
    %v2973 = vunpack.c.l.b16 %v2860
    %v2974 = vunpack.c.h.b16 %v2860
    %v2975 = vunpack.c.l.b16 %v2861
    %v2976 = vunpack.c.h.b16 %v2861
    %v2977 = vunpack.c.l.b16 %v2862
    %v2978 = vunpack.c.h.b16 %v2862
    %v2979 = vunpack.c.l.b16 %v2863
    %v2980 = vunpack.c.h.b16 %v2863
    %v2981 = vunpack.c.l.b16 %v2864
    %v2982 = vunpack.c.h.b16 %v2864
    %v2983 = vunpack.c.l.b16 %v2865
    %v2984 = vunpack.c.h.b16 %v2865
    %v2985 = vunpack.c.l.b16 %v2866
    %v2986 = vunpack.c.h.b16 %v2866
    %v2987 = vunpack.c.l.b16 %v2867
    %v2988 = vunpack.c.h.b16 %v2867
    %v2989 = vunpack.c.l.b16 %v2868
    %v2990 = vunpack.c.h.b16 %v2868
    %v2991 = vunpack.c.l.b16 %v2869
    %v2992 = vunpack.c.h.b16 %v2869
    %v2993 = vunpack.c.l.b16 %v2870
    %v2994 = vunpack.c.h.b16 %v2870
    %v2995 = vunpack.c.l.b16 %v2871
    %v2996 = vunpack.c.h.b16 %v2871
    %v2997 = vunpack.c.l.b16 %v2872
    %v2998 = vunpack.c.h.b16 %v2872
    %v2999 = vunpack.c.l.b16 %v2873
    %v3000 = vunpack.c.h.b16 %v2873
    %v3001 = vunpack.c.l.b16 %v2874
    %v3002 = vunpack.c.h.b16 %v2874
    %v3003 = vpack.c.b16 %v2941, %v2939
    %v3004 = vpack.c.b16 %v2942, %v2940
    %v3005 = vpack.c.b16 %v2945, %v2943
    %v3006 = vpack.c.b16 %v2946, %v2944
    %v3007 = vpack.c.b16 %v2949, %v2947
    %v3008 = vpack.c.b16 %v2950, %v2948
    %v3009 = vpack.c.b16 %v2953, %v2951
    %v3010 = vpack.c.b16 %v2954, %v2952
    %v3011 = vpack.c.b16 %v2957, %v2955
    %v3012 = vpack.c.b16 %v2958, %v2956
    %v3013 = vpack.c.b16 %v2961, %v2959
    %v3014 = vpack.c.b16 %v2962, %v2960
    %v3015 = vpack.c.b16 %v2965, %v2963
    %v3016 = vpack.c.b16 %v2966, %v2964
    %v3017 = vpack.c.b16 %v2969, %v2967
    %v3018 = vpack.c.b16 %v2970, %v2968
    %v3019 = vpack.c.b16 %v2973, %v2971
    %v3020 = vpack.c.b16 %v2974, %v2972
    %v3021 = vpack.c.b16 %v2977, %v2975
    %v3022 = vpack.c.b16 %v2978, %v2976
    %v3023 = vpack.c.b16 %v2981, %v2979
    %v3024 = vpack.c.b16 %v2982, %v2980
    %v3025 = vpack.c.b16 %v2985, %v2983
    %v3026 = vpack.c.b16 %v2986, %v2984
    %v3027 = vpack.c.b16 %v2989, %v2987
    %v3028 = vpack.c.b16 %v2990, %v2988
    %v3029 = vpack.c.b16 %v2993, %v2991
    %v3030 = vpack.c.b16 %v2994, %v2992
    %v3031 = vpack.c.b16 %v2997, %v2995
    %v3032 = vpack.c.b16 %v2998, %v2996
    %v3033 = vpack.c.b16 %v3001, %v2999
    %v3034 = vpack.c.b16 %v3002, %v3000
    %v3099 = vunpack.c.l.b16 %v2875
    %v3100 = vunpack.c.h.b16 %v2875
    %v3101 = vunpack.c.l.b16 %v2876
    %v3102 = vunpack.c.h.b16 %v2876
    %v3103 = vunpack.c.l.b16 %v2877
    %v3104 = vunpack.c.h.b16 %v2877
    %v3105 = vunpack.c.l.b16 %v2878
    %v3106 = vunpack.c.h.b16 %v2878
    %v3107 = vunpack.c.l.b16 %v2879
    %v3108 = vunpack.c.h.b16 %v2879
    %v3109 = vunpack.c.l.b16 %v2880
    %v3110 = vunpack.c.h.b16 %v2880
    %v3111 = vunpack.c.l.b16 %v2881
    %v3112 = vunpack.c.h.b16 %v2881
    %v3113 = vunpack.c.l.b16 %v2882
    %v3114 = vunpack.c.h.b16 %v2882
    %v3115 = vunpack.c.l.b16 %v2883
    %v3116 = vunpack.c.h.b16 %v2883
    %v3117 = vunpack.c.l.b16 %v2884
    %v3118 = vunpack.c.h.b16 %v2884
    %v3119 = vunpack.c.l.b16 %v2885
    %v3120 = vunpack.c.h.b16 %v2885
    %v3121 = vunpack.c.l.b16 %v2886
    %v3122 = vunpack.c.h.b16 %v2886
    %v3123 = vunpack.c.l.b16 %v2887
    %v3124 = vunpack.c.h.b16 %v2887
    %v3125 = vunpack.c.l.b16 %v2888
    %v3126 = vunpack.c.h.b16 %v2888
    %v3127 = vunpack.c.l.b16 %v2889
    %v3128 = vunpack.c.h.b16 %v2889
    %v3129 = vunpack.c.l.b16 %v2890
    %v3130 = vunpack.c.h.b16 %v2890
    %v3131 = vunpack.c.l.b16 %v2891
    %v3132 = vunpack.c.h.b16 %v2891
    %v3133 = vunpack.c.l.b16 %v2892
    %v3134 = vunpack.c.h.b16 %v2892
    %v3135 = vunpack.c.l.b16 %v2893
    %v3136 = vunpack.c.h.b16 %v2893
    %v3137 = vunpack.c.l.b16 %v2894
    %v3138 = vunpack.c.h.b16 %v2894
    %v3139 = vunpack.c.l.b16 %v2895
    %v3140 = vunpack.c.h.b16 %v2895
    %v3141 = vunpack.c.l.b16 %v2896
    %v3142 = vunpack.c.h.b16 %v2896
    %v3143 = vunpack.c.l.b16 %v2897
    %v3144 = vunpack.c.h.b16 %v2897
    %v3145 = vunpack.c.l.b16 %v2898
    %v3146 = vunpack.c.h.b16 %v2898
    %v3147 = vunpack.c.l.b16 %v2899
    %v3148 = vunpack.c.h.b16 %v2899
    %v3149 = vunpack.c.l.b16 %v2900
    %v3150 = vunpack.c.h.b16 %v2900
    %v3151 = vunpack.c.l.b16 %v2901
    %v3152 = vunpack.c.h.b16 %v2901
    %v3153 = vunpack.c.l.b16 %v2902
    %v3154 = vunpack.c.h.b16 %v2902
    %v3155 = vunpack.c.l.b16 %v2903
    %v3156 = vunpack.c.h.b16 %v2903
    %v3157 = vunpack.c.l.b16 %v2904
    %v3158 = vunpack.c.h.b16 %v2904
    %v3159 = vunpack.c.l.b16 %v2905
    %v3160 = vunpack.c.h.b16 %v2905
    %v3161 = vunpack.c.l.b16 %v2906
    %v3162 = vunpack.c.h.b16 %v2906
    %v3163 = vpack.c.b16 %v3101, %v3099
    %v3164 = vpack.c.b16 %v3102, %v3100
    %v3165 = vpack.c.b16 %v3105, %v3103
    %v3166 = vpack.c.b16 %v3106, %v3104
    %v3167 = vpack.c.b16 %v3109, %v3107
    %v3168 = vpack.c.b16 %v3110, %v3108
    %v3169 = vpack.c.b16 %v3113, %v3111
    %v3170 = vpack.c.b16 %v3114, %v3112
    %v3171 = vpack.c.b16 %v3117, %v3115
    %v3172 = vpack.c.b16 %v3118, %v3116
    %v3173 = vpack.c.b16 %v3121, %v3119
    %v3174 = vpack.c.b16 %v3122, %v3120
    %v3175 = vpack.c.b16 %v3125, %v3123
    %v3176 = vpack.c.b16 %v3126, %v3124
    %v3177 = vpack.c.b16 %v3129, %v3127
    %v3178 = vpack.c.b16 %v3130, %v3128
    %v3179 = vpack.c.b16 %v3133, %v3131
    %v3180 = vpack.c.b16 %v3134, %v3132
    %v3181 = vpack.c.b16 %v3137, %v3135
    %v3182 = vpack.c.b16 %v3138, %v3136
    %v3183 = vpack.c.b16 %v3141, %v3139
    %v3184 = vpack.c.b16 %v3142, %v3140
    %v3185 = vpack.c.b16 %v3145, %v3143
    %v3186 = vpack.c.b16 %v3146, %v3144
    %v3187 = vpack.c.b16 %v3149, %v3147
    %v3188 = vpack.c.b16 %v3150, %v3148
    %v3189 = vpack.c.b16 %v3153, %v3151
    %v3190 = vpack.c.b16 %v3154, %v3152
    %v3191 = vpack.c.b16 %v3157, %v3155
    %v3192 = vpack.c.b16 %v3158, %v3156
    %v3193 = vpack.c.b16 %v3161, %v3159
    %v3194 = vpack.c.b16 %v3162, %v3160
    %3227 = vmatprep.subr.bf16.mxu0 %v3164
    %3228 = vmatpush1.bf16.msra.mxu0 %v3163
    %3229 = vmatprep.subr.bf16.mxu0 %v3166
    %3230 = vmatpush1.bf16.msra.mxu0 %v3165
    %3231 = vmatprep.subr.bf16.mxu0 %v3168
    %3232 = vmatpush1.bf16.msra.mxu0 %v3167
    %3233 = vmatprep.subr.bf16.mxu0 %v3170
    %3234 = vmatpush1.bf16.msra.mxu0 %v3169
    %3235 = vmatprep.subr.bf16.mxu0 %v3172
    %3236 = vmatpush1.bf16.msra.mxu0 %v3171
    %3237 = vmatprep.subr.bf16.mxu0 %v3174
    %3238 = vmatpush1.bf16.msra.mxu0 %v3173
    %3239 = vmatprep.subr.bf16.mxu0 %v3176
    %3240 = vmatpush1.bf16.msra.mxu0 %v3175
    %3241 = vmatprep.subr.bf16.mxu0 %v3178
    %3242 = vmatpush1.bf16.msra.mxu0 %v3177
    %3243 = vmatprep.subr.bf16.mxu0 %v3180
    %3244 = vmatpush1.bf16.msra.mxu0 %v3179
    %3245 = vmatprep.subr.bf16.mxu0 %v3182
    %3246 = vmatpush1.bf16.msra.mxu0 %v3181
    %3247 = vmatprep.subr.bf16.mxu0 %v3184
    %3248 = vmatpush1.bf16.msra.mxu0 %v3183
    %3249 = vmatprep.subr.bf16.mxu0 %v3186
    %3250 = vmatpush1.bf16.msra.mxu0 %v3185
    %3251 = vmatprep.subr.bf16.mxu0 %v3188
    %3252 = vmatpush1.bf16.msra.mxu0 %v3187
    %3253 = vmatprep.subr.bf16.mxu0 %v3190
    %3254 = vmatpush1.bf16.msra.mxu0 %v3189
    %3255 = vmatprep.subr.bf16.mxu0 %v3192
    %3256 = vmatpush1.bf16.msra.mxu0 %v3191
    %3257 = vmatprep.subr.bf16.mxu0 %v3194
    %3258 = vmatpush1.bf16.msra.mxu0 %v3193
    %3259 = vmatprep.mubr.bf16.mxu0 %v3004
    %3260 = vmatmul.mubr.bf16.gmra.mrb[0].mxu0 %v3003
    %v3261 = vpop.f32.mrb[0].mxu0
    %v3262 = vadd.f32 0.0, %v3261
    %v3263 = vpop.f32.mrb[0].mxu0
    %v3264 = vadd.f32 0.0, %v3263
    %v3265 = vpop.f32.mrb[0].mxu0
    %v3266 = vadd.f32 0.0, %v3265
    %v3267 = vpop.f32.mrb[0].mxu0
    %v3268 = vadd.f32 0.0, %v3267
    %3269 = vmatprep.mubr.bf16.mxu0 %v3006
    %3270 = vmatmul.mubr.bf16.gmra.mrb[0].mxu0 %v3005
    %v3271 = vpop.f32.mrb[0].mxu0
    %v3272 = vadd.f32 0.0, %v3271
    %v3273 = vpop.f32.mrb[0].mxu0
    %v3274 = vadd.f32 0.0, %v3273
    %v3275 = vpop.f32.mrb[0].mxu0
    %v3276 = vadd.f32 0.0, %v3275
    %v3277 = vpop.f32.mrb[0].mxu0
    %v3278 = vadd.f32 0.0, %v3277
    %3279 = vmatprep.mubr.bf16.mxu0 %v3008
    %3280 = vmatmul.mubr.bf16.gmra.mrb[0].mxu0 %v3007
    %v3281 = vpop.f32.mrb[0].mxu0
    %v3282 = vadd.f32 0.0, %v3281
    %v3283 = vpop.f32.mrb[0].mxu0
    %v3284 = vadd.f32 0.0, %v3283
    %v3285 = vpop.f32.mrb[0].mxu0
    %v3286 = vadd.f32 0.0, %v3285
    %v3287 = vpop.f32.mrb[0].mxu0
    %v3288 = vadd.f32 0.0, %v3287
    %3289 = vmatprep.mubr.bf16.mxu0 %v3010
    %3290 = vmatmul.mubr.bf16.gmra.mrb[0].mxu0 %v3009
    %v3291 = vpop.f32.mrb[0].mxu0
    %v3292 = vadd.f32 0.0, %v3291
    %v3293 = vpop.f32.mrb[0].mxu0
    %v3294 = vadd.f32 0.0, %v3293
    %v3295 = vpop.f32.mrb[0].mxu0
    %v3296 = vadd.f32 0.0, %v3295
    %v3297 = vpop.f32.mrb[0].mxu0
    %v3298 = vadd.f32 0.0, %v3297
    %3299 = vmatprep.mubr.bf16.mxu0 %v3012
    %3300 = vmatmul.mubr.bf16.gmra.mrb[0].mxu0 %v3011
    %v3301 = vpop.f32.mrb[0].mxu0
    %v3302 = vadd.f32 0.0, %v3301
    %v3303 = vpop.f32.mrb[0].mxu0
    %v3304 = vadd.f32 0.0, %v3303
    %v3305 = vpop.f32.mrb[0].mxu0
    %v3306 = vadd.f32 0.0, %v3305
    %v3307 = vpop.f32.mrb[0].mxu0
    %v3308 = vadd.f32 0.0, %v3307
    %3309 = vmatprep.mubr.bf16.mxu0 %v3014
    %3310 = vmatmul.mubr.bf16.gmra.mrb[0].mxu0 %v3013
    %v3311 = vpop.f32.mrb[0].mxu0
    %v3312 = vadd.f32 0.0, %v3311
    %v3313 = vpop.f32.mrb[0].mxu0
    %v3314 = vadd.f32 0.0, %v3313
    %v3315 = vpop.f32.mrb[0].mxu0
    %v3316 = vadd.f32 0.0, %v3315
    %v3317 = vpop.f32.mrb[0].mxu0
    %v3318 = vadd.f32 0.0, %v3317
    %3319 = vmatprep.mubr.bf16.mxu0 %v3016
    %3320 = vmatmul.mubr.bf16.gmra.mrb[0].mxu0 %v3015
    %v3321 = vpop.f32.mrb[0].mxu0
    %v3322 = vadd.f32 0.0, %v3321
    %v3323 = vpop.f32.mrb[0].mxu0
    %v3324 = vadd.f32 0.0, %v3323
    %v3325 = vpop.f32.mrb[0].mxu0
    %v3326 = vadd.f32 0.0, %v3325
    %v3327 = vpop.f32.mrb[0].mxu0
    %v3328 = vadd.f32 0.0, %v3327
    %3329 = vmatprep.mubr.bf16.mxu0 %v3018
    %3330 = vmatmul.mubr.bf16.gmra.mrb[0].mxu0 %v3017
    %v3331 = vpop.f32.mrb[0].mxu0
    %v3332 = vadd.f32 0.0, %v3331
    %v3333 = vpop.f32.mrb[0].mxu0
    %v3334 = vadd.f32 0.0, %v3333
    %v3335 = vpop.f32.mrb[0].mxu0
    %v3336 = vadd.f32 0.0, %v3335
    %v3337 = vpop.f32.mrb[0].mxu0
    %v3338 = vadd.f32 0.0, %v3337
    %3339 = vmatprep.mubr.bf16.mxu0 %v3020
    %3340 = vmatmul.mubr.bf16.gmra.mrb[0].mxu0 %v3019
    %v3341 = vpop.f32.mrb[0].mxu0
    %v3342 = vadd.f32 0.0, %v3341
    %v3343 = vpop.f32.mrb[0].mxu0
    %v3344 = vadd.f32 0.0, %v3343
    %v3345 = vpop.f32.mrb[0].mxu0
    %v3346 = vadd.f32 0.0, %v3345
    %v3347 = vpop.f32.mrb[0].mxu0
    %v3348 = vadd.f32 0.0, %v3347
    %3349 = vmatprep.mubr.bf16.mxu0 %v3022
    %3350 = vmatmul.mubr.bf16.gmra.mrb[0].mxu0 %v3021
    %v3351 = vpop.f32.mrb[0].mxu0
    %v3352 = vadd.f32 0.0, %v3351
    %v3353 = vpop.f32.mrb[0].mxu0
    %v3354 = vadd.f32 0.0, %v3353
    %v3355 = vpop.f32.mrb[0].mxu0
    %v3356 = vadd.f32 0.0, %v3355
    %v3357 = vpop.f32.mrb[0].mxu0
    %v3358 = vadd.f32 0.0, %v3357
    %3359 = vmatprep.mubr.bf16.mxu0 %v3024
    %3360 = vmatmul.mubr.bf16.gmra.mrb[0].mxu0 %v3023
    %v3361 = vpop.f32.mrb[0].mxu0
    %v3362 = vadd.f32 0.0, %v3361
    %v3363 = vpop.f32.mrb[0].mxu0
    %v3364 = vadd.f32 0.0, %v3363
    %v3365 = vpop.f32.mrb[0].mxu0
    %v3366 = vadd.f32 0.0, %v3365
    %v3367 = vpop.f32.mrb[0].mxu0
    %v3368 = vadd.f32 0.0, %v3367
    %3369 = vmatprep.mubr.bf16.mxu0 %v3026
    %3370 = vmatmul.mubr.bf16.gmra.mrb[0].mxu0 %v3025
    %v3371 = vpop.f32.mrb[0].mxu0
    %v3372 = vadd.f32 0.0, %v3371
    %v3373 = vpop.f32.mrb[0].mxu0
    %v3374 = vadd.f32 0.0, %v3373
    %v3375 = vpop.f32.mrb[0].mxu0
    %v3376 = vadd.f32 0.0, %v3375
    %v3377 = vpop.f32.mrb[0].mxu0
    %v3378 = vadd.f32 0.0, %v3377
    %3379 = vmatprep.mubr.bf16.mxu0 %v3028
    %3380 = vmatmul.mubr.bf16.gmra.mrb[0].mxu0 %v3027
    %v3381 = vpop.f32.mrb[0].mxu0
    %v3382 = vadd.f32 0.0, %v3381
    %v3383 = vpop.f32.mrb[0].mxu0
    %v3384 = vadd.f32 0.0, %v3383
    %v3385 = vpop.f32.mrb[0].mxu0
    %v3386 = vadd.f32 0.0, %v3385
    %v3387 = vpop.f32.mrb[0].mxu0
    %v3388 = vadd.f32 0.0, %v3387
    %3389 = vmatprep.mubr.bf16.mxu0 %v3030
    %3390 = vmatmul.mubr.bf16.gmra.mrb[0].mxu0 %v3029
    %v3391 = vpop.f32.mrb[0].mxu0
    %v3392 = vadd.f32 0.0, %v3391
    %v3393 = vpop.f32.mrb[0].mxu0
    %v3394 = vadd.f32 0.0, %v3393
    %v3395 = vpop.f32.mrb[0].mxu0
    %v3396 = vadd.f32 0.0, %v3395
    %v3397 = vpop.f32.mrb[0].mxu0
    %v3398 = vadd.f32 0.0, %v3397
    %3399 = vmatprep.mubr.bf16.mxu0 %v3032
    %3400 = vmatmul.mubr.bf16.gmra.mrb[0].mxu0 %v3031
    %v3401 = vpop.f32.mrb[0].mxu0
    %v3402 = vadd.f32 0.0, %v3401
    %v3403 = vpop.f32.mrb[0].mxu0
    %v3404 = vadd.f32 0.0, %v3403
    %v3405 = vpop.f32.mrb[0].mxu0
    %v3406 = vadd.f32 0.0, %v3405
    %v3407 = vpop.f32.mrb[0].mxu0
    %v3408 = vadd.f32 0.0, %v3407
    %3409 = vmatprep.mubr.bf16.mxu0 %v3034
    %3410 = vmatmul.mubr.bf16.gmra.mrb[0].mxu0 %v3033
    %v3411 = vpop.f32.mrb[0].mxu0
    %v3412 = vadd.f32 0.0, %v3411
    %v3413 = vpop.f32.mrb[0].mxu0
    %v3414 = vadd.f32 0.0, %v3413
    %v3415 = vpop.f32.mrb[0].mxu0
    %v3416 = vadd.f32 0.0, %v3415
    %v3417 = vpop.f32.mrb[0].mxu0
    %v3418 = vadd.f32 0.0, %v3417
    %3419 = vdwg.mxu0
    %v3420 = vadd.f32 %v2779, %v3262
    %v3421 = vadd.f32 %v2780, %v3264
    %v3422 = vadd.f32 %v2781, %v3266
    %v3423 = vadd.f32 %v2782, %v3268
    %v3424 = vadd.f32 %v2783, %v3272
    %v3425 = vadd.f32 %v2784, %v3274
    %v3426 = vadd.f32 %v2785, %v3276
    %v3427 = vadd.f32 %v2786, %v3278
    %v3428 = vadd.f32 %v2787, %v3282
    %v3429 = vadd.f32 %v2788, %v3284
    %v3430 = vadd.f32 %v2789, %v3286
    %v3431 = vadd.f32 %v2790, %v3288
    %v3432 = vadd.f32 %v2791, %v3292
    %v3433 = vadd.f32 %v2792, %v3294
    %v3434 = vadd.f32 %v2793, %v3296
    %v3435 = vadd.f32 %v2794, %v3298
    %v3436 = vadd.f32 %v2795, %v3302
    %v3437 = vadd.f32 %v2796, %v3304
    %v3438 = vadd.f32 %v2797, %v3306
    %v3439 = vadd.f32 %v2798, %v3308
    %v3440 = vadd.f32 %v2799, %v3312
    %v3441 = vadd.f32 %v2800, %v3314
    %v3442 = vadd.f32 %v2801, %v3316
    %v3443 = vadd.f32 %v2802, %v3318
    %v3444 = vadd.f32 %v2803, %v3322
    %v3445 = vadd.f32 %v2804, %v3324
    %v3446 = vadd.f32 %v2805, %v3326
    %v3447 = vadd.f32 %v2806, %v3328
    %v3448 = vadd.f32 %v2807, %v3332
    %v3449 = vadd.f32 %v2808, %v3334
    %v3450 = vadd.f32 %v2809, %v3336
    %v3451 = vadd.f32 %v2810, %v3338
    %v3452 = vadd.f32 %v2811, %v3342
    %v3453 = vadd.f32 %v2812, %v3344
    %v3454 = vadd.f32 %v2813, %v3346
    %v3455 = vadd.f32 %v2814, %v3348
    %v3456 = vadd.f32 %v2815, %v3352
    %v3457 = vadd.f32 %v2816, %v3354
    %v3458 = vadd.f32 %v2817, %v3356
    %v3459 = vadd.f32 %v2818, %v3358
    %v3460 = vadd.f32 %v2819, %v3362
    %v3461 = vadd.f32 %v2820, %v3364
    %v3462 = vadd.f32 %v2821, %v3366
    %v3463 = vadd.f32 %v2822, %v3368
    %v3464 = vadd.f32 %v2823, %v3372
    %v3465 = vadd.f32 %v2824, %v3374
    %v3466 = vadd.f32 %v2825, %v3376
    %v3467 = vadd.f32 %v2826, %v3378
    %v3468 = vadd.f32 %v2827, %v3382
    %v3469 = vadd.f32 %v2828, %v3384
    %v3470 = vadd.f32 %v2829, %v3386
    %v3471 = vadd.f32 %v2830, %v3388
    %v3472 = vadd.f32 %v2831, %v3392
    %v3473 = vadd.f32 %v2832, %v3394
    %v3474 = vadd.f32 %v2833, %v3396
    %v3475 = vadd.f32 %v2834, %v3398
    %v3476 = vadd.f32 %v2835, %v3402
    %v3477 = vadd.f32 %v2836, %v3404
    %v3478 = vadd.f32 %v2837, %v3406
    %v3479 = vadd.f32 %v2838, %v3408
    %v3480 = vadd.f32 %v2839, %v3412
    %v3481 = vadd.f32 %v2840, %v3414
    %v3482 = vadd.f32 %v2841, %v3416
    %v3483 = vadd.f32 %v2842, %v3418
    %3484 = vst [vmem:[#allocation2] sm:$0xff] %v3420
    %3485 = vst [vmem:[#allocation2 + $0x8] sm:$0xff] %v3421
    %3486 = vst [vmem:[#allocation2 + $0x10] sm:$0xff] %v3422
    %3487 = vst [vmem:[#allocation2 + $0x18] sm:$0xff] %v3423
    %3488 = vst [vmem:[#allocation2 + $0x20] sm:$0xff] %v3424
    %3489 = vst [vmem:[#allocation2 + $0x28] sm:$0xff] %v3425
    %3490 = vst [vmem:[#allocation2 + $0x30] sm:$0xff] %v3426
    %3491 = vst [vmem:[#allocation2 + $0x38] sm:$0xff] %v3427
    %3492 = vst [vmem:[#allocation2 + $0x40] sm:$0xff] %v3428
    %3493 = vst [vmem:[#allocation2 + $0x48] sm:$0xff] %v3429
    %3494 = vst [vmem:[#allocation2 + $0x50] sm:$0xff] %v3430
    %3495 = vst [vmem:[#allocation2 + $0x58] sm:$0xff] %v3431
    %3496 = vst [vmem:[#allocation2 + $0x60] sm:$0xff] %v3432
    %3497 = vst [vmem:[#allocation2 + $0x68] sm:$0xff] %v3433
    %3498 = vst [vmem:[#allocation2 + $0x70] sm:$0xff] %v3434
    %3499 = vst [vmem:[#allocation2 + $0x78] sm:$0xff] %v3435
    %3500 = vst [vmem:[#allocation2 + $0x80] sm:$0xff] %v3436
    %3501 = vst [vmem:[#allocation2 + $0x88] sm:$0xff] %v3437
    %3502 = vst [vmem:[#allocation2 + $0x90] sm:$0xff] %v3438
    %3503 = vst [vmem:[#allocation2 + $0x98] sm:$0xff] %v3439
    %3504 = vst [vmem:[#allocation2 + $0xa0] sm:$0xff] %v3440
    %3505 = vst [vmem:[#allocation2 + $0xa8] sm:$0xff] %v3441
    %3506 = vst [vmem:[#allocation2 + $0xb0] sm:$0xff] %v3442
    %3507 = vst [vmem:[#allocation2 + $0xb8] sm:$0xff] %v3443
    %3508 = vst [vmem:[#allocation2 + $0xc0] sm:$0xff] %v3444
    %3509 = vst [vmem:[#allocation2 + $0xc8] sm:$0xff] %v3445
    %3510 = vst [vmem:[#allocation2 + $0xd0] sm:$0xff] %v3446
    %3511 = vst [vmem:[#allocation2 + $0xd8] sm:$0xff] %v3447
    %3512 = vst [vmem:[#allocation2 + $0xe0] sm:$0xff] %v3448
    %3513 = vst [vmem:[#allocation2 + $0xe8] sm:$0xff] %v3449
    %3514 = vst [vmem:[#allocation2 + $0xf0] sm:$0xff] %v3450
    %3515 = vst [vmem:[#allocation2 + $0xf8] sm:$0xff] %v3451
    %3516 = vst [vmem:[#allocation2 + $0x100] sm:$0xff] %v3452
    %3517 = vst [vmem:[#allocation2 + $0x108] sm:$0xff] %v3453
    %3518 = vst [vmem:[#allocation2 + $0x110] sm:$0xff] %v3454
    %3519 = vst [vmem:[#allocation2 + $0x118] sm:$0xff] %v3455
    %3520 = vst [vmem:[#allocation2 + $0x120] sm:$0xff] %v3456
    %3521 = vst [vmem:[#allocation2 + $0x128] sm:$0xff] %v3457
    %3522 = vst [vmem:[#allocation2 + $0x130] sm:$0xff] %v3458
    %3523 = vst [vmem:[#allocation2 + $0x138] sm:$0xff] %v3459
    %3524 = vst [vmem:[#allocation2 + $0x140] sm:$0xff] %v3460
    %3525 = vst [vmem:[#allocation2 + $0x148] sm:$0xff] %v3461
    %3526 = vst [vmem:[#allocation2 + $0x150] sm:$0xff] %v3462
    %3527 = vst [vmem:[#allocation2 + $0x158] sm:$0xff] %v3463
    %3528 = vst [vmem:[#allocation2 + $0x160] sm:$0xff] %v3464
    %3529 = vst [vmem:[#allocation2 + $0x168] sm:$0xff] %v3465
    %3530 = vst [vmem:[#allocation2 + $0x170] sm:$0xff] %v3466
    %3531 = vst [vmem:[#allocation2 + $0x178] sm:$0xff] %v3467
    %3532 = vst [vmem:[#allocation2 + $0x180] sm:$0xff] %v3468
    %3533 = vst [vmem:[#allocation2 + $0x188] sm:$0xff] %v3469
    %3534 = vst [vmem:[#allocation2 + $0x190] sm:$0xff] %v3470
    %3535 = vst [vmem:[#allocation2 + $0x198] sm:$0xff] %v3471
    %3536 = vst [vmem:[#allocation2 + $0x1a0] sm:$0xff] %v3472
    %3537 = vst [vmem:[#allocation2 + $0x1a8] sm:$0xff] %v3473
    %3538 = vst [vmem:[#allocation2 + $0x1b0] sm:$0xff] %v3474
    %3539 = vst [vmem:[#allocation2 + $0x1b8] sm:$0xff] %v3475
    %3540 = vst [vmem:[#allocation2 + $0x1c0] sm:$0xff] %v3476
    %3541 = vst [vmem:[#allocation2 + $0x1c8] sm:$0xff] %v3477
    %3542 = vst [vmem:[#allocation2 + $0x1d0] sm:$0xff] %v3478
    %3543 = vst [vmem:[#allocation2 + $0x1d8] sm:$0xff] %v3479
    %3544 = vst [vmem:[#allocation2 + $0x1e0] sm:$0xff] %v3480
    %3545 = vst [vmem:[#allocation2 + $0x1e8] sm:$0xff] %v3481
    %3546 = vst [vmem:[#allocation2 + $0x1f0] sm:$0xff] %v3482
    %3547 = vst [vmem:[#allocation2 + $0x1f8] sm:$0xff] %v3483
    // Predicated region
    $region90: #{tpu_custom_call.1} parent=1 // pred_check
      %p3548 = pneg %p172
    $region91: #{tpu_custom_call.1} parent=1 // pred_check_branch
      %3550 = sbr.rel (%p3548) target = $region93
    $region92: #{tpu_custom_call.1} parent=1 // pred_region
      %v3551 = vld [vmem:[#allocation2] sm:$0xff]
      %v3552 = vld [vmem:[#allocation2 + $0x8] sm:$0xff]
      %v3553 = vld [vmem:[#allocation2 + $0x10] sm:$0xff]
      %v3554 = vld [vmem:[#allocation2 + $0x18] sm:$0xff]
      %v3555 = vld [vmem:[#allocation2 + $0x20] sm:$0xff]
      %v3556 = vld [vmem:[#allocation2 + $0x28] sm:$0xff]
      %v3557 = vld [vmem:[#allocation2 + $0x30] sm:$0xff]
      %v3558 = vld [vmem:[#allocation2 + $0x38] sm:$0xff]
      %v3559 = vld [vmem:[#allocation2 + $0x40] sm:$0xff]
      %v3560 = vld [vmem:[#allocation2 + $0x48] sm:$0xff]
      %v3561 = vld [vmem:[#allocation2 + $0x50] sm:$0xff]
      %v3562 = vld [vmem:[#allocation2 + $0x58] sm:$0xff]
      %v3563 = vld [vmem:[#allocation2 + $0x60] sm:$0xff]
      %v3564 = vld [vmem:[#allocation2 + $0x68] sm:$0xff]
      %v3565 = vld [vmem:[#allocation2 + $0x70] sm:$0xff]
      %v3566 = vld [vmem:[#allocation2 + $0x78] sm:$0xff]
      %v3567 = vld [vmem:[#allocation2 + $0x80] sm:$0xff]
      %v3568 = vld [vmem:[#allocation2 + $0x88] sm:$0xff]
      %v3569 = vld [vmem:[#allocation2 + $0x90] sm:$0xff]
      %v3570 = vld [vmem:[#allocation2 + $0x98] sm:$0xff]
      %v3571 = vld [vmem:[#allocation2 + $0xa0] sm:$0xff]
      %v3572 = vld [vmem:[#allocation2 + $0xa8] sm:$0xff]
      %v3573 = vld [vmem:[#allocation2 + $0xb0] sm:$0xff]
      %v3574 = vld [vmem:[#allocation2 + $0xb8] sm:$0xff]
      %v3575 = vld [vmem:[#allocation2 + $0xc0] sm:$0xff]
      %v3576 = vld [vmem:[#allocation2 + $0xc8] sm:$0xff]
      %v3577 = vld [vmem:[#allocation2 + $0xd0] sm:$0xff]
      %v3578 = vld [vmem:[#allocation2 + $0xd8] sm:$0xff]
      %v3579 = vld [vmem:[#allocation2 + $0xe0] sm:$0xff]
      %v3580 = vld [vmem:[#allocation2 + $0xe8] sm:$0xff]
      %v3581 = vld [vmem:[#allocation2 + $0xf0] sm:$0xff]
      %v3582 = vld [vmem:[#allocation2 + $0xf8] sm:$0xff]
      %v3583 = vld [vmem:[#allocation2 + $0x100] sm:$0xff]
      %v3584 = vld [vmem:[#allocation2 + $0x108] sm:$0xff]
      %v3585 = vld [vmem:[#allocation2 + $0x110] sm:$0xff]
      %v3586 = vld [vmem:[#allocation2 + $0x118] sm:$0xff]
      %v3587 = vld [vmem:[#allocation2 + $0x120] sm:$0xff]
      %v3588 = vld [vmem:[#allocation2 + $0x128] sm:$0xff]
      %v3589 = vld [vmem:[#allocation2 + $0x130] sm:$0xff]
      %v3590 = vld [vmem:[#allocation2 + $0x138] sm:$0xff]
      %v3591 = vld [vmem:[#allocation2 + $0x140] sm:$0xff]
      %v3592 = vld [vmem:[#allocation2 + $0x148] sm:$0xff]
      %v3593 = vld [vmem:[#allocation2 + $0x150] sm:$0xff]
      %v3594 = vld [vmem:[#allocation2 + $0x158] sm:$0xff]
      %v3595 = vld [vmem:[#allocation2 + $0x160] sm:$0xff]
      %v3596 = vld [vmem:[#allocation2 + $0x168] sm:$0xff]
      %v3597 = vld [vmem:[#allocation2 + $0x170] sm:$0xff]
      %v3598 = vld [vmem:[#allocation2 + $0x178] sm:$0xff]
      %v3599 = vld [vmem:[#allocation2 + $0x180] sm:$0xff]
      %v3600 = vld [vmem:[#allocation2 + $0x188] sm:$0xff]
      %v3601 = vld [vmem:[#allocation2 + $0x190] sm:$0xff]
      %v3602 = vld [vmem:[#allocation2 + $0x198] sm:$0xff]
      %v3603 = vld [vmem:[#allocation2 + $0x1a0] sm:$0xff]
      %v3604 = vld [vmem:[#allocation2 + $0x1a8] sm:$0xff]
      %v3605 = vld [vmem:[#allocation2 + $0x1b0] sm:$0xff]
      %v3606 = vld [vmem:[#allocation2 + $0x1b8] sm:$0xff]
      %v3607 = vld [vmem:[#allocation2 + $0x1c0] sm:$0xff]
      %v3608 = vld [vmem:[#allocation2 + $0x1c8] sm:$0xff]
      %v3609 = vld [vmem:[#allocation2 + $0x1d0] sm:$0xff]
      %v3610 = vld [vmem:[#allocation2 + $0x1d8] sm:$0xff]
      %v3611 = vld [vmem:[#allocation2 + $0x1e0] sm:$0xff]
      %v3612 = vld [vmem:[#allocation2 + $0x1e8] sm:$0xff]
      %v3613 = vld [vmem:[#allocation2 + $0x1f0] sm:$0xff]
      %v3614 = vld [vmem:[#allocation2 + $0x1f8] sm:$0xff]
      %vm3615 = vcmp.gt.f32.partialorder %v3551, 0.0
      %vm3616 = vcmp.gt.f32.partialorder %v3552, 0.0
      %vm3617 = vcmp.gt.f32.partialorder %v3553, 0.0
      %vm3618 = vcmp.gt.f32.partialorder %v3554, 0.0
      %vm3619 = vcmp.gt.f32.partialorder %v3555, 0.0
      %vm3620 = vcmp.gt.f32.partialorder %v3556, 0.0
      %vm3621 = vcmp.gt.f32.partialorder %v3557, 0.0
      %vm3622 = vcmp.gt.f32.partialorder %v3558, 0.0
      %vm3623 = vcmp.gt.f32.partialorder %v3559, 0.0
      %vm3624 = vcmp.gt.f32.partialorder %v3560, 0.0
      %vm3625 = vcmp.gt.f32.partialorder %v3561, 0.0
      %vm3626 = vcmp.gt.f32.partialorder %v3562, 0.0
      %vm3627 = vcmp.gt.f32.partialorder %v3563, 0.0
      %vm3628 = vcmp.gt.f32.partialorder %v3564, 0.0
      %vm3629 = vcmp.gt.f32.partialorder %v3565, 0.0
      %vm3630 = vcmp.gt.f32.partialorder %v3566, 0.0
      %vm3631 = vcmp.gt.f32.partialorder %v3567, 0.0
      %vm3632 = vcmp.gt.f32.partialorder %v3568, 0.0
      %vm3633 = vcmp.gt.f32.partialorder %v3569, 0.0
      %vm3634 = vcmp.gt.f32.partialorder %v3570, 0.0
      %vm3635 = vcmp.gt.f32.partialorder %v3571, 0.0
      %vm3636 = vcmp.gt.f32.partialorder %v3572, 0.0
      %vm3637 = vcmp.gt.f32.partialorder %v3573, 0.0
      %vm3638 = vcmp.gt.f32.partialorder %v3574, 0.0
      %vm3639 = vcmp.gt.f32.partialorder %v3575, 0.0
      %vm3640 = vcmp.gt.f32.partialorder %v3576, 0.0
      %vm3641 = vcmp.gt.f32.partialorder %v3577, 0.0
      %vm3642 = vcmp.gt.f32.partialorder %v3578, 0.0
      %vm3643 = vcmp.gt.f32.partialorder %v3579, 0.0
      %vm3644 = vcmp.gt.f32.partialorder %v3580, 0.0
      %vm3645 = vcmp.gt.f32.partialorder %v3581, 0.0
      %vm3646 = vcmp.gt.f32.partialorder %v3582, 0.0
      %vm3647 = vcmp.gt.f32.partialorder %v3583, 0.0
      %vm3648 = vcmp.gt.f32.partialorder %v3584, 0.0
      %vm3649 = vcmp.gt.f32.partialorder %v3585, 0.0
      %vm3650 = vcmp.gt.f32.partialorder %v3586, 0.0
      %vm3651 = vcmp.gt.f32.partialorder %v3587, 0.0
      %vm3652 = vcmp.gt.f32.partialorder %v3588, 0.0
      %vm3653 = vcmp.gt.f32.partialorder %v3589, 0.0
      %vm3654 = vcmp.gt.f32.partialorder %v3590, 0.0
      %vm3655 = vcmp.gt.f32.partialorder %v3591, 0.0
      %vm3656 = vcmp.gt.f32.partialorder %v3592, 0.0
      %vm3657 = vcmp.gt.f32.partialorder %v3593, 0.0
      %vm3658 = vcmp.gt.f32.partialorder %v3594, 0.0
      %vm3659 = vcmp.gt.f32.partialorder %v3595, 0.0
      %vm3660 = vcmp.gt.f32.partialorder %v3596, 0.0
      %vm3661 = vcmp.gt.f32.partialorder %v3597, 0.0
      %vm3662 = vcmp.gt.f32.partialorder %v3598, 0.0
      %vm3663 = vcmp.gt.f32.partialorder %v3599, 0.0
      %vm3664 = vcmp.gt.f32.partialorder %v3600, 0.0
      %vm3665 = vcmp.gt.f32.partialorder %v3601, 0.0
      %vm3666 = vcmp.gt.f32.partialorder %v3602, 0.0
      %vm3667 = vcmp.gt.f32.partialorder %v3603, 0.0
      %vm3668 = vcmp.gt.f32.partialorder %v3604, 0.0
      %vm3669 = vcmp.gt.f32.partialorder %v3605, 0.0
      %vm3670 = vcmp.gt.f32.partialorder %v3606, 0.0
      %vm3671 = vcmp.gt.f32.partialorder %v3607, 0.0
      %vm3672 = vcmp.gt.f32.partialorder %v3608, 0.0
      %vm3673 = vcmp.gt.f32.partialorder %v3609, 0.0
      %vm3674 = vcmp.gt.f32.partialorder %v3610, 0.0
      %vm3675 = vcmp.gt.f32.partialorder %v3611, 0.0
      %vm3676 = vcmp.gt.f32.partialorder %v3612, 0.0
      %vm3677 = vcmp.gt.f32.partialorder %v3613, 0.0
      %vm3678 = vcmp.gt.f32.partialorder %v3614, 0.0
      %v3679 = vld [vmem:[#allocation4] sm:$0xff]
      %v3680 = vld [vmem:[#allocation4 + $0x8] sm:$0xff]
      %v3681 = vld [vmem:[#allocation4 + $0x10] sm:$0xff]
      %v3682 = vld [vmem:[#allocation4 + $0x18] sm:$0xff]
      %v3683 = vld [vmem:[#allocation4 + $0x20] sm:$0xff]
      %v3684 = vld [vmem:[#allocation4 + $0x28] sm:$0xff]
      %v3685 = vld [vmem:[#allocation4 + $0x30] sm:$0xff]
      %v3686 = vld [vmem:[#allocation4 + $0x38] sm:$0xff]
      %v3687 = vld [vmem:[#allocation4 + $0x40] sm:$0xff]
      %v3688 = vld [vmem:[#allocation4 + $0x48] sm:$0xff]
      %v3689 = vld [vmem:[#allocation4 + $0x50] sm:$0xff]
      %v3690 = vld [vmem:[#allocation4 + $0x58] sm:$0xff]
      %v3691 = vld [vmem:[#allocation4 + $0x60] sm:$0xff]
      %v3692 = vld [vmem:[#allocation4 + $0x68] sm:$0xff]
      %v3693 = vld [vmem:[#allocation4 + $0x70] sm:$0xff]
      %v3694 = vld [vmem:[#allocation4 + $0x78] sm:$0xff]
      %v3695 = vld [vmem:[#allocation4 + $0x80] sm:$0xff]
      %v3696 = vld [vmem:[#allocation4 + $0x88] sm:$0xff]
      %v3697 = vld [vmem:[#allocation4 + $0x90] sm:$0xff]
      %v3698 = vld [vmem:[#allocation4 + $0x98] sm:$0xff]
      %v3699 = vld [vmem:[#allocation4 + $0xa0] sm:$0xff]
      %v3700 = vld [vmem:[#allocation4 + $0xa8] sm:$0xff]
      %v3701 = vld [vmem:[#allocation4 + $0xb0] sm:$0xff]
      %v3702 = vld [vmem:[#allocation4 + $0xb8] sm:$0xff]
      %v3703 = vld [vmem:[#allocation4 + $0xc0] sm:$0xff]
      %v3704 = vld [vmem:[#allocation4 + $0xc8] sm:$0xff]
      %v3705 = vld [vmem:[#allocation4 + $0xd0] sm:$0xff]
      %v3706 = vld [vmem:[#allocation4 + $0xd8] sm:$0xff]
      %v3707 = vld [vmem:[#allocation4 + $0xe0] sm:$0xff]
      %v3708 = vld [vmem:[#allocation4 + $0xe8] sm:$0xff]
      %v3709 = vld [vmem:[#allocation4 + $0xf0] sm:$0xff]
      %v3710 = vld [vmem:[#allocation4 + $0xf8] sm:$0xff]
      %v3711 = vsel %vm3615, 1, 0
      %v3712 = vsel %vm3616, 1, 0
      %v3713 = vsel %vm3617, 1, 0
      %v3714 = vsel %vm3618, 1, 0
      %v3715 = vsel %vm3619, 1, 0
      %v3716 = vsel %vm3620, 1, 0
      %v3717 = vsel %vm3621, 1, 0
      %v3718 = vsel %vm3622, 1, 0
      %v3719 = vsel %vm3623, 1, 0
      %v3720 = vsel %vm3624, 1, 0
      %v3721 = vsel %vm3625, 1, 0
      %v3722 = vsel %vm3626, 1, 0
      %v3723 = vsel %vm3627, 1, 0
      %v3724 = vsel %vm3628, 1, 0
      %v3725 = vsel %vm3629, 1, 0
      %v3726 = vsel %vm3630, 1, 0
      %v3727 = vsel %vm3631, 1, 0
      %v3728 = vsel %vm3632, 1, 0
      %v3729 = vsel %vm3633, 1, 0
      %v3730 = vsel %vm3634, 1, 0
      %v3731 = vsel %vm3635, 1, 0
      %v3732 = vsel %vm3636, 1, 0
      %v3733 = vsel %vm3637, 1, 0
      %v3734 = vsel %vm3638, 1, 0
      %v3735 = vsel %vm3639, 1, 0
      %v3736 = vsel %vm3640, 1, 0
      %v3737 = vsel %vm3641, 1, 0
      %v3738 = vsel %vm3642, 1, 0
      %v3739 = vsel %vm3643, 1, 0
      %v3740 = vsel %vm3644, 1, 0
      %v3741 = vsel %vm3645, 1, 0
      %v3742 = vsel %vm3646, 1, 0
      %v3743 = vsel %vm3647, 1, 0
      %v3744 = vsel %vm3648, 1, 0
      %v3745 = vsel %vm3649, 1, 0
      %v3746 = vsel %vm3650, 1, 0
      %v3747 = vsel %vm3651, 1, 0
      %v3748 = vsel %vm3652, 1, 0
      %v3749 = vsel %vm3653, 1, 0
      %v3750 = vsel %vm3654, 1, 0
      %v3751 = vsel %vm3655, 1, 0
      %v3752 = vsel %vm3656, 1, 0
      %v3753 = vsel %vm3657, 1, 0
      %v3754 = vsel %vm3658, 1, 0
      %v3755 = vsel %vm3659, 1, 0
      %v3756 = vsel %vm3660, 1, 0
      %v3757 = vsel %vm3661, 1, 0
      %v3758 = vsel %vm3662, 1, 0
      %v3759 = vsel %vm3663, 1, 0
      %v3760 = vsel %vm3664, 1, 0
      %v3761 = vsel %vm3665, 1, 0
      %v3762 = vsel %vm3666, 1, 0
      %v3763 = vsel %vm3667, 1, 0
      %v3764 = vsel %vm3668, 1, 0
      %v3765 = vsel %vm3669, 1, 0
      %v3766 = vsel %vm3670, 1, 0
      %v3767 = vsel %vm3671, 1, 0
      %v3768 = vsel %vm3672, 1, 0
      %v3769 = vsel %vm3673, 1, 0
      %v3770 = vsel %vm3674, 1, 0
      %v3771 = vsel %vm3675, 1, 0
      %v3772 = vsel %vm3676, 1, 0
      %v3773 = vsel %vm3677, 1, 0
      %v3774 = vsel %vm3678, 1, 0
      %v3775 = vcvt.s32.f32 %v3711
      %v3776 = vcvt.s32.f32 %v3712
      %v3777 = vcvt.s32.f32 %v3713
      %v3778 = vcvt.s32.f32 %v3714
      %v3779 = vcvt.s32.f32 %v3715
      %v3780 = vcvt.s32.f32 %v3716
      %v3781 = vcvt.s32.f32 %v3717
      %v3782 = vcvt.s32.f32 %v3718
      %v3783 = vcvt.s32.f32 %v3719
      %v3784 = vcvt.s32.f32 %v3720
      %v3785 = vcvt.s32.f32 %v3721
      %v3786 = vcvt.s32.f32 %v3722
      %v3787 = vcvt.s32.f32 %v3723
      %v3788 = vcvt.s32.f32 %v3724
      %v3789 = vcvt.s32.f32 %v3725
      %v3790 = vcvt.s32.f32 %v3726
      %v3791 = vcvt.s32.f32 %v3727
      %v3792 = vcvt.s32.f32 %v3728
      %v3793 = vcvt.s32.f32 %v3729
      %v3794 = vcvt.s32.f32 %v3730
      %v3795 = vcvt.s32.f32 %v3731
      %v3796 = vcvt.s32.f32 %v3732
      %v3797 = vcvt.s32.f32 %v3733
      %v3798 = vcvt.s32.f32 %v3734
      %v3799 = vcvt.s32.f32 %v3735
      %v3800 = vcvt.s32.f32 %v3736
      %v3801 = vcvt.s32.f32 %v3737
      %v3802 = vcvt.s32.f32 %v3738
      %v3803 = vcvt.s32.f32 %v3739
      %v3804 = vcvt.s32.f32 %v3740
      %v3805 = vcvt.s32.f32 %v3741
      %v3806 = vcvt.s32.f32 %v3742
      %v3807 = vcvt.s32.f32 %v3743
      %v3808 = vcvt.s32.f32 %v3744
      %v3809 = vcvt.s32.f32 %v3745
      %v3810 = vcvt.s32.f32 %v3746
      %v3811 = vcvt.s32.f32 %v3747
      %v3812 = vcvt.s32.f32 %v3748
      %v3813 = vcvt.s32.f32 %v3749
      %v3814 = vcvt.s32.f32 %v3750
      %v3815 = vcvt.s32.f32 %v3751
      %v3816 = vcvt.s32.f32 %v3752
      %v3817 = vcvt.s32.f32 %v3753
      %v3818 = vcvt.s32.f32 %v3754
      %v3819 = vcvt.s32.f32 %v3755
      %v3820 = vcvt.s32.f32 %v3756
      %v3821 = vcvt.s32.f32 %v3757
      %v3822 = vcvt.s32.f32 %v3758
      %v3823 = vcvt.s32.f32 %v3759
      %v3824 = vcvt.s32.f32 %v3760
      %v3825 = vcvt.s32.f32 %v3761
      %v3826 = vcvt.s32.f32 %v3762
      %v3827 = vcvt.s32.f32 %v3763
      %v3828 = vcvt.s32.f32 %v3764
      %v3829 = vcvt.s32.f32 %v3765
      %v3830 = vcvt.s32.f32 %v3766
      %v3831 = vcvt.s32.f32 %v3767
      %v3832 = vcvt.s32.f32 %v3768
      %v3833 = vcvt.s32.f32 %v3769
      %v3834 = vcvt.s32.f32 %v3770
      %v3835 = vcvt.s32.f32 %v3771
      %v3836 = vcvt.s32.f32 %v3772
      %v3837 = vcvt.s32.f32 %v3773
      %v3838 = vcvt.s32.f32 %v3774
      %v3839 = vadd.f32 %v3775, %v3776
      %3840 = vadd.xlane.f32.xlu0 %v3839
      %v3841 = vpop.xlane.xlu0 %3840
      %v3842 = vadd.f32 %v3777, %v3778
      %3843 = vadd.xlane.f32.xlu0 %v3842
      %v3844 = vpop.xlane.xlu0 %3843
      %v3845 = vadd.f32 %v3779, %v3780
      %3846 = vadd.xlane.f32.xlu0 %v3845
      %v3847 = vpop.xlane.xlu0 %3846
      %v3848 = vadd.f32 %v3781, %v3782
      %3849 = vadd.xlane.f32.xlu0 %v3848
      %v3850 = vpop.xlane.xlu0 %3849
      %v3851 = vadd.f32 %v3783, %v3784
      %3852 = vadd.xlane.f32.xlu0 %v3851
      %v3853 = vpop.xlane.xlu0 %3852
      %v3854 = vadd.f32 %v3785, %v3786
      %3855 = vadd.xlane.f32.xlu0 %v3854
      %v3856 = vpop.xlane.xlu0 %3855
      %v3857 = vadd.f32 %v3787, %v3788
      %3858 = vadd.xlane.f32.xlu0 %v3857
      %v3859 = vpop.xlane.xlu0 %3858
      %v3860 = vadd.f32 %v3789, %v3790
      %3861 = vadd.xlane.f32.xlu0 %v3860
      %v3862 = vpop.xlane.xlu0 %3861
      %v3863 = vadd.f32 %v3791, %v3792
      %3864 = vadd.xlane.f32.xlu0 %v3863
      %v3865 = vpop.xlane.xlu0 %3864
      %v3866 = vadd.f32 %v3793, %v3794
      %3867 = vadd.xlane.f32.xlu0 %v3866
      %v3868 = vpop.xlane.xlu0 %3867
      %v3869 = vadd.f32 %v3795, %v3796
      %3870 = vadd.xlane.f32.xlu0 %v3869
      %v3871 = vpop.xlane.xlu0 %3870
      %v3872 = vadd.f32 %v3797, %v3798
      %3873 = vadd.xlane.f32.xlu0 %v3872
      %v3874 = vpop.xlane.xlu0 %3873
      %v3875 = vadd.f32 %v3799, %v3800
      %3876 = vadd.xlane.f32.xlu0 %v3875
      %v3877 = vpop.xlane.xlu0 %3876
      %v3878 = vadd.f32 %v3801, %v3802
      %3879 = vadd.xlane.f32.xlu0 %v3878
      %v3880 = vpop.xlane.xlu0 %3879
      %v3881 = vadd.f32 %v3803, %v3804
      %3882 = vadd.xlane.f32.xlu0 %v3881
      %v3883 = vpop.xlane.xlu0 %3882
      %v3884 = vadd.f32 %v3805, %v3806
      %3885 = vadd.xlane.f32.xlu0 %v3884
      %v3886 = vpop.xlane.xlu0 %3885
      %v3887 = vadd.f32 %v3807, %v3808
      %3888 = vadd.xlane.f32.xlu0 %v3887
      %v3889 = vpop.xlane.xlu0 %3888
      %v3890 = vadd.f32 %v3809, %v3810
      %3891 = vadd.xlane.f32.xlu0 %v3890
      %v3892 = vpop.xlane.xlu0 %3891
      %v3893 = vadd.f32 %v3811, %v3812
      %3894 = vadd.xlane.f32.xlu0 %v3893
      %v3895 = vpop.xlane.xlu0 %3894
      %v3896 = vadd.f32 %v3813, %v3814
      %3897 = vadd.xlane.f32.xlu0 %v3896
      %v3898 = vpop.xlane.xlu0 %3897
      %v3899 = vadd.f32 %v3815, %v3816
      %3900 = vadd.xlane.f32.xlu0 %v3899
      %v3901 = vpop.xlane.xlu0 %3900
      %v3902 = vadd.f32 %v3817, %v3818
      %3903 = vadd.xlane.f32.xlu0 %v3902
      %v3904 = vpop.xlane.xlu0 %3903
      %v3905 = vadd.f32 %v3819, %v3820
      %3906 = vadd.xlane.f32.xlu0 %v3905
      %v3907 = vpop.xlane.xlu0 %3906
      %v3908 = vadd.f32 %v3821, %v3822
      %3909 = vadd.xlane.f32.xlu0 %v3908
      %v3910 = vpop.xlane.xlu0 %3909
      %v3911 = vadd.f32 %v3823, %v3824
      %3912 = vadd.xlane.f32.xlu0 %v3911
      %v3913 = vpop.xlane.xlu0 %3912
      %v3914 = vadd.f32 %v3825, %v3826
      %3915 = vadd.xlane.f32.xlu0 %v3914
      %v3916 = vpop.xlane.xlu0 %3915
      %v3917 = vadd.f32 %v3827, %v3828
      %3918 = vadd.xlane.f32.xlu0 %v3917
      %v3919 = vpop.xlane.xlu0 %3918
      %v3920 = vadd.f32 %v3829, %v3830
      %3921 = vadd.xlane.f32.xlu0 %v3920
      %v3922 = vpop.xlane.xlu0 %3921
      %v3923 = vadd.f32 %v3831, %v3832
      %3924 = vadd.xlane.f32.xlu0 %v3923
      %v3925 = vpop.xlane.xlu0 %3924
      %v3926 = vadd.f32 %v3833, %v3834
      %3927 = vadd.xlane.f32.xlu0 %v3926
      %v3928 = vpop.xlane.xlu0 %3927
      %v3929 = vadd.f32 %v3835, %v3836
      %3930 = vadd.xlane.f32.xlu0 %v3929
      %v3931 = vpop.xlane.xlu0 %3930
      %v3932 = vadd.f32 %v3837, %v3838
      %3933 = vadd.xlane.f32.xlu0 %v3932
      %v3934 = vpop.xlane.xlu0 %3933
      %v3935 = vadd.f32 %v3679, %v3841
      %v3936 = vadd.f32 %v3680, %v3844
      %v3937 = vadd.f32 %v3681, %v3847
      %v3938 = vadd.f32 %v3682, %v3850
      %v3939 = vadd.f32 %v3683, %v3853
      %v3940 = vadd.f32 %v3684, %v3856
      %v3941 = vadd.f32 %v3685, %v3859
      %v3942 = vadd.f32 %v3686, %v3862
      %v3943 = vadd.f32 %v3687, %v3865
      %v3944 = vadd.f32 %v3688, %v3868
      %v3945 = vadd.f32 %v3689, %v3871
      %v3946 = vadd.f32 %v3690, %v3874
      %v3947 = vadd.f32 %v3691, %v3877
      %v3948 = vadd.f32 %v3692, %v3880
      %v3949 = vadd.f32 %v3693, %v3883
      %v3950 = vadd.f32 %v3694, %v3886
      %v3951 = vadd.f32 %v3695, %v3889
      %v3952 = vadd.f32 %v3696, %v3892
      %v3953 = vadd.f32 %v3697, %v3895
      %v3954 = vadd.f32 %v3698, %v3898
      %v3955 = vadd.f32 %v3699, %v3901
      %v3956 = vadd.f32 %v3700, %v3904
      %v3957 = vadd.f32 %v3701, %v3907
      %v3958 = vadd.f32 %v3702, %v3910
      %v3959 = vadd.f32 %v3703, %v3913
      %v3960 = vadd.f32 %v3704, %v3916
      %v3961 = vadd.f32 %v3705, %v3919
      %v3962 = vadd.f32 %v3706, %v3922
      %v3963 = vadd.f32 %v3707, %v3925
      %v3964 = vadd.f32 %v3708, %v3928
      %v3965 = vadd.f32 %v3709, %v3931
      %v3966 = vadd.f32 %v3710, %v3934
      %vm3967 = vcmask 7168
      %3968 = vst.msk [vmem:[#allocation4] sm:$0xff] %vm3967, %v3935
      %3969 = vst.msk [vmem:[#allocation4 + $0x8] sm:$0xff] %vm3967, %v3936
      %3970 = vst.msk [vmem:[#allocation4 + $0x10] sm:$0xff] %vm3967, %v3937
      %3971 = vst.msk [vmem:[#allocation4 + $0x18] sm:$0xff] %vm3967, %v3938
      %3972 = vst.msk [vmem:[#allocation4 + $0x20] sm:$0xff] %vm3967, %v3939
      %3973 = vst.msk [vmem:[#allocation4 + $0x28] sm:$0xff] %vm3967, %v3940
      %3974 = vst.msk [vmem:[#allocation4 + $0x30] sm:$0xff] %vm3967, %v3941
      %3975 = vst.msk [vmem:[#allocation4 + $0x38] sm:$0xff] %vm3967, %v3942
      %3976 = vst.msk [vmem:[#allocation4 + $0x40] sm:$0xff] %vm3967, %v3943
      %3977 = vst.msk [vmem:[#allocation4 + $0x48] sm:$0xff] %vm3967, %v3944
      %3978 = vst.msk [vmem:[#allocation4 + $0x50] sm:$0xff] %vm3967, %v3945
      %3979 = vst.msk [vmem:[#allocation4 + $0x58] sm:$0xff] %vm3967, %v3946
      %3980 = vst.msk [vmem:[#allocation4 + $0x60] sm:$0xff] %vm3967, %v3947
      %3981 = vst.msk [vmem:[#allocation4 + $0x68] sm:$0xff] %vm3967, %v3948
      %3982 = vst.msk [vmem:[#allocation4 + $0x70] sm:$0xff] %vm3967, %v3949
      %3983 = vst.msk [vmem:[#allocation4 + $0x78] sm:$0xff] %vm3967, %v3950
      %3984 = vst.msk [vmem:[#allocation4 + $0x80] sm:$0xff] %vm3967, %v3951
      %3985 = vst.msk [vmem:[#allocation4 + $0x88] sm:$0xff] %vm3967, %v3952
      %3986 = vst.msk [vmem:[#allocation4 + $0x90] sm:$0xff] %vm3967, %v3953
      %3987 = vst.msk [vmem:[#allocation4 + $0x98] sm:$0xff] %vm3967, %v3954
      %3988 = vst.msk [vmem:[#allocation4 + $0xa0] sm:$0xff] %vm3967, %v3955
      %3989 = vst.msk [vmem:[#allocation4 + $0xa8] sm:$0xff] %vm3967, %v3956
      %3990 = vst.msk [vmem:[#allocation4 + $0xb0] sm:$0xff] %vm3967, %v3957
      %3991 = vst.msk [vmem:[#allocation4 + $0xb8] sm:$0xff] %vm3967, %v3958
      %3992 = vst.msk [vmem:[#allocation4 + $0xc0] sm:$0xff] %vm3967, %v3959
      %3993 = vst.msk [vmem:[#allocation4 + $0xc8] sm:$0xff] %vm3967, %v3960
      %3994 = vst.msk [vmem:[#allocation4 + $0xd0] sm:$0xff] %vm3967, %v3961
      %3995 = vst.msk [vmem:[#allocation4 + $0xd8] sm:$0xff] %vm3967, %v3962
      %3996 = vst.msk [vmem:[#allocation4 + $0xe0] sm:$0xff] %vm3967, %v3963
      %3997 = vst.msk [vmem:[#allocation4 + $0xe8] sm:$0xff] %vm3967, %v3964
      %3998 = vst.msk [vmem:[#allocation4 + $0xf0] sm:$0xff] %vm3967, %v3965
      %3999 = vst.msk [vmem:[#allocation4 + $0xf8] sm:$0xff] %vm3967, %v3966
      %v4000 = vld [vmem:[#allocation3] sm:$0xff]
      %v4001 = vld [vmem:[#allocation3 + $0x8] sm:$0xff]
      %v4002 = vld [vmem:[#allocation3 + $0x10] sm:$0xff]
      %v4003 = vld [vmem:[#allocation3 + $0x18] sm:$0xff]
      %v4004 = vld [vmem:[#allocation3 + $0x20] sm:$0xff]
      %v4005 = vld [vmem:[#allocation3 + $0x28] sm:$0xff]
      %v4006 = vld [vmem:[#allocation3 + $0x30] sm:$0xff]
      %v4007 = vld [vmem:[#allocation3 + $0x38] sm:$0xff]
      %v4008 = vld [vmem:[#allocation3 + $0x40] sm:$0xff]
      %v4009 = vld [vmem:[#allocation3 + $0x48] sm:$0xff]
      %v4010 = vld [vmem:[#allocation3 + $0x50] sm:$0xff]
      %v4011 = vld [vmem:[#allocation3 + $0x58] sm:$0xff]
      %v4012 = vld [vmem:[#allocation3 + $0x60] sm:$0xff]
      %v4013 = vld [vmem:[#allocation3 + $0x68] sm:$0xff]
      %v4014 = vld [vmem:[#allocation3 + $0x70] sm:$0xff]
      %v4015 = vld [vmem:[#allocation3 + $0x78] sm:$0xff]
      %v4016 = vld [vmem:[#allocation3 + $0x80] sm:$0xff]
      %v4017 = vld [vmem:[#allocation3 + $0x88] sm:$0xff]
      %v4018 = vld [vmem:[#allocation3 + $0x90] sm:$0xff]
      %v4019 = vld [vmem:[#allocation3 + $0x98] sm:$0xff]
      %v4020 = vld [vmem:[#allocation3 + $0xa0] sm:$0xff]
      %v4021 = vld [vmem:[#allocation3 + $0xa8] sm:$0xff]
      %v4022 = vld [vmem:[#allocation3 + $0xb0] sm:$0xff]
      %v4023 = vld [vmem:[#allocation3 + $0xb8] sm:$0xff]
      %v4024 = vld [vmem:[#allocation3 + $0xc0] sm:$0xff]
      %v4025 = vld [vmem:[#allocation3 + $0xc8] sm:$0xff]
      %v4026 = vld [vmem:[#allocation3 + $0xd0] sm:$0xff]
      %v4027 = vld [vmem:[#allocation3 + $0xd8] sm:$0xff]
      %v4028 = vld [vmem:[#allocation3 + $0xe0] sm:$0xff]
      %v4029 = vld [vmem:[#allocation3 + $0xe8] sm:$0xff]
      %v4030 = vld [vmem:[#allocation3 + $0xf0] sm:$0xff]
      %v4031 = vld [vmem:[#allocation3 + $0xf8] sm:$0xff]
      %v4032 = vpack.c.bf16 %v3777, %v3775
      %v4033 = vpack.c.bf16 %v3778, %v3776
      %v4034 = vpack.c.bf16 %v3781, %v3779
      %v4035 = vpack.c.bf16 %v3782, %v3780
      %v4036 = vpack.c.bf16 %v3785, %v3783
      %v4037 = vpack.c.bf16 %v3786, %v3784
      %v4038 = vpack.c.bf16 %v3789, %v3787
      %v4039 = vpack.c.bf16 %v3790, %v3788
      %v4040 = vpack.c.bf16 %v3793, %v3791
      %v4041 = vpack.c.bf16 %v3794, %v3792
      %v4042 = vpack.c.bf16 %v3797, %v3795
      %v4043 = vpack.c.bf16 %v3798, %v3796
      %v4044 = vpack.c.bf16 %v3801, %v3799
      %v4045 = vpack.c.bf16 %v3802, %v3800
      %v4046 = vpack.c.bf16 %v3805, %v3803
      %v4047 = vpack.c.bf16 %v3806, %v3804
      %v4048 = vpack.c.bf16 %v3809, %v3807
      %v4049 = vpack.c.bf16 %v3810, %v3808
      %v4050 = vpack.c.bf16 %v3813, %v3811
      %v4051 = vpack.c.bf16 %v3814, %v3812
      %v4052 = vpack.c.bf16 %v3817, %v3815
      %v4053 = vpack.c.bf16 %v3818, %v3816
      %v4054 = vpack.c.bf16 %v3821, %v3819
      %v4055 = vpack.c.bf16 %v3822, %v3820
      %v4056 = vpack.c.bf16 %v3825, %v3823
      %v4057 = vpack.c.bf16 %v3826, %v3824
      %v4058 = vpack.c.bf16 %v3829, %v3827
      %v4059 = vpack.c.bf16 %v3830, %v3828
      %v4060 = vpack.c.bf16 %v3833, %v3831
      %v4061 = vpack.c.bf16 %v3834, %v3832
      %v4062 = vpack.c.bf16 %v3837, %v3835
      %v4063 = vpack.c.bf16 %v3838, %v3836
      %v4064 = vld [vmem:[#allocation18] sm:$0xf]
      %v4065 = vld [vmem:[#allocation18 + $0x4] sm:$0xf]
      %v4066 = vld [vmem:[#allocation18 + $0x8] sm:$0xf]
      %v4067 = vld [vmem:[#allocation18 + $0xc] sm:$0xf]
      %v4068 = vld [vmem:[#allocation18 + $0x10] sm:$0xf]
      %v4069 = vld [vmem:[#allocation18 + $0x14] sm:$0xf]
      %v4070 = vld [vmem:[#allocation18 + $0x18] sm:$0xf]
      %v4071 = vld [vmem:[#allocation18 + $0x1c] sm:$0xf]
      %v4072 = vld [vmem:[#allocation18 + $0x20] sm:$0xf]
      %v4073 = vld [vmem:[#allocation18 + $0x24] sm:$0xf]
      %v4074 = vld [vmem:[#allocation18 + $0x28] sm:$0xf]
      %v4075 = vld [vmem:[#allocation18 + $0x2c] sm:$0xf]
      %v4076 = vld [vmem:[#allocation18 + $0x30] sm:$0xf]
      %v4077 = vld [vmem:[#allocation18 + $0x34] sm:$0xf]
      %v4078 = vld [vmem:[#allocation18 + $0x38] sm:$0xf]
      %v4079 = vld [vmem:[#allocation18 + $0x3c] sm:$0xf]
      %v4080 = vld [vmem:[#allocation18 + $0x40] sm:$0xf]
      %v4081 = vld [vmem:[#allocation18 + $0x44] sm:$0xf]
      %v4082 = vld [vmem:[#allocation18 + $0x48] sm:$0xf]
      %v4083 = vld [vmem:[#allocation18 + $0x4c] sm:$0xf]
      %v4084 = vld [vmem:[#allocation18 + $0x50] sm:$0xf]
      %v4085 = vld [vmem:[#allocation18 + $0x54] sm:$0xf]
      %v4086 = vld [vmem:[#allocation18 + $0x58] sm:$0xf]
      %v4087 = vld [vmem:[#allocation18 + $0x5c] sm:$0xf]
      %v4088 = vld [vmem:[#allocation18 + $0x60] sm:$0xf]
      %v4089 = vld [vmem:[#allocation18 + $0x64] sm:$0xf]
      %v4090 = vld [vmem:[#allocation18 + $0x68] sm:$0xf]
      %v4091 = vld [vmem:[#allocation18 + $0x6c] sm:$0xf]
      %v4092 = vld [vmem:[#allocation18 + $0x70] sm:$0xf]
      %v4093 = vld [vmem:[#allocation18 + $0x74] sm:$0xf]
      %v4094 = vld [vmem:[#allocation18 + $0x78] sm:$0xf]
      %v4095 = vld [vmem:[#allocation18 + $0x7c] sm:$0xf]
      %v4128 = vunpack.c.l.b16 %v4064
      %v4129 = vunpack.c.l.b16 %v4065
      %v4130 = vunpack.c.l.b16 %v4066
      %v4131 = vunpack.c.l.b16 %v4067
      %v4132 = vunpack.c.l.b16 %v4068
      %v4133 = vunpack.c.l.b16 %v4069
      %v4134 = vunpack.c.l.b16 %v4070
      %v4135 = vunpack.c.l.b16 %v4071
      %v4136 = vunpack.c.l.b16 %v4072
      %v4137 = vunpack.c.l.b16 %v4073
      %v4138 = vunpack.c.l.b16 %v4074
      %v4139 = vunpack.c.l.b16 %v4075
      %v4140 = vunpack.c.l.b16 %v4076
      %v4141 = vunpack.c.l.b16 %v4077
      %v4142 = vunpack.c.l.b16 %v4078
      %v4143 = vunpack.c.l.b16 %v4079
      %v4144 = vunpack.c.l.b16 %v4080
      %v4145 = vunpack.c.l.b16 %v4081
      %v4146 = vunpack.c.l.b16 %v4082
      %v4147 = vunpack.c.l.b16 %v4083
      %v4148 = vunpack.c.l.b16 %v4084
      %v4149 = vunpack.c.l.b16 %v4085
      %v4150 = vunpack.c.l.b16 %v4086
      %v4151 = vunpack.c.l.b16 %v4087
      %v4152 = vunpack.c.l.b16 %v4088
      %v4153 = vunpack.c.l.b16 %v4089
      %v4154 = vunpack.c.l.b16 %v4090
      %v4155 = vunpack.c.l.b16 %v4091
      %v4156 = vunpack.c.l.b16 %v4092
      %v4157 = vunpack.c.l.b16 %v4093
      %v4158 = vunpack.c.l.b16 %v4094
      %v4159 = vunpack.c.l.b16 %v4095
      %v4160 = vpack.c.b16 %v4129, %v4128
      %v4161 = vpack.c.b16 %v4131, %v4130
      %v4162 = vpack.c.b16 %v4133, %v4132
      %v4163 = vpack.c.b16 %v4135, %v4134
      %v4164 = vpack.c.b16 %v4137, %v4136
      %v4165 = vpack.c.b16 %v4139, %v4138
      %v4166 = vpack.c.b16 %v4141, %v4140
      %v4167 = vpack.c.b16 %v4143, %v4142
      %v4168 = vpack.c.b16 %v4145, %v4144
      %v4169 = vpack.c.b16 %v4147, %v4146
      %v4170 = vpack.c.b16 %v4149, %v4148
      %v4171 = vpack.c.b16 %v4151, %v4150
      %v4172 = vpack.c.b16 %v4153, %v4152
      %v4173 = vpack.c.b16 %v4155, %v4154
      %v4174 = vpack.c.b16 %v4157, %v4156
      %v4175 = vpack.c.b16 %v4159, %v4158
      %4192 = vmatprep.subr.bf16.mxu0 0
      %4193 = vmatpush1.bf16.msra.mxu0 %v4160
      %4194 = vmatprep.subr.bf16.mxu0 0
      %4195 = vmatpush1.bf16.msra.mxu0 %v4161
      %4196 = vmatprep.subr.bf16.mxu0 0
      %4197 = vmatpush1.bf16.msra.mxu0 %v4162
      %4198 = vmatprep.subr.bf16.mxu0 0
      %4199 = vmatpush1.bf16.msra.mxu0 %v4163
      %4200 = vmatprep.subr.bf16.mxu0 0
      %4201 = vmatpush1.bf16.msra.mxu0 %v4164
      %4202 = vmatprep.subr.bf16.mxu0 0
      %4203 = vmatpush1.bf16.msra.mxu0 %v4165
      %4204 = vmatprep.subr.bf16.mxu0 0
      %4205 = vmatpush1.bf16.msra.mxu0 %v4166
      %4206 = vmatprep.subr.bf16.mxu0 0
      %4207 = vmatpush1.bf16.msra.mxu0 %v4167
      %4208 = vmatprep.subr.bf16.mxu0 0
      %4209 = vmatpush1.bf16.msra.mxu0 %v4168
      %4210 = vmatprep.subr.bf16.mxu0 0
      %4211 = vmatpush1.bf16.msra.mxu0 %v4169
      %4212 = vmatprep.subr.bf16.mxu0 0
      %4213 = vmatpush1.bf16.msra.mxu0 %v4170
      %4214 = vmatprep.subr.bf16.mxu0 0
      %4215 = vmatpush1.bf16.msra.mxu0 %v4171
      %4216 = vmatprep.subr.bf16.mxu0 0
      %4217 = vmatpush1.bf16.msra.mxu0 %v4172
      %4218 = vmatprep.subr.bf16.mxu0 0
      %4219 = vmatpush1.bf16.msra.mxu0 %v4173
      %4220 = vmatprep.subr.bf16.mxu0 0
      %4221 = vmatpush1.bf16.msra.mxu0 %v4174
      %4222 = vmatprep.subr.bf16.mxu0 0
      %4223 = vmatpush1.bf16.msra.mxu0 %v4175
      %4224 = vmatprep.mubr.bf16.mxu0 %v4033
      %4225 = vmatmul.mubr.bf16.gmra.mrb[0].mxu0 %v4032
      %v4226 = vpop.f32.mrb[0].mxu0
      %v4227 = vadd.f32 0.0, %v4226
      %v4228 = vpop.f32.mrb[0].mxu0
      %v4229 = vpop.f32.mrb[0].mxu0
      %v4230 = vadd.f32 0.0, %v4229
      %v4231 = vpop.f32.mrb[0].mxu0
      %4232 = vmatprep.mubr.bf16.mxu0 %v4035
      %4233 = vmatmul.mubr.bf16.gmra.mrb[0].mxu0 %v4034
      %v4234 = vpop.f32.mrb[0].mxu0
      %v4235 = vadd.f32 0.0, %v4234
      %v4236 = vpop.f32.mrb[0].mxu0
      %v4237 = vpop.f32.mrb[0].mxu0
      %v4238 = vadd.f32 0.0, %v4237
      %v4239 = vpop.f32.mrb[0].mxu0
      %4240 = vmatprep.mubr.bf16.mxu0 %v4037
      %4241 = vmatmul.mubr.bf16.gmra.mrb[0].mxu0 %v4036
      %v4242 = vpop.f32.mrb[0].mxu0
      %v4243 = vadd.f32 0.0, %v4242
      %v4244 = vpop.f32.mrb[0].mxu0
      %v4245 = vpop.f32.mrb[0].mxu0
      %v4246 = vadd.f32 0.0, %v4245
      %v4247 = vpop.f32.mrb[0].mxu0
      %4248 = vmatprep.mubr.bf16.mxu0 %v4039
      %4249 = vmatmul.mubr.bf16.gmra.mrb[0].mxu0 %v4038
      %v4250 = vpop.f32.mrb[0].mxu0
      %v4251 = vadd.f32 0.0, %v4250
      %v4252 = vpop.f32.mrb[0].mxu0
      %v4253 = vpop.f32.mrb[0].mxu0
      %v4254 = vadd.f32 0.0, %v4253
      %v4255 = vpop.f32.mrb[0].mxu0
      %4256 = vmatprep.mubr.bf16.mxu0 %v4041
      %4257 = vmatmul.mubr.bf16.gmra.mrb[0].mxu0 %v4040
      %v4258 = vpop.f32.mrb[0].mxu0
      %v4259 = vadd.f32 0.0, %v4258
      %v4260 = vpop.f32.mrb[0].mxu0
      %v4261 = vpop.f32.mrb[0].mxu0
      %v4262 = vadd.f32 0.0, %v4261
      %v4263 = vpop.f32.mrb[0].mxu0
      %4264 = vmatprep.mubr.bf16.mxu0 %v4043
      %4265 = vmatmul.mubr.bf16.gmra.mrb[0].mxu0 %v4042
      %v4266 = vpop.f32.mrb[0].mxu0
      %v4267 = vadd.f32 0.0, %v4266
      %v4268 = vpop.f32.mrb[0].mxu0
      %v4269 = vpop.f32.mrb[0].mxu0
      %v4270 = vadd.f32 0.0, %v4269
      %v4271 = vpop.f32.mrb[0].mxu0
      %4272 = vmatprep.mubr.bf16.mxu0 %v4045
      %4273 = vmatmul.mubr.bf16.gmra.mrb[0].mxu0 %v4044
      %v4274 = vpop.f32.mrb[0].mxu0
      %v4275 = vadd.f32 0.0, %v4274
      %v4276 = vpop.f32.mrb[0].mxu0
      %v4277 = vpop.f32.mrb[0].mxu0
      %v4278 = vadd.f32 0.0, %v4277
      %v4279 = vpop.f32.mrb[0].mxu0
      %4280 = vmatprep.mubr.bf16.mxu0 %v4047
      %4281 = vmatmul.mubr.bf16.gmra.mrb[0].mxu0 %v4046
      %v4282 = vpop.f32.mrb[0].mxu0
      %v4283 = vadd.f32 0.0, %v4282
      %v4284 = vpop.f32.mrb[0].mxu0
      %v4285 = vpop.f32.mrb[0].mxu0
      %v4286 = vadd.f32 0.0, %v4285
      %v4287 = vpop.f32.mrb[0].mxu0
      %4288 = vmatprep.mubr.bf16.mxu0 %v4049
      %4289 = vmatmul.mubr.bf16.gmra.mrb[0].mxu0 %v4048
      %v4290 = vpop.f32.mrb[0].mxu0
      %v4291 = vadd.f32 0.0, %v4290
      %v4292 = vpop.f32.mrb[0].mxu0
      %v4293 = vpop.f32.mrb[0].mxu0
      %v4294 = vadd.f32 0.0, %v4293
      %v4295 = vpop.f32.mrb[0].mxu0
      %4296 = vmatprep.mubr.bf16.mxu0 %v4051
      %4297 = vmatmul.mubr.bf16.gmra.mrb[0].mxu0 %v4050
      %v4298 = vpop.f32.mrb[0].mxu0
      %v4299 = vadd.f32 0.0, %v4298
      %v4300 = vpop.f32.mrb[0].mxu0
      %v4301 = vpop.f32.mrb[0].mxu0
      %v4302 = vadd.f32 0.0, %v4301
      %v4303 = vpop.f32.mrb[0].mxu0
      %4304 = vmatprep.mubr.bf16.mxu0 %v4053
      %4305 = vmatmul.mubr.bf16.gmra.mrb[0].mxu0 %v4052
      %v4306 = vpop.f32.mrb[0].mxu0
      %v4307 = vadd.f32 0.0, %v4306
      %v4308 = vpop.f32.mrb[0].mxu0
      %v4309 = vpop.f32.mrb[0].mxu0
      %v4310 = vadd.f32 0.0, %v4309
      %v4311 = vpop.f32.mrb[0].mxu0
      %4312 = vmatprep.mubr.bf16.mxu0 %v4055
      %4313 = vmatmul.mubr.bf16.gmra.mrb[0].mxu0 %v4054
      %v4314 = vpop.f32.mrb[0].mxu0
      %v4315 = vadd.f32 0.0, %v4314
      %v4316 = vpop.f32.mrb[0].mxu0
      %v4317 = vpop.f32.mrb[0].mxu0
      %v4318 = vadd.f32 0.0, %v4317
      %v4319 = vpop.f32.mrb[0].mxu0
      %4320 = vmatprep.mubr.bf16.mxu0 %v4057
      %4321 = vmatmul.mubr.bf16.gmra.mrb[0].mxu0 %v4056
      %v4322 = vpop.f32.mrb[0].mxu0
      %v4323 = vadd.f32 0.0, %v4322
      %v4324 = vpop.f32.mrb[0].mxu0
      %v4325 = vpop.f32.mrb[0].mxu0
      %v4326 = vadd.f32 0.0, %v4325
      %v4327 = vpop.f32.mrb[0].mxu0
      %4328 = vmatprep.mubr.bf16.mxu0 %v4059
      %4329 = vmatmul.mubr.bf16.gmra.mrb[0].mxu0 %v4058
      %v4330 = vpop.f32.mrb[0].mxu0
      %v4331 = vadd.f32 0.0, %v4330
      %v4332 = vpop.f32.mrb[0].mxu0
      %v4333 = vpop.f32.mrb[0].mxu0
      %v4334 = vadd.f32 0.0, %v4333
      %v4335 = vpop.f32.mrb[0].mxu0
      %4336 = vmatprep.mubr.bf16.mxu0 %v4061
      %4337 = vmatmul.mubr.bf16.gmra.mrb[0].mxu0 %v4060
      %v4338 = vpop.f32.mrb[0].mxu0
      %v4339 = vadd.f32 0.0, %v4338
      %v4340 = vpop.f32.mrb[0].mxu0
      %v4341 = vpop.f32.mrb[0].mxu0
      %v4342 = vadd.f32 0.0, %v4341
      %v4343 = vpop.f32.mrb[0].mxu0
      %4344 = vmatprep.mubr.bf16.mxu0 %v4063
      %4345 = vmatmul.mubr.bf16.gmra.mrb[0].mxu0 %v4062
      %v4346 = vpop.f32.mrb[0].mxu0
      %v4347 = vadd.f32 0.0, %v4346
      %v4348 = vpop.f32.mrb[0].mxu0
      %v4349 = vpop.f32.mrb[0].mxu0
      %v4350 = vadd.f32 0.0, %v4349
      %v4351 = vpop.f32.mrb[0].mxu0
      %4352 = vdwg.mxu0
      %v4353 = vadd.f32 %v4000, %v4227
      %v4354 = vadd.f32 %v4001, %v4230
      %v4355 = vadd.f32 %v4002, %v4235
      %v4356 = vadd.f32 %v4003, %v4238
      %v4357 = vadd.f32 %v4004, %v4243
      %v4358 = vadd.f32 %v4005, %v4246
      %v4359 = vadd.f32 %v4006, %v4251
      %v4360 = vadd.f32 %v4007, %v4254
      %v4361 = vadd.f32 %v4008, %v4259
      %v4362 = vadd.f32 %v4009, %v4262
      %v4363 = vadd.f32 %v4010, %v4267
      %v4364 = vadd.f32 %v4011, %v4270
      %v4365 = vadd.f32 %v4012, %v4275
      %v4366 = vadd.f32 %v4013, %v4278
      %v4367 = vadd.f32 %v4014, %v4283
      %v4368 = vadd.f32 %v4015, %v4286
      %v4369 = vadd.f32 %v4016, %v4291
      %v4370 = vadd.f32 %v4017, %v4294
      %v4371 = vadd.f32 %v4018, %v4299
      %v4372 = vadd.f32 %v4019, %v4302
      %v4373 = vadd.f32 %v4020, %v4307
      %v4374 = vadd.f32 %v4021, %v4310
      %v4375 = vadd.f32 %v4022, %v4315
      %v4376 = vadd.f32 %v4023, %v4318
      %v4377 = vadd.f32 %v4024, %v4323
      %v4378 = vadd.f32 %v4025, %v4326
      %v4379 = vadd.f32 %v4026, %v4331
      %v4380 = vadd.f32 %v4027, %v4334
      %v4381 = vadd.f32 %v4028, %v4339
      %v4382 = vadd.f32 %v4029, %v4342
      %v4383 = vadd.f32 %v4030, %v4347
      %v4384 = vadd.f32 %v4031, %v4350
      %vm4385 = vcmask 64512
      %4386 = vst.msk [vmem:[#allocation3] sm:$0xff] %vm4385, %v4353
      %4387 = vst.msk [vmem:[#allocation3 + $0x8] sm:$0xff] %vm4385, %v4354
      %4388 = vst.msk [vmem:[#allocation3 + $0x10] sm:$0xff] %vm4385, %v4355
      %4389 = vst.msk [vmem:[#allocation3 + $0x18] sm:$0xff] %vm4385, %v4356
      %4390 = vst.msk [vmem:[#allocation3 + $0x20] sm:$0xff] %vm4385, %v4357
      %4391 = vst.msk [vmem:[#allocation3 + $0x28] sm:$0xff] %vm4385, %v4358
      %4392 = vst.msk [vmem:[#allocation3 + $0x30] sm:$0xff] %vm4385, %v4359
      %4393 = vst.msk [vmem:[#allocation3 + $0x38] sm:$0xff] %vm4385, %v4360
      %4394 = vst.msk [vmem:[#allocation3 + $0x40] sm:$0xff] %vm4385, %v4361
      %4395 = vst.msk [vmem:[#allocation3 + $0x48] sm:$0xff] %vm4385, %v4362
      %4396 = vst.msk [vmem:[#allocation3 + $0x50] sm:$0xff] %vm4385, %v4363
      %4397 = vst.msk [vmem:[#allocation3 + $0x58] sm:$0xff] %vm4385, %v4364
      %4398 = vst.msk [vmem:[#allocation3 + $0x60] sm:$0xff] %vm4385, %v4365
      %4399 = vst.msk [vmem:[#allocation3 + $0x68] sm:$0xff] %vm4385, %v4366
      %4400 = vst.msk [vmem:[#allocation3 + $0x70] sm:$0xff] %vm4385, %v4367
      %4401 = vst.msk [vmem:[#allocation3 + $0x78] sm:$0xff] %vm4385, %v4368
      %4402 = vst.msk [vmem:[#allocation3 + $0x80] sm:$0xff] %vm4385, %v4369
      %4403 = vst.msk [vmem:[#allocation3 + $0x88] sm:$0xff] %vm4385, %v4370
      %4404 = vst.msk [vmem:[#allocation3 + $0x90] sm:$0xff] %vm4385, %v4371
      %4405 = vst.msk [vmem:[#allocation3 + $0x98] sm:$0xff] %vm4385, %v4372
      %4406 = vst.msk [vmem:[#allocation3 + $0xa0] sm:$0xff] %vm4385, %v4373
      %4407 = vst.msk [vmem:[#allocation3 + $0xa8] sm:$0xff] %vm4385, %v4374
      %4408 = vst.msk [vmem:[#allocation3 + $0xb0] sm:$0xff] %vm4385, %v4375
      %4409 = vst.msk [vmem:[#allocation3 + $0xb8] sm:$0xff] %vm4385, %v4376
      %4410 = vst.msk [vmem:[#allocation3 + $0xc0] sm:$0xff] %vm4385, %v4377
      %4411 = vst.msk [vmem:[#allocation3 + $0xc8] sm:$0xff] %vm4385, %v4378
      %4412 = vst.msk [vmem:[#allocation3 + $0xd0] sm:$0xff] %vm4385, %v4379
      %4413 = vst.msk [vmem:[#allocation3 + $0xd8] sm:$0xff] %vm4385, %v4380
      %4414 = vst.msk [vmem:[#allocation3 + $0xe0] sm:$0xff] %vm4385, %v4381
      %4415 = vst.msk [vmem:[#allocation3 + $0xe8] sm:$0xff] %vm4385, %v4382
      %4416 = vst.msk [vmem:[#allocation3 + $0xf0] sm:$0xff] %vm4385, %v4383
      %4417 = vst.msk [vmem:[#allocation3 + $0xf8] sm:$0xff] %vm4385, %v4384
    $region93: #{tpu_custom_call.1} parent=1 // pred_fallthru
      _
    // Predicated region
    $region94: #{tpu_custom_call.1} parent=1 // pred_check
      _
    $region95: #{tpu_custom_call.1} parent=1 // pred_check_branch
      %4419 = sbr.rel (%p173) target = $region97
    $region96: #{tpu_custom_call.1} parent=1 // pred_region
      %v4420 = vld [vmem:[#allocation19] sm:$0xf]
      %v4421 = vld [vmem:[#allocation19 + $0x4] sm:$0xf]
      %v4422 = vld [vmem:[#allocation19 + $0x8] sm:$0xf]
      %v4423 = vld [vmem:[#allocation19 + $0xc] sm:$0xf]
      %v4424 = vld [vmem:[#allocation19 + $0x10] sm:$0xf]
      %v4425 = vld [vmem:[#allocation19 + $0x14] sm:$0xf]
      %v4426 = vld [vmem:[#allocation19 + $0x18] sm:$0xf]
      %v4427 = vld [vmem:[#allocation19 + $0x1c] sm:$0xf]
      %v4428 = vld [vmem:[#allocation19 + $0x20] sm:$0xf]
      %v4429 = vld [vmem:[#allocation19 + $0x24] sm:$0xf]
      %v4430 = vld [vmem:[#allocation19 + $0x28] sm:$0xf]
      %v4431 = vld [vmem:[#allocation19 + $0x2c] sm:$0xf]
      %v4432 = vld [vmem:[#allocation19 + $0x30] sm:$0xf]
      %v4433 = vld [vmem:[#allocation19 + $0x34] sm:$0xf]
      %v4434 = vld [vmem:[#allocation19 + $0x38] sm:$0xf]
      %v4435 = vld [vmem:[#allocation19 + $0x3c] sm:$0xf]
      %v4436 = vld [vmem:[#allocation19 + $0x40] sm:$0xf]
      %v4437 = vld [vmem:[#allocation19 + $0x44] sm:$0xf]
      %v4438 = vld [vmem:[#allocation19 + $0x48] sm:$0xf]
      %v4439 = vld [vmem:[#allocation19 + $0x4c] sm:$0xf]
      %v4440 = vld [vmem:[#allocation19 + $0x50] sm:$0xf]
      %v4441 = vld [vmem:[#allocation19 + $0x54] sm:$0xf]
      %v4442 = vld [vmem:[#allocation19 + $0x58] sm:$0xf]
      %v4443 = vld [vmem:[#allocation19 + $0x5c] sm:$0xf]
      %v4444 = vld [vmem:[#allocation19 + $0x60] sm:$0xf]
      %v4445 = vld [vmem:[#allocation19 + $0x64] sm:$0xf]
      %v4446 = vld [vmem:[#allocation19 + $0x68] sm:$0xf]
      %v4447 = vld [vmem:[#allocation19 + $0x6c] sm:$0xf]
      %v4448 = vld [vmem:[#allocation19 + $0x70] sm:$0xf]
      %v4449 = vld [vmem:[#allocation19 + $0x74] sm:$0xf]
      %v4450 = vld [vmem:[#allocation19 + $0x78] sm:$0xf]
      %v4451 = vld [vmem:[#allocation19 + $0x7c] sm:$0xf]
      %v4452 = vunpack.c.l.bf16 %v4420
      %v4453 = vunpack.c.l.bf16 %v4421
      %v4454 = vunpack.c.l.bf16 %v4422
      %v4455 = vunpack.c.l.bf16 %v4423
      %v4456 = vunpack.c.l.bf16 %v4424
      %v4457 = vunpack.c.l.bf16 %v4425
      %v4458 = vunpack.c.l.bf16 %v4426
      %v4459 = vunpack.c.l.bf16 %v4427
      %v4460 = vunpack.c.l.bf16 %v4428
      %v4461 = vunpack.c.l.bf16 %v4429
      %v4462 = vunpack.c.l.bf16 %v4430
      %v4463 = vunpack.c.l.bf16 %v4431
      %v4464 = vunpack.c.l.bf16 %v4432
      %v4465 = vunpack.c.l.bf16 %v4433
      %v4466 = vunpack.c.l.bf16 %v4434
      %v4467 = vunpack.c.l.bf16 %v4435
      %v4468 = vunpack.c.l.bf16 %v4436
      %v4469 = vunpack.c.l.bf16 %v4437
      %v4470 = vunpack.c.l.bf16 %v4438
      %v4471 = vunpack.c.l.bf16 %v4439
      %v4472 = vunpack.c.l.bf16 %v4440
      %v4473 = vunpack.c.l.bf16 %v4441
      %v4474 = vunpack.c.l.bf16 %v4442
      %v4475 = vunpack.c.l.bf16 %v4443
      %v4476 = vunpack.c.l.bf16 %v4444
      %v4477 = vunpack.c.l.bf16 %v4445
      %v4478 = vunpack.c.l.bf16 %v4446
      %v4479 = vunpack.c.l.bf16 %v4447
      %v4480 = vunpack.c.l.bf16 %v4448
      %v4481 = vunpack.c.l.bf16 %v4449
      %v4482 = vunpack.c.l.bf16 %v4450
      %v4483 = vunpack.c.l.bf16 %v4451
      %v4484 = vld [vmem:[#allocation3] sm:$0xff]
      %v4485 = vld [vmem:[#allocation3 + $0x8] sm:$0xff]
      %v4486 = vld [vmem:[#allocation3 + $0x10] sm:$0xff]
      %v4487 = vld [vmem:[#allocation3 + $0x18] sm:$0xff]
      %v4488 = vld [vmem:[#allocation3 + $0x20] sm:$0xff]
      %v4489 = vld [vmem:[#allocation3 + $0x28] sm:$0xff]
      %v4490 = vld [vmem:[#allocation3 + $0x30] sm:$0xff]
      %v4491 = vld [vmem:[#allocation3 + $0x38] sm:$0xff]
      %v4492 = vld [vmem:[#allocation3 + $0x40] sm:$0xff]
      %v4493 = vld [vmem:[#allocation3 + $0x48] sm:$0xff]
      %v4494 = vld [vmem:[#allocation3 + $0x50] sm:$0xff]
      %v4495 = vld [vmem:[#allocation3 + $0x58] sm:$0xff]
      %v4496 = vld [vmem:[#allocation3 + $0x60] sm:$0xff]
      %v4497 = vld [vmem:[#allocation3 + $0x68] sm:$0xff]
      %v4498 = vld [vmem:[#allocation3 + $0x70] sm:$0xff]
      %v4499 = vld [vmem:[#allocation3 + $0x78] sm:$0xff]
      %v4500 = vld [vmem:[#allocation3 + $0x80] sm:$0xff]
      %v4501 = vld [vmem:[#allocation3 + $0x88] sm:$0xff]
      %v4502 = vld [vmem:[#allocation3 + $0x90] sm:$0xff]
      %v4503 = vld [vmem:[#allocation3 + $0x98] sm:$0xff]
      %v4504 = vld [vmem:[#allocation3 + $0xa0] sm:$0xff]
      %v4505 = vld [vmem:[#allocation3 + $0xa8] sm:$0xff]
      %v4506 = vld [vmem:[#allocation3 + $0xb0] sm:$0xff]
      %v4507 = vld [vmem:[#allocation3 + $0xb8] sm:$0xff]
      %v4508 = vld [vmem:[#allocation3 + $0xc0] sm:$0xff]
      %v4509 = vld [vmem:[#allocation3 + $0xc8] sm:$0xff]
      %v4510 = vld [vmem:[#allocation3 + $0xd0] sm:$0xff]
      %v4511 = vld [vmem:[#allocation3 + $0xd8] sm:$0xff]
      %v4512 = vld [vmem:[#allocation3 + $0xe0] sm:$0xff]
      %v4513 = vld [vmem:[#allocation3 + $0xe8] sm:$0xff]
      %v4514 = vld [vmem:[#allocation3 + $0xf0] sm:$0xff]
      %v4515 = vld [vmem:[#allocation3 + $0xf8] sm:$0xff]
      %v4516 = vld [vmem:[#allocation4] sm:$0xff]
      %v4517 = vld [vmem:[#allocation4 + $0x8] sm:$0xff]
      %v4518 = vld [vmem:[#allocation4 + $0x10] sm:$0xff]
      %v4519 = vld [vmem:[#allocation4 + $0x18] sm:$0xff]
      %v4520 = vld [vmem:[#allocation4 + $0x20] sm:$0xff]
      %v4521 = vld [vmem:[#allocation4 + $0x28] sm:$0xff]
      %v4522 = vld [vmem:[#allocation4 + $0x30] sm:$0xff]
      %v4523 = vld [vmem:[#allocation4 + $0x38] sm:$0xff]
      %v4524 = vld [vmem:[#allocation4 + $0x40] sm:$0xff]
      %v4525 = vld [vmem:[#allocation4 + $0x48] sm:$0xff]
      %v4526 = vld [vmem:[#allocation4 + $0x50] sm:$0xff]
      %v4527 = vld [vmem:[#allocation4 + $0x58] sm:$0xff]
      %v4528 = vld [vmem:[#allocation4 + $0x60] sm:$0xff]
      %v4529 = vld [vmem:[#allocation4 + $0x68] sm:$0xff]
      %v4530 = vld [vmem:[#allocation4 + $0x70] sm:$0xff]
      %v4531 = vld [vmem:[#allocation4 + $0x78] sm:$0xff]
      %v4532 = vld [vmem:[#allocation4 + $0x80] sm:$0xff]
      %v4533 = vld [vmem:[#allocation4 + $0x88] sm:$0xff]
      %v4534 = vld [vmem:[#allocation4 + $0x90] sm:$0xff]
      %v4535 = vld [vmem:[#allocation4 + $0x98] sm:$0xff]
      %v4536 = vld [vmem:[#allocation4 + $0xa0] sm:$0xff]
      %v4537 = vld [vmem:[#allocation4 + $0xa8] sm:$0xff]
      %v4538 = vld [vmem:[#allocation4 + $0xb0] sm:$0xff]
      %v4539 = vld [vmem:[#allocation4 + $0xb8] sm:$0xff]
      %v4540 = vld [vmem:[#allocation4 + $0xc0] sm:$0xff]
      %v4541 = vld [vmem:[#allocation4 + $0xc8] sm:$0xff]
      %v4542 = vld [vmem:[#allocation4 + $0xd0] sm:$0xff]
      %v4543 = vld [vmem:[#allocation4 + $0xd8] sm:$0xff]
      %v4544 = vld [vmem:[#allocation4 + $0xe0] sm:$0xff]
      %v4545 = vld [vmem:[#allocation4 + $0xe8] sm:$0xff]
      %v4546 = vld [vmem:[#allocation4 + $0xf0] sm:$0xff]
      %v4547 = vld [vmem:[#allocation4 + $0xf8] sm:$0xff]
      %4549 = vset.pattern.permute.xlu0 0
      %4550 = vperm.xlu0 %4549, %v4516
      %v4551 = vpop.permute.xlu0 %4550
      %4554 = vset.pattern.permute.xlu0 0
      %4555 = vperm.xlu0 %4554, %v4517
      %v4556 = vpop.permute.xlu0 %4555
      %4559 = vset.pattern.permute.xlu0 0
      %4560 = vperm.xlu0 %4559, %v4518
      %v4561 = vpop.permute.xlu0 %4560
      %4564 = vset.pattern.permute.xlu0 0
      %4565 = vperm.xlu0 %4564, %v4519
      %v4566 = vpop.permute.xlu0 %4565
      %4569 = vset.pattern.permute.xlu0 0
      %4570 = vperm.xlu0 %4569, %v4520
      %v4571 = vpop.permute.xlu0 %4570
      %4574 = vset.pattern.permute.xlu0 0
      %4575 = vperm.xlu0 %4574, %v4521
      %v4576 = vpop.permute.xlu0 %4575
      %4579 = vset.pattern.permute.xlu0 0
      %4580 = vperm.xlu0 %4579, %v4522
      %v4581 = vpop.permute.xlu0 %4580
      %4584 = vset.pattern.permute.xlu0 0
      %4585 = vperm.xlu0 %4584, %v4523
      %v4586 = vpop.permute.xlu0 %4585
      %4589 = vset.pattern.permute.xlu0 0
      %4590 = vperm.xlu0 %4589, %v4524
      %v4591 = vpop.permute.xlu0 %4590
      %4594 = vset.pattern.permute.xlu0 0
      %4595 = vperm.xlu0 %4594, %v4525
      %v4596 = vpop.permute.xlu0 %4595
      %4599 = vset.pattern.permute.xlu0 0
      %4600 = vperm.xlu0 %4599, %v4526
      %v4601 = vpop.permute.xlu0 %4600
      %4604 = vset.pattern.permute.xlu0 0
      %4605 = vperm.xlu0 %4604, %v4527
      %v4606 = vpop.permute.xlu0 %4605
      %4609 = vset.pattern.permute.xlu0 0
      %4610 = vperm.xlu0 %4609, %v4528
      %v4611 = vpop.permute.xlu0 %4610
      %4614 = vset.pattern.permute.xlu0 0
      %4615 = vperm.xlu0 %4614, %v4529
      %v4616 = vpop.permute.xlu0 %4615
      %4619 = vset.pattern.permute.xlu0 0
      %4620 = vperm.xlu0 %4619, %v4530
      %v4621 = vpop.permute.xlu0 %4620
      %4624 = vset.pattern.permute.xlu0 0
      %4625 = vperm.xlu0 %4624, %v4531
      %v4626 = vpop.permute.xlu0 %4625
      %4629 = vset.pattern.permute.xlu0 0
      %4630 = vperm.xlu0 %4629, %v4532
      %v4631 = vpop.permute.xlu0 %4630
      %4634 = vset.pattern.permute.xlu0 0
      %4635 = vperm.xlu0 %4634, %v4533
      %v4636 = vpop.permute.xlu0 %4635
      %4639 = vset.pattern.permute.xlu0 0
      %4640 = vperm.xlu0 %4639, %v4534
      %v4641 = vpop.permute.xlu0 %4640
      %4644 = vset.pattern.permute.xlu0 0
      %4645 = vperm.xlu0 %4644, %v4535
      %v4646 = vpop.permute.xlu0 %4645
      %4649 = vset.pattern.permute.xlu0 0
      %4650 = vperm.xlu0 %4649, %v4536
      %v4651 = vpop.permute.xlu0 %4650
      %4654 = vset.pattern.permute.xlu0 0
      %4655 = vperm.xlu0 %4654, %v4537
      %v4656 = vpop.permute.xlu0 %4655
      %4659 = vset.pattern.permute.xlu0 0
      %4660 = vperm.xlu0 %4659, %v4538
      %v4661 = vpop.permute.xlu0 %4660
      %4664 = vset.pattern.permute.xlu0 0
      %4665 = vperm.xlu0 %4664, %v4539
      %v4666 = vpop.permute.xlu0 %4665
      %4669 = vset.pattern.permute.xlu0 0
      %4670 = vperm.xlu0 %4669, %v4540
      %v4671 = vpop.permute.xlu0 %4670
      %4674 = vset.pattern.permute.xlu0 0
      %4675 = vperm.xlu0 %4674, %v4541
      %v4676 = vpop.permute.xlu0 %4675
      %4679 = vset.pattern.permute.xlu0 0
      %4680 = vperm.xlu0 %4679, %v4542
      %v4681 = vpop.permute.xlu0 %4680
      %4684 = vset.pattern.permute.xlu0 0
      %4685 = vperm.xlu0 %4684, %v4543
      %v4686 = vpop.permute.xlu0 %4685
      %4689 = vset.pattern.permute.xlu0 0
      %4690 = vperm.xlu0 %4689, %v4544
      %v4691 = vpop.permute.xlu0 %4690
      %4694 = vset.pattern.permute.xlu0 0
      %4695 = vperm.xlu0 %4694, %v4545
      %v4696 = vpop.permute.xlu0 %4695
      %4699 = vset.pattern.permute.xlu0 0
      %4700 = vperm.xlu0 %4699, %v4546
      %v4701 = vpop.permute.xlu0 %4700
      %4704 = vset.pattern.permute.xlu0 0
      %4705 = vperm.xlu0 %4704, %v4547
      %v4706 = vpop.permute.xlu0 %4705
      %v4708 = vrcp.pop %v4551
      %v4709 = vmul.f32 %v4484, %v4708
      %v4710 = vrcp.pop %v4556
      %v4711 = vmul.f32 %v4485, %v4710
      %v4712 = vrcp.pop %v4561
      %v4713 = vmul.f32 %v4486, %v4712
      %v4714 = vrcp.pop %v4566
      %v4715 = vmul.f32 %v4487, %v4714
      %v4716 = vrcp.pop %v4571
      %v4717 = vmul.f32 %v4488, %v4716
      %v4718 = vrcp.pop %v4576
      %v4719 = vmul.f32 %v4489, %v4718
      %v4720 = vrcp.pop %v4581
      %v4721 = vmul.f32 %v4490, %v4720
      %v4722 = vrcp.pop %v4586
      %v4723 = vmul.f32 %v4491, %v4722
      %v4724 = vrcp.pop %v4591
      %v4725 = vmul.f32 %v4492, %v4724
      %v4726 = vrcp.pop %v4596
      %v4727 = vmul.f32 %v4493, %v4726
      %v4728 = vrcp.pop %v4601
      %v4729 = vmul.f32 %v4494, %v4728
      %v4730 = vrcp.pop %v4606
      %v4731 = vmul.f32 %v4495, %v4730
      %v4732 = vrcp.pop %v4611
      %v4733 = vmul.f32 %v4496, %v4732
      %v4734 = vrcp.pop %v4616
      %v4735 = vmul.f32 %v4497, %v4734
      %v4736 = vrcp.pop %v4621
      %v4737 = vmul.f32 %v4498, %v4736
      %v4738 = vrcp.pop %v4626
      %v4739 = vmul.f32 %v4499, %v4738
      %v4740 = vrcp.pop %v4631
      %v4741 = vmul.f32 %v4500, %v4740
      %v4742 = vrcp.pop %v4636
      %v4743 = vmul.f32 %v4501, %v4742
      %v4744 = vrcp.pop %v4641
      %v4745 = vmul.f32 %v4502, %v4744
      %v4746 = vrcp.pop %v4646
      %v4747 = vmul.f32 %v4503, %v4746
      %v4748 = vrcp.pop %v4651
      %v4749 = vmul.f32 %v4504, %v4748
      %v4750 = vrcp.pop %v4656
      %v4751 = vmul.f32 %v4505, %v4750
      %v4752 = vrcp.pop %v4661
      %v4753 = vmul.f32 %v4506, %v4752
      %v4754 = vrcp.pop %v4666
      %v4755 = vmul.f32 %v4507, %v4754
      %v4756 = vrcp.pop %v4671
      %v4757 = vmul.f32 %v4508, %v4756
      %v4758 = vrcp.pop %v4676
      %v4759 = vmul.f32 %v4509, %v4758
      %v4760 = vrcp.pop %v4681
      %v4761 = vmul.f32 %v4510, %v4760
      %v4762 = vrcp.pop %v4686
      %v4763 = vmul.f32 %v4511, %v4762
      %v4764 = vrcp.pop %v4691
      %v4765 = vmul.f32 %v4512, %v4764
      %v4766 = vrcp.pop %v4696
      %v4767 = vmul.f32 %v4513, %v4766
      %v4768 = vrcp.pop %v4701
      %v4769 = vmul.f32 %v4514, %v4768
      %v4770 = vrcp.pop %v4706
      %v4771 = vmul.f32 %v4515, %v4770
      %v4772 = vld [vmem:[#allocation7] sm:$0xff]
      %v4773 = vld [vmem:[#allocation7 + $0x8] sm:$0xff]
      %v4774 = vld [vmem:[#allocation7 + $0x10] sm:$0xff]
      %v4775 = vld [vmem:[#allocation7 + $0x18] sm:$0xff]
      %v4776 = vld [vmem:[#allocation7 + $0x20] sm:$0xff]
      %v4777 = vld [vmem:[#allocation7 + $0x28] sm:$0xff]
      %v4778 = vld [vmem:[#allocation7 + $0x30] sm:$0xff]
      %v4779 = vld [vmem:[#allocation7 + $0x38] sm:$0xff]
      %v4780 = vld [vmem:[#allocation7 + $0x40] sm:$0xff]
      %v4781 = vld [vmem:[#allocation7 + $0x48] sm:$0xff]
      %v4782 = vld [vmem:[#allocation7 + $0x50] sm:$0xff]
      %v4783 = vld [vmem:[#allocation7 + $0x58] sm:$0xff]
      %v4784 = vld [vmem:[#allocation7 + $0x60] sm:$0xff]
      %v4785 = vld [vmem:[#allocation7 + $0x68] sm:$0xff]
      %v4786 = vld [vmem:[#allocation7 + $0x70] sm:$0xff]
      %v4787 = vld [vmem:[#allocation7 + $0x78] sm:$0xff]
      %v4788 = vld [vmem:[#allocation7 + $0x80] sm:$0xff]
      %v4789 = vld [vmem:[#allocation7 + $0x88] sm:$0xff]
      %v4790 = vld [vmem:[#allocation7 + $0x90] sm:$0xff]
      %v4791 = vld [vmem:[#allocation7 + $0x98] sm:$0xff]
      %v4792 = vld [vmem:[#allocation7 + $0xa0] sm:$0xff]
      %v4793 = vld [vmem:[#allocation7 + $0xa8] sm:$0xff]
      %v4794 = vld [vmem:[#allocation7 + $0xb0] sm:$0xff]
      %v4795 = vld [vmem:[#allocation7 + $0xb8] sm:$0xff]
      %v4796 = vld [vmem:[#allocation7 + $0xc0] sm:$0xff]
      %v4797 = vld [vmem:[#allocation7 + $0xc8] sm:$0xff]
      %v4798 = vld [vmem:[#allocation7 + $0xd0] sm:$0xff]
      %v4799 = vld [vmem:[#allocation7 + $0xd8] sm:$0xff]
      %v4800 = vld [vmem:[#allocation7 + $0xe0] sm:$0xff]
      %v4801 = vld [vmem:[#allocation7 + $0xe8] sm:$0xff]
      %v4802 = vld [vmem:[#allocation7 + $0xf0] sm:$0xff]
      %v4803 = vld [vmem:[#allocation7 + $0xf8] sm:$0xff]
      %vm4804 = vcmp.gt.f32.partialorder %v4772, 0.0
      %vm4805 = vcmp.gt.f32.partialorder %v4773, 0.0
      %vm4806 = vcmp.gt.f32.partialorder %v4774, 0.0
      %vm4807 = vcmp.gt.f32.partialorder %v4775, 0.0
      %vm4808 = vcmp.gt.f32.partialorder %v4776, 0.0
      %vm4809 = vcmp.gt.f32.partialorder %v4777, 0.0
      %vm4810 = vcmp.gt.f32.partialorder %v4778, 0.0
      %vm4811 = vcmp.gt.f32.partialorder %v4779, 0.0
      %vm4812 = vcmp.gt.f32.partialorder %v4780, 0.0
      %vm4813 = vcmp.gt.f32.partialorder %v4781, 0.0
      %vm4814 = vcmp.gt.f32.partialorder %v4782, 0.0
      %vm4815 = vcmp.gt.f32.partialorder %v4783, 0.0
      %vm4816 = vcmp.gt.f32.partialorder %v4784, 0.0
      %vm4817 = vcmp.gt.f32.partialorder %v4785, 0.0
      %vm4818 = vcmp.gt.f32.partialorder %v4786, 0.0
      %vm4819 = vcmp.gt.f32.partialorder %v4787, 0.0
      %vm4820 = vcmp.gt.f32.partialorder %v4788, 0.0
      %vm4821 = vcmp.gt.f32.partialorder %v4789, 0.0
      %vm4822 = vcmp.gt.f32.partialorder %v4790, 0.0
      %vm4823 = vcmp.gt.f32.partialorder %v4791, 0.0
      %vm4824 = vcmp.gt.f32.partialorder %v4792, 0.0
      %vm4825 = vcmp.gt.f32.partialorder %v4793, 0.0
      %vm4826 = vcmp.gt.f32.partialorder %v4794, 0.0
      %vm4827 = vcmp.gt.f32.partialorder %v4795, 0.0
      %vm4828 = vcmp.gt.f32.partialorder %v4796, 0.0
      %vm4829 = vcmp.gt.f32.partialorder %v4797, 0.0
      %vm4830 = vcmp.gt.f32.partialorder %v4798, 0.0
      %vm4831 = vcmp.gt.f32.partialorder %v4799, 0.0
      %vm4832 = vcmp.gt.f32.partialorder %v4800, 0.0
      %vm4833 = vcmp.gt.f32.partialorder %v4801, 0.0
      %vm4834 = vcmp.gt.f32.partialorder %v4802, 0.0
      %vm4835 = vcmp.gt.f32.partialorder %v4803, 0.0
      %v4836 = vld [vmem:[#allocation6] sm:$0xff]
      %v4837 = vld [vmem:[#allocation6 + $0x8] sm:$0xff]
      %v4838 = vld [vmem:[#allocation6 + $0x10] sm:$0xff]
      %v4839 = vld [vmem:[#allocation6 + $0x18] sm:$0xff]
      %v4840 = vld [vmem:[#allocation6 + $0x20] sm:$0xff]
      %v4841 = vld [vmem:[#allocation6 + $0x28] sm:$0xff]
      %v4842 = vld [vmem:[#allocation6 + $0x30] sm:$0xff]
      %v4843 = vld [vmem:[#allocation6 + $0x38] sm:$0xff]
      %v4844 = vld [vmem:[#allocation6 + $0x40] sm:$0xff]
      %v4845 = vld [vmem:[#allocation6 + $0x48] sm:$0xff]
      %v4846 = vld [vmem:[#allocation6 + $0x50] sm:$0xff]
      %v4847 = vld [vmem:[#allocation6 + $0x58] sm:$0xff]
      %v4848 = vld [vmem:[#allocation6 + $0x60] sm:$0xff]
      %v4849 = vld [vmem:[#allocation6 + $0x68] sm:$0xff]
      %v4850 = vld [vmem:[#allocation6 + $0x70] sm:$0xff]
      %v4851 = vld [vmem:[#allocation6 + $0x78] sm:$0xff]
      %v4852 = vld [vmem:[#allocation6 + $0x80] sm:$0xff]
      %v4853 = vld [vmem:[#allocation6 + $0x88] sm:$0xff]
      %v4854 = vld [vmem:[#allocation6 + $0x90] sm:$0xff]
      %v4855 = vld [vmem:[#allocation6 + $0x98] sm:$0xff]
      %v4856 = vld [vmem:[#allocation6 + $0xa0] sm:$0xff]
      %v4857 = vld [vmem:[#allocation6 + $0xa8] sm:$0xff]
      %v4858 = vld [vmem:[#allocation6 + $0xb0] sm:$0xff]
      %v4859 = vld [vmem:[#allocation6 + $0xb8] sm:$0xff]
      %v4860 = vld [vmem:[#allocation6 + $0xc0] sm:$0xff]
      %v4861 = vld [vmem:[#allocation6 + $0xc8] sm:$0xff]
      %v4862 = vld [vmem:[#allocation6 + $0xd0] sm:$0xff]
      %v4863 = vld [vmem:[#allocation6 + $0xd8] sm:$0xff]
      %v4864 = vld [vmem:[#allocation6 + $0xe0] sm:$0xff]
      %v4865 = vld [vmem:[#allocation6 + $0xe8] sm:$0xff]
      %v4866 = vld [vmem:[#allocation6 + $0xf0] sm:$0xff]
      %v4867 = vld [vmem:[#allocation6 + $0xf8] sm:$0xff]
      %vm4868 = vcmp.gt.f32.partialorder %v4836, 0.0
      %vm4869 = vcmp.gt.f32.partialorder %v4837, 0.0
      %vm4870 = vcmp.gt.f32.partialorder %v4838, 0.0
      %vm4871 = vcmp.gt.f32.partialorder %v4839, 0.0
      %vm4872 = vcmp.gt.f32.partialorder %v4840, 0.0
      %vm4873 = vcmp.gt.f32.partialorder %v4841, 0.0
      %vm4874 = vcmp.gt.f32.partialorder %v4842, 0.0
      %vm4875 = vcmp.gt.f32.partialorder %v4843, 0.0
      %vm4876 = vcmp.gt.f32.partialorder %v4844, 0.0
      %vm4877 = vcmp.gt.f32.partialorder %v4845, 0.0
      %vm4878 = vcmp.gt.f32.partialorder %v4846, 0.0
      %vm4879 = vcmp.gt.f32.partialorder %v4847, 0.0
      %vm4880 = vcmp.gt.f32.partialorder %v4848, 0.0
      %vm4881 = vcmp.gt.f32.partialorder %v4849, 0.0
      %vm4882 = vcmp.gt.f32.partialorder %v4850, 0.0
      %vm4883 = vcmp.gt.f32.partialorder %v4851, 0.0
      %vm4884 = vcmp.gt.f32.partialorder %v4852, 0.0
      %vm4885 = vcmp.gt.f32.partialorder %v4853, 0.0
      %vm4886 = vcmp.gt.f32.partialorder %v4854, 0.0
      %vm4887 = vcmp.gt.f32.partialorder %v4855, 0.0
      %vm4888 = vcmp.gt.f32.partialorder %v4856, 0.0
      %vm4889 = vcmp.gt.f32.partialorder %v4857, 0.0
      %vm4890 = vcmp.gt.f32.partialorder %v4858, 0.0
      %vm4891 = vcmp.gt.f32.partialorder %v4859, 0.0
      %vm4892 = vcmp.gt.f32.partialorder %v4860, 0.0
      %vm4893 = vcmp.gt.f32.partialorder %v4861, 0.0
      %vm4894 = vcmp.gt.f32.partialorder %v4862, 0.0
      %vm4895 = vcmp.gt.f32.partialorder %v4863, 0.0
      %vm4896 = vcmp.gt.f32.partialorder %v4864, 0.0
      %vm4897 = vcmp.gt.f32.partialorder %v4865, 0.0
      %vm4898 = vcmp.gt.f32.partialorder %v4866, 0.0
      %vm4899 = vcmp.gt.f32.partialorder %v4867, 0.0
      %vm4900 = vmand %vm4804, %vm4868
      %vm4901 = vmand %vm4805, %vm4869
      %vm4902 = vmand %vm4806, %vm4870
      %vm4903 = vmand %vm4807, %vm4871
      %vm4904 = vmand %vm4808, %vm4872
      %vm4905 = vmand %vm4809, %vm4873
      %vm4906 = vmand %vm4810, %vm4874
      %vm4907 = vmand %vm4811, %vm4875
      %vm4908 = vmand %vm4812, %vm4876
      %vm4909 = vmand %vm4813, %vm4877
      %vm4910 = vmand %vm4814, %vm4878
      %vm4911 = vmand %vm4815, %vm4879
      %vm4912 = vmand %vm4816, %vm4880
      %vm4913 = vmand %vm4817, %vm4881
      %vm4914 = vmand %vm4818, %vm4882
      %vm4915 = vmand %vm4819, %vm4883
      %vm4916 = vmand %vm4820, %vm4884
      %vm4917 = vmand %vm4821, %vm4885
      %vm4918 = vmand %vm4822, %vm4886
      %vm4919 = vmand %vm4823, %vm4887
      %vm4920 = vmand %vm4824, %vm4888
      %vm4921 = vmand %vm4825, %vm4889
      %vm4922 = vmand %vm4826, %vm4890
      %vm4923 = vmand %vm4827, %vm4891
      %vm4924 = vmand %vm4828, %vm4892
      %vm4925 = vmand %vm4829, %vm4893
      %vm4926 = vmand %vm4830, %vm4894
      %vm4927 = vmand %vm4831, %vm4895
      %vm4928 = vmand %vm4832, %vm4896
      %vm4929 = vmand %vm4833, %vm4897
      %vm4930 = vmand %vm4834, %vm4898
      %vm4931 = vmand %vm4835, %vm4899
      %v4932 = vld [vmem:[#allocation5] sm:$0xff]
      %v4933 = vld [vmem:[#allocation5 + $0x8] sm:$0xff]
      %v4934 = vld [vmem:[#allocation5 + $0x10] sm:$0xff]
      %v4935 = vld [vmem:[#allocation5 + $0x18] sm:$0xff]
      %v4936 = vld [vmem:[#allocation5 + $0x20] sm:$0xff]
      %v4937 = vld [vmem:[#allocation5 + $0x28] sm:$0xff]
      %v4938 = vld [vmem:[#allocation5 + $0x30] sm:$0xff]
      %v4939 = vld [vmem:[#allocation5 + $0x38] sm:$0xff]
      %v4940 = vld [vmem:[#allocation5 + $0x40] sm:$0xff]
      %v4941 = vld [vmem:[#allocation5 + $0x48] sm:$0xff]
      %v4942 = vld [vmem:[#allocation5 + $0x50] sm:$0xff]
      %v4943 = vld [vmem:[#allocation5 + $0x58] sm:$0xff]
      %v4944 = vld [vmem:[#allocation5 + $0x60] sm:$0xff]
      %v4945 = vld [vmem:[#allocation5 + $0x68] sm:$0xff]
      %v4946 = vld [vmem:[#allocation5 + $0x70] sm:$0xff]
      %v4947 = vld [vmem:[#allocation5 + $0x78] sm:$0xff]
      %v4948 = vld [vmem:[#allocation5 + $0x80] sm:$0xff]
      %v4949 = vld [vmem:[#allocation5 + $0x88] sm:$0xff]
      %v4950 = vld [vmem:[#allocation5 + $0x90] sm:$0xff]
      %v4951 = vld [vmem:[#allocation5 + $0x98] sm:$0xff]
      %v4952 = vld [vmem:[#allocation5 + $0xa0] sm:$0xff]
      %v4953 = vld [vmem:[#allocation5 + $0xa8] sm:$0xff]
      %v4954 = vld [vmem:[#allocation5 + $0xb0] sm:$0xff]
      %v4955 = vld [vmem:[#allocation5 + $0xb8] sm:$0xff]
      %v4956 = vld [vmem:[#allocation5 + $0xc0] sm:$0xff]
      %v4957 = vld [vmem:[#allocation5 + $0xc8] sm:$0xff]
      %v4958 = vld [vmem:[#allocation5 + $0xd0] sm:$0xff]
      %v4959 = vld [vmem:[#allocation5 + $0xd8] sm:$0xff]
      %v4960 = vld [vmem:[#allocation5 + $0xe0] sm:$0xff]
      %v4961 = vld [vmem:[#allocation5 + $0xe8] sm:$0xff]
      %v4962 = vld [vmem:[#allocation5 + $0xf0] sm:$0xff]
      %v4963 = vld [vmem:[#allocation5 + $0xf8] sm:$0xff]
      %v4964 = vsel %vm4868, %v4836, 1.0
      %v4965 = vsel %vm4869, %v4837, 1.0
      %v4966 = vsel %vm4870, %v4838, 1.0
      %v4967 = vsel %vm4871, %v4839, 1.0
      %v4968 = vsel %vm4872, %v4840, 1.0
      %v4969 = vsel %vm4873, %v4841, 1.0
      %v4970 = vsel %vm4874, %v4842, 1.0
      %v4971 = vsel %vm4875, %v4843, 1.0
      %v4972 = vsel %vm4876, %v4844, 1.0
      %v4973 = vsel %vm4877, %v4845, 1.0
      %v4974 = vsel %vm4878, %v4846, 1.0
      %v4975 = vsel %vm4879, %v4847, 1.0
      %v4976 = vsel %vm4880, %v4848, 1.0
      %v4977 = vsel %vm4881, %v4849, 1.0
      %v4978 = vsel %vm4882, %v4850, 1.0
      %v4979 = vsel %vm4883, %v4851, 1.0
      %v4980 = vsel %vm4884, %v4852, 1.0
      %v4981 = vsel %vm4885, %v4853, 1.0
      %v4982 = vsel %vm4886, %v4854, 1.0
      %v4983 = vsel %vm4887, %v4855, 1.0
      %v4984 = vsel %vm4888, %v4856, 1.0
      %v4985 = vsel %vm4889, %v4857, 1.0
      %v4986 = vsel %vm4890, %v4858, 1.0
      %v4987 = vsel %vm4891, %v4859, 1.0
      %v4988 = vsel %vm4892, %v4860, 1.0
      %v4989 = vsel %vm4893, %v4861, 1.0
      %v4990 = vsel %vm4894, %v4862, 1.0
      %v4991 = vsel %vm4895, %v4863, 1.0
      %v4992 = vsel %vm4896, %v4864, 1.0
      %v4993 = vsel %vm4897, %v4865, 1.0
      %v4994 = vsel %vm4898, %v4866, 1.0
      %v4995 = vsel %vm4899, %v4867, 1.0
      %4997 = vset.pattern.permute.xlu0 0
      %4998 = vperm.xlu0 %4997, %v4964
      %v4999 = vpop.permute.xlu0 %4998
      %5002 = vset.pattern.permute.xlu0 0
      %5003 = vperm.xlu0 %5002, %v4965
      %v5004 = vpop.permute.xlu0 %5003
      %5007 = vset.pattern.permute.xlu0 0
      %5008 = vperm.xlu0 %5007, %v4966
      %v5009 = vpop.permute.xlu0 %5008
      %5012 = vset.pattern.permute.xlu0 0
      %5013 = vperm.xlu0 %5012, %v4967
      %v5014 = vpop.permute.xlu0 %5013
      %5017 = vset.pattern.permute.xlu0 0
      %5018 = vperm.xlu0 %5017, %v4968
      %v5019 = vpop.permute.xlu0 %5018
      %5022 = vset.pattern.permute.xlu0 0
      %5023 = vperm.xlu0 %5022, %v4969
      %v5024 = vpop.permute.xlu0 %5023
      %5027 = vset.pattern.permute.xlu0 0
      %5028 = vperm.xlu0 %5027, %v4970
      %v5029 = vpop.permute.xlu0 %5028
      %5032 = vset.pattern.permute.xlu0 0
      %5033 = vperm.xlu0 %5032, %v4971
      %v5034 = vpop.permute.xlu0 %5033
      %5037 = vset.pattern.permute.xlu0 0
      %5038 = vperm.xlu0 %5037, %v4972
      %v5039 = vpop.permute.xlu0 %5038
      %5042 = vset.pattern.permute.xlu0 0
      %5043 = vperm.xlu0 %5042, %v4973
      %v5044 = vpop.permute.xlu0 %5043
      %5047 = vset.pattern.permute.xlu0 0
      %5048 = vperm.xlu0 %5047, %v4974
      %v5049 = vpop.permute.xlu0 %5048
      %5052 = vset.pattern.permute.xlu0 0
      %5053 = vperm.xlu0 %5052, %v4975
      %v5054 = vpop.permute.xlu0 %5053
      %5057 = vset.pattern.permute.xlu0 0
      %5058 = vperm.xlu0 %5057, %v4976
      %v5059 = vpop.permute.xlu0 %5058
      %5062 = vset.pattern.permute.xlu0 0
      %5063 = vperm.xlu0 %5062, %v4977
      %v5064 = vpop.permute.xlu0 %5063
      %5067 = vset.pattern.permute.xlu0 0
      %5068 = vperm.xlu0 %5067, %v4978
      %v5069 = vpop.permute.xlu0 %5068
      %5072 = vset.pattern.permute.xlu0 0
      %5073 = vperm.xlu0 %5072, %v4979
      %v5074 = vpop.permute.xlu0 %5073
      %5077 = vset.pattern.permute.xlu0 0
      %5078 = vperm.xlu0 %5077, %v4980
      %v5079 = vpop.permute.xlu0 %5078
      %5082 = vset.pattern.permute.xlu0 0
      %5083 = vperm.xlu0 %5082, %v4981
      %v5084 = vpop.permute.xlu0 %5083
      %5087 = vset.pattern.permute.xlu0 0
      %5088 = vperm.xlu0 %5087, %v4982
      %v5089 = vpop.permute.xlu0 %5088
      %5092 = vset.pattern.permute.xlu0 0
      %5093 = vperm.xlu0 %5092, %v4983
      %v5094 = vpop.permute.xlu0 %5093
      %5097 = vset.pattern.permute.xlu0 0
      %5098 = vperm.xlu0 %5097, %v4984
      %v5099 = vpop.permute.xlu0 %5098
      %5102 = vset.pattern.permute.xlu0 0
      %5103 = vperm.xlu0 %5102, %v4985
      %v5104 = vpop.permute.xlu0 %5103
      %5107 = vset.pattern.permute.xlu0 0
      %5108 = vperm.xlu0 %5107, %v4986
      %v5109 = vpop.permute.xlu0 %5108
      %5112 = vset.pattern.permute.xlu0 0
      %5113 = vperm.xlu0 %5112, %v4987
      %v5114 = vpop.permute.xlu0 %5113
      %5117 = vset.pattern.permute.xlu0 0
      %5118 = vperm.xlu0 %5117, %v4988
      %v5119 = vpop.permute.xlu0 %5118
      %5122 = vset.pattern.permute.xlu0 0
      %5123 = vperm.xlu0 %5122, %v4989
      %v5124 = vpop.permute.xlu0 %5123
      %5127 = vset.pattern.permute.xlu0 0
      %5128 = vperm.xlu0 %5127, %v4990
      %v5129 = vpop.permute.xlu0 %5128
      %5132 = vset.pattern.permute.xlu0 0
      %5133 = vperm.xlu0 %5132, %v4991
      %v5134 = vpop.permute.xlu0 %5133
      %5137 = vset.pattern.permute.xlu0 0
      %5138 = vperm.xlu0 %5137, %v4992
      %v5139 = vpop.permute.xlu0 %5138
      %5142 = vset.pattern.permute.xlu0 0
      %5143 = vperm.xlu0 %5142, %v4993
      %v5144 = vpop.permute.xlu0 %5143
      %5147 = vset.pattern.permute.xlu0 0
      %5148 = vperm.xlu0 %5147, %v4994
      %v5149 = vpop.permute.xlu0 %5148
      %5152 = vset.pattern.permute.xlu0 0
      %5153 = vperm.xlu0 %5152, %v4995
      %v5154 = vpop.permute.xlu0 %5153
      %v5156 = vrcp.pop %v4999
      %v5157 = vmul.f32 %v4932, %v5156
      %v5158 = vrcp.pop %v5004
      %v5159 = vmul.f32 %v4933, %v5158
      %v5160 = vrcp.pop %v5009
      %v5161 = vmul.f32 %v4934, %v5160
      %v5162 = vrcp.pop %v5014
      %v5163 = vmul.f32 %v4935, %v5162
      %v5164 = vrcp.pop %v5019
      %v5165 = vmul.f32 %v4936, %v5164
      %v5166 = vrcp.pop %v5024
      %v5167 = vmul.f32 %v4937, %v5166
      %v5168 = vrcp.pop %v5029
      %v5169 = vmul.f32 %v4938, %v5168
      %v5170 = vrcp.pop %v5034
      %v5171 = vmul.f32 %v4939, %v5170
      %v5172 = vrcp.pop %v5039
      %v5173 = vmul.f32 %v4940, %v5172
      %v5174 = vrcp.pop %v5044
      %v5175 = vmul.f32 %v4941, %v5174
      %v5176 = vrcp.pop %v5049
      %v5177 = vmul.f32 %v4942, %v5176
      %v5178 = vrcp.pop %v5054
      %v5179 = vmul.f32 %v4943, %v5178
      %v5180 = vrcp.pop %v5059
      %v5181 = vmul.f32 %v4944, %v5180
      %v5182 = vrcp.pop %v5064
      %v5183 = vmul.f32 %v4945, %v5182
      %v5184 = vrcp.pop %v5069
      %v5185 = vmul.f32 %v4946, %v5184
      %v5186 = vrcp.pop %v5074
      %v5187 = vmul.f32 %v4947, %v5186
      %v5188 = vrcp.pop %v5079
      %v5189 = vmul.f32 %v4948, %v5188
      %v5190 = vrcp.pop %v5084
      %v5191 = vmul.f32 %v4949, %v5190
      %v5192 = vrcp.pop %v5089
      %v5193 = vmul.f32 %v4950, %v5192
      %v5194 = vrcp.pop %v5094
      %v5195 = vmul.f32 %v4951, %v5194
      %v5196 = vrcp.pop %v5099
      %v5197 = vmul.f32 %v4952, %v5196
      %v5198 = vrcp.pop %v5104
      %v5199 = vmul.f32 %v4953, %v5198
      %v5200 = vrcp.pop %v5109
      %v5201 = vmul.f32 %v4954, %v5200
      %v5202 = vrcp.pop %v5114
      %v5203 = vmul.f32 %v4955, %v5202
      %v5204 = vrcp.pop %v5119
      %v5205 = vmul.f32 %v4956, %v5204
      %v5206 = vrcp.pop %v5124
      %v5207 = vmul.f32 %v4957, %v5206
      %v5208 = vrcp.pop %v5129
      %v5209 = vmul.f32 %v4958, %v5208
      %v5210 = vrcp.pop %v5134
      %v5211 = vmul.f32 %v4959, %v5210
      %v5212 = vrcp.pop %v5139
      %v5213 = vmul.f32 %v4960, %v5212
      %v5214 = vrcp.pop %v5144
      %v5215 = vmul.f32 %v4961, %v5214
      %v5216 = vrcp.pop %v5149
      %v5217 = vmul.f32 %v4962, %v5216
      %v5218 = vrcp.pop %v5154
      %v5219 = vmul.f32 %v4963, %v5218
      %v5220 = vsel %vm4900, 1, 0
      %v5221 = vsel %vm4901, 1, 0
      %v5222 = vsel %vm4902, 1, 0
      %v5223 = vsel %vm4903, 1, 0
      %v5224 = vsel %vm4904, 1, 0
      %v5225 = vsel %vm4905, 1, 0
      %v5226 = vsel %vm4906, 1, 0
      %v5227 = vsel %vm4907, 1, 0
      %v5228 = vsel %vm4908, 1, 0
      %v5229 = vsel %vm4909, 1, 0
      %v5230 = vsel %vm4910, 1, 0
      %v5231 = vsel %vm4911, 1, 0
      %v5232 = vsel %vm4912, 1, 0
      %v5233 = vsel %vm4913, 1, 0
      %v5234 = vsel %vm4914, 1, 0
      %v5235 = vsel %vm4915, 1, 0
      %v5236 = vsel %vm4916, 1, 0
      %v5237 = vsel %vm4917, 1, 0
      %v5238 = vsel %vm4918, 1, 0
      %v5239 = vsel %vm4919, 1, 0
      %v5240 = vsel %vm4920, 1, 0
      %v5241 = vsel %vm4921, 1, 0
      %v5242 = vsel %vm4922, 1, 0
      %v5243 = vsel %vm4923, 1, 0
      %v5244 = vsel %vm4924, 1, 0
      %v5245 = vsel %vm4925, 1, 0
      %v5246 = vsel %vm4926, 1, 0
      %v5247 = vsel %vm4927, 1, 0
      %v5248 = vsel %vm4928, 1, 0
      %v5249 = vsel %vm4929, 1, 0
      %v5250 = vsel %vm4930, 1, 0
      %v5251 = vsel %vm4931, 1, 0
      %5252 = vset.pattern.permute.xlu0 0
      %5253 = vperm.xlu0 %5252, %v5220
      %v5254 = vpop.permute.xlu0 %5253
      %5255 = vset.pattern.permute.xlu0 0
      %5256 = vperm.xlu0 %5255, %v5221
      %v5257 = vpop.permute.xlu0 %5256
      %5258 = vset.pattern.permute.xlu0 0
      %5259 = vperm.xlu0 %5258, %v5222
      %v5260 = vpop.permute.xlu0 %5259
      %5261 = vset.pattern.permute.xlu0 0
      %5262 = vperm.xlu0 %5261, %v5223
      %v5263 = vpop.permute.xlu0 %5262
      %5264 = vset.pattern.permute.xlu0 0
      %5265 = vperm.xlu0 %5264, %v5224
      %v5266 = vpop.permute.xlu0 %5265
      %5267 = vset.pattern.permute.xlu0 0
      %5268 = vperm.xlu0 %5267, %v5225
      %v5269 = vpop.permute.xlu0 %5268
      %5270 = vset.pattern.permute.xlu0 0
      %5271 = vperm.xlu0 %5270, %v5226
      %v5272 = vpop.permute.xlu0 %5271
      %5273 = vset.pattern.permute.xlu0 0
      %5274 = vperm.xlu0 %5273, %v5227
      %v5275 = vpop.permute.xlu0 %5274
      %5276 = vset.pattern.permute.xlu0 0
      %5277 = vperm.xlu0 %5276, %v5228
      %v5278 = vpop.permute.xlu0 %5277
      %5279 = vset.pattern.permute.xlu0 0
      %5280 = vperm.xlu0 %5279, %v5229
      %v5281 = vpop.permute.xlu0 %5280
      %5282 = vset.pattern.permute.xlu0 0
      %5283 = vperm.xlu0 %5282, %v5230
      %v5284 = vpop.permute.xlu0 %5283
      %5285 = vset.pattern.permute.xlu0 0
      %5286 = vperm.xlu0 %5285, %v5231
      %v5287 = vpop.permute.xlu0 %5286
      %5288 = vset.pattern.permute.xlu0 0
      %5289 = vperm.xlu0 %5288, %v5232
      %v5290 = vpop.permute.xlu0 %5289
      %5291 = vset.pattern.permute.xlu0 0
      %5292 = vperm.xlu0 %5291, %v5233
      %v5293 = vpop.permute.xlu0 %5292
      %5294 = vset.pattern.permute.xlu0 0
      %5295 = vperm.xlu0 %5294, %v5234
      %v5296 = vpop.permute.xlu0 %5295
      %5297 = vset.pattern.permute.xlu0 0
      %5298 = vperm.xlu0 %5297, %v5235
      %v5299 = vpop.permute.xlu0 %5298
      %5300 = vset.pattern.permute.xlu0 0
      %5301 = vperm.xlu0 %5300, %v5236
      %v5302 = vpop.permute.xlu0 %5301
      %5303 = vset.pattern.permute.xlu0 0
      %5304 = vperm.xlu0 %5303, %v5237
      %v5305 = vpop.permute.xlu0 %5304
      %5306 = vset.pattern.permute.xlu0 0
      %5307 = vperm.xlu0 %5306, %v5238
      %v5308 = vpop.permute.xlu0 %5307
      %5309 = vset.pattern.permute.xlu0 0
      %5310 = vperm.xlu0 %5309, %v5239
      %v5311 = vpop.permute.xlu0 %5310
      %5312 = vset.pattern.permute.xlu0 0
      %5313 = vperm.xlu0 %5312, %v5240
      %v5314 = vpop.permute.xlu0 %5313
      %5315 = vset.pattern.permute.xlu0 0
      %5316 = vperm.xlu0 %5315, %v5241
      %v5317 = vpop.permute.xlu0 %5316
      %5318 = vset.pattern.permute.xlu0 0
      %5319 = vperm.xlu0 %5318, %v5242
      %v5320 = vpop.permute.xlu0 %5319
      %5321 = vset.pattern.permute.xlu0 0
      %5322 = vperm.xlu0 %5321, %v5243
      %v5323 = vpop.permute.xlu0 %5322
      %5324 = vset.pattern.permute.xlu0 0
      %5325 = vperm.xlu0 %5324, %v5244
      %v5326 = vpop.permute.xlu0 %5325
      %5327 = vset.pattern.permute.xlu0 0
      %5328 = vperm.xlu0 %5327, %v5245
      %v5329 = vpop.permute.xlu0 %5328
      %5330 = vset.pattern.permute.xlu0 0
      %5331 = vperm.xlu0 %5330, %v5246
      %v5332 = vpop.permute.xlu0 %5331
      %5333 = vset.pattern.permute.xlu0 0
      %5334 = vperm.xlu0 %5333, %v5247
      %v5335 = vpop.permute.xlu0 %5334
      %5336 = vset.pattern.permute.xlu0 0
      %5337 = vperm.xlu0 %5336, %v5248
      %v5338 = vpop.permute.xlu0 %5337
      %5339 = vset.pattern.permute.xlu0 0
      %5340 = vperm.xlu0 %5339, %v5249
      %v5341 = vpop.permute.xlu0 %5340
      %5342 = vset.pattern.permute.xlu0 0
      %5343 = vperm.xlu0 %5342, %v5250
      %v5344 = vpop.permute.xlu0 %5343
      %5345 = vset.pattern.permute.xlu0 0
      %5346 = vperm.xlu0 %5345, %v5251
      %v5347 = vpop.permute.xlu0 %5346
      %vm5348 = vcmp.eq.s32.totalorder %v5254, 1
      %vm5349 = vcmp.eq.s32.totalorder %v5257, 1
      %vm5350 = vcmp.eq.s32.totalorder %v5260, 1
      %vm5351 = vcmp.eq.s32.totalorder %v5263, 1
      %vm5352 = vcmp.eq.s32.totalorder %v5266, 1
      %vm5353 = vcmp.eq.s32.totalorder %v5269, 1
      %vm5354 = vcmp.eq.s32.totalorder %v5272, 1
      %vm5355 = vcmp.eq.s32.totalorder %v5275, 1
      %vm5356 = vcmp.eq.s32.totalorder %v5278, 1
      %vm5357 = vcmp.eq.s32.totalorder %v5281, 1
      %vm5358 = vcmp.eq.s32.totalorder %v5284, 1
      %vm5359 = vcmp.eq.s32.totalorder %v5287, 1
      %vm5360 = vcmp.eq.s32.totalorder %v5290, 1
      %vm5361 = vcmp.eq.s32.totalorder %v5293, 1
      %vm5362 = vcmp.eq.s32.totalorder %v5296, 1
      %vm5363 = vcmp.eq.s32.totalorder %v5299, 1
      %vm5364 = vcmp.eq.s32.totalorder %v5302, 1
      %vm5365 = vcmp.eq.s32.totalorder %v5305, 1
      %vm5366 = vcmp.eq.s32.totalorder %v5308, 1
      %vm5367 = vcmp.eq.s32.totalorder %v5311, 1
      %vm5368 = vcmp.eq.s32.totalorder %v5314, 1
      %vm5369 = vcmp.eq.s32.totalorder %v5317, 1
      %vm5370 = vcmp.eq.s32.totalorder %v5320, 1
      %vm5371 = vcmp.eq.s32.totalorder %v5323, 1
      %vm5372 = vcmp.eq.s32.totalorder %v5326, 1
      %vm5373 = vcmp.eq.s32.totalorder %v5329, 1
      %vm5374 = vcmp.eq.s32.totalorder %v5332, 1
      %vm5375 = vcmp.eq.s32.totalorder %v5335, 1
      %vm5376 = vcmp.eq.s32.totalorder %v5338, 1
      %vm5377 = vcmp.eq.s32.totalorder %v5341, 1
      %vm5378 = vcmp.eq.s32.totalorder %v5344, 1
      %vm5379 = vcmp.eq.s32.totalorder %v5347, 1
      %v5380 = vsel %vm5348, %v5157, %v4452
      %v5381 = vsel %vm5349, %v5159, %v4453
      %v5382 = vsel %vm5350, %v5161, %v4454
      %v5383 = vsel %vm5351, %v5163, %v4455
      %v5384 = vsel %vm5352, %v5165, %v4456
      %v5385 = vsel %vm5353, %v5167, %v4457
      %v5386 = vsel %vm5354, %v5169, %v4458
      %v5387 = vsel %vm5355, %v5171, %v4459
      %v5388 = vsel %vm5356, %v5173, %v4460
      %v5389 = vsel %vm5357, %v5175, %v4461
      %v5390 = vsel %vm5358, %v5177, %v4462
      %v5391 = vsel %vm5359, %v5179, %v4463
      %v5392 = vsel %vm5360, %v5181, %v4464
      %v5393 = vsel %vm5361, %v5183, %v4465
      %v5394 = vsel %vm5362, %v5185, %v4466
      %v5395 = vsel %vm5363, %v5187, %v4467
      %v5396 = vsel %vm5364, %v5189, %v4468
      %v5397 = vsel %vm5365, %v5191, %v4469
      %v5398 = vsel %vm5366, %v5193, %v4470
      %v5399 = vsel %vm5367, %v5195, %v4471
      %v5400 = vsel %vm5368, %v5197, %v4472
      %v5401 = vsel %vm5369, %v5199, %v4473
      %v5402 = vsel %vm5370, %v5201, %v4474
      %v5403 = vsel %vm5371, %v5203, %v4475
      %v5404 = vsel %vm5372, %v5205, %v4476
      %v5405 = vsel %vm5373, %v5207, %v4477
      %v5406 = vsel %vm5374, %v5209, %v4478
      %v5407 = vsel %vm5375, %v5211, %v4479
      %v5408 = vsel %vm5376, %v5213, %v4480
      %v5409 = vsel %vm5377, %v5215, %v4481
      %v5410 = vsel %vm5378, %v5217, %v4482
      %v5411 = vsel %vm5379, %v5219, %v4483
      %v5412 = vld [vmem:[#allocation8] sm:$0xff]
      %v5413 = vld [vmem:[#allocation8 + $0x8] sm:$0xff]
      %v5414 = vld [vmem:[#allocation8 + $0x10] sm:$0xff]
      %v5415 = vld [vmem:[#allocation8 + $0x18] sm:$0xff]
      %v5416 = vld [vmem:[#allocation8 + $0x20] sm:$0xff]
      %v5417 = vld [vmem:[#allocation8 + $0x28] sm:$0xff]
      %v5418 = vld [vmem:[#allocation8 + $0x30] sm:$0xff]
      %v5419 = vld [vmem:[#allocation8 + $0x38] sm:$0xff]
      %v5420 = vld [vmem:[#allocation8 + $0x40] sm:$0xff]
      %v5421 = vld [vmem:[#allocation8 + $0x48] sm:$0xff]
      %v5422 = vld [vmem:[#allocation8 + $0x50] sm:$0xff]
      %v5423 = vld [vmem:[#allocation8 + $0x58] sm:$0xff]
      %v5424 = vld [vmem:[#allocation8 + $0x60] sm:$0xff]
      %v5425 = vld [vmem:[#allocation8 + $0x68] sm:$0xff]
      %v5426 = vld [vmem:[#allocation8 + $0x70] sm:$0xff]
      %v5427 = vld [vmem:[#allocation8 + $0x78] sm:$0xff]
      %v5428 = vld [vmem:[#allocation8 + $0x80] sm:$0xff]
      %v5429 = vld [vmem:[#allocation8 + $0x88] sm:$0xff]
      %v5430 = vld [vmem:[#allocation8 + $0x90] sm:$0xff]
      %v5431 = vld [vmem:[#allocation8 + $0x98] sm:$0xff]
      %v5432 = vld [vmem:[#allocation8 + $0xa0] sm:$0xff]
      %v5433 = vld [vmem:[#allocation8 + $0xa8] sm:$0xff]
      %v5434 = vld [vmem:[#allocation8 + $0xb0] sm:$0xff]
      %v5435 = vld [vmem:[#allocation8 + $0xb8] sm:$0xff]
      %v5436 = vld [vmem:[#allocation8 + $0xc0] sm:$0xff]
      %v5437 = vld [vmem:[#allocation8 + $0xc8] sm:$0xff]
      %v5438 = vld [vmem:[#allocation8 + $0xd0] sm:$0xff]
      %v5439 = vld [vmem:[#allocation8 + $0xd8] sm:$0xff]
      %v5440 = vld [vmem:[#allocation8 + $0xe0] sm:$0xff]
      %v5441 = vld [vmem:[#allocation8 + $0xe8] sm:$0xff]
      %v5442 = vld [vmem:[#allocation8 + $0xf0] sm:$0xff]
      %v5443 = vld [vmem:[#allocation8 + $0xf8] sm:$0xff]
      %v5444 = vld [vmem:[#allocation9] sm:$0xff]
      %v5445 = vld [vmem:[#allocation9 + $0x8] sm:$0xff]
      %v5446 = vld [vmem:[#allocation9 + $0x10] sm:$0xff]
      %v5447 = vld [vmem:[#allocation9 + $0x18] sm:$0xff]
      %v5448 = vld [vmem:[#allocation9 + $0x20] sm:$0xff]
      %v5449 = vld [vmem:[#allocation9 + $0x28] sm:$0xff]
      %v5450 = vld [vmem:[#allocation9 + $0x30] sm:$0xff]
      %v5451 = vld [vmem:[#allocation9 + $0x38] sm:$0xff]
      %v5452 = vld [vmem:[#allocation9 + $0x40] sm:$0xff]
      %v5453 = vld [vmem:[#allocation9 + $0x48] sm:$0xff]
      %v5454 = vld [vmem:[#allocation9 + $0x50] sm:$0xff]
      %v5455 = vld [vmem:[#allocation9 + $0x58] sm:$0xff]
      %v5456 = vld [vmem:[#allocation9 + $0x60] sm:$0xff]
      %v5457 = vld [vmem:[#allocation9 + $0x68] sm:$0xff]
      %v5458 = vld [vmem:[#allocation9 + $0x70] sm:$0xff]
      %v5459 = vld [vmem:[#allocation9 + $0x78] sm:$0xff]
      %v5460 = vld [vmem:[#allocation9 + $0x80] sm:$0xff]
      %v5461 = vld [vmem:[#allocation9 + $0x88] sm:$0xff]
      %v5462 = vld [vmem:[#allocation9 + $0x90] sm:$0xff]
      %v5463 = vld [vmem:[#allocation9 + $0x98] sm:$0xff]
      %v5464 = vld [vmem:[#allocation9 + $0xa0] sm:$0xff]
      %v5465 = vld [vmem:[#allocation9 + $0xa8] sm:$0xff]
      %v5466 = vld [vmem:[#allocation9 + $0xb0] sm:$0xff]
      %v5467 = vld [vmem:[#allocation9 + $0xb8] sm:$0xff]
      %v5468 = vld [vmem:[#allocation9 + $0xc0] sm:$0xff]
      %v5469 = vld [vmem:[#allocation9 + $0xc8] sm:$0xff]
      %v5470 = vld [vmem:[#allocation9 + $0xd0] sm:$0xff]
      %v5471 = vld [vmem:[#allocation9 + $0xd8] sm:$0xff]
      %v5472 = vld [vmem:[#allocation9 + $0xe0] sm:$0xff]
      %v5473 = vld [vmem:[#allocation9 + $0xe8] sm:$0xff]
      %v5474 = vld [vmem:[#allocation9 + $0xf0] sm:$0xff]
      %v5475 = vld [vmem:[#allocation9 + $0xf8] sm:$0xff]
      %vm5476 = vcmp.gt.f32.partialorder %v5412, 0.0
      %vm5477 = vcmp.gt.f32.partialorder %v5413, 0.0
      %vm5478 = vcmp.gt.f32.partialorder %v5414, 0.0
      %vm5479 = vcmp.gt.f32.partialorder %v5415, 0.0
      %vm5480 = vcmp.gt.f32.partialorder %v5416, 0.0
      %vm5481 = vcmp.gt.f32.partialorder %v5417, 0.0
      %vm5482 = vcmp.gt.f32.partialorder %v5418, 0.0
      %vm5483 = vcmp.gt.f32.partialorder %v5419, 0.0
      %vm5484 = vcmp.gt.f32.partialorder %v5420, 0.0
      %vm5485 = vcmp.gt.f32.partialorder %v5421, 0.0
      %vm5486 = vcmp.gt.f32.partialorder %v5422, 0.0
      %vm5487 = vcmp.gt.f32.partialorder %v5423, 0.0
      %vm5488 = vcmp.gt.f32.partialorder %v5424, 0.0
      %vm5489 = vcmp.gt.f32.partialorder %v5425, 0.0
      %vm5490 = vcmp.gt.f32.partialorder %v5426, 0.0
      %vm5491 = vcmp.gt.f32.partialorder %v5427, 0.0
      %vm5492 = vcmp.gt.f32.partialorder %v5428, 0.0
      %vm5493 = vcmp.gt.f32.partialorder %v5429, 0.0
      %vm5494 = vcmp.gt.f32.partialorder %v5430, 0.0
      %vm5495 = vcmp.gt.f32.partialorder %v5431, 0.0
      %vm5496 = vcmp.gt.f32.partialorder %v5432, 0.0
      %vm5497 = vcmp.gt.f32.partialorder %v5433, 0.0
      %vm5498 = vcmp.gt.f32.partialorder %v5434, 0.0
      %vm5499 = vcmp.gt.f32.partialorder %v5435, 0.0
      %vm5500 = vcmp.gt.f32.partialorder %v5436, 0.0
      %vm5501 = vcmp.gt.f32.partialorder %v5437, 0.0
      %vm5502 = vcmp.gt.f32.partialorder %v5438, 0.0
      %vm5503 = vcmp.gt.f32.partialorder %v5439, 0.0
      %vm5504 = vcmp.gt.f32.partialorder %v5440, 0.0
      %vm5505 = vcmp.gt.f32.partialorder %v5441, 0.0
      %vm5506 = vcmp.gt.f32.partialorder %v5442, 0.0
      %vm5507 = vcmp.gt.f32.partialorder %v5443, 0.0
      %v5508 = vsel %vm5476, %v5412, 1.0
      %v5509 = vsel %vm5477, %v5413, 1.0
      %v5510 = vsel %vm5478, %v5414, 1.0
      %v5511 = vsel %vm5479, %v5415, 1.0
      %v5512 = vsel %vm5480, %v5416, 1.0
      %v5513 = vsel %vm5481, %v5417, 1.0
      %v5514 = vsel %vm5482, %v5418, 1.0
      %v5515 = vsel %vm5483, %v5419, 1.0
      %v5516 = vsel %vm5484, %v5420, 1.0
      %v5517 = vsel %vm5485, %v5421, 1.0
      %v5518 = vsel %vm5486, %v5422, 1.0
      %v5519 = vsel %vm5487, %v5423, 1.0
      %v5520 = vsel %vm5488, %v5424, 1.0
      %v5521 = vsel %vm5489, %v5425, 1.0
      %v5522 = vsel %vm5490, %v5426, 1.0
      %v5523 = vsel %vm5491, %v5427, 1.0
      %v5524 = vsel %vm5492, %v5428, 1.0
      %v5525 = vsel %vm5493, %v5429, 1.0
      %v5526 = vsel %vm5494, %v5430, 1.0
      %v5527 = vsel %vm5495, %v5431, 1.0
      %v5528 = vsel %vm5496, %v5432, 1.0
      %v5529 = vsel %vm5497, %v5433, 1.0
      %v5530 = vsel %vm5498, %v5434, 1.0
      %v5531 = vsel %vm5499, %v5435, 1.0
      %v5532 = vsel %vm5500, %v5436, 1.0
      %v5533 = vsel %vm5501, %v5437, 1.0
      %v5534 = vsel %vm5502, %v5438, 1.0
      %v5535 = vsel %vm5503, %v5439, 1.0
      %v5536 = vsel %vm5504, %v5440, 1.0
      %v5537 = vsel %vm5505, %v5441, 1.0
      %v5538 = vsel %vm5506, %v5442, 1.0
      %v5539 = vsel %vm5507, %v5443, 1.0
      %5541 = vset.pattern.permute.xlu0 0
      %5542 = vperm.xlu0 %5541, %v5508
      %v5543 = vpop.permute.xlu0 %5542
      %5546 = vset.pattern.permute.xlu0 0
      %5547 = vperm.xlu0 %5546, %v5509
      %v5548 = vpop.permute.xlu0 %5547
      %5551 = vset.pattern.permute.xlu0 0
      %5552 = vperm.xlu0 %5551, %v5510
      %v5553 = vpop.permute.xlu0 %5552
      %5556 = vset.pattern.permute.xlu0 0
      %5557 = vperm.xlu0 %5556, %v5511
      %v5558 = vpop.permute.xlu0 %5557
      %5561 = vset.pattern.permute.xlu0 0
      %5562 = vperm.xlu0 %5561, %v5512
      %v5563 = vpop.permute.xlu0 %5562
      %5566 = vset.pattern.permute.xlu0 0
      %5567 = vperm.xlu0 %5566, %v5513
      %v5568 = vpop.permute.xlu0 %5567
      %5571 = vset.pattern.permute.xlu0 0
      %5572 = vperm.xlu0 %5571, %v5514
      %v5573 = vpop.permute.xlu0 %5572
      %5576 = vset.pattern.permute.xlu0 0
      %5577 = vperm.xlu0 %5576, %v5515
      %v5578 = vpop.permute.xlu0 %5577
      %5581 = vset.pattern.permute.xlu0 0
      %5582 = vperm.xlu0 %5581, %v5516
      %v5583 = vpop.permute.xlu0 %5582
      %5586 = vset.pattern.permute.xlu0 0
      %5587 = vperm.xlu0 %5586, %v5517
      %v5588 = vpop.permute.xlu0 %5587
      %5591 = vset.pattern.permute.xlu0 0
      %5592 = vperm.xlu0 %5591, %v5518
      %v5593 = vpop.permute.xlu0 %5592
      %5596 = vset.pattern.permute.xlu0 0
      %5597 = vperm.xlu0 %5596, %v5519
      %v5598 = vpop.permute.xlu0 %5597
      %5601 = vset.pattern.permute.xlu0 0
      %5602 = vperm.xlu0 %5601, %v5520
      %v5603 = vpop.permute.xlu0 %5602
      %5606 = vset.pattern.permute.xlu0 0
      %5607 = vperm.xlu0 %5606, %v5521
      %v5608 = vpop.permute.xlu0 %5607
      %5611 = vset.pattern.permute.xlu0 0
      %5612 = vperm.xlu0 %5611, %v5522
      %v5613 = vpop.permute.xlu0 %5612
      %5616 = vset.pattern.permute.xlu0 0
      %5617 = vperm.xlu0 %5616, %v5523
      %v5618 = vpop.permute.xlu0 %5617
      %5621 = vset.pattern.permute.xlu0 0
      %5622 = vperm.xlu0 %5621, %v5524
      %v5623 = vpop.permute.xlu0 %5622
      %5626 = vset.pattern.permute.xlu0 0
      %5627 = vperm.xlu0 %5626, %v5525
      %v5628 = vpop.permute.xlu0 %5627
      %5631 = vset.pattern.permute.xlu0 0
      %5632 = vperm.xlu0 %5631, %v5526
      %v5633 = vpop.permute.xlu0 %5632
      %5636 = vset.pattern.permute.xlu0 0
      %5637 = vperm.xlu0 %5636, %v5527
      %v5638 = vpop.permute.xlu0 %5637
      %5641 = vset.pattern.permute.xlu0 0
      %5642 = vperm.xlu0 %5641, %v5528
      %v5643 = vpop.permute.xlu0 %5642
      %5646 = vset.pattern.permute.xlu0 0
      %5647 = vperm.xlu0 %5646, %v5529
      %v5648 = vpop.permute.xlu0 %5647
      %5651 = vset.pattern.permute.xlu0 0
      %5652 = vperm.xlu0 %5651, %v5530
      %v5653 = vpop.permute.xlu0 %5652
      %5656 = vset.pattern.permute.xlu0 0
      %5657 = vperm.xlu0 %5656, %v5531
      %v5658 = vpop.permute.xlu0 %5657
      %5661 = vset.pattern.permute.xlu0 0
      %5662 = vperm.xlu0 %5661, %v5532
      %v5663 = vpop.permute.xlu0 %5662
      %5666 = vset.pattern.permute.xlu0 0
      %5667 = vperm.xlu0 %5666, %v5533
      %v5668 = vpop.permute.xlu0 %5667
      %5671 = vset.pattern.permute.xlu0 0
      %5672 = vperm.xlu0 %5671, %v5534
      %v5673 = vpop.permute.xlu0 %5672
      %5676 = vset.pattern.permute.xlu0 0
      %5677 = vperm.xlu0 %5676, %v5535
      %v5678 = vpop.permute.xlu0 %5677
      %5681 = vset.pattern.permute.xlu0 0
      %5682 = vperm.xlu0 %5681, %v5536
      %v5683 = vpop.permute.xlu0 %5682
      %5686 = vset.pattern.permute.xlu0 0
      %5687 = vperm.xlu0 %5686, %v5537
      %v5688 = vpop.permute.xlu0 %5687
      %5691 = vset.pattern.permute.xlu0 0
      %5692 = vperm.xlu0 %5691, %v5538
      %v5693 = vpop.permute.xlu0 %5692
      %5696 = vset.pattern.permute.xlu0 0
      %5697 = vperm.xlu0 %5696, %v5539
      %v5698 = vpop.permute.xlu0 %5697
      %v5700 = vrcp.pop %v5543
      %v5701 = vmul.f32 %v5444, %v5700
      %v5702 = vrcp.pop %v5548
      %v5703 = vmul.f32 %v5445, %v5702
      %v5704 = vrcp.pop %v5553
      %v5705 = vmul.f32 %v5446, %v5704
      %v5706 = vrcp.pop %v5558
      %v5707 = vmul.f32 %v5447, %v5706
      %v5708 = vrcp.pop %v5563
      %v5709 = vmul.f32 %v5448, %v5708
      %v5710 = vrcp.pop %v5568
      %v5711 = vmul.f32 %v5449, %v5710
      %v5712 = vrcp.pop %v5573
      %v5713 = vmul.f32 %v5450, %v5712
      %v5714 = vrcp.pop %v5578
      %v5715 = vmul.f32 %v5451, %v5714
      %v5716 = vrcp.pop %v5583
      %v5717 = vmul.f32 %v5452, %v5716
      %v5718 = vrcp.pop %v5588
      %v5719 = vmul.f32 %v5453, %v5718
      %v5720 = vrcp.pop %v5593
      %v5721 = vmul.f32 %v5454, %v5720
      %v5722 = vrcp.pop %v5598
      %v5723 = vmul.f32 %v5455, %v5722
      %v5724 = vrcp.pop %v5603
      %v5725 = vmul.f32 %v5456, %v5724
      %v5726 = vrcp.pop %v5608
      %v5727 = vmul.f32 %v5457, %v5726
      %v5728 = vrcp.pop %v5613
      %v5729 = vmul.f32 %v5458, %v5728
      %v5730 = vrcp.pop %v5618
      %v5731 = vmul.f32 %v5459, %v5730
      %v5732 = vrcp.pop %v5623
      %v5733 = vmul.f32 %v5460, %v5732
      %v5734 = vrcp.pop %v5628
      %v5735 = vmul.f32 %v5461, %v5734
      %v5736 = vrcp.pop %v5633
      %v5737 = vmul.f32 %v5462, %v5736
      %v5738 = vrcp.pop %v5638
      %v5739 = vmul.f32 %v5463, %v5738
      %v5740 = vrcp.pop %v5643
      %v5741 = vmul.f32 %v5464, %v5740
      %v5742 = vrcp.pop %v5648
      %v5743 = vmul.f32 %v5465, %v5742
      %v5744 = vrcp.pop %v5653
      %v5745 = vmul.f32 %v5466, %v5744
      %v5746 = vrcp.pop %v5658
      %v5747 = vmul.f32 %v5467, %v5746
      %v5748 = vrcp.pop %v5663
      %v5749 = vmul.f32 %v5468, %v5748
      %v5750 = vrcp.pop %v5668
      %v5751 = vmul.f32 %v5469, %v5750
      %v5752 = vrcp.pop %v5673
      %v5753 = vmul.f32 %v5470, %v5752
      %v5754 = vrcp.pop %v5678
      %v5755 = vmul.f32 %v5471, %v5754
      %v5756 = vrcp.pop %v5683
      %v5757 = vmul.f32 %v5472, %v5756
      %v5758 = vrcp.pop %v5688
      %v5759 = vmul.f32 %v5473, %v5758
      %v5760 = vrcp.pop %v5693
      %v5761 = vmul.f32 %v5474, %v5760
      %v5762 = vrcp.pop %v5698
      %v5763 = vmul.f32 %v5475, %v5762
      %v5764 = vsel %vm4804, 1, 0
      %v5765 = vsel %vm4805, 1, 0
      %v5766 = vsel %vm4806, 1, 0
      %v5767 = vsel %vm4807, 1, 0
      %v5768 = vsel %vm4808, 1, 0
      %v5769 = vsel %vm4809, 1, 0
      %v5770 = vsel %vm4810, 1, 0
      %v5771 = vsel %vm4811, 1, 0
      %v5772 = vsel %vm4812, 1, 0
      %v5773 = vsel %vm4813, 1, 0
      %v5774 = vsel %vm4814, 1, 0
      %v5775 = vsel %vm4815, 1, 0
      %v5776 = vsel %vm4816, 1, 0
      %v5777 = vsel %vm4817, 1, 0
      %v5778 = vsel %vm4818, 1, 0
      %v5779 = vsel %vm4819, 1, 0
      %v5780 = vsel %vm4820, 1, 0
      %v5781 = vsel %vm4821, 1, 0
      %v5782 = vsel %vm4822, 1, 0
      %v5783 = vsel %vm4823, 1, 0
      %v5784 = vsel %vm4824, 1, 0
      %v5785 = vsel %vm4825, 1, 0
      %v5786 = vsel %vm4826, 1, 0
      %v5787 = vsel %vm4827, 1, 0
      %v5788 = vsel %vm4828, 1, 0
      %v5789 = vsel %vm4829, 1, 0
      %v5790 = vsel %vm4830, 1, 0
      %v5791 = vsel %vm4831, 1, 0
      %v5792 = vsel %vm4832, 1, 0
      %v5793 = vsel %vm4833, 1, 0
      %v5794 = vsel %vm4834, 1, 0
      %v5795 = vsel %vm4835, 1, 0
      %5796 = vset.pattern.permute.xlu0 0
      %5797 = vperm.xlu0 %5796, %v5764
      %v5798 = vpop.permute.xlu0 %5797
      %5799 = vset.pattern.permute.xlu0 0
      %5800 = vperm.xlu0 %5799, %v5765
      %v5801 = vpop.permute.xlu0 %5800
      %5802 = vset.pattern.permute.xlu0 0
      %5803 = vperm.xlu0 %5802, %v5766
      %v5804 = vpop.permute.xlu0 %5803
      %5805 = vset.pattern.permute.xlu0 0
      %5806 = vperm.xlu0 %5805, %v5767
      %v5807 = vpop.permute.xlu0 %5806
      %5808 = vset.pattern.permute.xlu0 0
      %5809 = vperm.xlu0 %5808, %v5768
      %v5810 = vpop.permute.xlu0 %5809
      %5811 = vset.pattern.permute.xlu0 0
      %5812 = vperm.xlu0 %5811, %v5769
      %v5813 = vpop.permute.xlu0 %5812
      %5814 = vset.pattern.permute.xlu0 0
      %5815 = vperm.xlu0 %5814, %v5770
      %v5816 = vpop.permute.xlu0 %5815
      %5817 = vset.pattern.permute.xlu0 0
      %5818 = vperm.xlu0 %5817, %v5771
      %v5819 = vpop.permute.xlu0 %5818
      %5820 = vset.pattern.permute.xlu0 0
      %5821 = vperm.xlu0 %5820, %v5772
      %v5822 = vpop.permute.xlu0 %5821
      %5823 = vset.pattern.permute.xlu0 0
      %5824 = vperm.xlu0 %5823, %v5773
      %v5825 = vpop.permute.xlu0 %5824
      %5826 = vset.pattern.permute.xlu0 0
      %5827 = vperm.xlu0 %5826, %v5774
      %v5828 = vpop.permute.xlu0 %5827
      %5829 = vset.pattern.permute.xlu0 0
      %5830 = vperm.xlu0 %5829, %v5775
      %v5831 = vpop.permute.xlu0 %5830
      %5832 = vset.pattern.permute.xlu0 0
      %5833 = vperm.xlu0 %5832, %v5776
      %v5834 = vpop.permute.xlu0 %5833
      %5835 = vset.pattern.permute.xlu0 0
      %5836 = vperm.xlu0 %5835, %v5777
      %v5837 = vpop.permute.xlu0 %5836
      %5838 = vset.pattern.permute.xlu0 0
      %5839 = vperm.xlu0 %5838, %v5778
      %v5840 = vpop.permute.xlu0 %5839
      %5841 = vset.pattern.permute.xlu0 0
      %5842 = vperm.xlu0 %5841, %v5779
      %v5843 = vpop.permute.xlu0 %5842
      %5844 = vset.pattern.permute.xlu0 0
      %5845 = vperm.xlu0 %5844, %v5780
      %v5846 = vpop.permute.xlu0 %5845
      %5847 = vset.pattern.permute.xlu0 0
      %5848 = vperm.xlu0 %5847, %v5781
      %v5849 = vpop.permute.xlu0 %5848
      %5850 = vset.pattern.permute.xlu0 0
      %5851 = vperm.xlu0 %5850, %v5782
      %v5852 = vpop.permute.xlu0 %5851
      %5853 = vset.pattern.permute.xlu0 0
      %5854 = vperm.xlu0 %5853, %v5783
      %v5855 = vpop.permute.xlu0 %5854
      %5856 = vset.pattern.permute.xlu0 0
      %5857 = vperm.xlu0 %5856, %v5784
      %v5858 = vpop.permute.xlu0 %5857
      %5859 = vset.pattern.permute.xlu0 0
      %5860 = vperm.xlu0 %5859, %v5785
      %v5861 = vpop.permute.xlu0 %5860
      %5862 = vset.pattern.permute.xlu0 0
      %5863 = vperm.xlu0 %5862, %v5786
      %v5864 = vpop.permute.xlu0 %5863
      %5865 = vset.pattern.permute.xlu0 0
      %5866 = vperm.xlu0 %5865, %v5787
      %v5867 = vpop.permute.xlu0 %5866
      %5868 = vset.pattern.permute.xlu0 0
      %5869 = vperm.xlu0 %5868, %v5788
      %v5870 = vpop.permute.xlu0 %5869
      %5871 = vset.pattern.permute.xlu0 0
      %5872 = vperm.xlu0 %5871, %v5789
      %v5873 = vpop.permute.xlu0 %5872
      %5874 = vset.pattern.permute.xlu0 0
      %5875 = vperm.xlu0 %5874, %v5790
      %v5876 = vpop.permute.xlu0 %5875
      %5877 = vset.pattern.permute.xlu0 0
      %5878 = vperm.xlu0 %5877, %v5791
      %v5879 = vpop.permute.xlu0 %5878
      %5880 = vset.pattern.permute.xlu0 0
      %5881 = vperm.xlu0 %5880, %v5792
      %v5882 = vpop.permute.xlu0 %5881
      %5883 = vset.pattern.permute.xlu0 0
      %5884 = vperm.xlu0 %5883, %v5793
      %v5885 = vpop.permute.xlu0 %5884
      %5886 = vset.pattern.permute.xlu0 0
      %5887 = vperm.xlu0 %5886, %v5794
      %v5888 = vpop.permute.xlu0 %5887
      %5889 = vset.pattern.permute.xlu0 0
      %5890 = vperm.xlu0 %5889, %v5795
      %v5891 = vpop.permute.xlu0 %5890
      %vm5892 = vcmp.eq.s32.totalorder %v5798, 1
      %vm5893 = vcmp.eq.s32.totalorder %v5801, 1
      %vm5894 = vcmp.eq.s32.totalorder %v5804, 1
      %vm5895 = vcmp.eq.s32.totalorder %v5807, 1
      %vm5896 = vcmp.eq.s32.totalorder %v5810, 1
      %vm5897 = vcmp.eq.s32.totalorder %v5813, 1
      %vm5898 = vcmp.eq.s32.totalorder %v5816, 1
      %vm5899 = vcmp.eq.s32.totalorder %v5819, 1
      %vm5900 = vcmp.eq.s32.totalorder %v5822, 1
      %vm5901 = vcmp.eq.s32.totalorder %v5825, 1
      %vm5902 = vcmp.eq.s32.totalorder %v5828, 1
      %vm5903 = vcmp.eq.s32.totalorder %v5831, 1
      %vm5904 = vcmp.eq.s32.totalorder %v5834, 1
      %vm5905 = vcmp.eq.s32.totalorder %v5837, 1
      %vm5906 = vcmp.eq.s32.totalorder %v5840, 1
      %vm5907 = vcmp.eq.s32.totalorder %v5843, 1
      %vm5908 = vcmp.eq.s32.totalorder %v5846, 1
      %vm5909 = vcmp.eq.s32.totalorder %v5849, 1
      %vm5910 = vcmp.eq.s32.totalorder %v5852, 1
      %vm5911 = vcmp.eq.s32.totalorder %v5855, 1
      %vm5912 = vcmp.eq.s32.totalorder %v5858, 1
      %vm5913 = vcmp.eq.s32.totalorder %v5861, 1
      %vm5914 = vcmp.eq.s32.totalorder %v5864, 1
      %vm5915 = vcmp.eq.s32.totalorder %v5867, 1
      %vm5916 = vcmp.eq.s32.totalorder %v5870, 1
      %vm5917 = vcmp.eq.s32.totalorder %v5873, 1
      %vm5918 = vcmp.eq.s32.totalorder %v5876, 1
      %vm5919 = vcmp.eq.s32.totalorder %v5879, 1
      %vm5920 = vcmp.eq.s32.totalorder %v5882, 1
      %vm5921 = vcmp.eq.s32.totalorder %v5885, 1
      %vm5922 = vcmp.eq.s32.totalorder %v5888, 1
      %vm5923 = vcmp.eq.s32.totalorder %v5891, 1
      %v5924 = vsel %vm5892, %v5701, %v4452
      %v5925 = vsel %vm5893, %v5703, %v4453
      %v5926 = vsel %vm5894, %v5705, %v4454
      %v5927 = vsel %vm5895, %v5707, %v4455
      %v5928 = vsel %vm5896, %v5709, %v4456
      %v5929 = vsel %vm5897, %v5711, %v4457
      %v5930 = vsel %vm5898, %v5713, %v4458
      %v5931 = vsel %vm5899, %v5715, %v4459
      %v5932 = vsel %vm5900, %v5717, %v4460
      %v5933 = vsel %vm5901, %v5719, %v4461
      %v5934 = vsel %vm5902, %v5721, %v4462
      %v5935 = vsel %vm5903, %v5723, %v4463
      %v5936 = vsel %vm5904, %v5725, %v4464
      %v5937 = vsel %vm5905, %v5727, %v4465
      %v5938 = vsel %vm5906, %v5729, %v4466
      %v5939 = vsel %vm5907, %v5731, %v4467
      %v5940 = vsel %vm5908, %v5733, %v4468
      %v5941 = vsel %vm5909, %v5735, %v4469
      %v5942 = vsel %vm5910, %v5737, %v4470
      %v5943 = vsel %vm5911, %v5739, %v4471
      %v5944 = vsel %vm5912, %v5741, %v4472
      %v5945 = vsel %vm5913, %v5743, %v4473
      %v5946 = vsel %vm5914, %v5745, %v4474
      %v5947 = vsel %vm5915, %v5747, %v4475
      %v5948 = vsel %vm5916, %v5749, %v4476
      %v5949 = vsel %vm5917, %v5751, %v4477
      %v5950 = vsel %vm5918, %v5753, %v4478
      %v5951 = vsel %vm5919, %v5755, %v4479
      %v5952 = vsel %vm5920, %v5757, %v4480
      %v5953 = vsel %vm5921, %v5759, %v4481
      %v5954 = vsel %vm5922, %v5761, %v4482
      %v5955 = vsel %vm5923, %v5763, %v4483
      %v5956 = vld [vmem:[#allocation25] sm:$0x1]
      %v5957 = vpack.c.bf16 %v4711, %v4709
      %v5958 = vpack.c.bf16 %v4715, %v4713
      %v5959 = vpack.c.bf16 %v4719, %v4717
      %v5960 = vpack.c.bf16 %v4723, %v4721
      %v5961 = vpack.c.bf16 %v4727, %v4725
      %v5962 = vpack.c.bf16 %v4731, %v4729
      %v5963 = vpack.c.bf16 %v4735, %v4733
      %v5964 = vpack.c.bf16 %v4739, %v4737
      %v5965 = vpack.c.bf16 %v4743, %v4741
      %v5966 = vpack.c.bf16 %v4747, %v4745
      %v5967 = vpack.c.bf16 %v4751, %v4749
      %v5968 = vpack.c.bf16 %v4755, %v4753
      %v5969 = vpack.c.bf16 %v4759, %v4757
      %v5970 = vpack.c.bf16 %v4763, %v4761
      %v5971 = vpack.c.bf16 %v4767, %v4765
      %v5972 = vpack.c.bf16 %v4771, %v4769
      %v5973 = vld [vmem:[#allocation24] sm:$0xff]
      %v5974 = vpack.c.bf16 %v5973, %v5973
      %vm5975 = vcmask 64512
      %v5977 = vsel %vm5975, %v5957, 0
      %v5980 = vsel %vm5975, %v5958, 0
      %v5983 = vsel %vm5975, %v5959, 0
      %v5986 = vsel %vm5975, %v5960, 0
      %v5989 = vsel %vm5975, %v5961, 0
      %v5992 = vsel %vm5975, %v5962, 0
      %v5995 = vsel %vm5975, %v5963, 0
      %v5998 = vsel %vm5975, %v5964, 0
      %v6001 = vsel %vm5975, %v5965, 0
      %v6004 = vsel %vm5975, %v5966, 0
      %v6007 = vsel %vm5975, %v5967, 0
      %v6010 = vsel %vm5975, %v5968, 0
      %v6013 = vsel %vm5975, %v5969, 0
      %v6016 = vsel %vm5975, %v5970, 0
      %v6019 = vsel %vm5975, %v5971, 0
      %v6022 = vsel %vm5975, %v5972, 0
      %vm6024 = vcmask 1043456
      %v6026 = vsel %vm6024, %v5974, 0
      %6028 = vmatprep.subr.bf16.mxu0 0
      %6029 = vmatpush1.bf16.msra.mxu0 %v6026
      %6030 = vmatprep.subr.bf16.mxu0 0
      %6031 = vmatpush1.bf16.msra.mxu0 0
      %6032 = vmatprep.subr.bf16.mxu0 0
      %6033 = vmatpush1.bf16.msra.mxu0 0
      %6034 = vmatprep.subr.bf16.mxu0 0
      %6035 = vmatpush1.bf16.msra.mxu0 0
      %6036 = vmatprep.subr.bf16.mxu0 0
      %6037 = vmatpush1.bf16.msra.mxu0 0
      %6038 = vmatprep.subr.bf16.mxu0 0
      %6039 = vmatpush1.bf16.msra.mxu0 0
      %6040 = vmatprep.subr.bf16.mxu0 0
      %6041 = vmatpush1.bf16.msra.mxu0 0
      %6042 = vmatprep.subr.bf16.mxu0 0
      %6043 = vmatpush1.bf16.msra.mxu0 0
      %6044 = vmatprep.subr.bf16.mxu0 0
      %6045 = vmatpush1.bf16.msra.mxu0 0
      %6046 = vmatprep.subr.bf16.mxu0 0
      %6047 = vmatpush1.bf16.msra.mxu0 0
      %6048 = vmatprep.subr.bf16.mxu0 0
      %6049 = vmatpush1.bf16.msra.mxu0 0
      %6050 = vmatprep.subr.bf16.mxu0 0
      %6051 = vmatpush1.bf16.msra.mxu0 0
      %6052 = vmatprep.subr.bf16.mxu0 0
      %6053 = vmatpush1.bf16.msra.mxu0 0
      %6054 = vmatprep.subr.bf16.mxu0 0
      %6055 = vmatpush1.bf16.msra.mxu0 0
      %6056 = vmatprep.subr.bf16.mxu0 0
      %6057 = vmatpush1.bf16.msra.mxu0 0
      %6058 = vmatprep.subr.bf16.mxu0 0
      %6059 = vmatpush1.bf16.msra.mxu0 0
      %6060 = vmatprep.mubr.bf16.mxu0 0
      %6061 = vmatmul.mubr.bf16.gmra.mrb[0].mxu0 %v5977
      %v6062 = vpop.f32.mrb[0].mxu0
      %v6063 = vadd.f32 0.0, %v6062
      %v6064 = vpop.f32.mrb[0].mxu0
      %v6065 = vpop.f32.mrb[0].mxu0
      %v6066 = vadd.f32 0.0, %v6065
      %v6067 = vpop.f32.mrb[0].mxu0
      %6068 = vmatprep.mubr.bf16.mxu0 0
      %6069 = vmatmul.mubr.bf16.gmra.mrb[0].mxu0 %v5980
      %v6070 = vpop.f32.mrb[0].mxu0
      %v6071 = vadd.f32 0.0, %v6070
      %v6072 = vpop.f32.mrb[0].mxu0
      %v6073 = vpop.f32.mrb[0].mxu0
      %v6074 = vadd.f32 0.0, %v6073
      %v6075 = vpop.f32.mrb[0].mxu0
      %6076 = vmatprep.mubr.bf16.mxu0 0
      %6077 = vmatmul.mubr.bf16.gmra.mrb[0].mxu0 %v5983
      %v6078 = vpop.f32.mrb[0].mxu0
      %v6079 = vadd.f32 0.0, %v6078
      %v6080 = vpop.f32.mrb[0].mxu0
      %v6081 = vpop.f32.mrb[0].mxu0
      %v6082 = vadd.f32 0.0, %v6081
      %v6083 = vpop.f32.mrb[0].mxu0
      %6084 = vmatprep.mubr.bf16.mxu0 0
      %6085 = vmatmul.mubr.bf16.gmra.mrb[0].mxu0 %v5986
      %v6086 = vpop.f32.mrb[0].mxu0
      %v6087 = vadd.f32 0.0, %v6086
      %v6088 = vpop.f32.mrb[0].mxu0
      %v6089 = vpop.f32.mrb[0].mxu0
      %v6090 = vadd.f32 0.0, %v6089
      %v6091 = vpop.f32.mrb[0].mxu0
      %6092 = vmatprep.mubr.bf16.mxu0 0
      %6093 = vmatmul.mubr.bf16.gmra.mrb[0].mxu0 %v5989
      %v6094 = vpop.f32.mrb[0].mxu0
      %v6095 = vadd.f32 0.0, %v6094
      %v6096 = vpop.f32.mrb[0].mxu0
      %v6097 = vpop.f32.mrb[0].mxu0
      %v6098 = vadd.f32 0.0, %v6097
      %v6099 = vpop.f32.mrb[0].mxu0
      %6100 = vmatprep.mubr.bf16.mxu0 0
      %6101 = vmatmul.mubr.bf16.gmra.mrb[0].mxu0 %v5992
      %v6102 = vpop.f32.mrb[0].mxu0
      %v6103 = vadd.f32 0.0, %v6102
      %v6104 = vpop.f32.mrb[0].mxu0
      %v6105 = vpop.f32.mrb[0].mxu0
      %v6106 = vadd.f32 0.0, %v6105
      %v6107 = vpop.f32.mrb[0].mxu0
      %6108 = vmatprep.mubr.bf16.mxu0 0
      %6109 = vmatmul.mubr.bf16.gmra.mrb[0].mxu0 %v5995
      %v6110 = vpop.f32.mrb[0].mxu0
      %v6111 = vadd.f32 0.0, %v6110
      %v6112 = vpop.f32.mrb[0].mxu0
      %v6113 = vpop.f32.mrb[0].mxu0
      %v6114 = vadd.f32 0.0, %v6113
      %v6115 = vpop.f32.mrb[0].mxu0
      %6116 = vmatprep.mubr.bf16.mxu0 0
      %6117 = vmatmul.mubr.bf16.gmra.mrb[0].mxu0 %v5998
      %v6118 = vpop.f32.mrb[0].mxu0
      %v6119 = vadd.f32 0.0, %v6118
      %v6120 = vpop.f32.mrb[0].mxu0
      %v6121 = vpop.f32.mrb[0].mxu0
      %v6122 = vadd.f32 0.0, %v6121
      %v6123 = vpop.f32.mrb[0].mxu0
      %6124 = vmatprep.mubr.bf16.mxu0 0
      %6125 = vmatmul.mubr.bf16.gmra.mrb[0].mxu0 %v6001
      %v6126 = vpop.f32.mrb[0].mxu0
      %v6127 = vadd.f32 0.0, %v6126
      %v6128 = vpop.f32.mrb[0].mxu0
      %v6129 = vpop.f32.mrb[0].mxu0
      %v6130 = vadd.f32 0.0, %v6129
      %v6131 = vpop.f32.mrb[0].mxu0
      %6132 = vmatprep.mubr.bf16.mxu0 0
      %6133 = vmatmul.mubr.bf16.gmra.mrb[0].mxu0 %v6004
      %v6134 = vpop.f32.mrb[0].mxu0
      %v6135 = vadd.f32 0.0, %v6134
      %v6136 = vpop.f32.mrb[0].mxu0
      %v6137 = vpop.f32.mrb[0].mxu0
      %v6138 = vadd.f32 0.0, %v6137
      %v6139 = vpop.f32.mrb[0].mxu0
      %6140 = vmatprep.mubr.bf16.mxu0 0
      %6141 = vmatmul.mubr.bf16.gmra.mrb[0].mxu0 %v6007
      %v6142 = vpop.f32.mrb[0].mxu0
      %v6143 = vadd.f32 0.0, %v6142
      %v6144 = vpop.f32.mrb[0].mxu0
      %v6145 = vpop.f32.mrb[0].mxu0
      %v6146 = vadd.f32 0.0, %v6145
      %v6147 = vpop.f32.mrb[0].mxu0
      %6148 = vmatprep.mubr.bf16.mxu0 0
      %6149 = vmatmul.mubr.bf16.gmra.mrb[0].mxu0 %v6010
      %v6150 = vpop.f32.mrb[0].mxu0
      %v6151 = vadd.f32 0.0, %v6150
      %v6152 = vpop.f32.mrb[0].mxu0
      %v6153 = vpop.f32.mrb[0].mxu0
      %v6154 = vadd.f32 0.0, %v6153
      %v6155 = vpop.f32.mrb[0].mxu0
      %6156 = vmatprep.mubr.bf16.mxu0 0
      %6157 = vmatmul.mubr.bf16.gmra.mrb[0].mxu0 %v6013
      %v6158 = vpop.f32.mrb[0].mxu0
      %v6159 = vadd.f32 0.0, %v6158
      %v6160 = vpop.f32.mrb[0].mxu0
      %v6161 = vpop.f32.mrb[0].mxu0
      %v6162 = vadd.f32 0.0, %v6161
      %v6163 = vpop.f32.mrb[0].mxu0
      %6164 = vmatprep.mubr.bf16.mxu0 0
      %6165 = vmatmul.mubr.bf16.gmra.mrb[0].mxu0 %v6016
      %v6166 = vpop.f32.mrb[0].mxu0
      %v6167 = vadd.f32 0.0, %v6166
      %v6168 = vpop.f32.mrb[0].mxu0
      %v6169 = vpop.f32.mrb[0].mxu0
      %v6170 = vadd.f32 0.0, %v6169
      %v6171 = vpop.f32.mrb[0].mxu0
      %6172 = vmatprep.mubr.bf16.mxu0 0
      %6173 = vmatmul.mubr.bf16.gmra.mrb[0].mxu0 %v6019
      %v6174 = vpop.f32.mrb[0].mxu0
      %v6175 = vadd.f32 0.0, %v6174
      %v6176 = vpop.f32.mrb[0].mxu0
      %v6177 = vpop.f32.mrb[0].mxu0
      %v6178 = vadd.f32 0.0, %v6177
      %v6179 = vpop.f32.mrb[0].mxu0
      %6180 = vmatprep.mubr.bf16.mxu0 0
      %6181 = vmatmul.mubr.bf16.gmra.mrb[0].mxu0 %v6022
      %v6182 = vpop.f32.mrb[0].mxu0
      %v6183 = vadd.f32 0.0, %v6182
      %v6184 = vpop.f32.mrb[0].mxu0
      %v6185 = vpop.f32.mrb[0].mxu0
      %v6186 = vadd.f32 0.0, %v6185
      %v6187 = vpop.f32.mrb[0].mxu0
      %6188 = vdwg.mxu0
      %v6190 = vlaneseq
      %v6191 = vshrl.u32 %v6190, 7
      %v6192 = vsub.s32 0, %v6191
      %v6193 = vrot.slane %v5956, %v6192
      %v6195 = vadd.f32 %v6193, %v6063
      %v6196 = vadd.f32 %v6193, %v6066
      %v6197 = vadd.f32 %v6193, %v6071
      %v6198 = vadd.f32 %v6193, %v6074
      %v6199 = vadd.f32 %v6193, %v6079
      %v6200 = vadd.f32 %v6193, %v6082
      %v6201 = vadd.f32 %v6193, %v6087
      %v6202 = vadd.f32 %v6193, %v6090
      %v6203 = vadd.f32 %v6193, %v6095
      %v6204 = vadd.f32 %v6193, %v6098
      %v6205 = vadd.f32 %v6193, %v6103
      %v6206 = vadd.f32 %v6193, %v6106
      %v6207 = vadd.f32 %v6193, %v6111
      %v6208 = vadd.f32 %v6193, %v6114
      %v6209 = vadd.f32 %v6193, %v6119
      %v6210 = vadd.f32 %v6193, %v6122
      %v6211 = vadd.f32 %v6193, %v6127
      %v6212 = vadd.f32 %v6193, %v6130
      %v6213 = vadd.f32 %v6193, %v6135
      %v6214 = vadd.f32 %v6193, %v6138
      %v6215 = vadd.f32 %v6193, %v6143
      %v6216 = vadd.f32 %v6193, %v6146
      %v6217 = vadd.f32 %v6193, %v6151
      %v6218 = vadd.f32 %v6193, %v6154
      %v6219 = vadd.f32 %v6193, %v6159
      %v6220 = vadd.f32 %v6193, %v6162
      %v6221 = vadd.f32 %v6193, %v6167
      %v6222 = vadd.f32 %v6193, %v6170
      %v6223 = vadd.f32 %v6193, %v6175
      %v6224 = vadd.f32 %v6193, %v6178
      %v6225 = vadd.f32 %v6193, %v6183
      %v6226 = vadd.f32 %v6193, %v6186
      %v6227 = vpack.c.bf16 %v5381, %v5380
      %v6228 = vpack.c.bf16 %v5383, %v5382
      %v6229 = vpack.c.bf16 %v5385, %v5384
      %v6230 = vpack.c.bf16 %v5387, %v5386
      %v6231 = vpack.c.bf16 %v5389, %v5388
      %v6232 = vpack.c.bf16 %v5391, %v5390
      %v6233 = vpack.c.bf16 %v5393, %v5392
      %v6234 = vpack.c.bf16 %v5395, %v5394
      %v6235 = vpack.c.bf16 %v5397, %v5396
      %v6236 = vpack.c.bf16 %v5399, %v5398
      %v6237 = vpack.c.bf16 %v5401, %v5400
      %v6238 = vpack.c.bf16 %v5403, %v5402
      %v6239 = vpack.c.bf16 %v5405, %v5404
      %v6240 = vpack.c.bf16 %v5407, %v5406
      %v6241 = vpack.c.bf16 %v5409, %v5408
      %v6242 = vpack.c.bf16 %v5411, %v5410
      %v6243 = vld [vmem:[#allocation24 + $0x8] sm:$0xff]
      %v6244 = vpack.c.bf16 %v6243, %v6243
      %v6246 = vsel %vm5975, %v6227, 0
      %v6249 = vsel %vm5975, %v6228, 0
      %v6252 = vsel %vm5975, %v6229, 0
      %v6255 = vsel %vm5975, %v6230, 0
      %v6258 = vsel %vm5975, %v6231, 0
      %v6261 = vsel %vm5975, %v6232, 0
      %v6264 = vsel %vm5975, %v6233, 0
      %v6267 = vsel %vm5975, %v6234, 0
      %v6270 = vsel %vm5975, %v6235, 0
      %v6273 = vsel %vm5975, %v6236, 0
      %v6276 = vsel %vm5975, %v6237, 0
      %v6279 = vsel %vm5975, %v6238, 0
      %v6282 = vsel %vm5975, %v6239, 0
      %v6285 = vsel %vm5975, %v6240, 0
      %v6288 = vsel %vm5975, %v6241, 0
      %v6291 = vsel %vm5975, %v6242, 0
      %v6294 = vsel %vm6024, %v6244, 0
      %6296 = vmatprep.subr.bf16.mxu0 0
      %6297 = vmatpush1.bf16.msra.mxu0 %v6294
      %6298 = vmatprep.subr.bf16.mxu0 0
      %6299 = vmatpush1.bf16.msra.mxu0 0
      %6300 = vmatprep.subr.bf16.mxu0 0
      %6301 = vmatpush1.bf16.msra.mxu0 0
      %6302 = vmatprep.subr.bf16.mxu0 0
      %6303 = vmatpush1.bf16.msra.mxu0 0
      %6304 = vmatprep.subr.bf16.mxu0 0
      %6305 = vmatpush1.bf16.msra.mxu0 0
      %6306 = vmatprep.subr.bf16.mxu0 0
      %6307 = vmatpush1.bf16.msra.mxu0 0
      %6308 = vmatprep.subr.bf16.mxu0 0
      %6309 = vmatpush1.bf16.msra.mxu0 0
      %6310 = vmatprep.subr.bf16.mxu0 0
      %6311 = vmatpush1.bf16.msra.mxu0 0
      %6312 = vmatprep.subr.bf16.mxu0 0
      %6313 = vmatpush1.bf16.msra.mxu0 0
      %6314 = vmatprep.subr.bf16.mxu0 0
      %6315 = vmatpush1.bf16.msra.mxu0 0
      %6316 = vmatprep.subr.bf16.mxu0 0
      %6317 = vmatpush1.bf16.msra.mxu0 0
      %6318 = vmatprep.subr.bf16.mxu0 0
      %6319 = vmatpush1.bf16.msra.mxu0 0
      %6320 = vmatprep.subr.bf16.mxu0 0
      %6321 = vmatpush1.bf16.msra.mxu0 0
      %6322 = vmatprep.subr.bf16.mxu0 0
      %6323 = vmatpush1.bf16.msra.mxu0 0
      %6324 = vmatprep.subr.bf16.mxu0 0
      %6325 = vmatpush1.bf16.msra.mxu0 0
      %6326 = vmatprep.subr.bf16.mxu0 0
      %6327 = vmatpush1.bf16.msra.mxu0 0
      %6328 = vmatprep.mubr.bf16.mxu0 0
      %6329 = vmatmul.mubr.bf16.gmra.mrb[0].mxu0 %v6246
      %v6330 = vpop.f32.mrb[0].mxu0
      %v6331 = vadd.f32 0.0, %v6330
      %v6332 = vpop.f32.mrb[0].mxu0
      %v6333 = vpop.f32.mrb[0].mxu0
      %v6334 = vadd.f32 0.0, %v6333
      %v6335 = vpop.f32.mrb[0].mxu0
      %6336 = vmatprep.mubr.bf16.mxu0 0
      %6337 = vmatmul.mubr.bf16.gmra.mrb[0].mxu0 %v6249
      %v6338 = vpop.f32.mrb[0].mxu0
      %v6339 = vadd.f32 0.0, %v6338
      %v6340 = vpop.f32.mrb[0].mxu0
      %v6341 = vpop.f32.mrb[0].mxu0
      %v6342 = vadd.f32 0.0, %v6341
      %v6343 = vpop.f32.mrb[0].mxu0
      %6344 = vmatprep.mubr.bf16.mxu0 0
      %6345 = vmatmul.mubr.bf16.gmra.mrb[0].mxu0 %v6252
      %v6346 = vpop.f32.mrb[0].mxu0
      %v6347 = vadd.f32 0.0, %v6346
      %v6348 = vpop.f32.mrb[0].mxu0
      %v6349 = vpop.f32.mrb[0].mxu0
      %v6350 = vadd.f32 0.0, %v6349
      %v6351 = vpop.f32.mrb[0].mxu0
      %6352 = vmatprep.mubr.bf16.mxu0 0
      %6353 = vmatmul.mubr.bf16.gmra.mrb[0].mxu0 %v6255
      %v6354 = vpop.f32.mrb[0].mxu0
      %v6355 = vadd.f32 0.0, %v6354
      %v6356 = vpop.f32.mrb[0].mxu0
      %v6357 = vpop.f32.mrb[0].mxu0
      %v6358 = vadd.f32 0.0, %v6357
      %v6359 = vpop.f32.mrb[0].mxu0
      %6360 = vmatprep.mubr.bf16.mxu0 0
      %6361 = vmatmul.mubr.bf16.gmra.mrb[0].mxu0 %v6258
      %v6362 = vpop.f32.mrb[0].mxu0
      %v6363 = vadd.f32 0.0, %v6362
      %v6364 = vpop.f32.mrb[0].mxu0
      %v6365 = vpop.f32.mrb[0].mxu0
      %v6366 = vadd.f32 0.0, %v6365
      %v6367 = vpop.f32.mrb[0].mxu0
      %6368 = vmatprep.mubr.bf16.mxu0 0
      %6369 = vmatmul.mubr.bf16.gmra.mrb[0].mxu0 %v6261
      %v6370 = vpop.f32.mrb[0].mxu0
      %v6371 = vadd.f32 0.0, %v6370
      %v6372 = vpop.f32.mrb[0].mxu0
      %v6373 = vpop.f32.mrb[0].mxu0
      %v6374 = vadd.f32 0.0, %v6373
      %v6375 = vpop.f32.mrb[0].mxu0
      %6376 = vmatprep.mubr.bf16.mxu0 0
      %6377 = vmatmul.mubr.bf16.gmra.mrb[0].mxu0 %v6264
      %v6378 = vpop.f32.mrb[0].mxu0
      %v6379 = vadd.f32 0.0, %v6378
      %v6380 = vpop.f32.mrb[0].mxu0
      %v6381 = vpop.f32.mrb[0].mxu0
      %v6382 = vadd.f32 0.0, %v6381
      %v6383 = vpop.f32.mrb[0].mxu0
      %6384 = vmatprep.mubr.bf16.mxu0 0
      %6385 = vmatmul.mubr.bf16.gmra.mrb[0].mxu0 %v6267
      %v6386 = vpop.f32.mrb[0].mxu0
      %v6387 = vadd.f32 0.0, %v6386
      %v6388 = vpop.f32.mrb[0].mxu0
      %v6389 = vpop.f32.mrb[0].mxu0
      %v6390 = vadd.f32 0.0, %v6389
      %v6391 = vpop.f32.mrb[0].mxu0
      %6392 = vmatprep.mubr.bf16.mxu0 0
      %6393 = vmatmul.mubr.bf16.gmra.mrb[0].mxu0 %v6270
      %v6394 = vpop.f32.mrb[0].mxu0
      %v6395 = vadd.f32 0.0, %v6394
      %v6396 = vpop.f32.mrb[0].mxu0
      %v6397 = vpop.f32.mrb[0].mxu0
      %v6398 = vadd.f32 0.0, %v6397
      %v6399 = vpop.f32.mrb[0].mxu0
      %6400 = vmatprep.mubr.bf16.mxu0 0
      %6401 = vmatmul.mubr.bf16.gmra.mrb[0].mxu0 %v6273
      %v6402 = vpop.f32.mrb[0].mxu0
      %v6403 = vadd.f32 0.0, %v6402
      %v6404 = vpop.f32.mrb[0].mxu0
      %v6405 = vpop.f32.mrb[0].mxu0
      %v6406 = vadd.f32 0.0, %v6405
      %v6407 = vpop.f32.mrb[0].mxu0
      %6408 = vmatprep.mubr.bf16.mxu0 0
      %6409 = vmatmul.mubr.bf16.gmra.mrb[0].mxu0 %v6276
      %v6410 = vpop.f32.mrb[0].mxu0
      %v6411 = vadd.f32 0.0, %v6410
      %v6412 = vpop.f32.mrb[0].mxu0
      %v6413 = vpop.f32.mrb[0].mxu0
      %v6414 = vadd.f32 0.0, %v6413
      %v6415 = vpop.f32.mrb[0].mxu0
      %6416 = vmatprep.mubr.bf16.mxu0 0
      %6417 = vmatmul.mubr.bf16.gmra.mrb[0].mxu0 %v6279
      %v6418 = vpop.f32.mrb[0].mxu0
      %v6419 = vadd.f32 0.0, %v6418
      %v6420 = vpop.f32.mrb[0].mxu0
      %v6421 = vpop.f32.mrb[0].mxu0
      %v6422 = vadd.f32 0.0, %v6421
      %v6423 = vpop.f32.mrb[0].mxu0
      %6424 = vmatprep.mubr.bf16.mxu0 0
      %6425 = vmatmul.mubr.bf16.gmra.mrb[0].mxu0 %v6282
      %v6426 = vpop.f32.mrb[0].mxu0
      %v6427 = vadd.f32 0.0, %v6426
      %v6428 = vpop.f32.mrb[0].mxu0
      %v6429 = vpop.f32.mrb[0].mxu0
      %v6430 = vadd.f32 0.0, %v6429
      %v6431 = vpop.f32.mrb[0].mxu0
      %6432 = vmatprep.mubr.bf16.mxu0 0
      %6433 = vmatmul.mubr.bf16.gmra.mrb[0].mxu0 %v6285
      %v6434 = vpop.f32.mrb[0].mxu0
      %v6435 = vadd.f32 0.0, %v6434
      %v6436 = vpop.f32.mrb[0].mxu0
      %v6437 = vpop.f32.mrb[0].mxu0
      %v6438 = vadd.f32 0.0, %v6437
      %v6439 = vpop.f32.mrb[0].mxu0
      %6440 = vmatprep.mubr.bf16.mxu0 0
      %6441 = vmatmul.mubr.bf16.gmra.mrb[0].mxu0 %v6288
      %v6442 = vpop.f32.mrb[0].mxu0
      %v6443 = vadd.f32 0.0, %v6442
      %v6444 = vpop.f32.mrb[0].mxu0
      %v6445 = vpop.f32.mrb[0].mxu0
      %v6446 = vadd.f32 0.0, %v6445
      %v6447 = vpop.f32.mrb[0].mxu0
      %6448 = vmatprep.mubr.bf16.mxu0 0
      %6449 = vmatmul.mubr.bf16.gmra.mrb[0].mxu0 %v6291
      %v6450 = vpop.f32.mrb[0].mxu0
      %v6451 = vadd.f32 0.0, %v6450
      %v6452 = vpop.f32.mrb[0].mxu0
      %v6453 = vpop.f32.mrb[0].mxu0
      %v6454 = vadd.f32 0.0, %v6453
      %v6455 = vpop.f32.mrb[0].mxu0
      %6456 = vdwg.mxu0
      %v6457 = vadd.f32 %v6195, %v6331
      %v6458 = vadd.f32 %v6196, %v6334
      %v6459 = vadd.f32 %v6197, %v6339
      %v6460 = vadd.f32 %v6198, %v6342
      %v6461 = vadd.f32 %v6199, %v6347
      %v6462 = vadd.f32 %v6200, %v6350
      %v6463 = vadd.f32 %v6201, %v6355
      %v6464 = vadd.f32 %v6202, %v6358
      %v6465 = vadd.f32 %v6203, %v6363
      %v6466 = vadd.f32 %v6204, %v6366
      %v6467 = vadd.f32 %v6205, %v6371
      %v6468 = vadd.f32 %v6206, %v6374
      %v6469 = vadd.f32 %v6207, %v6379
      %v6470 = vadd.f32 %v6208, %v6382
      %v6471 = vadd.f32 %v6209, %v6387
      %v6472 = vadd.f32 %v6210, %v6390
      %v6473 = vadd.f32 %v6211, %v6395
      %v6474 = vadd.f32 %v6212, %v6398
      %v6475 = vadd.f32 %v6213, %v6403
      %v6476 = vadd.f32 %v6214, %v6406
      %v6477 = vadd.f32 %v6215, %v6411
      %v6478 = vadd.f32 %v6216, %v6414
      %v6479 = vadd.f32 %v6217, %v6419
      %v6480 = vadd.f32 %v6218, %v6422
      %v6481 = vadd.f32 %v6219, %v6427
      %v6482 = vadd.f32 %v6220, %v6430
      %v6483 = vadd.f32 %v6221, %v6435
      %v6484 = vadd.f32 %v6222, %v6438
      %v6485 = vadd.f32 %v6223, %v6443
      %v6486 = vadd.f32 %v6224, %v6446
      %v6487 = vadd.f32 %v6225, %v6451
      %v6488 = vadd.f32 %v6226, %v6454
      %v6489 = vpack.c.bf16 %v5925, %v5924
      %v6490 = vpack.c.bf16 %v5927, %v5926
      %v6491 = vpack.c.bf16 %v5929, %v5928
      %v6492 = vpack.c.bf16 %v5931, %v5930
      %v6493 = vpack.c.bf16 %v5933, %v5932
      %v6494 = vpack.c.bf16 %v5935, %v5934
      %v6495 = vpack.c.bf16 %v5937, %v5936
      %v6496 = vpack.c.bf16 %v5939, %v5938
      %v6497 = vpack.c.bf16 %v5941, %v5940
      %v6498 = vpack.c.bf16 %v5943, %v5942
      %v6499 = vpack.c.bf16 %v5945, %v5944
      %v6500 = vpack.c.bf16 %v5947, %v5946
      %v6501 = vpack.c.bf16 %v5949, %v5948
      %v6502 = vpack.c.bf16 %v5951, %v5950
      %v6503 = vpack.c.bf16 %v5953, %v5952
      %v6504 = vpack.c.bf16 %v5955, %v5954
      %v6505 = vld [vmem:[#allocation24 + $0x10] sm:$0xff]
      %v6506 = vpack.c.bf16 %v6505, %v6505
      %v6508 = vsel %vm5975, %v6489, 0
      %v6511 = vsel %vm5975, %v6490, 0
      %v6514 = vsel %vm5975, %v6491, 0
      %v6517 = vsel %vm5975, %v6492, 0
      %v6520 = vsel %vm5975, %v6493, 0
      %v6523 = vsel %vm5975, %v6494, 0
      %v6526 = vsel %vm5975, %v6495, 0
      %v6529 = vsel %vm5975, %v6496, 0
      %v6532 = vsel %vm5975, %v6497, 0
      %v6535 = vsel %vm5975, %v6498, 0
      %v6538 = vsel %vm5975, %v6499, 0
      %v6541 = vsel %vm5975, %v6500, 0
      %v6544 = vsel %vm5975, %v6501, 0
      %v6547 = vsel %vm5975, %v6502, 0
      %v6550 = vsel %vm5975, %v6503, 0
      %v6553 = vsel %vm5975, %v6504, 0
      %v6556 = vsel %vm6024, %v6506, 0
      %6558 = vmatprep.subr.bf16.mxu0 0
      %6559 = vmatpush1.bf16.msra.mxu0 %v6556
      %6560 = vmatprep.subr.bf16.mxu0 0
      %6561 = vmatpush1.bf16.msra.mxu0 0
      %6562 = vmatprep.subr.bf16.mxu0 0
      %6563 = vmatpush1.bf16.msra.mxu0 0
      %6564 = vmatprep.subr.bf16.mxu0 0
      %6565 = vmatpush1.bf16.msra.mxu0 0
      %6566 = vmatprep.subr.bf16.mxu0 0
      %6567 = vmatpush1.bf16.msra.mxu0 0
      %6568 = vmatprep.subr.bf16.mxu0 0
      %6569 = vmatpush1.bf16.msra.mxu0 0
      %6570 = vmatprep.subr.bf16.mxu0 0
      %6571 = vmatpush1.bf16.msra.mxu0 0
      %6572 = vmatprep.subr.bf16.mxu0 0
      %6573 = vmatpush1.bf16.msra.mxu0 0
      %6574 = vmatprep.subr.bf16.mxu0 0
      %6575 = vmatpush1.bf16.msra.mxu0 0
      %6576 = vmatprep.subr.bf16.mxu0 0
      %6577 = vmatpush1.bf16.msra.mxu0 0
      %6578 = vmatprep.subr.bf16.mxu0 0
      %6579 = vmatpush1.bf16.msra.mxu0 0
      %6580 = vmatprep.subr.bf16.mxu0 0
      %6581 = vmatpush1.bf16.msra.mxu0 0
      %6582 = vmatprep.subr.bf16.mxu0 0
      %6583 = vmatpush1.bf16.msra.mxu0 0
      %6584 = vmatprep.subr.bf16.mxu0 0
      %6585 = vmatpush1.bf16.msra.mxu0 0
      %6586 = vmatprep.subr.bf16.mxu0 0
      %6587 = vmatpush1.bf16.msra.mxu0 0
      %6588 = vmatprep.subr.bf16.mxu0 0
      %6589 = vmatpush1.bf16.msra.mxu0 0
      %6590 = vmatprep.mubr.bf16.mxu0 0
      %6591 = vmatmul.mubr.bf16.gmra.mrb[0].mxu0 %v6508
      %v6592 = vpop.f32.mrb[0].mxu0
      %v6593 = vadd.f32 0.0, %v6592
      %v6594 = vpop.f32.mrb[0].mxu0
      %v6595 = vpop.f32.mrb[0].mxu0
      %v6596 = vadd.f32 0.0, %v6595
      %v6597 = vpop.f32.mrb[0].mxu0
      %6598 = vmatprep.mubr.bf16.mxu0 0
      %6599 = vmatmul.mubr.bf16.gmra.mrb[0].mxu0 %v6511
      %v6600 = vpop.f32.mrb[0].mxu0
      %v6601 = vadd.f32 0.0, %v6600
      %v6602 = vpop.f32.mrb[0].mxu0
      %v6603 = vpop.f32.mrb[0].mxu0
      %v6604 = vadd.f32 0.0, %v6603
      %v6605 = vpop.f32.mrb[0].mxu0
      %6606 = vmatprep.mubr.bf16.mxu0 0
      %6607 = vmatmul.mubr.bf16.gmra.mrb[0].mxu0 %v6514
      %v6608 = vpop.f32.mrb[0].mxu0
      %v6609 = vadd.f32 0.0, %v6608
      %v6610 = vpop.f32.mrb[0].mxu0
      %v6611 = vpop.f32.mrb[0].mxu0
      %v6612 = vadd.f32 0.0, %v6611
      %v6613 = vpop.f32.mrb[0].mxu0
      %6614 = vmatprep.mubr.bf16.mxu0 0
      %6615 = vmatmul.mubr.bf16.gmra.mrb[0].mxu0 %v6517
      %v6616 = vpop.f32.mrb[0].mxu0
      %v6617 = vadd.f32 0.0, %v6616
      %v6618 = vpop.f32.mrb[0].mxu0
      %v6619 = vpop.f32.mrb[0].mxu0
      %v6620 = vadd.f32 0.0, %v6619
      %v6621 = vpop.f32.mrb[0].mxu0
      %6622 = vmatprep.mubr.bf16.mxu0 0
      %6623 = vmatmul.mubr.bf16.gmra.mrb[0].mxu0 %v6520
      %v6624 = vpop.f32.mrb[0].mxu0
      %v6625 = vadd.f32 0.0, %v6624
      %v6626 = vpop.f32.mrb[0].mxu0
      %v6627 = vpop.f32.mrb[0].mxu0
      %v6628 = vadd.f32 0.0, %v6627
      %v6629 = vpop.f32.mrb[0].mxu0
      %6630 = vmatprep.mubr.bf16.mxu0 0
      %6631 = vmatmul.mubr.bf16.gmra.mrb[0].mxu0 %v6523
      %v6632 = vpop.f32.mrb[0].mxu0
      %v6633 = vadd.f32 0.0, %v6632
      %v6634 = vpop.f32.mrb[0].mxu0
      %v6635 = vpop.f32.mrb[0].mxu0
      %v6636 = vadd.f32 0.0, %v6635
      %v6637 = vpop.f32.mrb[0].mxu0
      %6638 = vmatprep.mubr.bf16.mxu0 0
      %6639 = vmatmul.mubr.bf16.gmra.mrb[0].mxu0 %v6526
      %v6640 = vpop.f32.mrb[0].mxu0
      %v6641 = vadd.f32 0.0, %v6640
      %v6642 = vpop.f32.mrb[0].mxu0
      %v6643 = vpop.f32.mrb[0].mxu0
      %v6644 = vadd.f32 0.0, %v6643
      %v6645 = vpop.f32.mrb[0].mxu0
      %6646 = vmatprep.mubr.bf16.mxu0 0
      %6647 = vmatmul.mubr.bf16.gmra.mrb[0].mxu0 %v6529
      %v6648 = vpop.f32.mrb[0].mxu0
      %v6649 = vadd.f32 0.0, %v6648
      %v6650 = vpop.f32.mrb[0].mxu0
      %v6651 = vpop.f32.mrb[0].mxu0
      %v6652 = vadd.f32 0.0, %v6651
      %v6653 = vpop.f32.mrb[0].mxu0
      %6654 = vmatprep.mubr.bf16.mxu0 0
      %6655 = vmatmul.mubr.bf16.gmra.mrb[0].mxu0 %v6532
      %v6656 = vpop.f32.mrb[0].mxu0
      %v6657 = vadd.f32 0.0, %v6656
      %v6658 = vpop.f32.mrb[0].mxu0
      %v6659 = vpop.f32.mrb[0].mxu0
      %v6660 = vadd.f32 0.0, %v6659
      %v6661 = vpop.f32.mrb[0].mxu0
      %6662 = vmatprep.mubr.bf16.mxu0 0
      %6663 = vmatmul.mubr.bf16.gmra.mrb[0].mxu0 %v6535
      %v6664 = vpop.f32.mrb[0].mxu0
      %v6665 = vadd.f32 0.0, %v6664
      %v6666 = vpop.f32.mrb[0].mxu0
      %v6667 = vpop.f32.mrb[0].mxu0
      %v6668 = vadd.f32 0.0, %v6667
      %v6669 = vpop.f32.mrb[0].mxu0
      %6670 = vmatprep.mubr.bf16.mxu0 0
      %6671 = vmatmul.mubr.bf16.gmra.mrb[0].mxu0 %v6538
      %v6672 = vpop.f32.mrb[0].mxu0
      %v6673 = vadd.f32 0.0, %v6672
      %v6674 = vpop.f32.mrb[0].mxu0
      %v6675 = vpop.f32.mrb[0].mxu0
      %v6676 = vadd.f32 0.0, %v6675
      %v6677 = vpop.f32.mrb[0].mxu0
      %6678 = vmatprep.mubr.bf16.mxu0 0
      %6679 = vmatmul.mubr.bf16.gmra.mrb[0].mxu0 %v6541
      %v6680 = vpop.f32.mrb[0].mxu0
      %v6681 = vadd.f32 0.0, %v6680
      %v6682 = vpop.f32.mrb[0].mxu0
      %v6683 = vpop.f32.mrb[0].mxu0
      %v6684 = vadd.f32 0.0, %v6683
      %v6685 = vpop.f32.mrb[0].mxu0
      %6686 = vmatprep.mubr.bf16.mxu0 0
      %6687 = vmatmul.mubr.bf16.gmra.mrb[0].mxu0 %v6544
      %v6688 = vpop.f32.mrb[0].mxu0
      %v6689 = vadd.f32 0.0, %v6688
      %v6690 = vpop.f32.mrb[0].mxu0
      %v6691 = vpop.f32.mrb[0].mxu0
      %v6692 = vadd.f32 0.0, %v6691
      %v6693 = vpop.f32.mrb[0].mxu0
      %6694 = vmatprep.mubr.bf16.mxu0 0
      %6695 = vmatmul.mubr.bf16.gmra.mrb[0].mxu0 %v6547
      %v6696 = vpop.f32.mrb[0].mxu0
      %v6697 = vadd.f32 0.0, %v6696
      %v6698 = vpop.f32.mrb[0].mxu0
      %v6699 = vpop.f32.mrb[0].mxu0
      %v6700 = vadd.f32 0.0, %v6699
      %v6701 = vpop.f32.mrb[0].mxu0
      %6702 = vmatprep.mubr.bf16.mxu0 0
      %6703 = vmatmul.mubr.bf16.gmra.mrb[0].mxu0 %v6550
      %v6704 = vpop.f32.mrb[0].mxu0
      %v6705 = vadd.f32 0.0, %v6704
      %v6706 = vpop.f32.mrb[0].mxu0
      %v6707 = vpop.f32.mrb[0].mxu0
      %v6708 = vadd.f32 0.0, %v6707
      %v6709 = vpop.f32.mrb[0].mxu0
      %6710 = vmatprep.mubr.bf16.mxu0 0
      %6711 = vmatmul.mubr.bf16.gmra.mrb[0].mxu0 %v6553
      %v6712 = vpop.f32.mrb[0].mxu0
      %v6713 = vadd.f32 0.0, %v6712
      %v6714 = vpop.f32.mrb[0].mxu0
      %v6715 = vpop.f32.mrb[0].mxu0
      %v6716 = vadd.f32 0.0, %v6715
      %v6717 = vpop.f32.mrb[0].mxu0
      %6718 = vdwg.mxu0
      %v6719 = vadd.f32 %v6457, %v6593
      %v6720 = vadd.f32 %v6458, %v6596
      %v6721 = vadd.f32 %v6459, %v6601
      %v6722 = vadd.f32 %v6460, %v6604
      %v6723 = vadd.f32 %v6461, %v6609
      %v6724 = vadd.f32 %v6462, %v6612
      %v6725 = vadd.f32 %v6463, %v6617
      %v6726 = vadd.f32 %v6464, %v6620
      %v6727 = vadd.f32 %v6465, %v6625
      %v6728 = vadd.f32 %v6466, %v6628
      %v6729 = vadd.f32 %v6467, %v6633
      %v6730 = vadd.f32 %v6468, %v6636
      %v6731 = vadd.f32 %v6469, %v6641
      %v6732 = vadd.f32 %v6470, %v6644
      %v6733 = vadd.f32 %v6471, %v6649
      %v6734 = vadd.f32 %v6472, %v6652
      %v6735 = vadd.f32 %v6473, %v6657
      %v6736 = vadd.f32 %v6474, %v6660
      %v6737 = vadd.f32 %v6475, %v6665
      %v6738 = vadd.f32 %v6476, %v6668
      %v6739 = vadd.f32 %v6477, %v6673
      %v6740 = vadd.f32 %v6478, %v6676
      %v6741 = vadd.f32 %v6479, %v6681
      %v6742 = vadd.f32 %v6480, %v6684
      %v6743 = vadd.f32 %v6481, %v6689
      %v6744 = vadd.f32 %v6482, %v6692
      %v6745 = vadd.f32 %v6483, %v6697
      %v6746 = vadd.f32 %v6484, %v6700
      %v6747 = vadd.f32 %v6485, %v6705
      %v6748 = vadd.f32 %v6486, %v6708
      %v6749 = vadd.f32 %v6487, %v6713
      %v6750 = vadd.f32 %v6488, %v6716
      %v6751 = vld [vmem:[#allocation24 + $0x18] sm:$0xff]
      %v6752 = vpack.c.bf16 %v6751, %v6751
      %v6785 = vunpack.c.l.b16 %v4420
      %v6786 = vunpack.c.l.b16 %v4421
      %v6787 = vunpack.c.l.b16 %v4422
      %v6788 = vunpack.c.l.b16 %v4423
      %v6789 = vunpack.c.l.b16 %v4424
      %v6790 = vunpack.c.l.b16 %v4425
      %v6791 = vunpack.c.l.b16 %v4426
      %v6792 = vunpack.c.l.b16 %v4427
      %v6793 = vunpack.c.l.b16 %v4428
      %v6794 = vunpack.c.l.b16 %v4429
      %v6795 = vunpack.c.l.b16 %v4430
      %v6796 = vunpack.c.l.b16 %v4431
      %v6797 = vunpack.c.l.b16 %v4432
      %v6798 = vunpack.c.l.b16 %v4433
      %v6799 = vunpack.c.l.b16 %v4434
      %v6800 = vunpack.c.l.b16 %v4435
      %v6801 = vunpack.c.l.b16 %v4436
      %v6802 = vunpack.c.l.b16 %v4437
      %v6803 = vunpack.c.l.b16 %v4438
      %v6804 = vunpack.c.l.b16 %v4439
      %v6805 = vunpack.c.l.b16 %v4440
      %v6806 = vunpack.c.l.b16 %v4441
      %v6807 = vunpack.c.l.b16 %v4442
      %v6808 = vunpack.c.l.b16 %v4443
      %v6809 = vunpack.c.l.b16 %v4444
      %v6810 = vunpack.c.l.b16 %v4445
      %v6811 = vunpack.c.l.b16 %v4446
      %v6812 = vunpack.c.l.b16 %v4447
      %v6813 = vunpack.c.l.b16 %v4448
      %v6814 = vunpack.c.l.b16 %v4449
      %v6815 = vunpack.c.l.b16 %v4450
      %v6816 = vunpack.c.l.b16 %v4451
      %v6817 = vpack.c.b16 %v6786, %v6785
      %v6818 = vpack.c.b16 %v6788, %v6787
      %v6819 = vpack.c.b16 %v6790, %v6789
      %v6820 = vpack.c.b16 %v6792, %v6791
      %v6821 = vpack.c.b16 %v6794, %v6793
      %v6822 = vpack.c.b16 %v6796, %v6795
      %v6823 = vpack.c.b16 %v6798, %v6797
      %v6824 = vpack.c.b16 %v6800, %v6799
      %v6825 = vpack.c.b16 %v6802, %v6801
      %v6826 = vpack.c.b16 %v6804, %v6803
      %v6827 = vpack.c.b16 %v6806, %v6805
      %v6828 = vpack.c.b16 %v6808, %v6807
      %v6829 = vpack.c.b16 %v6810, %v6809
      %v6830 = vpack.c.b16 %v6812, %v6811
      %v6831 = vpack.c.b16 %v6814, %v6813
      %v6832 = vpack.c.b16 %v6816, %v6815
      %v6834 = vsel %vm5975, %v6817, 0
      %v6837 = vsel %vm5975, %v6818, 0
      %v6840 = vsel %vm5975, %v6819, 0
      %v6843 = vsel %vm5975, %v6820, 0
      %v6846 = vsel %vm5975, %v6821, 0
      %v6849 = vsel %vm5975, %v6822, 0
      %v6852 = vsel %vm5975, %v6823, 0
      %v6855 = vsel %vm5975, %v6824, 0
      %v6858 = vsel %vm5975, %v6825, 0
      %v6861 = vsel %vm5975, %v6826, 0
      %v6864 = vsel %vm5975, %v6827, 0
      %v6867 = vsel %vm5975, %v6828, 0
      %v6870 = vsel %vm5975, %v6829, 0
      %v6873 = vsel %vm5975, %v6830, 0
      %v6876 = vsel %vm5975, %v6831, 0
      %v6879 = vsel %vm5975, %v6832, 0
      %v6882 = vsel %vm6024, %v6752, 0
      %6884 = vmatprep.subr.bf16.mxu0 0
      %6885 = vmatpush1.bf16.msra.mxu0 %v6882
      %6886 = vmatprep.subr.bf16.mxu0 0
      %6887 = vmatpush1.bf16.msra.mxu0 0
      %6888 = vmatprep.subr.bf16.mxu0 0
      %6889 = vmatpush1.bf16.msra.mxu0 0
      %6890 = vmatprep.subr.bf16.mxu0 0
      %6891 = vmatpush1.bf16.msra.mxu0 0
      %6892 = vmatprep.subr.bf16.mxu0 0
      %6893 = vmatpush1.bf16.msra.mxu0 0
      %6894 = vmatprep.subr.bf16.mxu0 0
      %6895 = vmatpush1.bf16.msra.mxu0 0
      %6896 = vmatprep.subr.bf16.mxu0 0
      %6897 = vmatpush1.bf16.msra.mxu0 0
      %6898 = vmatprep.subr.bf16.mxu0 0
      %6899 = vmatpush1.bf16.msra.mxu0 0
      %6900 = vmatprep.subr.bf16.mxu0 0
      %6901 = vmatpush1.bf16.msra.mxu0 0
      %6902 = vmatprep.subr.bf16.mxu0 0
      %6903 = vmatpush1.bf16.msra.mxu0 0
      %6904 = vmatprep.subr.bf16.mxu0 0
      %6905 = vmatpush1.bf16.msra.mxu0 0
      %6906 = vmatprep.subr.bf16.mxu0 0
      %6907 = vmatpush1.bf16.msra.mxu0 0
      %6908 = vmatprep.subr.bf16.mxu0 0
      %6909 = vmatpush1.bf16.msra.mxu0 0
      %6910 = vmatprep.subr.bf16.mxu0 0
      %6911 = vmatpush1.bf16.msra.mxu0 0
      %6912 = vmatprep.subr.bf16.mxu0 0
      %6913 = vmatpush1.bf16.msra.mxu0 0
      %6914 = vmatprep.subr.bf16.mxu0 0
      %6915 = vmatpush1.bf16.msra.mxu0 0
      %6916 = vmatprep.mubr.bf16.mxu0 0
      %6917 = vmatmul.mubr.bf16.gmra.mrb[0].mxu0 %v6834
      %v6918 = vpop.f32.mrb[0].mxu0
      %v6919 = vadd.f32 0.0, %v6918
      %v6920 = vpop.f32.mrb[0].mxu0
      %v6921 = vpop.f32.mrb[0].mxu0
      %v6922 = vadd.f32 0.0, %v6921
      %v6923 = vpop.f32.mrb[0].mxu0
      %6924 = vmatprep.mubr.bf16.mxu0 0
      %6925 = vmatmul.mubr.bf16.gmra.mrb[0].mxu0 %v6837
      %v6926 = vpop.f32.mrb[0].mxu0
      %v6927 = vadd.f32 0.0, %v6926
      %v6928 = vpop.f32.mrb[0].mxu0
      %v6929 = vpop.f32.mrb[0].mxu0
      %v6930 = vadd.f32 0.0, %v6929
      %v6931 = vpop.f32.mrb[0].mxu0
      %6932 = vmatprep.mubr.bf16.mxu0 0
      %6933 = vmatmul.mubr.bf16.gmra.mrb[0].mxu0 %v6840
      %v6934 = vpop.f32.mrb[0].mxu0
      %v6935 = vadd.f32 0.0, %v6934
      %v6936 = vpop.f32.mrb[0].mxu0
      %v6937 = vpop.f32.mrb[0].mxu0
      %v6938 = vadd.f32 0.0, %v6937
      %v6939 = vpop.f32.mrb[0].mxu0
      %6940 = vmatprep.mubr.bf16.mxu0 0
      %6941 = vmatmul.mubr.bf16.gmra.mrb[0].mxu0 %v6843
      %v6942 = vpop.f32.mrb[0].mxu0
      %v6943 = vadd.f32 0.0, %v6942
      %v6944 = vpop.f32.mrb[0].mxu0
      %v6945 = vpop.f32.mrb[0].mxu0
      %v6946 = vadd.f32 0.0, %v6945
      %v6947 = vpop.f32.mrb[0].mxu0
      %6948 = vmatprep.mubr.bf16.mxu0 0
      %6949 = vmatmul.mubr.bf16.gmra.mrb[0].mxu0 %v6846
      %v6950 = vpop.f32.mrb[0].mxu0
      %v6951 = vadd.f32 0.0, %v6950
      %v6952 = vpop.f32.mrb[0].mxu0
      %v6953 = vpop.f32.mrb[0].mxu0
      %v6954 = vadd.f32 0.0, %v6953
      %v6955 = vpop.f32.mrb[0].mxu0
      %6956 = vmatprep.mubr.bf16.mxu0 0
      %6957 = vmatmul.mubr.bf16.gmra.mrb[0].mxu0 %v6849
      %v6958 = vpop.f32.mrb[0].mxu0
      %v6959 = vadd.f32 0.0, %v6958
      %v6960 = vpop.f32.mrb[0].mxu0
      %v6961 = vpop.f32.mrb[0].mxu0
      %v6962 = vadd.f32 0.0, %v6961
      %v6963 = vpop.f32.mrb[0].mxu0
      %6964 = vmatprep.mubr.bf16.mxu0 0
      %6965 = vmatmul.mubr.bf16.gmra.mrb[0].mxu0 %v6852
      %v6966 = vpop.f32.mrb[0].mxu0
      %v6967 = vadd.f32 0.0, %v6966
      %v6968 = vpop.f32.mrb[0].mxu0
      %v6969 = vpop.f32.mrb[0].mxu0
      %v6970 = vadd.f32 0.0, %v6969
      %v6971 = vpop.f32.mrb[0].mxu0
      %6972 = vmatprep.mubr.bf16.mxu0 0
      %6973 = vmatmul.mubr.bf16.gmra.mrb[0].mxu0 %v6855
      %v6974 = vpop.f32.mrb[0].mxu0
      %v6975 = vadd.f32 0.0, %v6974
      %v6976 = vpop.f32.mrb[0].mxu0
      %v6977 = vpop.f32.mrb[0].mxu0
      %v6978 = vadd.f32 0.0, %v6977
      %v6979 = vpop.f32.mrb[0].mxu0
      %6980 = vmatprep.mubr.bf16.mxu0 0
      %6981 = vmatmul.mubr.bf16.gmra.mrb[0].mxu0 %v6858
      %v6982 = vpop.f32.mrb[0].mxu0
      %v6983 = vadd.f32 0.0, %v6982
      %v6984 = vpop.f32.mrb[0].mxu0
      %v6985 = vpop.f32.mrb[0].mxu0
      %v6986 = vadd.f32 0.0, %v6985
      %v6987 = vpop.f32.mrb[0].mxu0
      %6988 = vmatprep.mubr.bf16.mxu0 0
      %6989 = vmatmul.mubr.bf16.gmra.mrb[0].mxu0 %v6861
      %v6990 = vpop.f32.mrb[0].mxu0
      %v6991 = vadd.f32 0.0, %v6990
      %v6992 = vpop.f32.mrb[0].mxu0
      %v6993 = vpop.f32.mrb[0].mxu0
      %v6994 = vadd.f32 0.0, %v6993
      %v6995 = vpop.f32.mrb[0].mxu0
      %6996 = vmatprep.mubr.bf16.mxu0 0
      %6997 = vmatmul.mubr.bf16.gmra.mrb[0].mxu0 %v6864
      %v6998 = vpop.f32.mrb[0].mxu0
      %v6999 = vadd.f32 0.0, %v6998
      %v7000 = vpop.f32.mrb[0].mxu0
      %v7001 = vpop.f32.mrb[0].mxu0
      %v7002 = vadd.f32 0.0, %v7001
      %v7003 = vpop.f32.mrb[0].mxu0
      %7004 = vmatprep.mubr.bf16.mxu0 0
      %7005 = vmatmul.mubr.bf16.gmra.mrb[0].mxu0 %v6867
      %v7006 = vpop.f32.mrb[0].mxu0
      %v7007 = vadd.f32 0.0, %v7006
      %v7008 = vpop.f32.mrb[0].mxu0
      %v7009 = vpop.f32.mrb[0].mxu0
      %v7010 = vadd.f32 0.0, %v7009
      %v7011 = vpop.f32.mrb[0].mxu0
      %7012 = vmatprep.mubr.bf16.mxu0 0
      %7013 = vmatmul.mubr.bf16.gmra.mrb[0].mxu0 %v6870
      %v7014 = vpop.f32.mrb[0].mxu0
      %v7015 = vadd.f32 0.0, %v7014
      %v7016 = vpop.f32.mrb[0].mxu0
      %v7017 = vpop.f32.mrb[0].mxu0
      %v7018 = vadd.f32 0.0, %v7017
      %v7019 = vpop.f32.mrb[0].mxu0
      %7020 = vmatprep.mubr.bf16.mxu0 0
      %7021 = vmatmul.mubr.bf16.gmra.mrb[0].mxu0 %v6873
      %v7022 = vpop.f32.mrb[0].mxu0
      %v7023 = vadd.f32 0.0, %v7022
      %v7024 = vpop.f32.mrb[0].mxu0
      %v7025 = vpop.f32.mrb[0].mxu0
      %v7026 = vadd.f32 0.0, %v7025
      %v7027 = vpop.f32.mrb[0].mxu0
      %7028 = vmatprep.mubr.bf16.mxu0 0
      %7029 = vmatmul.mubr.bf16.gmra.mrb[0].mxu0 %v6876
      %v7030 = vpop.f32.mrb[0].mxu0
      %v7031 = vadd.f32 0.0, %v7030
      %v7032 = vpop.f32.mrb[0].mxu0
      %v7033 = vpop.f32.mrb[0].mxu0
      %v7034 = vadd.f32 0.0, %v7033
      %v7035 = vpop.f32.mrb[0].mxu0
      %7036 = vmatprep.mubr.bf16.mxu0 0
      %7037 = vmatmul.mubr.bf16.gmra.mrb[0].mxu0 %v6879
      %v7038 = vpop.f32.mrb[0].mxu0
      %v7039 = vadd.f32 0.0, %v7038
      %v7040 = vpop.f32.mrb[0].mxu0
      %v7041 = vpop.f32.mrb[0].mxu0
      %v7042 = vadd.f32 0.0, %v7041
      %v7043 = vpop.f32.mrb[0].mxu0
      %7044 = vdwg.mxu0
      %v7045 = vadd.f32 %v6719, %v6919
      %v7046 = vadd.f32 %v6720, %v6922
      %v7047 = vadd.f32 %v6721, %v6927
      %v7048 = vadd.f32 %v6722, %v6930
      %v7049 = vadd.f32 %v6723, %v6935
      %v7050 = vadd.f32 %v6724, %v6938
      %v7051 = vadd.f32 %v6725, %v6943
      %v7052 = vadd.f32 %v6726, %v6946
      %v7053 = vadd.f32 %v6727, %v6951
      %v7054 = vadd.f32 %v6728, %v6954
      %v7055 = vadd.f32 %v6729, %v6959
      %v7056 = vadd.f32 %v6730, %v6962
      %v7057 = vadd.f32 %v6731, %v6967
      %v7058 = vadd.f32 %v6732, %v6970
      %v7059 = vadd.f32 %v6733, %v6975
      %v7060 = vadd.f32 %v6734, %v6978
      %v7061 = vadd.f32 %v6735, %v6983
      %v7062 = vadd.f32 %v6736, %v6986
      %v7063 = vadd.f32 %v6737, %v6991
      %v7064 = vadd.f32 %v6738, %v6994
      %v7065 = vadd.f32 %v6739, %v6999
      %v7066 = vadd.f32 %v6740, %v7002
      %v7067 = vadd.f32 %v6741, %v7007
      %v7068 = vadd.f32 %v6742, %v7010
      %v7069 = vadd.f32 %v6743, %v7015
      %v7070 = vadd.f32 %v6744, %v7018
      %v7071 = vadd.f32 %v6745, %v7023
      %v7072 = vadd.f32 %v6746, %v7026
      %v7073 = vadd.f32 %v6747, %v7031
      %v7074 = vadd.f32 %v6748, %v7034
      %v7075 = vadd.f32 %v6749, %v7039
      %v7076 = vadd.f32 %v6750, %v7042
      %v7077 = vpack.c.bf16 %v7046, %v7045
      %v7078 = vpack.c.bf16 %v7048, %v7047
      %v7079 = vpack.c.bf16 %v7050, %v7049
      %v7080 = vpack.c.bf16 %v7052, %v7051
      %v7081 = vpack.c.bf16 %v7054, %v7053
      %v7082 = vpack.c.bf16 %v7056, %v7055
      %v7083 = vpack.c.bf16 %v7058, %v7057
      %v7084 = vpack.c.bf16 %v7060, %v7059
      %v7085 = vpack.c.bf16 %v7062, %v7061
      %v7086 = vpack.c.bf16 %v7064, %v7063
      %v7087 = vpack.c.bf16 %v7066, %v7065
      %v7088 = vpack.c.bf16 %v7068, %v7067
      %v7089 = vpack.c.bf16 %v7070, %v7069
      %v7090 = vpack.c.bf16 %v7072, %v7071
      %v7091 = vpack.c.bf16 %v7074, %v7073
      %v7092 = vpack.c.bf16 %v7076, %v7075
      %v7109 = vunpack.c.l.b16 %v7077
      %v7110 = vunpack.c.h.b16 %v7077
      %v7111 = vunpack.c.l.b16 %v7078
      %v7112 = vunpack.c.h.b16 %v7078
      %v7113 = vunpack.c.l.b16 %v7079
      %v7114 = vunpack.c.h.b16 %v7079
      %v7115 = vunpack.c.l.b16 %v7080
      %v7116 = vunpack.c.h.b16 %v7080
      %v7117 = vunpack.c.l.b16 %v7081
      %v7118 = vunpack.c.h.b16 %v7081
      %v7119 = vunpack.c.l.b16 %v7082
      %v7120 = vunpack.c.h.b16 %v7082
      %v7121 = vunpack.c.l.b16 %v7083
      %v7122 = vunpack.c.h.b16 %v7083
      %v7123 = vunpack.c.l.b16 %v7084
      %v7124 = vunpack.c.h.b16 %v7084
      %v7125 = vunpack.c.l.b16 %v7085
      %v7126 = vunpack.c.h.b16 %v7085
      %v7127 = vunpack.c.l.b16 %v7086
      %v7128 = vunpack.c.h.b16 %v7086
      %v7129 = vunpack.c.l.b16 %v7087
      %v7130 = vunpack.c.h.b16 %v7087
      %v7131 = vunpack.c.l.b16 %v7088
      %v7132 = vunpack.c.h.b16 %v7088
      %v7133 = vunpack.c.l.b16 %v7089
      %v7134 = vunpack.c.h.b16 %v7089
      %v7135 = vunpack.c.l.b16 %v7090
      %v7136 = vunpack.c.h.b16 %v7090
      %v7137 = vunpack.c.l.b16 %v7091
      %v7138 = vunpack.c.h.b16 %v7091
      %v7139 = vunpack.c.l.b16 %v7092
      %v7140 = vunpack.c.h.b16 %v7092
      %v7141 = vpack.c.b16 %v7109, %v7109
      %v7142 = vpack.c.b16 %v7110, %v7110
      %v7143 = vpack.c.b16 %v7111, %v7111
      %v7144 = vpack.c.b16 %v7112, %v7112
      %v7145 = vpack.c.b16 %v7113, %v7113
      %v7146 = vpack.c.b16 %v7114, %v7114
      %v7147 = vpack.c.b16 %v7115, %v7115
      %v7148 = vpack.c.b16 %v7116, %v7116
      %v7149 = vpack.c.b16 %v7117, %v7117
      %v7150 = vpack.c.b16 %v7118, %v7118
      %v7151 = vpack.c.b16 %v7119, %v7119
      %v7152 = vpack.c.b16 %v7120, %v7120
      %v7153 = vpack.c.b16 %v7121, %v7121
      %v7154 = vpack.c.b16 %v7122, %v7122
      %v7155 = vpack.c.b16 %v7123, %v7123
      %v7156 = vpack.c.b16 %v7124, %v7124
      %v7157 = vpack.c.b16 %v7125, %v7125
      %v7158 = vpack.c.b16 %v7126, %v7126
      %v7159 = vpack.c.b16 %v7127, %v7127
      %v7160 = vpack.c.b16 %v7128, %v7128
      %v7161 = vpack.c.b16 %v7129, %v7129
      %v7162 = vpack.c.b16 %v7130, %v7130
      %v7163 = vpack.c.b16 %v7131, %v7131
      %v7164 = vpack.c.b16 %v7132, %v7132
      %v7165 = vpack.c.b16 %v7133, %v7133
      %v7166 = vpack.c.b16 %v7134, %v7134
      %v7167 = vpack.c.b16 %v7135, %v7135
      %v7168 = vpack.c.b16 %v7136, %v7136
      %v7169 = vpack.c.b16 %v7137, %v7137
      %v7170 = vpack.c.b16 %v7138, %v7138
      %v7171 = vpack.c.b16 %v7139, %v7139
      %v7172 = vpack.c.b16 %v7140, %v7140
      %7205 = vst [vmem:[#allocation27] sm:$0xf] %v7141
      %7206 = vst [vmem:[#allocation27 + $0x4] sm:$0xf] %v7142
      %7207 = vst [vmem:[#allocation27 + $0x8] sm:$0xf] %v7143
      %7208 = vst [vmem:[#allocation27 + $0xc] sm:$0xf] %v7144
      %7209 = vst [vmem:[#allocation27 + $0x10] sm:$0xf] %v7145
      %7210 = vst [vmem:[#allocation27 + $0x14] sm:$0xf] %v7146
      %7211 = vst [vmem:[#allocation27 + $0x18] sm:$0xf] %v7147
      %7212 = vst [vmem:[#allocation27 + $0x1c] sm:$0xf] %v7148
      %7213 = vst [vmem:[#allocation27 + $0x20] sm:$0xf] %v7149
      %7214 = vst [vmem:[#allocation27 + $0x24] sm:$0xf] %v7150
      %7215 = vst [vmem:[#allocation27 + $0x28] sm:$0xf] %v7151
      %7216 = vst [vmem:[#allocation27 + $0x2c] sm:$0xf] %v7152
      %7217 = vst [vmem:[#allocation27 + $0x30] sm:$0xf] %v7153
      %7218 = vst [vmem:[#allocation27 + $0x34] sm:$0xf] %v7154
      %7219 = vst [vmem:[#allocation27 + $0x38] sm:$0xf] %v7155
      %7220 = vst [vmem:[#allocation27 + $0x3c] sm:$0xf] %v7156
      %7221 = vst [vmem:[#allocation27 + $0x40] sm:$0xf] %v7157
      %7222 = vst [vmem:[#allocation27 + $0x44] sm:$0xf] %v7158
      %7223 = vst [vmem:[#allocation27 + $0x48] sm:$0xf] %v7159
      %7224 = vst [vmem:[#allocation27 + $0x4c] sm:$0xf] %v7160
      %7225 = vst [vmem:[#allocation27 + $0x50] sm:$0xf] %v7161
      %7226 = vst [vmem:[#allocation27 + $0x54] sm:$0xf] %v7162
      %7227 = vst [vmem:[#allocation27 + $0x58] sm:$0xf] %v7163
      %7228 = vst [vmem:[#allocation27 + $0x5c] sm:$0xf] %v7164
      %7229 = vst [vmem:[#allocation27 + $0x60] sm:$0xf] %v7165
      %7230 = vst [vmem:[#allocation27 + $0x64] sm:$0xf] %v7166
      %7231 = vst [vmem:[#allocation27 + $0x68] sm:$0xf] %v7167
      %7232 = vst [vmem:[#allocation27 + $0x6c] sm:$0xf] %v7168
      %7233 = vst [vmem:[#allocation27 + $0x70] sm:$0xf] %v7169
      %7234 = vst [vmem:[#allocation27 + $0x74] sm:$0xf] %v7170
      %7235 = vst [vmem:[#allocation27 + $0x78] sm:$0xf] %v7171
      %7236 = vst [vmem:[#allocation27 + $0x7c] sm:$0xf] %v7172
    $region97: #{tpu_custom_call.1} parent=1 // pred_fallthru
      _
    // Predicated region
    $region98: #{tpu_custom_call.1} parent=1 // pred_check
      _
    $region99: #{tpu_custom_call.1} parent=1 // pred_check_branch
      %7238 = sbr.rel (0) target = $region101
    $region100: #{tpu_custom_call.1} parent=1 // pred_region
      %s7240 = ssub.s32 2048, 2048
      %7241 = vsyncadd [#allocation12], %s7240
      %s7242 = sshll.u32 [#allocation27], 4
      %s7243 = int_to_ptr.vmem [resolvable:$true] %s7242
      %7248 = dma.vmem_to_hbm [thread:$0]  %s7243, 2048, %s10, [#allocation12], 64, 64, 4
    $region101: #{tpu_custom_call.1} parent=1 // pred_fallthru
      _
    // Predicated region
    $region102: #{tpu_custom_call.1} parent=1 // pred_check
      _
    $region103: #{tpu_custom_call.1} parent=1 // pred_check_branch
      %7250 = sbr.rel (0) target = $region105
    $region104: #{tpu_custom_call.1} parent=1 // pred_region
      %7251 = dma.done [#allocation12], 2048
    $region105: #{tpu_custom_call.1} parent=1 // pred_fallthru
      _
    %7252 = vsyncpa [#allocation11], 1
    %7253 = vsyncpa [#allocation14], 1
    %7254 = vsyncpa [#allocation17], 1
    %7255 = vsyncpa [#allocation20], 1
    %7256 = vsyncpa [#allocation23], 1
    %7257 = vsyncpa [#allocation26], 1
    %7258 = vsyncpa [#allocation12], 1

</llo_original>
